<compile_context>
chip_gen: v5e
topology: v5e:2x2
jax: 0.10.0
libtpu: 0.0.40
codegen_flags: <defaults>
</compile_context>

<pallas_src>
import functools

import jax
import jax.numpy as jnp
from jax import lax
from jax.experimental import pallas as pl
from jax.experimental.pallas import tpu as pltpu

VMEM_LIMIT_BYTES = 32 * 1024 * 1024      # safe on v5e / v6e / v7x
ACT_DTYPE = jnp.bfloat16                 # inter-layer activation storage dtype

_COMPILER_PARAMS = pltpu.CompilerParams(
    dimension_semantics=("parallel",),   # batch axis: shard across TCs (v7x megacore)
    vmem_limit_bytes=VMEM_LIMIT_BYTES,
)


# ----------------------------------------------------------------------------
# Fused 3x3 conv (padding=1) — one image per grid step, taps formed in VMEM
# ----------------------------------------------------------------------------
def _conv3x3_kernel(*refs, stride, hout, wout, cin, cout, activation):
    """refs = (*phase_refs, w_ref, b_ref, o_ref).

    phase_refs[p]: (Hph, Wph, cin)   padded input (even/odd phases for stride 2)
    w_ref:         (9, cin, cout)    tap-major weights
    b_ref:         (1, cout)
    o_ref:         (hout*wout, cout) output (batch dim squeezed)
    """
    nph = stride * stride
    phases = [refs[i][...].astype(jnp.float32) for i in range(nph)]
    w_all = refs[nph][...]                 # (9, cin, cout) f32
    bias = refs[nph + 1][...]              # (1, cout) f32
    o_ref = refs[nph + 2]

    acc = jnp.zeros((hout * wout, cout), jnp.float32)
    for kh in range(3):
        for kw in range(3):
            ph = phases[(kh % stride) * stride + (kw % stride)]
            r0, c0 = kh // stride, kw // stride
            win = ph[r0:r0 + hout, c0:c0 + wout, :]          # (hout, wout, cin)
            win2 = win.reshape(hout * wout, cin)
            wtap = w_all[kh * 3 + kw]                        # (cin, cout)
            if cin == 1:
                # Cin==1: a K=1 "matmul" is a broadcast outer product — keep it on the VPU.
                acc = acc + win2 * wtap
            else:
                acc = acc + jnp.dot(win2, wtap, preferred_element_type=jnp.float32)
    acc = acc + bias
    if activation == "relu":
        acc = jnp.maximum(acc, 0.0)
    o_ref[...] = acc.astype(o_ref.dtype)


def conv3x3(x, w, b, *, stride=1, activation="relu", out_dtype=ACT_DTYPE):
    """x: NHWC (B,H,W,Cin); w: HWIO (3,3,Cin,Cout); b: (Cout,). padding=1."""
    B, H, W, Cin = x.shape
    Cout = w.shape[-1]
    Hout = (H + 2 - 3) // stride + 1
    Wout = (W + 2 - 3) // stride + 1

    xp = jnp.pad(x, ((0, 0), (1, 1), (1, 1), (0, 0)))
    if stride == 1:
        phases = [xp]
    else:
        assert H % 2 == 0 and W % 2 == 0
        phases = [xp[:, i::stride, j::stride, :]
                  for i in range(stride) for j in range(stride)]

    w9 = w.reshape(9, Cin, Cout).astype(jnp.float32)
    b2 = b.reshape(1, Cout).astype(jnp.float32)

    in_specs = [pl.BlockSpec((None,) + tuple(p.shape[1:]), lambda bi: (bi, 0, 0, 0))
                for p in phases]
    in_specs += [pl.BlockSpec((9, Cin, Cout), lambda bi: (0, 0, 0)),
                 pl.BlockSpec((1, Cout), lambda bi: (0, 0))]

    kernel = functools.partial(_conv3x3_kernel, stride=stride, hout=Hout,
                               wout=Wout, cin=Cin, cout=Cout, activation=activation)
    out = pl.pallas_call(
        kernel,
        out_shape=jax.ShapeDtypeStruct((B, Hout * Wout, Cout), out_dtype),
        grid=(B,),
        in_specs=in_specs,
        out_specs=pl.BlockSpec((None, Hout * Wout, Cout), lambda bi: (bi, 0, 0)),
        compiler_params=_COMPILER_PARAMS,
    )(*phases, w9, b2)
    return out.reshape(B, Hout, Wout, Cout)


# ----------------------------------------------------------------------------
# Multi-head self-attention bottleneck — one image per grid step, heads batched
# ----------------------------------------------------------------------------
def _mhsa_kernel(x_ref, wq_ref, bq_ref, wk_ref, bk_ref, wv_ref, bv_ref,
                 wo3_ref, bo_ref, o_ref, *, num_heads, head_dim):
    x = x_ref[...].astype(jnp.float32)                                   # (S, C)
    q = jnp.dot(x, wq_ref[...], preferred_element_type=jnp.float32) + bq_ref[...]
    k = jnp.dot(x, wk_ref[...], preferred_element_type=jnp.float32) + bk_ref[...]
    v = jnp.dot(x, wv_ref[...], preferred_element_type=jnp.float32) + bv_ref[...]

    def split_heads(t):                                 # (S, C) -> (nh, S, hd)
        return jnp.stack([t[:, h * head_dim:(h + 1) * head_dim]
                          for h in range(num_heads)], axis=0)

    qh, kh, vh = split_heads(q), split_heads(k), split_heads(v)
    scale = 1.0 / (head_dim ** 0.5)

    s = jnp.einsum("hqd,hkd->hqk", qh, kh,
                   preferred_element_type=jnp.float32) * scale           # (nh,S,S)
    s = s - jnp.max(s, axis=-1, keepdims=True)
    p = jnp.exp(s)
    p = p * pl.reciprocal(jnp.sum(p, axis=-1, keepdims=True), approx=True)

    att = jnp.einsum("hqk,hkd->hqd", p, vh,
                     preferred_element_type=jnp.float32)                 # (nh,S,hd)
    # combine_heads(concat_h att_h) == sum_h att_h @ wo[h*hd:(h+1)*hd, :]
    outs = jnp.einsum("hqd,hdc->hqc", att, wo3_ref[...],
                      preferred_element_type=jnp.float32)                # (nh,S,C)
    out = jnp.sum(outs, axis=0) + bo_ref[...]
    o_ref[...] = out.astype(o_ref.dtype)


def mhsa(seq, wq, bq, wk, bk, wv, bv, wo, bo, *, num_heads, out_dtype=ACT_DTYPE):
    B, S, C = seq.shape
    head_dim = C // num_heads
    wo3 = wo.reshape(num_heads, head_dim, C).astype(jnp.float32)

    mat_spec = pl.BlockSpec((C, C), lambda b: (0, 0))
    vec_spec = pl.BlockSpec((1, C), lambda b: (0, 0))
    kernel = functools.partial(_mhsa_kernel, num_heads=num_heads, head_dim=head_dim)
    return pl.pallas_call(
        kernel,
        out_shape=jax.ShapeDtypeStruct((B, S, C), out_dtype),
        grid=(B,),
        in_specs=[pl.BlockSpec((None, S, C), lambda b: (b, 0, 0)),
                  mat_spec, vec_spec,                         # q
                  mat_spec, vec_spec,                         # k
                  mat_spec, vec_spec,                         # v
                  pl.BlockSpec((num_heads, head_dim, C), lambda b: (0, 0, 0)),
                  vec_spec],                                  # combine
        out_specs=pl.BlockSpec((None, S, C), lambda b: (b, 0, 0)),
        compiler_params=_COMPILER_PARAMS,
    )(seq, wq, bq, wk, bk, wv, bv, wo3, bo)


# ----------------------------------------------------------------------------
# Fused tail: (+x1) -> res conv (C->1, VPU) -> 2x -> output conv (1->1, VPU) -> tanh
# ----------------------------------------------------------------------------
def _tail_kernel(y_ref, x1_ref, rw_ref, ow_ref, rb_ref, ob_ref, o_ref, *, H, W):
    s = y_ref[...].astype(jnp.float32) + x1_ref[...].astype(jnp.float32)  # (H+4,W+4,C)
    rw = rw_ref[...]                                                      # (9, C) f32
    He, We = H + 2, W + 2

    # res_layer (C -> 1) on the extended grid: 9 VPU multiplies + lane reductions.
    r_ext = jnp.zeros((He, We), jnp.float32)
    for kh in range(3):
        for kw in range(3):
            win = s[kh:kh + He, kw:kw + We, :]                            # (He,We,C)
            tap = kh * 3 + kw
            r_ext = r_ext + jnp.sum(win * rw[tap:tap + 1, :], axis=-1)
    r_ext = r_ext + rb_ref[0]

    # zero the 1-pixel border == zero padding of the res_layer output;
    # the module computes output_layer(x + x), hence the 2x.
    rows = lax.broadcasted_iota(jnp.int32, (He, We), 0)
    cols = lax.broadcasted_iota(jnp.int32, (He, We), 1)
    interior = (rows >= 1) & (rows <= H) & (cols >= 1) & (cols <= W)
    rp = jnp.where(interior, 2.0 * r_ext, 0.0)                            # (He, We)

    # output_layer (1 -> 1): 9 shifted scalar MACs on the VPU, then tanh (EUP).
    t = jnp.zeros((H, W), jnp.float32)
    for kh in range(3):
        for kw in range(3):
            t = t + rp[kh:kh + H, kw:kw + W] * ow_ref[kh * 3 + kw]
    o_ref[...] = jnp.tanh(t + ob_ref[0]).astype(o_ref.dtype)


def conv_tail(y, x1, res_w, res_b, out_w, out_b):
    """y, x1: NHWC (B,H,W,C). Returns tanh(out_conv(2*res_conv(y+x1))) as (B,H,W)."""
    B, H, W, C = y.shape
    yp = jnp.pad(y, ((0, 0), (2, 2), (2, 2), (0, 0)))
    x1p = jnp.pad(x1, ((0, 0), (2, 2), (2, 2), (0, 0)))
    rw = res_w.reshape(9, C).astype(jnp.float32)
    ow = out_w.reshape(9).astype(jnp.float32)
    rb = res_b.reshape(1).astype(jnp.float32)
    ob = out_b.reshape(1).astype(jnp.float32)

    smem = pl.BlockSpec(memory_space=pltpu.MemorySpace.SMEM)
    kernel = functools.partial(_tail_kernel, H=H, W=W)
    return pl.pallas_call(
        kernel,
        out_shape=jax.ShapeDtypeStruct((B, H, W), jnp.float32),
        grid=(B,),
        in_specs=[pl.BlockSpec((None, H + 4, W + 4, C), lambda b: (b, 0, 0, 0)),
                  pl.BlockSpec((None, H + 4, W + 4, C), lambda b: (b, 0, 0, 0)),
                  pl.BlockSpec((9, C), lambda b: (0, 0)),
                  smem, smem, smem],
        out_specs=pl.BlockSpec((None, H, W), lambda b: (b, 0, 0)),
        compiler_params=_COMPILER_PARAMS,
    )(yp, x1p, rw, ow, rb, ob)


# ----------------------------------------------------------------------------
# Parameters (deterministic, synthetic; mirrors the PyTorch init scheme)
# ----------------------------------------------------------------------------
def init_params(key, num_filters):
    C = num_filters
    keys = jax.random.split(key, 10)

    def kaiming(k, shape):                      # HWIO, fan_in mode, relu gain
        fan_in = shape[0] * shape[1] * shape[2]
        bound = (6.0 / fan_in) ** 0.5
        return jax.random.uniform(k, shape, jnp.float32, -bound, bound)

    def xavier(k, shape):
        fan_in, fan_out = shape
        bound = (6.0 / (fan_in + fan_out)) ** 0.5
        return jax.random.uniform(k, shape, jnp.float32, -bound, bound)

    return {
        "conv1_w": kaiming(keys[0], (3, 3, 1, C)), "conv1_b": jnp.zeros((C,), jnp.float32),
        "conv2_w": kaiming(keys[1], (3, 3, C, C)), "conv2_b": jnp.zeros((C,), jnp.float32),
        "conv3_w": kaiming(keys[2], (3, 3, C, C)), "conv3_b": jnp.zeros((C,), jnp.float32),
        "conv4_w": kaiming(keys[3], (3, 3, C, C)), "conv4_b": jnp.zeros((C,), jnp.float32),
        "res_w":   kaiming(keys[4], (3, 3, C, 1)), "res_b":   jnp.zeros((1,), jnp.float32),
        "out_w":   kaiming(keys[5], (3, 3, 1, 1)), "out_b":   jnp.zeros((1,), jnp.float32),
        # attention linears stored as (in, out) so y = x @ W + b
        "wq": xavier(keys[6], (C, C)), "bq": jnp.zeros((1, C), jnp.float32),
        "wk": xavier(keys[7], (C, C)), "bk": jnp.zeros((1, C), jnp.float32),
        "wv": xavier(keys[8], (C, C)), "bv": jnp.zeros((1, C), jnp.float32),
        "wo": xavier(keys[9], (C, C)), "bo": jnp.zeros((1, C), jnp.float32),
    }


# ----------------------------------------------------------------------------
# Denoiser forward
# ----------------------------------------------------------------------------
def denoiser_forward(params, x_nchw, num_heads=4):
    x = jnp.transpose(x_nchw, (0, 2, 3, 1)).astype(jnp.float32)    # NCHW -> NHWC

    x1 = conv3x3(x,  params["conv1_w"], params["conv1_b"], stride=1, activation="relu")
    x2 = conv3x3(x1, params["conv2_w"], params["conv2_b"], stride=2, activation="relu")
    x3 = conv3x3(x2, params["conv3_w"], params["conv3_b"], stride=2, activation="relu")
    x4 = conv3x3(x3, params["conv4_w"], params["conv4_b"], stride=2, activation="relu")

    B, h4, w4, C = x4.shape
    # Bit-faithful reproduction of torch's `x.reshape(b, h*w, -1)` on an NCHW tensor.
    seq = jnp.transpose(x4, (0, 3, 1, 2)).reshape(B, h4 * w4, C)
    attn = mhsa(seq, params["wq"], params["bq"], params["wk"], params["bk"],
                params["wv"], params["bv"], params["wo"], params["bo"],
                num_heads=num_heads)                                # (B, h*w, C)
    xb = attn.reshape(B, h4, w4, C)   # == torch reshape(b,h,w,C).permute(0,3,1,2), kept NHWC

    def up2x(t):                      # nearest-neighbor 2x upsample (XLA fuses with the adds)
        return jnp.repeat(jnp.repeat(t, 2, axis=1), 2, axis=2)

    # TODO(synk): the up2x + skip-add chain could be folded into the consuming kernel's
    # input index_map (row i -> i//2) to avoid materializing the upsampled tensors.
    y = up2x(xb)
    y = up2x(y + x3)
    y = up2x(y + x2)

    # fused tail: (+x1) -> res conv (C->1) -> 2x -> output conv (1->1) -> tanh
    out_hw = conv_tail(y, x1, params["res_w"], params["res_b"],
                       params["out_w"], params["out_b"])            # (B, H, W) f32
    return out_hw[:, None, :, :]                                    # (B, 1, H, W) NCHW


# ----------------------------------------------------------------------------
if __name__ == "__main__":
    B, H, W = 2, 16, 16
    NUM_FILTERS = 16

    key = jax.random.PRNGKey(0)
    pkey, xkey = jax.random.split(key)
    params = init_params(pkey, NUM_FILTERS)
    x = jax.random.normal(xkey, (B, 1, H, W), dtype=jnp.float32)    # NCHW like PyTorch

    fwd = jax.jit(functools.partial(denoiser_forward, num_heads=4))
    out = fwd(params, x)
    out = jax.block_until_ready(out)

    assert out.shape == (B, 1, H, W), out.shape
    assert bool(jnp.all(jnp.isfinite(out)))
    print("KERNEL_OK")
</pallas_src>

<mosaic_0001>
module attributes {stable_mosaic.version = 11 : i64} {
  func.func @_conv3x3_kernel(%arg0: i32, %arg1: memref<1x18x18x1xf32, #tpu.memory_space<vmem>>, %arg2: memref<9x1x16xf32, #tpu.memory_space<vmem>>, %arg3: memref<1x16xf32, #tpu.memory_space<vmem>>, %arg4: memref<1x256x16xbf16, #tpu.memory_space<vmem>>) attributes {dimension_semantics = [#tpu.dimension_semantics<parallel>], iteration_bounds = array<i64: 2>, scalar_prefetch = 0 : i64, scratch_operands = 0 : i64, tpu.core_type = #tpu.core_type<tc>, window_params = [{transform_indices = @transform_0, window_bounds = array<i64: 1, 18, 18, 1>}, {pipeline_mode = #tpu.pipeline_mode<synchronous>, transform_indices = @transform_1, window_bounds = array<i64: 9, 1, 16>}, {pipeline_mode = #tpu.pipeline_mode<synchronous>, transform_indices = @transform_2, window_bounds = array<i64: 1, 16>}, {transform_indices = @transform_3, window_bounds = array<i64: 1, 256, 16>}]} {
    %c0 = arith.constant 0 : index
    %c0_0 = arith.constant 0 : index
    %c0_1 = arith.constant 0 : index
    %c0_2 = arith.constant 0 : index
    %0 = vector.load %arg1[%c0, %c0_0, %c0_1, %c0_2] : memref<1x18x18x1xf32, #tpu.memory_space<vmem>>, vector<1x18x18x1xf32>
    %1 = vector.shape_cast %0 : vector<1x18x18x1xf32> to vector<18x18x1xf32>
    %c0_3 = arith.constant 0 : index
    %c0_4 = arith.constant 0 : index
    %c0_5 = arith.constant 0 : index
    %2 = vector.load %arg2[%c0_3, %c0_4, %c0_5] : memref<9x1x16xf32, #tpu.memory_space<vmem>>, vector<9x1x16xf32>
    %c0_6 = arith.constant 0 : index
    %c0_7 = arith.constant 0 : index
    %3 = vector.load %arg3[%c0_6, %c0_7] : memref<1x16xf32, #tpu.memory_space<vmem>>, vector<1x16xf32>
    %cst = arith.constant 0.000000e+00 : f32
    %4 = vector.broadcast %cst : f32 to vector<256x16xf32>
    %5 = vector.extract_strided_slice %1 {offsets = [0, 0, 0], sizes = [16, 16, 1], strides = [1, 1, 1]} : vector<18x18x1xf32> to vector<16x16x1xf32>
    %6 = vector.shape_cast %5 : vector<16x16x1xf32> to vector<256x1xf32>
    %7 = vector.extract_strided_slice %2 {offsets = [0, 0, 0], sizes = [1, 1, 16], strides = [1, 1, 1]} : vector<9x1x16xf32> to vector<1x1x16xf32>
    %8 = vector.shape_cast %7 : vector<1x1x16xf32> to vector<1x16xf32>
    %9 = vector.broadcast %6 : vector<256x1xf32> to vector<256x16xf32>
    %10 = vector.broadcast %8 : vector<1x16xf32> to vector<256x16xf32>
    %11 = arith.mulf %9, %10 : vector<256x16xf32>
    %12 = arith.addf %4, %11 : vector<256x16xf32>
    %13 = vector.extract_strided_slice %1 {offsets = [0, 1, 0], sizes = [16, 16, 1], strides = [1, 1, 1]} : vector<18x18x1xf32> to vector<16x16x1xf32>
    %14 = vector.shape_cast %13 : vector<16x16x1xf32> to vector<256x1xf32>
    %15 = vector.extract_strided_slice %2 {offsets = [1, 0, 0], sizes = [1, 1, 16], strides = [1, 1, 1]} : vector<9x1x16xf32> to vector<1x1x16xf32>
    %16 = vector.shape_cast %15 : vector<1x1x16xf32> to vector<1x16xf32>
    %17 = vector.broadcast %14 : vector<256x1xf32> to vector<256x16xf32>
    %18 = vector.broadcast %16 : vector<1x16xf32> to vector<256x16xf32>
    %19 = arith.mulf %17, %18 : vector<256x16xf32>
    %20 = arith.addf %12, %19 : vector<256x16xf32>
    %21 = vector.extract_strided_slice %1 {offsets = [0, 2, 0], sizes = [16, 16, 1], strides = [1, 1, 1]} : vector<18x18x1xf32> to vector<16x16x1xf32>
    %22 = vector.shape_cast %21 : vector<16x16x1xf32> to vector<256x1xf32>
    %23 = vector.extract_strided_slice %2 {offsets = [2, 0, 0], sizes = [1, 1, 16], strides = [1, 1, 1]} : vector<9x1x16xf32> to vector<1x1x16xf32>
    %24 = vector.shape_cast %23 : vector<1x1x16xf32> to vector<1x16xf32>
    %25 = vector.broadcast %22 : vector<256x1xf32> to vector<256x16xf32>
    %26 = vector.broadcast %24 : vector<1x16xf32> to vector<256x16xf32>
    %27 = arith.mulf %25, %26 : vector<256x16xf32>
    %28 = arith.addf %20, %27 : vector<256x16xf32>
    %29 = vector.extract_strided_slice %1 {offsets = [1, 0, 0], sizes = [16, 16, 1], strides = [1, 1, 1]} : vector<18x18x1xf32> to vector<16x16x1xf32>
    %30 = vector.shape_cast %29 : vector<16x16x1xf32> to vector<256x1xf32>
    %31 = vector.extract_strided_slice %2 {offsets = [3, 0, 0], sizes = [1, 1, 16], strides = [1, 1, 1]} : vector<9x1x16xf32> to vector<1x1x16xf32>
    %32 = vector.shape_cast %31 : vector<1x1x16xf32> to vector<1x16xf32>
    %33 = vector.broadcast %30 : vector<256x1xf32> to vector<256x16xf32>
    %34 = vector.broadcast %32 : vector<1x16xf32> to vector<256x16xf32>
    %35 = arith.mulf %33, %34 : vector<256x16xf32>
    %36 = arith.addf %28, %35 : vector<256x16xf32>
    %37 = vector.extract_strided_slice %1 {offsets = [1, 1, 0], sizes = [16, 16, 1], strides = [1, 1, 1]} : vector<18x18x1xf32> to vector<16x16x1xf32>
    %38 = vector.shape_cast %37 : vector<16x16x1xf32> to vector<256x1xf32>
    %39 = vector.extract_strided_slice %2 {offsets = [4, 0, 0], sizes = [1, 1, 16], strides = [1, 1, 1]} : vector<9x1x16xf32> to vector<1x1x16xf32>
    %40 = vector.shape_cast %39 : vector<1x1x16xf32> to vector<1x16xf32>
    %41 = vector.broadcast %38 : vector<256x1xf32> to vector<256x16xf32>
    %42 = vector.broadcast %40 : vector<1x16xf32> to vector<256x16xf32>
    %43 = arith.mulf %41, %42 : vector<256x16xf32>
    %44 = arith.addf %36, %43 : vector<256x16xf32>
    %45 = vector.extract_strided_slice %1 {offsets = [1, 2, 0], sizes = [16, 16, 1], strides = [1, 1, 1]} : vector<18x18x1xf32> to vector<16x16x1xf32>
    %46 = vector.shape_cast %45 : vector<16x16x1xf32> to vector<256x1xf32>
    %47 = vector.extract_strided_slice %2 {offsets = [5, 0, 0], sizes = [1, 1, 16], strides = [1, 1, 1]} : vector<9x1x16xf32> to vector<1x1x16xf32>
    %48 = vector.shape_cast %47 : vector<1x1x16xf32> to vector<1x16xf32>
    %49 = vector.broadcast %46 : vector<256x1xf32> to vector<256x16xf32>
    %50 = vector.broadcast %48 : vector<1x16xf32> to vector<256x16xf32>
    %51 = arith.mulf %49, %50 : vector<256x16xf32>
    %52 = arith.addf %44, %51 : vector<256x16xf32>
    %53 = vector.extract_strided_slice %1 {offsets = [2, 0, 0], sizes = [16, 16, 1], strides = [1, 1, 1]} : vector<18x18x1xf32> to vector<16x16x1xf32>
    %54 = vector.shape_cast %53 : vector<16x16x1xf32> to vector<256x1xf32>
    %55 = vector.extract_strided_slice %2 {offsets = [6, 0, 0], sizes = [1, 1, 16], strides = [1, 1, 1]} : vector<9x1x16xf32> to vector<1x1x16xf32>
    %56 = vector.shape_cast %55 : vector<1x1x16xf32> to vector<1x16xf32>
    %57 = vector.broadcast %54 : vector<256x1xf32> to vector<256x16xf32>
    %58 = vector.broadcast %56 : vector<1x16xf32> to vector<256x16xf32>
    %59 = arith.mulf %57, %58 : vector<256x16xf32>
    %60 = arith.addf %52, %59 : vector<256x16xf32>
    %61 = vector.extract_strided_slice %1 {offsets = [2, 1, 0], sizes = [16, 16, 1], strides = [1, 1, 1]} : vector<18x18x1xf32> to vector<16x16x1xf32>
    %62 = vector.shape_cast %61 : vector<16x16x1xf32> to vector<256x1xf32>
    %63 = vector.extract_strided_slice %2 {offsets = [7, 0, 0], sizes = [1, 1, 16], strides = [1, 1, 1]} : vector<9x1x16xf32> to vector<1x1x16xf32>
    %64 = vector.shape_cast %63 : vector<1x1x16xf32> to vector<1x16xf32>
    %65 = vector.broadcast %62 : vector<256x1xf32> to vector<256x16xf32>
    %66 = vector.broadcast %64 : vector<1x16xf32> to vector<256x16xf32>
    %67 = arith.mulf %65, %66 : vector<256x16xf32>
    %68 = arith.addf %60, %67 : vector<256x16xf32>
    %69 = vector.extract_strided_slice %1 {offsets = [2, 2, 0], sizes = [16, 16, 1], strides = [1, 1, 1]} : vector<18x18x1xf32> to vector<16x16x1xf32>
    %70 = vector.shape_cast %69 : vector<16x16x1xf32> to vector<256x1xf32>
    %71 = vector.extract_strided_slice %2 {offsets = [8, 0, 0], sizes = [1, 1, 16], strides = [1, 1, 1]} : vector<9x1x16xf32> to vector<1x1x16xf32>
    %72 = vector.shape_cast %71 : vector<1x1x16xf32> to vector<1x16xf32>
    %73 = vector.broadcast %70 : vector<256x1xf32> to vector<256x16xf32>
    %74 = vector.broadcast %72 : vector<1x16xf32> to vector<256x16xf32>
    %75 = arith.mulf %73, %74 : vector<256x16xf32>
    %76 = arith.addf %68, %75 : vector<256x16xf32>
    %77 = vector.broadcast %3 : vector<1x16xf32> to vector<256x16xf32>
    %78 = arith.addf %76, %77 : vector<256x16xf32>
    %cst_8 = arith.constant 0.000000e+00 : f32
    %79 = vector.broadcast %cst_8 : f32 to vector<256x16xf32>
    %80 = arith.maximumf %78, %79 : vector<256x16xf32>
    %81 = arith.truncf %80 : vector<256x16xf32> to vector<256x16xbf16>
    %c0_9 = arith.constant 0 : index
    %c0_10 = arith.constant 0 : index
    %c0_11 = arith.constant 0 : index
    %82 = vector.load %arg4[%c0_9, %c0_10, %c0_11] : memref<1x256x16xbf16, #tpu.memory_space<vmem>>, vector<1x256x16xbf16>
    %83 = vector.shape_cast %82 : vector<1x256x16xbf16> to vector<256x16xbf16>
    %84 = vector.shape_cast %81 : vector<256x16xbf16> to vector<1x256x16xbf16>
    tpu.vector_store %arg4[%c0_9, %c0_10, %c0_11], %84 {strides = array<i32>} : memref<1x256x16xbf16, #tpu.memory_space<vmem>>, vector<1x256x16xbf16>,
    return
  }
  func.func @transform_0(%arg0: i32) -> (i32, i32, i32, i32) {
    %c0_i32 = arith.constant 0 : i32
    %c0_i32_0 = arith.constant 0 : i32
    %c0_i32_1 = arith.constant 0 : i32
    %c0_i32_2 = arith.constant 0 : i32
    return %arg0, %c0_i32, %c0_i32_0, %c0_i32_1 : i32, i32, i32, i32
  }
  func.func @transform_1(%arg0: i32) -> (i32, i32, i32) {
    %c0_i32 = arith.constant 0 : i32
    %c0_i32_0 = arith.constant 0 : i32
    %c0_i32_1 = arith.constant 0 : i32
    %c0_i32_2 = arith.constant 0 : i32
    return %c0_i32, %c0_i32_0, %c0_i32_1 : i32, i32, i32
  }
  func.func @transform_2(%arg0: i32) -> (i32, i32) {
    %c0_i32 = arith.constant 0 : i32
    %c0_i32_0 = arith.constant 0 : i32
    %c0_i32_1 = arith.constant 0 : i32
    return %c0_i32, %c0_i32_0 : i32, i32
  }
  func.func @transform_3(%arg0: i32) -> (i32, i32, i32) {
    %c0_i32 = arith.constant 0 : i32
    %c0_i32_0 = arith.constant 0 : i32
    %c0_i32_1 = arith.constant 0 : i32
    return %arg0, %c0_i32, %c0_i32_0 : i32, i32, i32
  }
}

module attributes {stable_mosaic.version = 11 : i64} {
  func.func @_conv3x3_kernel(%arg0: i32, %arg1: memref<1x9x9x16xbf16, #tpu.memory_space<vmem>>, %arg2: memref<1x9x9x16xbf16, #tpu.memory_space<vmem>>, %arg3: memref<1x9x9x16xbf16, #tpu.memory_space<vmem>>, %arg4: memref<1x9x9x16xbf16, #tpu.memory_space<vmem>>, %arg5: memref<9x16x16xf32, #tpu.memory_space<vmem>>, %arg6: memref<1x16xf32, #tpu.memory_space<vmem>>, %arg7: memref<1x64x16xbf16, #tpu.memory_space<vmem>>) attributes {dimension_semantics = [#tpu.dimension_semantics<parallel>], iteration_bounds = array<i64: 2>, scalar_prefetch = 0 : i64, scratch_operands = 0 : i64, tpu.core_type = #tpu.core_type<tc>, window_params = [{transform_indices = @transform_0, window_bounds = array<i64: 1, 9, 9, 16>}, {transform_indices = @transform_1, window_bounds = array<i64: 1, 9, 9, 16>}, {transform_indices = @transform_2, window_bounds = array<i64: 1, 9, 9, 16>}, {transform_indices = @transform_3, window_bounds = array<i64: 1, 9, 9, 16>}, {pipeline_mode = #tpu.pipeline_mode<synchronous>, transform_indices = @transform_4, window_bounds = array<i64: 9, 16, 16>}, {pipeline_mode = #tpu.pipeline_mode<synchronous>, transform_indices = @transform_5, window_bounds = array<i64: 1, 16>}, {transform_indices = @transform_6, window_bounds = array<i64: 1, 64, 16>}]} {
    %c0 = arith.constant 0 : index
    %c0_0 = arith.constant 0 : index
    %c0_1 = arith.constant 0 : index
    %c0_2 = arith.constant 0 : index
    %0 = vector.load %arg1[%c0, %c0_0, %c0_1, %c0_2] : memref<1x9x9x16xbf16, #tpu.memory_space<vmem>>, vector<1x9x9x16xbf16>
    %1 = vector.shape_cast %0 : vector<1x9x9x16xbf16> to vector<9x9x16xbf16>
    %2 = arith.extf %1 : vector<9x9x16xbf16> to vector<9x9x16xf32>
    %c0_3 = arith.constant 0 : index
    %c0_4 = arith.constant 0 : index
    %c0_5 = arith.constant 0 : index
    %c0_6 = arith.constant 0 : index
    %3 = vector.load %arg2[%c0_3, %c0_4, %c0_5, %c0_6] : memref<1x9x9x16xbf16, #tpu.memory_space<vmem>>, vector<1x9x9x16xbf16>
    %4 = vector.shape_cast %3 : vector<1x9x9x16xbf16> to vector<9x9x16xbf16>
    %5 = arith.extf %4 : vector<9x9x16xbf16> to vector<9x9x16xf32>
    %c0_7 = arith.constant 0 : index
    %c0_8 = arith.constant 0 : index
    %c0_9 = arith.constant 0 : index
    %c0_10 = arith.constant 0 : index
    %6 = vector.load %arg3[%c0_7, %c0_8, %c0_9, %c0_10] : memref<1x9x9x16xbf16, #tpu.memory_space<vmem>>, vector<1x9x9x16xbf16>
    %7 = vector.shape_cast %6 : vector<1x9x9x16xbf16> to vector<9x9x16xbf16>
    %8 = arith.extf %7 : vector<9x9x16xbf16> to vector<9x9x16xf32>
    %c0_11 = arith.constant 0 : index
    %c0_12 = arith.constant 0 : index
    %c0_13 = arith.constant 0 : index
    %c0_14 = arith.constant 0 : index
    %9 = vector.load %arg4[%c0_11, %c0_12, %c0_13, %c0_14] : memref<1x9x9x16xbf16, #tpu.memory_space<vmem>>, vector<1x9x9x16xbf16>
    %10 = vector.shape_cast %9 : vector<1x9x9x16xbf16> to vector<9x9x16xbf16>
    %11 = arith.extf %10 : vector<9x9x16xbf16> to vector<9x9x16xf32>
    %c0_15 = arith.constant 0 : index
    %c0_16 = arith.constant 0 : index
    %c0_17 = arith.constant 0 : index
    %12 = vector.load %arg5[%c0_15, %c0_16, %c0_17] : memref<9x16x16xf32, #tpu.memory_space<vmem>>, vector<9x16x16xf32>
    %c0_18 = arith.constant 0 : index
    %c0_19 = arith.constant 0 : index
    %13 = vector.load %arg6[%c0_18, %c0_19] : memref<1x16xf32, #tpu.memory_space<vmem>>, vector<1x16xf32>
    %cst = arith.constant 0.000000e+00 : f32
    %14 = vector.broadcast %cst : f32 to vector<64x16xf32>
    %15 = vector.extract_strided_slice %2 {offsets = [0, 0, 0], sizes = [8, 8, 16], strides = [1, 1, 1]} : vector<9x9x16xf32> to vector<8x8x16xf32>
    %16 = vector.shape_cast %15 : vector<8x8x16xf32> to vector<64x16xf32>
    %17 = vector.extract_strided_slice %12 {offsets = [0, 0, 0], sizes = [1, 16, 16], strides = [1, 1, 1]} : vector<9x16x16xf32> to vector<1x16x16xf32>
    %18 = vector.shape_cast %17 : vector<1x16x16xf32> to vector<16x16xf32>
    %cst_20 = arith.constant dense<0.000000e+00> : vector<64x16xf32>
    %19 = tpu.matmul %16, %18, %cst_20 {dimension_numbers = #tpu.dot_dimension_numbers<[1], [0], [0], [1], [0, 0, 1, 1], [], []>} : vector<64x16xf32>, vector<16x16xf32>, vector<64x16xf32> -> vector<64x16xf32>
    %20 = arith.addf %14, %19 : vector<64x16xf32>
    %21 = vector.extract_strided_slice %5 {offsets = [0, 0, 0], sizes = [8, 8, 16], strides = [1, 1, 1]} : vector<9x9x16xf32> to vector<8x8x16xf32>
    %22 = vector.shape_cast %21 : vector<8x8x16xf32> to vector<64x16xf32>
    %23 = vector.extract_strided_slice %12 {offsets = [1, 0, 0], sizes = [1, 16, 16], strides = [1, 1, 1]} : vector<9x16x16xf32> to vector<1x16x16xf32>
    %24 = vector.shape_cast %23 : vector<1x16x16xf32> to vector<16x16xf32>
    %cst_21 = arith.constant dense<0.000000e+00> : vector<64x16xf32>
    %25 = tpu.matmul %22, %24, %cst_21 {dimension_numbers = #tpu.dot_dimension_numbers<[1], [0], [0], [1], [0, 0, 1, 1], [], []>} : vector<64x16xf32>, vector<16x16xf32>, vector<64x16xf32> -> vector<64x16xf32>
    %26 = arith.addf %20, %25 : vector<64x16xf32>
    %27 = vector.extract_strided_slice %2 {offsets = [0, 1, 0], sizes = [8, 8, 16], strides = [1, 1, 1]} : vector<9x9x16xf32> to vector<8x8x16xf32>
    %28 = vector.shape_cast %27 : vector<8x8x16xf32> to vector<64x16xf32>
    %29 = vector.extract_strided_slice %12 {offsets = [2, 0, 0], sizes = [1, 16, 16], strides = [1, 1, 1]} : vector<9x16x16xf32> to vector<1x16x16xf32>
    %30 = vector.shape_cast %29 : vector<1x16x16xf32> to vector<16x16xf32>
    %cst_22 = arith.constant dense<0.000000e+00> : vector<64x16xf32>
    %31 = tpu.matmul %28, %30, %cst_22 {dimension_numbers = #tpu.dot_dimension_numbers<[1], [0], [0], [1], [0, 0, 1, 1], [], []>} : vector<64x16xf32>, vector<16x16xf32>, vector<64x16xf32> -> vector<64x16xf32>
    %32 = arith.addf %26, %31 : vector<64x16xf32>
    %33 = vector.extract_strided_slice %8 {offsets = [0, 0, 0], sizes = [8, 8, 16], strides = [1, 1, 1]} : vector<9x9x16xf32> to vector<8x8x16xf32>
    %34 = vector.shape_cast %33 : vector<8x8x16xf32> to vector<64x16xf32>
    %35 = vector.extract_strided_slice %12 {offsets = [3, 0, 0], sizes = [1, 16, 16], strides = [1, 1, 1]} : vector<9x16x16xf32> to vector<1x16x16xf32>
    %36 = vector.shape_cast %35 : vector<1x16x16xf32> to vector<16x16xf32>
    %cst_23 = arith.constant dense<0.000000e+00> : vector<64x16xf32>
    %37 = tpu.matmul %34, %36, %cst_23 {dimension_numbers = #tpu.dot_dimension_numbers<[1], [0], [0], [1], [0, 0, 1, 1], [], []>} : vector<64x16xf32>, vector<16x16xf32>, vector<64x16xf32> -> vector<64x16xf32>
    %38 = arith.addf %32, %37 : vector<64x16xf32>
    %39 = vector.extract_strided_slice %11 {offsets = [0, 0, 0], sizes = [8, 8, 16], strides = [1, 1, 1]} : vector<9x9x16xf32> to vector<8x8x16xf32>
    %40 = vector.shape_cast %39 : vector<8x8x16xf32> to vector<64x16xf32>
    %41 = vector.extract_strided_slice %12 {offsets = [4, 0, 0], sizes = [1, 16, 16], strides = [1, 1, 1]} : vector<9x16x16xf32> to vector<1x16x16xf32>
    %42 = vector.shape_cast %41 : vector<1x16x16xf32> to vector<16x16xf32>
    %cst_24 = arith.constant dense<0.000000e+00> : vector<64x16xf32>
    %43 = tpu.matmul %40, %42, %cst_24 {dimension_numbers = #tpu.dot_dimension_numbers<[1], [0], [0], [1], [0, 0, 1, 1], [], []>} : vector<64x16xf32>, vector<16x16xf32>, vector<64x16xf32> -> vector<64x16xf32>
    %44 = arith.addf %38, %43 : vector<64x16xf32>
    %45 = vector.extract_strided_slice %8 {offsets = [0, 1, 0], sizes = [8, 8, 16], strides = [1, 1, 1]} : vector<9x9x16xf32> to vector<8x8x16xf32>
    %46 = vector.shape_cast %45 : vector<8x8x16xf32> to vector<64x16xf32>
    %47 = vector.extract_strided_slice %12 {offsets = [5, 0, 0], sizes = [1, 16, 16], strides = [1, 1, 1]} : vector<9x16x16xf32> to vector<1x16x16xf32>
    %48 = vector.shape_cast %47 : vector<1x16x16xf32> to vector<16x16xf32>
    %cst_25 = arith.constant dense<0.000000e+00> : vector<64x16xf32>
    %49 = tpu.matmul %46, %48, %cst_25 {dimension_numbers = #tpu.dot_dimension_numbers<[1], [0], [0], [1], [0, 0, 1, 1], [], []>} : vector<64x16xf32>, vector<16x16xf32>, vector<64x16xf32> -> vector<64x16xf32>
    %50 = arith.addf %44, %49 : vector<64x16xf32>
    %51 = vector.extract_strided_slice %2 {offsets = [1, 0, 0], sizes = [8, 8, 16], strides = [1, 1, 1]} : vector<9x9x16xf32> to vector<8x8x16xf32>
    %52 = vector.shape_cast %51 : vector<8x8x16xf32> to vector<64x16xf32>
    %53 = vector.extract_strided_slice %12 {offsets = [6, 0, 0], sizes = [1, 16, 16], strides = [1, 1, 1]} : vector<9x16x16xf32> to vector<1x16x16xf32>
    %54 = vector.shape_cast %53 : vector<1x16x16xf32> to vector<16x16xf32>
    %cst_26 = arith.constant dense<0.000000e+00> : vector<64x16xf32>
    %55 = tpu.matmul %52, %54, %cst_26 {dimension_numbers = #tpu.dot_dimension_numbers<[1], [0], [0], [1], [0, 0, 1, 1], [], []>} : vector<64x16xf32>, vector<16x16xf32>, vector<64x16xf32> -> vector<64x16xf32>
    %56 = arith.addf %50, %55 : vector<64x16xf32>
    %57 = vector.extract_strided_slice %5 {offsets = [1, 0, 0], sizes = [8, 8, 16], strides = [1, 1, 1]} : vector<9x9x16xf32> to vector<8x8x16xf32>
    %58 = vector.shape_cast %57 : vector<8x8x16xf32> to vector<64x16xf32>
    %59 = vector.extract_strided_slice %12 {offsets = [7, 0, 0], sizes = [1, 16, 16], strides = [1, 1, 1]} : vector<9x16x16xf32> to vector<1x16x16xf32>
    %60 = vector.shape_cast %59 : vector<1x16x16xf32> to vector<16x16xf32>
    %cst_27 = arith.constant dense<0.000000e+00> : vector<64x16xf32>
    %61 = tpu.matmul %58, %60, %cst_27 {dimension_numbers = #tpu.dot_dimension_numbers<[1], [0], [0], [1], [0, 0, 1, 1], [], []>} : vector<64x16xf32>, vector<16x16xf32>, vector<64x16xf32> -> vector<64x16xf32>
    %62 = arith.addf %56, %61 : vector<64x16xf32>
    %63 = vector.extract_strided_slice %2 {offsets = [1, 1, 0], sizes = [8, 8, 16], strides = [1, 1, 1]} : vector<9x9x16xf32> to vector<8x8x16xf32>
    %64 = vector.shape_cast %63 : vector<8x8x16xf32> to vector<64x16xf32>
    %65 = vector.extract_strided_slice %12 {offsets = [8, 0, 0], sizes = [1, 16, 16], strides = [1, 1, 1]} : vector<9x16x16xf32> to vector<1x16x16xf32>
    %66 = vector.shape_cast %65 : vector<1x16x16xf32> to vector<16x16xf32>
    %cst_28 = arith.constant dense<0.000000e+00> : vector<64x16xf32>
    %67 = tpu.matmul %64, %66, %cst_28 {dimension_numbers = #tpu.dot_dimension_numbers<[1], [0], [0], [1], [0, 0, 1, 1], [], []>} : vector<64x16xf32>, vector<16x16xf32>, vector<64x16xf32> -> vector<64x16xf32>
    %68 = arith.addf %62, %67 : vector<64x16xf32>
    %69 = vector.broadcast %13 : vector<1x16xf32> to vector<64x16xf32>
    %70 = arith.addf %68, %69 : vector<64x16xf32>
    %cst_29 = arith.constant 0.000000e+00 : f32
    %71 = vector.broadcast %cst_29 : f32 to vector<64x16xf32>
    %72 = arith.maximumf %70, %71 : vector<64x16xf32>
    %73 = arith.truncf %72 : vector<64x16xf32> to vector<64x16xbf16>
    %c0_30 = arith.constant 0 : index
    %c0_31 = arith.constant 0 : index
    %c0_32 = arith.constant 0 : index
    %74 = vector.load %arg7[%c0_30, %c0_31, %c0_32] : memref<1x64x16xbf16, #tpu.memory_space<vmem>>, vector<1x64x16xbf16>
    %75 = vector.shape_cast %74 : vector<1x64x16xbf16> to vector<64x16xbf16>
    %76 = vector.shape_cast %73 : vector<64x16xbf16> to vector<1x64x16xbf16>
    tpu.vector_store %arg7[%c0_30, %c0_31, %c0_32], %76 {strides = array<i32>} : memref<1x64x16xbf16, #tpu.memory_space<vmem>>, vector<1x64x16xbf16>,
    return
  }
  func.func @transform_0(%arg0: i32) -> (i32, i32, i32, i32) {
    %c0_i32 = arith.constant 0 : i32
    %c0_i32_0 = arith.constant 0 : i32
    %c0_i32_1 = arith.constant 0 : i32
    %c0_i32_2 = arith.constant 0 : i32
    return %arg0, %c0_i32, %c0_i32_0, %c0_i32_1 : i32, i32, i32, i32
  }
  func.func @transform_1(%arg0: i32) -> (i32, i32, i32, i32) {
    %c0_i32 = arith.constant 0 : i32
    %c0_i32_0 = arith.constant 0 : i32
    %c0_i32_1 = arith.constant 0 : i32
    %c0_i32_2 = arith.constant 0 : i32
    return %arg0, %c0_i32, %c0_i32_0, %c0_i32_1 : i32, i32, i32, i32
  }
  func.func @transform_2(%arg0: i32) -> (i32, i32, i32, i32) {
    %c0_i32 = arith.constant 0 : i32
    %c0_i32_0 = arith.constant 0 : i32
    %c0_i32_1 = arith.constant 0 : i32
    %c0_i32_2 = arith.constant 0 : i32
    return %arg0, %c0_i32, %c0_i32_0, %c0_i32_1 : i32, i32, i32, i32
  }
  func.func @transform_3(%arg0: i32) -> (i32, i32, i32, i32) {
    %c0_i32 = arith.constant 0 : i32
    %c0_i32_0 = arith.constant 0 : i32
    %c0_i32_1 = arith.constant 0 : i32
    %c0_i32_2 = arith.constant 0 : i32
    return %arg0, %c0_i32, %c0_i32_0, %c0_i32_1 : i32, i32, i32, i32
  }
  func.func @transform_4(%arg0: i32) -> (i32, i32, i32) {
    %c0_i32 = arith.constant 0 : i32
    %c0_i32_0 = arith.constant 0 : i32
    %c0_i32_1 = arith.constant 0 : i32
    %c0_i32_2 = arith.constant 0 : i32
    return %c0_i32, %c0_i32_0, %c0_i32_1 : i32, i32, i32
  }
  func.func @transform_5(%arg0: i32) -> (i32, i32) {
    %c0_i32 = arith.constant 0 : i32
    %c0_i32_0 = arith.constant 0 : i32
    %c0_i32_1 = arith.constant 0 : i32
    return %c0_i32, %c0_i32_0 : i32, i32
  }
  func.func @transform_6(%arg0: i32) -> (i32, i32, i32) {
    %c0_i32 = arith.constant 0 : i32
    %c0_i32_0 = arith.constant 0 : i32
    %c0_i32_1 = arith.constant 0 : i32
    return %arg0, %c0_i32, %c0_i32_0 : i32, i32, i32
  }
}

module attributes {stable_mosaic.version = 11 : i64} {
  func.func @_conv3x3_kernel(%arg0: i32, %arg1: memref<1x5x5x16xbf16, #tpu.memory_space<vmem>>, %arg2: memref<1x5x5x16xbf16, #tpu.memory_space<vmem>>, %arg3: memref<1x5x5x16xbf16, #tpu.memory_space<vmem>>, %arg4: memref<1x5x5x16xbf16, #tpu.memory_space<vmem>>, %arg5: memref<9x16x16xf32, #tpu.memory_space<vmem>>, %arg6: memref<1x16xf32, #tpu.memory_space<vmem>>, %arg7: memref<1x16x16xbf16, #tpu.memory_space<vmem>>) attributes {dimension_semantics = [#tpu.dimension_semantics<parallel>], iteration_bounds = array<i64: 2>, scalar_prefetch = 0 : i64, scratch_operands = 0 : i64, tpu.core_type = #tpu.core_type<tc>, window_params = [{transform_indices = @transform_0, window_bounds = array<i64: 1, 5, 5, 16>}, {transform_indices = @transform_1, window_bounds = array<i64: 1, 5, 5, 16>}, {transform_indices = @transform_2, window_bounds = array<i64: 1, 5, 5, 16>}, {transform_indices = @transform_3, window_bounds = array<i64: 1, 5, 5, 16>}, {pipeline_mode = #tpu.pipeline_mode<synchronous>, transform_indices = @transform_4, window_bounds = array<i64: 9, 16, 16>}, {pipeline_mode = #tpu.pipeline_mode<synchronous>, transform_indices = @transform_5, window_bounds = array<i64: 1, 16>}, {transform_indices = @transform_6, window_bounds = array<i64: 1, 16, 16>}]} {
    %c0 = arith.constant 0 : index
    %c0_0 = arith.constant 0 : index
    %c0_1 = arith.constant 0 : index
    %c0_2 = arith.constant 0 : index
    %0 = vector.load %arg1[%c0, %c0_0, %c0_1, %c0_2] : memref<1x5x5x16xbf16, #tpu.memory_space<vmem>>, vector<1x5x5x16xbf16>
    %1 = vector.shape_cast %0 : vector<1x5x5x16xbf16> to vector<5x5x16xbf16>
    %2 = arith.extf %1 : vector<5x5x16xbf16> to vector<5x5x16xf32>
    %c0_3 = arith.constant 0 : index
    %c0_4 = arith.constant 0 : index
    %c0_5 = arith.constant 0 : index
    %c0_6 = arith.constant 0 : index
    %3 = vector.load %arg2[%c0_3, %c0_4, %c0_5, %c0_6] : memref<1x5x5x16xbf16, #tpu.memory_space<vmem>>, vector<1x5x5x16xbf16>
    %4 = vector.shape_cast %3 : vector<1x5x5x16xbf16> to vector<5x5x16xbf16>
    %5 = arith.extf %4 : vector<5x5x16xbf16> to vector<5x5x16xf32>
    %c0_7 = arith.constant 0 : index
    %c0_8 = arith.constant 0 : index
    %c0_9 = arith.constant 0 : index
    %c0_10 = arith.constant 0 : index
    %6 = vector.load %arg3[%c0_7, %c0_8, %c0_9, %c0_10] : memref<1x5x5x16xbf16, #tpu.memory_space<vmem>>, vector<1x5x5x16xbf16>
    %7 = vector.shape_cast %6 : vector<1x5x5x16xbf16> to vector<5x5x16xbf16>
    %8 = arith.extf %7 : vector<5x5x16xbf16> to vector<5x5x16xf32>
    %c0_11 = arith.constant 0 : index
    %c0_12 = arith.constant 0 : index
    %c0_13 = arith.constant 0 : index
    %c0_14 = arith.constant 0 : index
    %9 = vector.load %arg4[%c0_11, %c0_12, %c0_13, %c0_14] : memref<1x5x5x16xbf16, #tpu.memory_space<vmem>>, vector<1x5x5x16xbf16>
    %10 = vector.shape_cast %9 : vector<1x5x5x16xbf16> to vector<5x5x16xbf16>
    %11 = arith.extf %10 : vector<5x5x16xbf16> to vector<5x5x16xf32>
    %c0_15 = arith.constant 0 : index
    %c0_16 = arith.constant 0 : index
    %c0_17 = arith.constant 0 : index
    %12 = vector.load %arg5[%c0_15, %c0_16, %c0_17] : memref<9x16x16xf32, #tpu.memory_space<vmem>>, vector<9x16x16xf32>
    %c0_18 = arith.constant 0 : index
    %c0_19 = arith.constant 0 : index
    %13 = vector.load %arg6[%c0_18, %c0_19] : memref<1x16xf32, #tpu.memory_space<vmem>>, vector<1x16xf32>
    %cst = arith.constant 0.000000e+00 : f32
    %14 = vector.broadcast %cst : f32 to vector<16x16xf32>
    %15 = vector.extract_strided_slice %2 {offsets = [0, 0, 0], sizes = [4, 4, 16], strides = [1, 1, 1]} : vector<5x5x16xf32> to vector<4x4x16xf32>
    %16 = vector.shape_cast %15 : vector<4x4x16xf32> to vector<16x16xf32>
    %17 = vector.extract_strided_slice %12 {offsets = [0, 0, 0], sizes = [1, 16, 16], strides = [1, 1, 1]} : vector<9x16x16xf32> to vector<1x16x16xf32>
    %18 = vector.shape_cast %17 : vector<1x16x16xf32> to vector<16x16xf32>
    %cst_20 = arith.constant dense<0.000000e+00> : vector<16x16xf32>
    %19 = tpu.matmul %16, %18, %cst_20 {dimension_numbers = #tpu.dot_dimension_numbers<[1], [0], [0], [1], [0, 0, 1, 1], [], []>} : vector<16x16xf32>, vector<16x16xf32>, vector<16x16xf32> -> vector<16x16xf32>
    %20 = arith.addf %14, %19 : vector<16x16xf32>
    %21 = vector.extract_strided_slice %5 {offsets = [0, 0, 0], sizes = [4, 4, 16], strides = [1, 1, 1]} : vector<5x5x16xf32> to vector<4x4x16xf32>
    %22 = vector.shape_cast %21 : vector<4x4x16xf32> to vector<16x16xf32>
    %23 = vector.extract_strided_slice %12 {offsets = [1, 0, 0], sizes = [1, 16, 16], strides = [1, 1, 1]} : vector<9x16x16xf32> to vector<1x16x16xf32>
    %24 = vector.shape_cast %23 : vector<1x16x16xf32> to vector<16x16xf32>
    %cst_21 = arith.constant dense<0.000000e+00> : vector<16x16xf32>
    %25 = tpu.matmul %22, %24, %cst_21 {dimension_numbers = #tpu.dot_dimension_numbers<[1], [0], [0], [1], [0, 0, 1, 1], [], []>} : vector<16x16xf32>, vector<16x16xf32>, vector<16x16xf32> -> vector<16x16xf32>
    %26 = arith.addf %20, %25 : vector<16x16xf32>
    %27 = vector.extract_strided_slice %2 {offsets = [0, 1, 0], sizes = [4, 4, 16], strides = [1, 1, 1]} : vector<5x5x16xf32> to vector<4x4x16xf32>
    %28 = vector.shape_cast %27 : vector<4x4x16xf32> to vector<16x16xf32>
    %29 = vector.extract_strided_slice %12 {offsets = [2, 0, 0], sizes = [1, 16, 16], strides = [1, 1, 1]} : vector<9x16x16xf32> to vector<1x16x16xf32>
    %30 = vector.shape_cast %29 : vector<1x16x16xf32> to vector<16x16xf32>
    %cst_22 = arith.constant dense<0.000000e+00> : vector<16x16xf32>
    %31 = tpu.matmul %28, %30, %cst_22 {dimension_numbers = #tpu.dot_dimension_numbers<[1], [0], [0], [1], [0, 0, 1, 1], [], []>} : vector<16x16xf32>, vector<16x16xf32>, vector<16x16xf32> -> vector<16x16xf32>
    %32 = arith.addf %26, %31 : vector<16x16xf32>
    %33 = vector.extract_strided_slice %8 {offsets = [0, 0, 0], sizes = [4, 4, 16], strides = [1, 1, 1]} : vector<5x5x16xf32> to vector<4x4x16xf32>
    %34 = vector.shape_cast %33 : vector<4x4x16xf32> to vector<16x16xf32>
    %35 = vector.extract_strided_slice %12 {offsets = [3, 0, 0], sizes = [1, 16, 16], strides = [1, 1, 1]} : vector<9x16x16xf32> to vector<1x16x16xf32>
    %36 = vector.shape_cast %35 : vector<1x16x16xf32> to vector<16x16xf32>
    %cst_23 = arith.constant dense<0.000000e+00> : vector<16x16xf32>
    %37 = tpu.matmul %34, %36, %cst_23 {dimension_numbers = #tpu.dot_dimension_numbers<[1], [0], [0], [1], [0, 0, 1, 1], [], []>} : vector<16x16xf32>, vector<16x16xf32>, vector<16x16xf32> -> vector<16x16xf32>
    %38 = arith.addf %32, %37 : vector<16x16xf32>
    %39 = vector.extract_strided_slice %11 {offsets = [0, 0, 0], sizes = [4, 4, 16], strides = [1, 1, 1]} : vector<5x5x16xf32> to vector<4x4x16xf32>
    %40 = vector.shape_cast %39 : vector<4x4x16xf32> to vector<16x16xf32>
    %41 = vector.extract_strided_slice %12 {offsets = [4, 0, 0], sizes = [1, 16, 16], strides = [1, 1, 1]} : vector<9x16x16xf32> to vector<1x16x16xf32>
    %42 = vector.shape_cast %41 : vector<1x16x16xf32> to vector<16x16xf32>
    %cst_24 = arith.constant dense<0.000000e+00> : vector<16x16xf32>
    %43 = tpu.matmul %40, %42, %cst_24 {dimension_numbers = #tpu.dot_dimension_numbers<[1], [0], [0], [1], [0, 0, 1, 1], [], []>} : vector<16x16xf32>, vector<16x16xf32>, vector<16x16xf32> -> vector<16x16xf32>
    %44 = arith.addf %38, %43 : vector<16x16xf32>
    %45 = vector.extract_strided_slice %8 {offsets = [0, 1, 0], sizes = [4, 4, 16], strides = [1, 1, 1]} : vector<5x5x16xf32> to vector<4x4x16xf32>
    %46 = vector.shape_cast %45 : vector<4x4x16xf32> to vector<16x16xf32>
    %47 = vector.extract_strided_slice %12 {offsets = [5, 0, 0], sizes = [1, 16, 16], strides = [1, 1, 1]} : vector<9x16x16xf32> to vector<1x16x16xf32>
    %48 = vector.shape_cast %47 : vector<1x16x16xf32> to vector<16x16xf32>
    %cst_25 = arith.constant dense<0.000000e+00> : vector<16x16xf32>
    %49 = tpu.matmul %46, %48, %cst_25 {dimension_numbers = #tpu.dot_dimension_numbers<[1], [0], [0], [1], [0, 0, 1, 1], [], []>} : vector<16x16xf32>, vector<16x16xf32>, vector<16x16xf32> -> vector<16x16xf32>
    %50 = arith.addf %44, %49 : vector<16x16xf32>
    %51 = vector.extract_strided_slice %2 {offsets = [1, 0, 0], sizes = [4, 4, 16], strides = [1, 1, 1]} : vector<5x5x16xf32> to vector<4x4x16xf32>
    %52 = vector.shape_cast %51 : vector<4x4x16xf32> to vector<16x16xf32>
    %53 = vector.extract_strided_slice %12 {offsets = [6, 0, 0], sizes = [1, 16, 16], strides = [1, 1, 1]} : vector<9x16x16xf32> to vector<1x16x16xf32>
    %54 = vector.shape_cast %53 : vector<1x16x16xf32> to vector<16x16xf32>
    %cst_26 = arith.constant dense<0.000000e+00> : vector<16x16xf32>
    %55 = tpu.matmul %52, %54, %cst_26 {dimension_numbers = #tpu.dot_dimension_numbers<[1], [0], [0], [1], [0, 0, 1, 1], [], []>} : vector<16x16xf32>, vector<16x16xf32>, vector<16x16xf32> -> vector<16x16xf32>
    %56 = arith.addf %50, %55 : vector<16x16xf32>
    %57 = vector.extract_strided_slice %5 {offsets = [1, 0, 0], sizes = [4, 4, 16], strides = [1, 1, 1]} : vector<5x5x16xf32> to vector<4x4x16xf32>
    %58 = vector.shape_cast %57 : vector<4x4x16xf32> to vector<16x16xf32>
    %59 = vector.extract_strided_slice %12 {offsets = [7, 0, 0], sizes = [1, 16, 16], strides = [1, 1, 1]} : vector<9x16x16xf32> to vector<1x16x16xf32>
    %60 = vector.shape_cast %59 : vector<1x16x16xf32> to vector<16x16xf32>
    %cst_27 = arith.constant dense<0.000000e+00> : vector<16x16xf32>
    %61 = tpu.matmul %58, %60, %cst_27 {dimension_numbers = #tpu.dot_dimension_numbers<[1], [0], [0], [1], [0, 0, 1, 1], [], []>} : vector<16x16xf32>, vector<16x16xf32>, vector<16x16xf32> -> vector<16x16xf32>
    %62 = arith.addf %56, %61 : vector<16x16xf32>
    %63 = vector.extract_strided_slice %2 {offsets = [1, 1, 0], sizes = [4, 4, 16], strides = [1, 1, 1]} : vector<5x5x16xf32> to vector<4x4x16xf32>
    %64 = vector.shape_cast %63 : vector<4x4x16xf32> to vector<16x16xf32>
    %65 = vector.extract_strided_slice %12 {offsets = [8, 0, 0], sizes = [1, 16, 16], strides = [1, 1, 1]} : vector<9x16x16xf32> to vector<1x16x16xf32>
    %66 = vector.shape_cast %65 : vector<1x16x16xf32> to vector<16x16xf32>
    %cst_28 = arith.constant dense<0.000000e+00> : vector<16x16xf32>
    %67 = tpu.matmul %64, %66, %cst_28 {dimension_numbers = #tpu.dot_dimension_numbers<[1], [0], [0], [1], [0, 0, 1, 1], [], []>} : vector<16x16xf32>, vector<16x16xf32>, vector<16x16xf32> -> vector<16x16xf32>
    %68 = arith.addf %62, %67 : vector<16x16xf32>
    %69 = vector.broadcast %13 : vector<1x16xf32> to vector<16x16xf32>
    %70 = arith.addf %68, %69 : vector<16x16xf32>
    %cst_29 = arith.constant 0.000000e+00 : f32
    %71 = vector.broadcast %cst_29 : f32 to vector<16x16xf32>
    %72 = arith.maximumf %70, %71 : vector<16x16xf32>
    %73 = arith.truncf %72 : vector<16x16xf32> to vector<16x16xbf16>
    %c0_30 = arith.constant 0 : index
    %c0_31 = arith.constant 0 : index
    %c0_32 = arith.constant 0 : index
    %74 = vector.load %arg7[%c0_30, %c0_31, %c0_32] : memref<1x16x16xbf16, #tpu.memory_space<vmem>>, vector<1x16x16xbf16>
    %75 = vector.shape_cast %74 : vector<1x16x16xbf16> to vector<16x16xbf16>
    %76 = vector.shape_cast %73 : vector<16x16xbf16> to vector<1x16x16xbf16>
    tpu.vector_store %arg7[%c0_30, %c0_31, %c0_32], %76 {strides = array<i32>} : memref<1x16x16xbf16, #tpu.memory_space<vmem>>, vector<1x16x16xbf16>,
    return
  }
  func.func @transform_0(%arg0: i32) -> (i32, i32, i32, i32) {
    %c0_i32 = arith.constant 0 : i32
    %c0_i32_0 = arith.constant 0 : i32
    %c0_i32_1 = arith.constant 0 : i32
    %c0_i32_2 = arith.constant 0 : i32
    return %arg0, %c0_i32, %c0_i32_0, %c0_i32_1 : i32, i32, i32, i32
  }
  func.func @transform_1(%arg0: i32) -> (i32, i32, i32, i32) {
    %c0_i32 = arith.constant 0 : i32
    %c0_i32_0 = arith.constant 0 : i32
    %c0_i32_1 = arith.constant 0 : i32
    %c0_i32_2 = arith.constant 0 : i32
    return %arg0, %c0_i32, %c0_i32_0, %c0_i32_1 : i32, i32, i32, i32
  }
  func.func @transform_2(%arg0: i32) -> (i32, i32, i32, i32) {
    %c0_i32 = arith.constant 0 : i32
    %c0_i32_0 = arith.constant 0 : i32
    %c0_i32_1 = arith.constant 0 : i32
    %c0_i32_2 = arith.constant 0 : i32
    return %arg0, %c0_i32, %c0_i32_0, %c0_i32_1 : i32, i32, i32, i32
  }
  func.func @transform_3(%arg0: i32) -> (i32, i32, i32, i32) {
    %c0_i32 = arith.constant 0 : i32
    %c0_i32_0 = arith.constant 0 : i32
    %c0_i32_1 = arith.constant 0 : i32
    %c0_i32_2 = arith.constant 0 : i32
    return %arg0, %c0_i32, %c0_i32_0, %c0_i32_1 : i32, i32, i32, i32
  }
  func.func @transform_4(%arg0: i32) -> (i32, i32, i32) {
    %c0_i32 = arith.constant 0 : i32
    %c0_i32_0 = arith.constant 0 : i32
    %c0_i32_1 = arith.constant 0 : i32
    %c0_i32_2 = arith.constant 0 : i32
    return %c0_i32, %c0_i32_0, %c0_i32_1 : i32, i32, i32
  }
  func.func @transform_5(%arg0: i32) -> (i32, i32) {
    %c0_i32 = arith.constant 0 : i32
    %c0_i32_0 = arith.constant 0 : i32
    %c0_i32_1 = arith.constant 0 : i32
    return %c0_i32, %c0_i32_0 : i32, i32
  }
  func.func @transform_6(%arg0: i32) -> (i32, i32, i32) {
    %c0_i32 = arith.constant 0 : i32
    %c0_i32_0 = arith.constant 0 : i32
    %c0_i32_1 = arith.constant 0 : i32
    return %arg0, %c0_i32, %c0_i32_0 : i32, i32, i32
  }
}

module attributes {stable_mosaic.version = 11 : i64} {
  func.func @_conv3x3_kernel(%arg0: i32, %arg1: memref<1x3x3x16xbf16, #tpu.memory_space<vmem>>, %arg2: memref<1x3x3x16xbf16, #tpu.memory_space<vmem>>, %arg3: memref<1x3x3x16xbf16, #tpu.memory_space<vmem>>, %arg4: memref<1x3x3x16xbf16, #tpu.memory_space<vmem>>, %arg5: memref<9x16x16xf32, #tpu.memory_space<vmem>>, %arg6: memref<1x16xf32, #tpu.memory_space<vmem>>, %arg7: memref<1x4x16xbf16, #tpu.memory_space<vmem>>) attributes {dimension_semantics = [#tpu.dimension_semantics<parallel>], iteration_bounds = array<i64: 2>, scalar_prefetch = 0 : i64, scratch_operands = 0 : i64, tpu.core_type = #tpu.core_type<tc>, window_params = [{transform_indices = @transform_0, window_bounds = array<i64: 1, 3, 3, 16>}, {transform_indices = @transform_1, window_bounds = array<i64: 1, 3, 3, 16>}, {transform_indices = @transform_2, window_bounds = array<i64: 1, 3, 3, 16>}, {transform_indices = @transform_3, window_bounds = array<i64: 1, 3, 3, 16>}, {pipeline_mode = #tpu.pipeline_mode<synchronous>, transform_indices = @transform_4, window_bounds = array<i64: 9, 16, 16>}, {pipeline_mode = #tpu.pipeline_mode<synchronous>, transform_indices = @transform_5, window_bounds = array<i64: 1, 16>}, {transform_indices = @transform_6, window_bounds = array<i64: 1, 4, 16>}]} {
    %c0 = arith.constant 0 : index
    %c0_0 = arith.constant 0 : index
    %c0_1 = arith.constant 0 : index
    %c0_2 = arith.constant 0 : index
    %0 = vector.load %arg1[%c0, %c0_0, %c0_1, %c0_2] : memref<1x3x3x16xbf16, #tpu.memory_space<vmem>>, vector<1x3x3x16xbf16>
    %1 = vector.shape_cast %0 : vector<1x3x3x16xbf16> to vector<3x3x16xbf16>
    %2 = arith.extf %1 : vector<3x3x16xbf16> to vector<3x3x16xf32>
    %c0_3 = arith.constant 0 : index
    %c0_4 = arith.constant 0 : index
    %c0_5 = arith.constant 0 : index
    %c0_6 = arith.constant 0 : index
    %3 = vector.load %arg2[%c0_3, %c0_4, %c0_5, %c0_6] : memref<1x3x3x16xbf16, #tpu.memory_space<vmem>>, vector<1x3x3x16xbf16>
    %4 = vector.shape_cast %3 : vector<1x3x3x16xbf16> to vector<3x3x16xbf16>
    %5 = arith.extf %4 : vector<3x3x16xbf16> to vector<3x3x16xf32>
    %c0_7 = arith.constant 0 : index
    %c0_8 = arith.constant 0 : index
    %c0_9 = arith.constant 0 : index
    %c0_10 = arith.constant 0 : index
    %6 = vector.load %arg3[%c0_7, %c0_8, %c0_9, %c0_10] : memref<1x3x3x16xbf16, #tpu.memory_space<vmem>>, vector<1x3x3x16xbf16>
    %7 = vector.shape_cast %6 : vector<1x3x3x16xbf16> to vector<3x3x16xbf16>
    %8 = arith.extf %7 : vector<3x3x16xbf16> to vector<3x3x16xf32>
    %c0_11 = arith.constant 0 : index
    %c0_12 = arith.constant 0 : index
    %c0_13 = arith.constant 0 : index
    %c0_14 = arith.constant 0 : index
    %9 = vector.load %arg4[%c0_11, %c0_12, %c0_13, %c0_14] : memref<1x3x3x16xbf16, #tpu.memory_space<vmem>>, vector<1x3x3x16xbf16>
    %10 = vector.shape_cast %9 : vector<1x3x3x16xbf16> to vector<3x3x16xbf16>
    %11 = arith.extf %10 : vector<3x3x16xbf16> to vector<3x3x16xf32>
    %c0_15 = arith.constant 0 : index
    %c0_16 = arith.constant 0 : index
    %c0_17 = arith.constant 0 : index
    %12 = vector.load %arg5[%c0_15, %c0_16, %c0_17] : memref<9x16x16xf32, #tpu.memory_space<vmem>>, vector<9x16x16xf32>
    %c0_18 = arith.constant 0 : index
    %c0_19 = arith.constant 0 : index
    %13 = vector.load %arg6[%c0_18, %c0_19] : memref<1x16xf32, #tpu.memory_space<vmem>>, vector<1x16xf32>
    %cst = arith.constant 0.000000e+00 : f32
    %14 = vector.broadcast %cst : f32 to vector<4x16xf32>
    %15 = vector.extract_strided_slice %2 {offsets = [0, 0, 0], sizes = [2, 2, 16], strides = [1, 1, 1]} : vector<3x3x16xf32> to vector<2x2x16xf32>
    %16 = vector.shape_cast %15 : vector<2x2x16xf32> to vector<4x16xf32>
    %17 = vector.extract_strided_slice %12 {offsets = [0, 0, 0], sizes = [1, 16, 16], strides = [1, 1, 1]} : vector<9x16x16xf32> to vector<1x16x16xf32>
    %18 = vector.shape_cast %17 : vector<1x16x16xf32> to vector<16x16xf32>
    %cst_20 = arith.constant dense<0.000000e+00> : vector<4x16xf32>
    %19 = tpu.matmul %16, %18, %cst_20 {dimension_numbers = #tpu.dot_dimension_numbers<[1], [0], [0], [1], [0, 0, 1, 1], [], []>} : vector<4x16xf32>, vector<16x16xf32>, vector<4x16xf32> -> vector<4x16xf32>
    %20 = arith.addf %14, %19 : vector<4x16xf32>
    %21 = vector.extract_strided_slice %5 {offsets = [0, 0, 0], sizes = [2, 2, 16], strides = [1, 1, 1]} : vector<3x3x16xf32> to vector<2x2x16xf32>
    %22 = vector.shape_cast %21 : vector<2x2x16xf32> to vector<4x16xf32>
    %23 = vector.extract_strided_slice %12 {offsets = [1, 0, 0], sizes = [1, 16, 16], strides = [1, 1, 1]} : vector<9x16x16xf32> to vector<1x16x16xf32>
    %24 = vector.shape_cast %23 : vector<1x16x16xf32> to vector<16x16xf32>
    %cst_21 = arith.constant dense<0.000000e+00> : vector<4x16xf32>
    %25 = tpu.matmul %22, %24, %cst_21 {dimension_numbers = #tpu.dot_dimension_numbers<[1], [0], [0], [1], [0, 0, 1, 1], [], []>} : vector<4x16xf32>, vector<16x16xf32>, vector<4x16xf32> -> vector<4x16xf32>
    %26 = arith.addf %20, %25 : vector<4x16xf32>
    %27 = vector.extract_strided_slice %2 {offsets = [0, 1, 0], sizes = [2, 2, 16], strides = [1, 1, 1]} : vector<3x3x16xf32> to vector<2x2x16xf32>
    %28 = vector.shape_cast %27 : vector<2x2x16xf32> to vector<4x16xf32>
    %29 = vector.extract_strided_slice %12 {offsets = [2, 0, 0], sizes = [1, 16, 16], strides = [1, 1, 1]} : vector<9x16x16xf32> to vector<1x16x16xf32>
    %30 = vector.shape_cast %29 : vector<1x16x16xf32> to vector<16x16xf32>
    %cst_22 = arith.constant dense<0.000000e+00> : vector<4x16xf32>
    %31 = tpu.matmul %28, %30, %cst_22 {dimension_numbers = #tpu.dot_dimension_numbers<[1], [0], [0], [1], [0, 0, 1, 1], [], []>} : vector<4x16xf32>, vector<16x16xf32>, vector<4x16xf32> -> vector<4x16xf32>
    %32 = arith.addf %26, %31 : vector<4x16xf32>
    %33 = vector.extract_strided_slice %8 {offsets = [0, 0, 0], sizes = [2, 2, 16], strides = [1, 1, 1]} : vector<3x3x16xf32> to vector<2x2x16xf32>
    %34 = vector.shape_cast %33 : vector<2x2x16xf32> to vector<4x16xf32>
    %35 = vector.extract_strided_slice %12 {offsets = [3, 0, 0], sizes = [1, 16, 16], strides = [1, 1, 1]} : vector<9x16x16xf32> to vector<1x16x16xf32>
    %36 = vector.shape_cast %35 : vector<1x16x16xf32> to vector<16x16xf32>
    %cst_23 = arith.constant dense<0.000000e+00> : vector<4x16xf32>
    %37 = tpu.matmul %34, %36, %cst_23 {dimension_numbers = #tpu.dot_dimension_numbers<[1], [0], [0], [1], [0, 0, 1, 1], [], []>} : vector<4x16xf32>, vector<16x16xf32>, vector<4x16xf32> -> vector<4x16xf32>
    %38 = arith.addf %32, %37 : vector<4x16xf32>
    %39 = vector.extract_strided_slice %11 {offsets = [0, 0, 0], sizes = [2, 2, 16], strides = [1, 1, 1]} : vector<3x3x16xf32> to vector<2x2x16xf32>
    %40 = vector.shape_cast %39 : vector<2x2x16xf32> to vector<4x16xf32>
    %41 = vector.extract_strided_slice %12 {offsets = [4, 0, 0], sizes = [1, 16, 16], strides = [1, 1, 1]} : vector<9x16x16xf32> to vector<1x16x16xf32>
    %42 = vector.shape_cast %41 : vector<1x16x16xf32> to vector<16x16xf32>
    %cst_24 = arith.constant dense<0.000000e+00> : vector<4x16xf32>
    %43 = tpu.matmul %40, %42, %cst_24 {dimension_numbers = #tpu.dot_dimension_numbers<[1], [0], [0], [1], [0, 0, 1, 1], [], []>} : vector<4x16xf32>, vector<16x16xf32>, vector<4x16xf32> -> vector<4x16xf32>
    %44 = arith.addf %38, %43 : vector<4x16xf32>
    %45 = vector.extract_strided_slice %8 {offsets = [0, 1, 0], sizes = [2, 2, 16], strides = [1, 1, 1]} : vector<3x3x16xf32> to vector<2x2x16xf32>
    %46 = vector.shape_cast %45 : vector<2x2x16xf32> to vector<4x16xf32>
    %47 = vector.extract_strided_slice %12 {offsets = [5, 0, 0], sizes = [1, 16, 16], strides = [1, 1, 1]} : vector<9x16x16xf32> to vector<1x16x16xf32>
    %48 = vector.shape_cast %47 : vector<1x16x16xf32> to vector<16x16xf32>
    %cst_25 = arith.constant dense<0.000000e+00> : vector<4x16xf32>
    %49 = tpu.matmul %46, %48, %cst_25 {dimension_numbers = #tpu.dot_dimension_numbers<[1], [0], [0], [1], [0, 0, 1, 1], [], []>} : vector<4x16xf32>, vector<16x16xf32>, vector<4x16xf32> -> vector<4x16xf32>
    %50 = arith.addf %44, %49 : vector<4x16xf32>
    %51 = vector.extract_strided_slice %2 {offsets = [1, 0, 0], sizes = [2, 2, 16], strides = [1, 1, 1]} : vector<3x3x16xf32> to vector<2x2x16xf32>
    %52 = vector.shape_cast %51 : vector<2x2x16xf32> to vector<4x16xf32>
    %53 = vector.extract_strided_slice %12 {offsets = [6, 0, 0], sizes = [1, 16, 16], strides = [1, 1, 1]} : vector<9x16x16xf32> to vector<1x16x16xf32>
    %54 = vector.shape_cast %53 : vector<1x16x16xf32> to vector<16x16xf32>
    %cst_26 = arith.constant dense<0.000000e+00> : vector<4x16xf32>
    %55 = tpu.matmul %52, %54, %cst_26 {dimension_numbers = #tpu.dot_dimension_numbers<[1], [0], [0], [1], [0, 0, 1, 1], [], []>} : vector<4x16xf32>, vector<16x16xf32>, vector<4x16xf32> -> vector<4x16xf32>
    %56 = arith.addf %50, %55 : vector<4x16xf32>
    %57 = vector.extract_strided_slice %5 {offsets = [1, 0, 0], sizes = [2, 2, 16], strides = [1, 1, 1]} : vector<3x3x16xf32> to vector<2x2x16xf32>
    %58 = vector.shape_cast %57 : vector<2x2x16xf32> to vector<4x16xf32>
    %59 = vector.extract_strided_slice %12 {offsets = [7, 0, 0], sizes = [1, 16, 16], strides = [1, 1, 1]} : vector<9x16x16xf32> to vector<1x16x16xf32>
    %60 = vector.shape_cast %59 : vector<1x16x16xf32> to vector<16x16xf32>
    %cst_27 = arith.constant dense<0.000000e+00> : vector<4x16xf32>
    %61 = tpu.matmul %58, %60, %cst_27 {dimension_numbers = #tpu.dot_dimension_numbers<[1], [0], [0], [1], [0, 0, 1, 1], [], []>} : vector<4x16xf32>, vector<16x16xf32>, vector<4x16xf32> -> vector<4x16xf32>
    %62 = arith.addf %56, %61 : vector<4x16xf32>
    %63 = vector.extract_strided_slice %2 {offsets = [1, 1, 0], sizes = [2, 2, 16], strides = [1, 1, 1]} : vector<3x3x16xf32> to vector<2x2x16xf32>
    %64 = vector.shape_cast %63 : vector<2x2x16xf32> to vector<4x16xf32>
    %65 = vector.extract_strided_slice %12 {offsets = [8, 0, 0], sizes = [1, 16, 16], strides = [1, 1, 1]} : vector<9x16x16xf32> to vector<1x16x16xf32>
    %66 = vector.shape_cast %65 : vector<1x16x16xf32> to vector<16x16xf32>
    %cst_28 = arith.constant dense<0.000000e+00> : vector<4x16xf32>
    %67 = tpu.matmul %64, %66, %cst_28 {dimension_numbers = #tpu.dot_dimension_numbers<[1], [0], [0], [1], [0, 0, 1, 1], [], []>} : vector<4x16xf32>, vector<16x16xf32>, vector<4x16xf32> -> vector<4x16xf32>
    %68 = arith.addf %62, %67 : vector<4x16xf32>
    %69 = vector.broadcast %13 : vector<1x16xf32> to vector<4x16xf32>
    %70 = arith.addf %68, %69 : vector<4x16xf32>
    %cst_29 = arith.constant 0.000000e+00 : f32
    %71 = vector.broadcast %cst_29 : f32 to vector<4x16xf32>
    %72 = arith.maximumf %70, %71 : vector<4x16xf32>
    %73 = arith.truncf %72 : vector<4x16xf32> to vector<4x16xbf16>
    %c0_30 = arith.constant 0 : index
    %c0_31 = arith.constant 0 : index
    %c0_32 = arith.constant 0 : index
    %74 = vector.load %arg7[%c0_30, %c0_31, %c0_32] : memref<1x4x16xbf16, #tpu.memory_space<vmem>>, vector<1x4x16xbf16>
    %75 = vector.shape_cast %74 : vector<1x4x16xbf16> to vector<4x16xbf16>
    %76 = vector.shape_cast %73 : vector<4x16xbf16> to vector<1x4x16xbf16>
    tpu.vector_store %arg7[%c0_30, %c0_31, %c0_32], %76 {strides = array<i32>} : memref<1x4x16xbf16, #tpu.memory_space<vmem>>, vector<1x4x16xbf16>,
    return
  }
  func.func @transform_0(%arg0: i32) -> (i32, i32, i32, i32) {
    %c0_i32 = arith.constant 0 : i32
    %c0_i32_0 = arith.constant 0 : i32
    %c0_i32_1 = arith.constant 0 : i32
    %c0_i32_2 = arith.constant 0 : i32
    return %arg0, %c0_i32, %c0_i32_0, %c0_i32_1 : i32, i32, i32, i32
  }
  func.func @transform_1(%arg0: i32) -> (i32, i32, i32, i32) {
    %c0_i32 = arith.constant 0 : i32
    %c0_i32_0 = arith.constant 0 : i32
    %c0_i32_1 = arith.constant 0 : i32
    %c0_i32_2 = arith.constant 0 : i32
    return %arg0, %c0_i32, %c0_i32_0, %c0_i32_1 : i32, i32, i32, i32
  }
  func.func @transform_2(%arg0: i32) -> (i32, i32, i32, i32) {
    %c0_i32 = arith.constant 0 : i32
    %c0_i32_0 = arith.constant 0 : i32
    %c0_i32_1 = arith.constant 0 : i32
    %c0_i32_2 = arith.constant 0 : i32
    return %arg0, %c0_i32, %c0_i32_0, %c0_i32_1 : i32, i32, i32, i32
  }
  func.func @transform_3(%arg0: i32) -> (i32, i32, i32, i32) {
    %c0_i32 = arith.constant 0 : i32
    %c0_i32_0 = arith.constant 0 : i32
    %c0_i32_1 = arith.constant 0 : i32
    %c0_i32_2 = arith.constant 0 : i32
    return %arg0, %c0_i32, %c0_i32_0, %c0_i32_1 : i32, i32, i32, i32
  }
  func.func @transform_4(%arg0: i32) -> (i32, i32, i32) {
    %c0_i32 = arith.constant 0 : i32
    %c0_i32_0 = arith.constant 0 : i32
    %c0_i32_1 = arith.constant 0 : i32
    %c0_i32_2 = arith.constant 0 : i32
    return %c0_i32, %c0_i32_0, %c0_i32_1 : i32, i32, i32
  }
  func.func @transform_5(%arg0: i32) -> (i32, i32) {
    %c0_i32 = arith.constant 0 : i32
    %c0_i32_0 = arith.constant 0 : i32
    %c0_i32_1 = arith.constant 0 : i32
    return %c0_i32, %c0_i32_0 : i32, i32
  }
  func.func @transform_6(%arg0: i32) -> (i32, i32, i32) {
    %c0_i32 = arith.constant 0 : i32
    %c0_i32_0 = arith.constant 0 : i32
    %c0_i32_1 = arith.constant 0 : i32
    return %arg0, %c0_i32, %c0_i32_0 : i32, i32, i32
  }
}

module attributes {stable_mosaic.version = 11 : i64} {
  func.func @_mhsa_kernel(%arg0: i32, %arg1: memref<1x4x16xbf16, #tpu.memory_space<vmem>>, %arg2: memref<16x16xf32, #tpu.memory_space<vmem>>, %arg3: memref<1x16xf32, #tpu.memory_space<vmem>>, %arg4: memref<16x16xf32, #tpu.memory_space<vmem>>, %arg5: memref<1x16xf32, #tpu.memory_space<vmem>>, %arg6: memref<16x16xf32, #tpu.memory_space<vmem>>, %arg7: memref<1x16xf32, #tpu.memory_space<vmem>>, %arg8: memref<4x4x16xf32, #tpu.memory_space<vmem>>, %arg9: memref<1x16xf32, #tpu.memory_space<vmem>>, %arg10: memref<1x4x16xbf16, #tpu.memory_space<vmem>>) attributes {dimension_semantics = [#tpu.dimension_semantics<parallel>], iteration_bounds = array<i64: 2>, scalar_prefetch = 0 : i64, scratch_operands = 0 : i64, tpu.core_type = #tpu.core_type<tc>, window_params = [{transform_indices = @transform_0, window_bounds = array<i64: 1, 4, 16>}, {pipeline_mode = #tpu.pipeline_mode<synchronous>, transform_indices = @transform_1, window_bounds = array<i64: 16, 16>}, {pipeline_mode = #tpu.pipeline_mode<synchronous>, transform_indices = @transform_2, window_bounds = array<i64: 1, 16>}, {pipeline_mode = #tpu.pipeline_mode<synchronous>, transform_indices = @transform_3, window_bounds = array<i64: 16, 16>}, {pipeline_mode = #tpu.pipeline_mode<synchronous>, transform_indices = @transform_4, window_bounds = array<i64: 1, 16>}, {pipeline_mode = #tpu.pipeline_mode<synchronous>, transform_indices = @transform_5, window_bounds = array<i64: 16, 16>}, {pipeline_mode = #tpu.pipeline_mode<synchronous>, transform_indices = @transform_6, window_bounds = array<i64: 1, 16>}, {pipeline_mode = #tpu.pipeline_mode<synchronous>, transform_indices = @transform_7, window_bounds = array<i64: 4, 4, 16>}, {pipeline_mode = #tpu.pipeline_mode<synchronous>, transform_indices = @transform_8, window_bounds = array<i64: 1, 16>}, {transform_indices = @transform_9, window_bounds = array<i64: 1, 4, 16>}]} {
    %c0 = arith.constant 0 : index
    %c0_0 = arith.constant 0 : index
    %c0_1 = arith.constant 0 : index
    %0 = vector.load %arg1[%c0, %c0_0, %c0_1] : memref<1x4x16xbf16, #tpu.memory_space<vmem>>, vector<1x4x16xbf16>
    %1 = vector.shape_cast %0 : vector<1x4x16xbf16> to vector<4x16xbf16>
    %2 = arith.extf %1 : vector<4x16xbf16> to vector<4x16xf32>
    %c0_2 = arith.constant 0 : index
    %c0_3 = arith.constant 0 : index
    %3 = vector.load %arg2[%c0_2, %c0_3] : memref<16x16xf32, #tpu.memory_space<vmem>>, vector<16x16xf32>
    %cst = arith.constant dense<0.000000e+00> : vector<4x16xf32>
    %4 = tpu.matmul %2, %3, %cst {dimension_numbers = #tpu.dot_dimension_numbers<[1], [0], [0], [1], [0, 0, 1, 1], [], []>} : vector<4x16xf32>, vector<16x16xf32>, vector<4x16xf32> -> vector<4x16xf32>
    %c0_4 = arith.constant 0 : index
    %c0_5 = arith.constant 0 : index
    %5 = vector.load %arg3[%c0_4, %c0_5] : memref<1x16xf32, #tpu.memory_space<vmem>>, vector<1x16xf32>
    %6 = vector.broadcast %5 : vector<1x16xf32> to vector<4x16xf32>
    %7 = arith.addf %4, %6 : vector<4x16xf32>
    %c0_6 = arith.constant 0 : index
    %c0_7 = arith.constant 0 : index
    %8 = vector.load %arg4[%c0_6, %c0_7] : memref<16x16xf32, #tpu.memory_space<vmem>>, vector<16x16xf32>
    %cst_8 = arith.constant dense<0.000000e+00> : vector<4x16xf32>
    %9 = tpu.matmul %2, %8, %cst_8 {dimension_numbers = #tpu.dot_dimension_numbers<[1], [0], [0], [1], [0, 0, 1, 1], [], []>} : vector<4x16xf32>, vector<16x16xf32>, vector<4x16xf32> -> vector<4x16xf32>
    %c0_9 = arith.constant 0 : index
    %c0_10 = arith.constant 0 : index
    %10 = vector.load %arg5[%c0_9, %c0_10] : memref<1x16xf32, #tpu.memory_space<vmem>>, vector<1x16xf32>
    %11 = vector.broadcast %10 : vector<1x16xf32> to vector<4x16xf32>
    %12 = arith.addf %9, %11 : vector<4x16xf32>
    %c0_11 = arith.constant 0 : index
    %c0_12 = arith.constant 0 : index
    %13 = vector.load %arg6[%c0_11, %c0_12] : memref<16x16xf32, #tpu.memory_space<vmem>>, vector<16x16xf32>
    %cst_13 = arith.constant dense<0.000000e+00> : vector<4x16xf32>
    %14 = tpu.matmul %2, %13, %cst_13 {dimension_numbers = #tpu.dot_dimension_numbers<[1], [0], [0], [1], [0, 0, 1, 1], [], []>} : vector<4x16xf32>, vector<16x16xf32>, vector<4x16xf32> -> vector<4x16xf32>
    %c0_14 = arith.constant 0 : index
    %c0_15 = arith.constant 0 : index
    %15 = vector.load %arg7[%c0_14, %c0_15] : memref<1x16xf32, #tpu.memory_space<vmem>>, vector<1x16xf32>
    %16 = vector.broadcast %15 : vector<1x16xf32> to vector<4x16xf32>
    %17 = arith.addf %14, %16 : vector<4x16xf32>
    %18 = vector.extract_strided_slice %7 {offsets = [0, 0], sizes = [4, 4], strides = [1, 1]} : vector<4x16xf32> to vector<4x4xf32>
    %19 = vector.extract_strided_slice %7 {offsets = [0, 4], sizes = [4, 4], strides = [1, 1]} : vector<4x16xf32> to vector<4x4xf32>
    %20 = vector.extract_strided_slice %7 {offsets = [0, 8], sizes = [4, 4], strides = [1, 1]} : vector<4x16xf32> to vector<4x4xf32>
    %21 = vector.extract_strided_slice %7 {offsets = [0, 12], sizes = [4, 4], strides = [1, 1]} : vector<4x16xf32> to vector<4x4xf32>
    %22 = vector.shape_cast %18 : vector<4x4xf32> to vector<1x4x4xf32>
    %23 = vector.shape_cast %19 : vector<4x4xf32> to vector<1x4x4xf32>
    %24 = vector.shape_cast %20 : vector<4x4xf32> to vector<1x4x4xf32>
    %25 = vector.shape_cast %21 : vector<4x4xf32> to vector<1x4x4xf32>
    %26 = tpu.concatenate %22, %23, %24, %25 in 0 : vector<1x4x4xf32>, vector<1x4x4xf32>, vector<1x4x4xf32>, vector<1x4x4xf32> -> vector<4x4x4xf32>
    %27 = vector.extract_strided_slice %12 {offsets = [0, 0], sizes = [4, 4], strides = [1, 1]} : vector<4x16xf32> to vector<4x4xf32>
    %28 = vector.extract_strided_slice %12 {offsets = [0, 4], sizes = [4, 4], strides = [1, 1]} : vector<4x16xf32> to vector<4x4xf32>
    %29 = vector.extract_strided_slice %12 {offsets = [0, 8], sizes = [4, 4], strides = [1, 1]} : vector<4x16xf32> to vector<4x4xf32>
    %30 = vector.extract_strided_slice %12 {offsets = [0, 12], sizes = [4, 4], strides = [1, 1]} : vector<4x16xf32> to vector<4x4xf32>
    %31 = vector.shape_cast %27 : vector<4x4xf32> to vector<1x4x4xf32>
    %32 = vector.shape_cast %28 : vector<4x4xf32> to vector<1x4x4xf32>
    %33 = vector.shape_cast %29 : vector<4x4xf32> to vector<1x4x4xf32>
    %34 = vector.shape_cast %30 : vector<4x4xf32> to vector<1x4x4xf32>
    %35 = tpu.concatenate %31, %32, %33, %34 in 0 : vector<1x4x4xf32>, vector<1x4x4xf32>, vector<1x4x4xf32>, vector<1x4x4xf32> -> vector<4x4x4xf32>
    %36 = vector.extract_strided_slice %17 {offsets = [0, 0], sizes = [4, 4], strides = [1, 1]} : vector<4x16xf32> to vector<4x4xf32>
    %37 = vector.extract_strided_slice %17 {offsets = [0, 4], sizes = [4, 4], strides = [1, 1]} : vector<4x16xf32> to vector<4x4xf32>
    %38 = vector.extract_strided_slice %17 {offsets = [0, 8], sizes = [4, 4], strides = [1, 1]} : vector<4x16xf32> to vector<4x4xf32>
    %39 = vector.extract_strided_slice %17 {offsets = [0, 12], sizes = [4, 4], strides = [1, 1]} : vector<4x16xf32> to vector<4x4xf32>
    %40 = vector.shape_cast %36 : vector<4x4xf32> to vector<1x4x4xf32>
    %41 = vector.shape_cast %37 : vector<4x4xf32> to vector<1x4x4xf32>
    %42 = vector.shape_cast %38 : vector<4x4xf32> to vector<1x4x4xf32>
    %43 = vector.shape_cast %39 : vector<4x4xf32> to vector<1x4x4xf32>
    %44 = tpu.concatenate %40, %41, %42, %43 in 0 : vector<1x4x4xf32>, vector<1x4x4xf32>, vector<1x4x4xf32>, vector<1x4x4xf32> -> vector<4x4x4xf32>
    "tpu.trace_start"() <{level = 10 : i32, message = "hqd,hkd->hqk"}> : () -> ()
    %cst_16 = arith.constant dense<0.000000e+00> : vector<4x4x4xf32>
    %45 = tpu.matmul %26, %35, %cst_16 {dimension_numbers = #tpu.dot_dimension_numbers<[2], [2], [1], [1], [0, 0, 0, 1, 1, 1], [0], [0]>} : vector<4x4x4xf32>, vector<4x4x4xf32>, vector<4x4x4xf32> -> vector<4x4x4xf32>
    "tpu.trace_stop"() : () -> ()
    %cst_17 = arith.constant 5.000000e-01 : f32
    %46 = vector.broadcast %cst_17 : f32 to vector<4x4x4xf32>
    %47 = arith.mulf %45, %46 : vector<4x4x4xf32>
    %cst_18 = arith.constant dense<0xFF800000> : vector<4x4xf32>
    %48 = vector.multi_reduction <maximumf>, %47, %cst_18 [2] : vector<4x4x4xf32> to vector<4x4xf32>
    %49 = vector.shape_cast %48 : vector<4x4xf32> to vector<4x4x1xf32>
    %50 = vector.broadcast %49 : vector<4x4x1xf32> to vector<4x4x4xf32>
    %51 = arith.subf %47, %50 : vector<4x4x4xf32>
    %52 = math.exp %51 : vector<4x4x4xf32>
    %cst_19 = arith.constant dense<0.000000e+00> : vector<4x4xf32>
    %53 = vector.multi_reduction <add>, %52, %cst_19 [2] : vector<4x4x4xf32> to vector<4x4xf32>
    %54 = vector.shape_cast %53 : vector<4x4xf32> to vector<4x4x1xf32>
    %55 = tpu.reciprocal %54 {approx = true} : vector<4x4x1xf32> -> vector<4x4x1xf32>
    %56 = vector.broadcast %55 : vector<4x4x1xf32> to vector<4x4x4xf32>
    %57 = arith.mulf %52, %56 : vector<4x4x4xf32>
    "tpu.trace_start"() <{level = 10 : i32, message = "hqk,hkd->hqd"}> : () -> ()
    %cst_20 = arith.constant dense<0.000000e+00> : vector<4x4x4xf32>
    %58 = tpu.matmul %57, %44, %cst_20 {dimension_numbers = #tpu.dot_dimension_numbers<[2], [1], [1], [2], [0, 0, 0, 1, 1, 2], [0], [0]>} : vector<4x4x4xf32>, vector<4x4x4xf32>, vector<4x4x4xf32> -> vector<4x4x4xf32>
    "tpu.trace_stop"() : () -> ()
    %c0_21 = arith.constant 0 : index
    %c0_22 = arith.constant 0 : index
    %c0_23 = arith.constant 0 : index
    %59 = vector.load %arg8[%c0_21, %c0_22, %c0_23] : memref<4x4x16xf32, #tpu.memory_space<vmem>>, vector<4x4x16xf32>
    "tpu.trace_start"() <{level = 10 : i32, message = "hqd,hdc->hqc"}> : () -> ()
    %cst_24 = arith.constant dense<0.000000e+00> : vector<4x4x16xf32>
    %60 = tpu.matmul %58, %59, %cst_24 {dimension_numbers = #tpu.dot_dimension_numbers<[2], [1], [1], [2], [0, 0, 0, 1, 1, 2], [0], [0]>} : vector<4x4x4xf32>, vector<4x4x16xf32>, vector<4x4x16xf32> -> vector<4x4x16xf32>
    "tpu.trace_stop"() : () -> ()
    %cst_25 = arith.constant dense<0.000000e+00> : vector<4x16xf32>
    %61 = vector.multi_reduction <add>, %60, %cst_25 [0] : vector<4x4x16xf32> to vector<4x16xf32>
    %c0_26 = arith.constant 0 : index
    %c0_27 = arith.constant 0 : index
    %62 = vector.load %arg9[%c0_26, %c0_27] : memref<1x16xf32, #tpu.memory_space<vmem>>, vector<1x16xf32>
    %63 = vector.broadcast %62 : vector<1x16xf32> to vector<4x16xf32>
    %64 = arith.addf %61, %63 : vector<4x16xf32>
    %65 = arith.truncf %64 : vector<4x16xf32> to vector<4x16xbf16>
    %c0_28 = arith.constant 0 : index
    %c0_29 = arith.constant 0 : index
    %c0_30 = arith.constant 0 : index
    %66 = vector.load %arg10[%c0_28, %c0_29, %c0_30] : memref<1x4x16xbf16, #tpu.memory_space<vmem>>, vector<1x4x16xbf16>
    %67 = vector.shape_cast %66 : vector<1x4x16xbf16> to vector<4x16xbf16>
    %68 = vector.shape_cast %65 : vector<4x16xbf16> to vector<1x4x16xbf16>
    tpu.vector_store %arg10[%c0_28, %c0_29, %c0_30], %68 {strides = array<i32>} : memref<1x4x16xbf16, #tpu.memory_space<vmem>>, vector<1x4x16xbf16>,
    return
  }
  func.func @transform_0(%arg0: i32) -> (i32, i32, i32) {
    %c0_i32 = arith.constant 0 : i32
    %c0_i32_0 = arith.constant 0 : i32
    %c0_i32_1 = arith.constant 0 : i32
    return %arg0, %c0_i32, %c0_i32_0 : i32, i32, i32
  }
  func.func @transform_1(%arg0: i32) -> (i32, i32) {
    %c0_i32 = arith.constant 0 : i32
    %c0_i32_0 = arith.constant 0 : i32
    %c0_i32_1 = arith.constant 0 : i32
    return %c0_i32, %c0_i32_0 : i32, i32
  }
  func.func @transform_2(%arg0: i32) -> (i32, i32) {
    %c0_i32 = arith.constant 0 : i32
    %c0_i32_0 = arith.constant 0 : i32
    %c0_i32_1 = arith.constant 0 : i32
    return %c0_i32, %c0_i32_0 : i32, i32
  }
  func.func @transform_3(%arg0: i32) -> (i32, i32) {
    %c0_i32 = arith.constant 0 : i32
    %c0_i32_0 = arith.constant 0 : i32
    %c0_i32_1 = arith.constant 0 : i32
    return %c0_i32, %c0_i32_0 : i32, i32
  }
  func.func @transform_4(%arg0: i32) -> (i32, i32) {
    %c0_i32 = arith.constant 0 : i32
    %c0_i32_0 = arith.constant 0 : i32
    %c0_i32_1 = arith.constant 0 : i32
    return %c0_i32, %c0_i32_0 : i32, i32
  }
  func.func @transform_5(%arg0: i32) -> (i32, i32) {
    %c0_i32 = arith.constant 0 : i32
    %c0_i32_0 = arith.constant 0 : i32
    %c0_i32_1 = arith.constant 0 : i32
    return %c0_i32, %c0_i32_0 : i32, i32
  }
  func.func @transform_6(%arg0: i32) -> (i32, i32) {
    %c0_i32 = arith.constant 0 : i32
    %c0_i32_0 = arith.constant 0 : i32
    %c0_i32_1 = arith.constant 0 : i32
    return %c0_i32, %c0_i32_0 : i32, i32
  }
  func.func @transform_7(%arg0: i32) -> (i32, i32, i32) {
    %c0_i32 = arith.constant 0 : i32
    %c0_i32_0 = arith.constant 0 : i32
    %c0_i32_1 = arith.constant 0 : i32
    %c0_i32_2 = arith.constant 0 : i32
    return %c0_i32, %c0_i32_0, %c0_i32_1 : i32, i32, i32
  }
  func.func @transform_8(%arg0: i32) -> (i32, i32) {
    %c0_i32 = arith.constant 0 : i32
    %c0_i32_0 = arith.constant 0 : i32
    %c0_i32_1 = arith.constant 0 : i32
    return %c0_i32, %c0_i32_0 : i32, i32
  }
  func.func @transform_9(%arg0: i32) -> (i32, i32, i32) {
    %c0_i32 = arith.constant 0 : i32
    %c0_i32_0 = arith.constant 0 : i32
    %c0_i32_1 = arith.constant 0 : i32
    return %arg0, %c0_i32, %c0_i32_0 : i32, i32, i32
  }
}

module attributes {stable_mosaic.version = 11 : i64} {
  func.func @_tail_kernel(%arg0: i32, %arg1: memref<1x20x20x16xbf16, #tpu.memory_space<vmem>>, %arg2: memref<1x20x20x16xbf16, #tpu.memory_space<vmem>>, %arg3: memref<9x16xf32, #tpu.memory_space<vmem>>, %arg4: memref<9xf32, #tpu.memory_space<smem>>, %arg5: memref<1xf32, #tpu.memory_space<smem>>, %arg6: memref<1xf32, #tpu.memory_space<smem>>, %arg7: memref<1x16x16xf32, #tpu.memory_space<vmem>>) attributes {dimension_semantics = [#tpu.dimension_semantics<parallel>], iteration_bounds = array<i64: 2>, scalar_prefetch = 0 : i64, scratch_operands = 0 : i64, tpu.core_type = #tpu.core_type<tc>, window_params = [{transform_indices = @transform_0, window_bounds = array<i64: 1, 20, 20, 16>}, {transform_indices = @transform_1, window_bounds = array<i64: 1, 20, 20, 16>}, {pipeline_mode = #tpu.pipeline_mode<synchronous>, transform_indices = @transform_2, window_bounds = array<i64: 9, 16>}, {transform_indices = @transform_3, window_bounds = array<i64: 9>}, {transform_indices = @transform_4, window_bounds = array<i64: 1>}, {transform_indices = @transform_5, window_bounds = array<i64: 1>}, {transform_indices = @transform_6, window_bounds = array<i64: 1, 16, 16>}]} {
    %c0 = arith.constant 0 : index
    %c0_0 = arith.constant 0 : index
    %c0_1 = arith.constant 0 : index
    %c0_2 = arith.constant 0 : index
    %0 = vector.load %arg1[%c0, %c0_0, %c0_1, %c0_2] : memref<1x20x20x16xbf16, #tpu.memory_space<vmem>>, vector<1x20x20x16xbf16>
    %1 = vector.shape_cast %0 : vector<1x20x20x16xbf16> to vector<20x20x16xbf16>
    %2 = arith.extf %1 : vector<20x20x16xbf16> to vector<20x20x16xf32>
    %c0_3 = arith.constant 0 : index
    %c0_4 = arith.constant 0 : index
    %c0_5 = arith.constant 0 : index
    %c0_6 = arith.constant 0 : index
    %3 = vector.load %arg2[%c0_3, %c0_4, %c0_5, %c0_6] : memref<1x20x20x16xbf16, #tpu.memory_space<vmem>>, vector<1x20x20x16xbf16>
    %4 = vector.shape_cast %3 : vector<1x20x20x16xbf16> to vector<20x20x16xbf16>
    %5 = arith.extf %4 : vector<20x20x16xbf16> to vector<20x20x16xf32>
    %6 = arith.addf %2, %5 : vector<20x20x16xf32>
    %c0_7 = arith.constant 0 : index
    %c0_8 = arith.constant 0 : index
    %7 = vector.load %arg3[%c0_7, %c0_8] : memref<9x16xf32, #tpu.memory_space<vmem>>, vector<9x16xf32>
    %cst = arith.constant 0.000000e+00 : f32
    %8 = vector.broadcast %cst : f32 to vector<18x18xf32>
    %9 = vector.extract_strided_slice %6 {offsets = [0, 0, 0], sizes = [18, 18, 16], strides = [1, 1, 1]} : vector<20x20x16xf32> to vector<18x18x16xf32>
    %10 = vector.extract_strided_slice %7 {offsets = [0, 0], sizes = [1, 16], strides = [1, 1]} : vector<9x16xf32> to vector<1x16xf32>
    %11 = vector.shape_cast %10 : vector<1x16xf32> to vector<1x1x16xf32>
    %12 = vector.broadcast %11 : vector<1x1x16xf32> to vector<18x18x16xf32>
    %13 = arith.mulf %9, %12 : vector<18x18x16xf32>
    %cst_9 = arith.constant dense<0.000000e+00> : vector<18x18xf32>
    %14 = vector.multi_reduction <add>, %13, %cst_9 [2] : vector<18x18x16xf32> to vector<18x18xf32>
    %15 = arith.addf %8, %14 : vector<18x18xf32>
    %16 = vector.extract_strided_slice %6 {offsets = [0, 1, 0], sizes = [18, 18, 16], strides = [1, 1, 1]} : vector<20x20x16xf32> to vector<18x18x16xf32>
    %17 = vector.extract_strided_slice %7 {offsets = [1, 0], sizes = [1, 16], strides = [1, 1]} : vector<9x16xf32> to vector<1x16xf32>
    %18 = vector.shape_cast %17 : vector<1x16xf32> to vector<1x1x16xf32>
    %19 = vector.broadcast %18 : vector<1x1x16xf32> to vector<18x18x16xf32>
    %20 = arith.mulf %16, %19 : vector<18x18x16xf32>
    %cst_10 = arith.constant dense<0.000000e+00> : vector<18x18xf32>
    %21 = vector.multi_reduction <add>, %20, %cst_10 [2] : vector<18x18x16xf32> to vector<18x18xf32>
    %22 = arith.addf %15, %21 : vector<18x18xf32>
    %23 = vector.extract_strided_slice %6 {offsets = [0, 2, 0], sizes = [18, 18, 16], strides = [1, 1, 1]} : vector<20x20x16xf32> to vector<18x18x16xf32>
    %24 = vector.extract_strided_slice %7 {offsets = [2, 0], sizes = [1, 16], strides = [1, 1]} : vector<9x16xf32> to vector<1x16xf32>
    %25 = vector.shape_cast %24 : vector<1x16xf32> to vector<1x1x16xf32>
    %26 = vector.broadcast %25 : vector<1x1x16xf32> to vector<18x18x16xf32>
    %27 = arith.mulf %23, %26 : vector<18x18x16xf32>
    %cst_11 = arith.constant dense<0.000000e+00> : vector<18x18xf32>
    %28 = vector.multi_reduction <add>, %27, %cst_11 [2] : vector<18x18x16xf32> to vector<18x18xf32>
    %29 = arith.addf %22, %28 : vector<18x18xf32>
    %30 = vector.extract_strided_slice %6 {offsets = [1, 0, 0], sizes = [18, 18, 16], strides = [1, 1, 1]} : vector<20x20x16xf32> to vector<18x18x16xf32>
    %31 = vector.extract_strided_slice %7 {offsets = [3, 0], sizes = [1, 16], strides = [1, 1]} : vector<9x16xf32> to vector<1x16xf32>
    %32 = vector.shape_cast %31 : vector<1x16xf32> to vector<1x1x16xf32>
    %33 = vector.broadcast %32 : vector<1x1x16xf32> to vector<18x18x16xf32>
    %34 = arith.mulf %30, %33 : vector<18x18x16xf32>
    %cst_12 = arith.constant dense<0.000000e+00> : vector<18x18xf32>
    %35 = vector.multi_reduction <add>, %34, %cst_12 [2] : vector<18x18x16xf32> to vector<18x18xf32>
    %36 = arith.addf %29, %35 : vector<18x18xf32>
    %37 = vector.extract_strided_slice %6 {offsets = [1, 1, 0], sizes = [18, 18, 16], strides = [1, 1, 1]} : vector<20x20x16xf32> to vector<18x18x16xf32>
    %38 = vector.extract_strided_slice %7 {offsets = [4, 0], sizes = [1, 16], strides = [1, 1]} : vector<9x16xf32> to vector<1x16xf32>
    %39 = vector.shape_cast %38 : vector<1x16xf32> to vector<1x1x16xf32>
    %40 = vector.broadcast %39 : vector<1x1x16xf32> to vector<18x18x16xf32>
    %41 = arith.mulf %37, %40 : vector<18x18x16xf32>
    %cst_13 = arith.constant dense<0.000000e+00> : vector<18x18xf32>
    %42 = vector.multi_reduction <add>, %41, %cst_13 [2] : vector<18x18x16xf32> to vector<18x18xf32>
    %43 = arith.addf %36, %42 : vector<18x18xf32>
    %44 = vector.extract_strided_slice %6 {offsets = [1, 2, 0], sizes = [18, 18, 16], strides = [1, 1, 1]} : vector<20x20x16xf32> to vector<18x18x16xf32>
    %45 = vector.extract_strided_slice %7 {offsets = [5, 0], sizes = [1, 16], strides = [1, 1]} : vector<9x16xf32> to vector<1x16xf32>
    %46 = vector.shape_cast %45 : vector<1x16xf32> to vector<1x1x16xf32>
    %47 = vector.broadcast %46 : vector<1x1x16xf32> to vector<18x18x16xf32>
    %48 = arith.mulf %44, %47 : vector<18x18x16xf32>
    %cst_14 = arith.constant dense<0.000000e+00> : vector<18x18xf32>
    %49 = vector.multi_reduction <add>, %48, %cst_14 [2] : vector<18x18x16xf32> to vector<18x18xf32>
    %50 = arith.addf %43, %49 : vector<18x18xf32>
    %51 = vector.extract_strided_slice %6 {offsets = [2, 0, 0], sizes = [18, 18, 16], strides = [1, 1, 1]} : vector<20x20x16xf32> to vector<18x18x16xf32>
    %52 = vector.extract_strided_slice %7 {offsets = [6, 0], sizes = [1, 16], strides = [1, 1]} : vector<9x16xf32> to vector<1x16xf32>
    %53 = vector.shape_cast %52 : vector<1x16xf32> to vector<1x1x16xf32>
    %54 = vector.broadcast %53 : vector<1x1x16xf32> to vector<18x18x16xf32>
    %55 = arith.mulf %51, %54 : vector<18x18x16xf32>
    %cst_15 = arith.constant dense<0.000000e+00> : vector<18x18xf32>
    %56 = vector.multi_reduction <add>, %55, %cst_15 [2] : vector<18x18x16xf32> to vector<18x18xf32>
    %57 = arith.addf %50, %56 : vector<18x18xf32>
    %58 = vector.extract_strided_slice %6 {offsets = [2, 1, 0], sizes = [18, 18, 16], strides = [1, 1, 1]} : vector<20x20x16xf32> to vector<18x18x16xf32>
    %59 = vector.extract_strided_slice %7 {offsets = [7, 0], sizes = [1, 16], strides = [1, 1]} : vector<9x16xf32> to vector<1x16xf32>
    %60 = vector.shape_cast %59 : vector<1x16xf32> to vector<1x1x16xf32>
    %61 = vector.broadcast %60 : vector<1x1x16xf32> to vector<18x18x16xf32>
    %62 = arith.mulf %58, %61 : vector<18x18x16xf32>
    %cst_16 = arith.constant dense<0.000000e+00> : vector<18x18xf32>
    %63 = vector.multi_reduction <add>, %62, %cst_16 [2] : vector<18x18x16xf32> to vector<18x18xf32>
    %64 = arith.addf %57, %63 : vector<18x18xf32>
    %65 = vector.extract_strided_slice %6 {offsets = [2, 2, 0], sizes = [18, 18, 16], strides = [1, 1, 1]} : vector<20x20x16xf32> to vector<18x18x16xf32>
    %66 = vector.extract_strided_slice %7 {offsets = [8, 0], sizes = [1, 16], strides = [1, 1]} : vector<9x16xf32> to vector<1x16xf32>
    %67 = vector.shape_cast %66 : vector<1x16xf32> to vector<1x1x16xf32>
    %68 = vector.broadcast %67 : vector<1x1x16xf32> to vector<18x18x16xf32>
    %69 = arith.mulf %65, %68 : vector<18x18x16xf32>
    %cst_17 = arith.constant dense<0.000000e+00> : vector<18x18xf32>
    %70 = vector.multi_reduction <add>, %69, %cst_17 [2] : vector<18x18x16xf32> to vector<18x18xf32>
    %71 = arith.addf %64, %70 : vector<18x18xf32>
    %c0_18 = arith.constant 0 : index
    %72 = memref.load %arg5[%c0_18] : memref<1xf32, #tpu.memory_space<smem>>
    %73 = vector.broadcast %72 : f32 to vector<18x18xf32>
    %74 = arith.addf %71, %73 : vector<18x18xf32>
    %75 = tpu.iota {dimensions = array<i32: 0>} : vector<18x18xi32>
    %76 = tpu.iota {dimensions = array<i32: 1>} : vector<18x18xi32>
    %c1_i32 = arith.constant 1 : i32
    %77 = vector.broadcast %c1_i32 : i32 to vector<18x18xi32>
    %78 = arith.cmpi sge, %75, %77 : vector<18x18xi32>
    %c16_i32 = arith.constant 16 : i32
    %79 = vector.broadcast %c16_i32 : i32 to vector<18x18xi32>
    %80 = arith.cmpi sle, %75, %79 : vector<18x18xi32>
    %81 = arith.andi %78, %80 : vector<18x18xi1>
    %c1_i32_19 = arith.constant 1 : i32
    %82 = vector.broadcast %c1_i32_19 : i32 to vector<18x18xi32>
    %83 = arith.cmpi sge, %76, %82 : vector<18x18xi32>
    %84 = arith.andi %81, %83 : vector<18x18xi1>
    %c16_i32_20 = arith.constant 16 : i32
    %85 = vector.broadcast %c16_i32_20 : i32 to vector<18x18xi32>
    %86 = arith.cmpi sle, %76, %85 : vector<18x18xi32>
    %87 = arith.andi %84, %86 : vector<18x18xi1>
    %cst_21 = arith.constant 2.000000e+00 : f32
    %88 = vector.broadcast %cst_21 : f32 to vector<18x18xf32>
    %89 = arith.mulf %88, %74 : vector<18x18xf32>
    %cst_22 = arith.constant 0.000000e+00 : f32
    %90 = vector.broadcast %cst_22 : f32 to vector<18x18xf32>
    %91 = arith.select %87, %89, %90 : vector<18x18xi1>, vector<18x18xf32>
    %cst_23 = arith.constant 0.000000e+00 : f32
    %92 = vector.broadcast %cst_23 : f32 to vector<16x16xf32>
    %93 = vector.extract_strided_slice %91 {offsets = [0, 0], sizes = [16, 16], strides = [1, 1]} : vector<18x18xf32> to vector<16x16xf32>
    %c0_24 = arith.constant 0 : index
    %94 = memref.load %arg4[%c0_24] : memref<9xf32, #tpu.memory_space<smem>>
    %95 = vector.broadcast %94 : f32 to vector<16x16xf32>
    %96 = arith.mulf %93, %95 : vector<16x16xf32>
    %97 = arith.addf %92, %96 : vector<16x16xf32>
    %98 = vector.extract_strided_slice %91 {offsets = [0, 1], sizes = [16, 16], strides = [1, 1]} : vector<18x18xf32> to vector<16x16xf32>
    %c1 = arith.constant 1 : index
    %99 = memref.load %arg4[%c1] : memref<9xf32, #tpu.memory_space<smem>>
    %100 = vector.broadcast %99 : f32 to vector<16x16xf32>
    %101 = arith.mulf %98, %100 : vector<16x16xf32>
    %102 = arith.addf %97, %101 : vector<16x16xf32>
    %103 = vector.extract_strided_slice %91 {offsets = [0, 2], sizes = [16, 16], strides = [1, 1]} : vector<18x18xf32> to vector<16x16xf32>
    %c2 = arith.constant 2 : index
    %104 = memref.load %arg4[%c2] : memref<9xf32, #tpu.memory_space<smem>>
    %105 = vector.broadcast %104 : f32 to vector<16x16xf32>
    %106 = arith.mulf %103, %105 : vector<16x16xf32>
    %107 = arith.addf %102, %106 : vector<16x16xf32>
    %108 = vector.extract_strided_slice %91 {offsets = [1, 0], sizes = [16, 16], strides = [1, 1]} : vector<18x18xf32> to vector<16x16xf32>
    %c3 = arith.constant 3 : index
    %109 = memref.load %arg4[%c3] : memref<9xf32, #tpu.memory_space<smem>>
    %110 = vector.broadcast %109 : f32 to vector<16x16xf32>
    %111 = arith.mulf %108, %110 : vector<16x16xf32>
    %112 = arith.addf %107, %111 : vector<16x16xf32>
    %113 = vector.extract_strided_slice %91 {offsets = [1, 1], sizes = [16, 16], strides = [1, 1]} : vector<18x18xf32> to vector<16x16xf32>
    %c4 = arith.constant 4 : index
    %114 = memref.load %arg4[%c4] : memref<9xf32, #tpu.memory_space<smem>>
    %115 = vector.broadcast %114 : f32 to vector<16x16xf32>
    %116 = arith.mulf %113, %115 : vector<16x16xf32>
    %117 = arith.addf %112, %116 : vector<16x16xf32>
    %118 = vector.extract_strided_slice %91 {offsets = [1, 2], sizes = [16, 16], strides = [1, 1]} : vector<18x18xf32> to vector<16x16xf32>
    %c5 = arith.constant 5 : index
    %119 = memref.load %arg4[%c5] : memref<9xf32, #tpu.memory_space<smem>>
    %120 = vector.broadcast %119 : f32 to vector<16x16xf32>
    %121 = arith.mulf %118, %120 : vector<16x16xf32>
    %122 = arith.addf %117, %121 : vector<16x16xf32>
    %123 = vector.extract_strided_slice %91 {offsets = [2, 0], sizes = [16, 16], strides = [1, 1]} : vector<18x18xf32> to vector<16x16xf32>
    %c6 = arith.constant 6 : index
    %124 = memref.load %arg4[%c6] : memref<9xf32, #tpu.memory_space<smem>>
    %125 = vector.broadcast %124 : f32 to vector<16x16xf32>
    %126 = arith.mulf %123, %125 : vector<16x16xf32>
    %127 = arith.addf %122, %126 : vector<16x16xf32>
    %128 = vector.extract_strided_slice %91 {offsets = [2, 1], sizes = [16, 16], strides = [1, 1]} : vector<18x18xf32> to vector<16x16xf32>
    %c7 = arith.constant 7 : index
    %129 = memref.load %arg4[%c7] : memref<9xf32, #tpu.memory_space<smem>>
    %130 = vector.broadcast %129 : f32 to vector<16x16xf32>
    %131 = arith.mulf %128, %130 : vector<16x16xf32>
    %132 = arith.addf %127, %131 : vector<16x16xf32>
    %133 = vector.extract_strided_slice %91 {offsets = [2, 2], sizes = [16, 16], strides = [1, 1]} : vector<18x18xf32> to vector<16x16xf32>
    %c8 = arith.constant 8 : index
    %134 = memref.load %arg4[%c8] : memref<9xf32, #tpu.memory_space<smem>>
    %135 = vector.broadcast %134 : f32 to vector<16x16xf32>
    %136 = arith.mulf %133, %135 : vector<16x16xf32>
    %137 = arith.addf %132, %136 : vector<16x16xf32>
    %c0_25 = arith.constant 0 : index
    %138 = memref.load %arg6[%c0_25] : memref<1xf32, #tpu.memory_space<smem>>
    %139 = vector.broadcast %138 : f32 to vector<16x16xf32>
    %140 = arith.addf %137, %139 : vector<16x16xf32>
    %141 = math.tanh %140 : vector<16x16xf32>
    %c0_26 = arith.constant 0 : index
    %c0_27 = arith.constant 0 : index
    %c0_28 = arith.constant 0 : index
    %142 = vector.load %arg7[%c0_26, %c0_27, %c0_28] : memref<1x16x16xf32, #tpu.memory_space<vmem>>, vector<1x16x16xf32>
    %143 = vector.shape_cast %142 : vector<1x16x16xf32> to vector<16x16xf32>
    %144 = vector.shape_cast %141 : vector<16x16xf32> to vector<1x16x16xf32>
    tpu.vector_store %arg7[%c0_26, %c0_27, %c0_28], %144 {strides = array<i32>} : memref<1x16x16xf32, #tpu.memory_space<vmem>>, vector<1x16x16xf32>,
    return
  }
  func.func @transform_0(%arg0: i32) -> (i32, i32, i32, i32) {
    %c0_i32 = arith.constant 0 : i32
    %c0_i32_0 = arith.constant 0 : i32
    %c0_i32_1 = arith.constant 0 : i32
    %c0_i32_2 = arith.constant 0 : i32
    return %arg0, %c0_i32, %c0_i32_0, %c0_i32_1 : i32, i32, i32, i32
  }
  func.func @transform_1(%arg0: i32) -> (i32, i32, i32, i32) {
    %c0_i32 = arith.constant 0 : i32
    %c0_i32_0 = arith.constant 0 : i32
    %c0_i32_1 = arith.constant 0 : i32
    %c0_i32_2 = arith.constant 0 : i32
    return %arg0, %c0_i32, %c0_i32_0, %c0_i32_1 : i32, i32, i32, i32
  }
  func.func @transform_2(%arg0: i32) -> (i32, i32) {
    %c0_i32 = arith.constant 0 : i32
    %c0_i32_0 = arith.constant 0 : i32
    %c0_i32_1 = arith.constant 0 : i32
    return %c0_i32, %c0_i32_0 : i32, i32
  }
  func.func @transform_3(%arg0: i32) -> i32 {
    %c0_i32 = arith.constant 0 : i32
    %c0_i32_0 = arith.constant 0 : i32
    return %c0_i32 : i32
  }
  func.func @transform_4(%arg0: i32) -> i32 {
    %c0_i32 = arith.constant 0 : i32
    %c0_i32_0 = arith.constant 0 : i32
    return %c0_i32 : i32
  }
  func.func @transform_5(%arg0: i32) -> i32 {
    %c0_i32 = arith.constant 0 : i32
    %c0_i32_0 = arith.constant 0 : i32
    return %c0_i32 : i32
  }
  func.func @transform_6(%arg0: i32) -> (i32, i32, i32) {
    %c0_i32 = arith.constant 0 : i32
    %c0_i32_0 = arith.constant 0 : i32
    %c0_i32_1 = arith.constant 0 : i32
    return %arg0, %c0_i32, %c0_i32_0 : i32, i32, i32
  }
}

</mosaic_0001>

<llo_original>
// kernel: denoiser_forward.7
$region0: #{denoiser_forward.7}
  #allocation0 [shape = 'u32[]', space=smem, size = 0x4, offset = 0x4, fixed_abs, tag = 'smem constant byte address 0x4 - core index']
  #allocation1 [shape = 'u32[72,128]{1,0:T(1,128)}', space=vmem, size = 0x9000, scoped, tag = 'internal scratch']
  %s0 = inlined_call_operand.vmem [shape: bf16[2,9,9,16], index: 0, kind: input, shape index: {}]
  %s1 = inlined_call_operand.vmem [shape: bf16[2,9,9,16], index: 1, kind: input, shape index: {}]
  %s2 = inlined_call_operand.vmem [shape: bf16[2,9,9,16], index: 2, kind: input, shape index: {}]
  %s3 = inlined_call_operand.vmem [shape: bf16[2,9,9,16], index: 3, kind: input, shape index: {}]
  %s4 = inlined_call_operand.vmem [shape: f32[9,16,16], index: 4, kind: input, shape index: {}]
  %s5 = inlined_call_operand.vmem [shape: f32[1,16], index: 5, kind: input, shape index: {}]
  %s6 = inlined_call_operand.vmem [shape: bf16[2,64,16], index: 6, kind: output, shape index: {}]
  %s7 = sld [smem:[#allocation0]]
  $region57: #{denoiser_forward.7} parent=0
    _
  %s9 = ssub.s32 1, %s7
  %s10 = scalar_select 0, %s9, %s7
  loop: start=0, step=1, limit=4
  $region2: #{denoiser_forward.7} parent=0 // loop_pre_header
    _
  $region3: #{denoiser_forward.7} parent=0 // loop_header
    %s12 = sphi 0, %s16
    %p13 = scmp.ge.s32.totalorder %s12, 4
    %s22 = sphi 0, %s24
    %s25 = sphi 0, %s22
    %s26 = sphi 0, %s25
    %s42 = sphi 0, %s26
    %s48 = sphi 0, %s50
    %s51 = sphi 0, %s48
    %s52 = sphi 0, %s51
    %s68 = sphi 0, %s52
    %s74 = sphi 0, %s76
    %s77 = sphi 0, %s74
    %s78 = sphi 0, %s77
    %s94 = sphi 0, %s78
    %s100 = sphi 0, %s102
    %s103 = sphi 0, %s100
    %s104 = sphi 0, %s103
    %s120 = sphi 0, %s104
    %s124 = sphi 0, %s124
    %s126 = sphi 0, %s124
    %s127 = sphi 0, %s126
    %s141 = sphi 0, %s127
    %s145 = sphi 0, %s145
    %s147 = sphi 0, %s145
    %s148 = sphi 0, %s147
    %s162 = sphi 0, %s148
    %s168 = sphi 0, %s170
    %s171 = sphi 0, %s168
    %s172 = sphi 0, %s171
    %s188 = sphi 0, %s172
  $region4: #{denoiser_forward.7} parent=0 // loop_header_branch
    %15 = sbr.rel (%p13) target = $region8
  $region5: #{denoiser_forward.7} parent=0 // loop_body
    %s17 = ssub.s32 %s12, 1
    %s18 = ssub.s32 %s12, 2
    %s19 = sadd.s32 %s12, 1
    %s20 = ssub.s32 %s12, %s19
    %p21 = scmp.eq.s32.totalorder %s20, 0
    %s23 = sadd.s32 %s22, 1
    %s24 = scalar_select %p21, %s22, %s23
    %p27 = pneg %p21
    %p28 = scmp.eq.s32.totalorder %s12, 1
    %p29 = por %p27, %p28
    %p30 = scmp.ne.s32.totalorder %s22, %s25
    %p31 = scmp.eq.s32.totalorder %s12, 0
    %p32 = por %p30, %p31
    %p33 = scmp.ne.s32.totalorder %s22, %s25
    %p34 = scmp.eq.s32.totalorder %s17, 1
    %p35 = por %p33, %p34
    %p36 = scmp.ne.s32.totalorder %s25, %s26
    %p37 = scmp.eq.s32.totalorder %s17, 0
    %p38 = por %p36, %p37
    %p39 = scmp.ne.s32.totalorder %s25, %s26
    %p40 = scmp.eq.s32.totalorder %s18, 1
    %p41 = por %p39, %p40
    %p43 = scmp.ne.s32.totalorder %s26, %s42
    %p44 = scmp.eq.s32.totalorder %s18, 0
    %p45 = por %p43, %p44
    %s46 = ssub.s32 %s12, %s19
    %p47 = scmp.eq.s32.totalorder %s46, 0
    %s49 = sadd.s32 %s48, 1
    %s50 = scalar_select %p47, %s48, %s49
    %p53 = pneg %p47
    %p54 = scmp.eq.s32.totalorder %s12, 1
    %p55 = por %p53, %p54
    %p56 = scmp.ne.s32.totalorder %s48, %s51
    %p57 = scmp.eq.s32.totalorder %s12, 0
    %p58 = por %p56, %p57
    %p59 = scmp.ne.s32.totalorder %s48, %s51
    %p60 = scmp.eq.s32.totalorder %s17, 1
    %p61 = por %p59, %p60
    %p62 = scmp.ne.s32.totalorder %s51, %s52
    %p63 = scmp.eq.s32.totalorder %s17, 0
    %p64 = por %p62, %p63
    %p65 = scmp.ne.s32.totalorder %s51, %s52
    %p66 = scmp.eq.s32.totalorder %s18, 1
    %p67 = por %p65, %p66
    %p69 = scmp.ne.s32.totalorder %s52, %s68
    %p70 = scmp.eq.s32.totalorder %s18, 0
    %p71 = por %p69, %p70
    %s72 = ssub.s32 %s12, %s19
    %p73 = scmp.eq.s32.totalorder %s72, 0
    %s75 = sadd.s32 %s74, 1
    %s76 = scalar_select %p73, %s74, %s75
    %p79 = pneg %p73
    %p80 = scmp.eq.s32.totalorder %s12, 1
    %p81 = por %p79, %p80
    %p82 = scmp.ne.s32.totalorder %s74, %s77
    %p83 = scmp.eq.s32.totalorder %s12, 0
    %p84 = por %p82, %p83
    %p85 = scmp.ne.s32.totalorder %s74, %s77
    %p86 = scmp.eq.s32.totalorder %s17, 1
    %p87 = por %p85, %p86
    %p88 = scmp.ne.s32.totalorder %s77, %s78
    %p89 = scmp.eq.s32.totalorder %s17, 0
    %p90 = por %p88, %p89
    %p91 = scmp.ne.s32.totalorder %s77, %s78
    %p92 = scmp.eq.s32.totalorder %s18, 1
    %p93 = por %p91, %p92
    %p95 = scmp.ne.s32.totalorder %s78, %s94
    %p96 = scmp.eq.s32.totalorder %s18, 0
    %p97 = por %p95, %p96
    %s98 = ssub.s32 %s12, %s19
    %p99 = scmp.eq.s32.totalorder %s98, 0
    %s101 = sadd.s32 %s100, 1
    %s102 = scalar_select %p99, %s100, %s101
    %p105 = pneg %p99
    %p106 = scmp.eq.s32.totalorder %s12, 1
    %p107 = por %p105, %p106
    %p108 = scmp.ne.s32.totalorder %s100, %s103
    %p109 = scmp.eq.s32.totalorder %s12, 0
    %p110 = por %p108, %p109
    %p111 = scmp.ne.s32.totalorder %s100, %s103
    %p112 = scmp.eq.s32.totalorder %s17, 1
    %p113 = por %p111, %p112
    %p114 = scmp.ne.s32.totalorder %s103, %s104
    %p115 = scmp.eq.s32.totalorder %s17, 0
    %p116 = por %p114, %p115
    %p117 = scmp.ne.s32.totalorder %s103, %s104
    %p118 = scmp.eq.s32.totalorder %s18, 1
    %p119 = por %p117, %p118
    %p121 = scmp.ne.s32.totalorder %s104, %s120
    %p122 = scmp.eq.s32.totalorder %s18, 0
    %p123 = por %p121, %p122
    %s125 = sadd.s32 %s124, 1
    %p128 = scmp.eq.s32.totalorder %s12, 1
    %p129 = scmp.ne.s32.totalorder %s124, %s126
    %p130 = scmp.eq.s32.totalorder %s12, 0
    %p131 = por %p129, %p130
    %p132 = scmp.ne.s32.totalorder %s124, %s126
    %p133 = scmp.eq.s32.totalorder %s17, 1
    %p134 = por %p132, %p133
    %p135 = scmp.ne.s32.totalorder %s126, %s127
    %p136 = scmp.eq.s32.totalorder %s17, 0
    %p137 = por %p135, %p136
    %p138 = scmp.ne.s32.totalorder %s126, %s127
    %p139 = scmp.eq.s32.totalorder %s18, 1
    %p140 = por %p138, %p139
    %p142 = scmp.ne.s32.totalorder %s127, %s141
    %p143 = scmp.eq.s32.totalorder %s18, 0
    %p144 = por %p142, %p143
    %s146 = sadd.s32 %s145, 1
    %p149 = scmp.eq.s32.totalorder %s12, 1
    %p150 = scmp.ne.s32.totalorder %s145, %s147
    %p151 = scmp.eq.s32.totalorder %s12, 0
    %p152 = por %p150, %p151
    %p153 = scmp.ne.s32.totalorder %s145, %s147
    %p154 = scmp.eq.s32.totalorder %s17, 1
    %p155 = por %p153, %p154
    %p156 = scmp.ne.s32.totalorder %s147, %s148
    %p157 = scmp.eq.s32.totalorder %s17, 0
    %p158 = por %p156, %p157
    %p159 = scmp.ne.s32.totalorder %s147, %s148
    %p160 = scmp.eq.s32.totalorder %s18, 1
    %p161 = por %p159, %p160
    %p163 = scmp.ne.s32.totalorder %s148, %s162
    %p164 = scmp.eq.s32.totalorder %s18, 0
    %p165 = por %p163, %p164
    %s166 = ssub.s32 %s12, %s19
    %p167 = scmp.eq.s32.totalorder %s166, 0
    %s169 = sadd.s32 %s168, 1
    %s170 = scalar_select %p167, %s168, %s169
    %p173 = pneg %p167
    %p174 = scmp.eq.s32.totalorder %s12, 1
    %p175 = por %p173, %p174
    %p176 = scmp.ne.s32.totalorder %s168, %s171
    %p177 = scmp.eq.s32.totalorder %s12, 0
    %p178 = por %p176, %p177
    %p179 = scmp.ne.s32.totalorder %s168, %s171
    %p180 = scmp.eq.s32.totalorder %s17, 1
    %p181 = por %p179, %p180
    %p182 = scmp.ne.s32.totalorder %s171, %s172
    %p183 = scmp.eq.s32.totalorder %s17, 0
    %p184 = por %p182, %p183
    %p185 = scmp.ne.s32.totalorder %s171, %s172
    %p186 = scmp.eq.s32.totalorder %s18, 1
    %p187 = por %p185, %p186
    %p189 = scmp.ne.s32.totalorder %s172, %s188
    %p190 = scmp.eq.s32.totalorder %s18, 0
    %p191 = por %p189, %p190
    %p192 = scmp.le.s32.totalorder 1, %s12
    %p193 = scmp.lt.s32.totalorder %s12, 3
    %p194 = pnand %p192, %p193
    %p195 = pneg %p194
    // Predicated region
    $region9: #{denoiser_forward.7} parent=5 // pred_check
      _
    $region10: #{denoiser_forward.7} parent=5 // pred_check_branch
      %197 = sbr.rel (%p194) target = $region12
    $region11: #{denoiser_forward.7} parent=5 // pred_region
      %s198 = ssub.s32 %s12, 1
      // Predicated region
      $region13: #{denoiser_forward.7} parent=11 // pred_check
        %p199 = pneg %p137
      $region14: #{denoiser_forward.7} parent=11 // pred_check_branch
        %201 = sbr.rel (%p199) target = $region16
      $region15: #{denoiser_forward.7} parent=11 // pred_region
        _
      $region16: #{denoiser_forward.7} parent=11 // pred_fallthru
        _
      // Predicated region
      $region17: #{denoiser_forward.7} parent=11 // pred_check
        %p202 = pneg %p158
      $region18: #{denoiser_forward.7} parent=11 // pred_check_branch
        %204 = sbr.rel (%p202) target = $region20
      $region19: #{denoiser_forward.7} parent=11 // pred_region
        _
      $region20: #{denoiser_forward.7} parent=11 // pred_fallthru
        _
    $region12: #{denoiser_forward.7} parent=5 // pred_fallthru
      _
    %p205 = scmp.lt.s32.totalorder %s12, 2
    // Predicated region
    $region21: #{denoiser_forward.7} parent=5 // pred_check
      %p206 = pneg %p205
    $region22: #{denoiser_forward.7} parent=5 // pred_check_branch
      %208 = sbr.rel (%p206) target = $region24
    $region23: #{denoiser_forward.7} parent=5 // pred_region
      // Predicated region
      $region25: #{denoiser_forward.7} parent=23 // pred_check
        %p209 = pneg %p32
      $region26: #{denoiser_forward.7} parent=23 // pred_check_branch
        %211 = sbr.rel (%p209) target = $region28
      $region27: #{denoiser_forward.7} parent=23 // pred_region
        %p212 = scmp.lt.s32.totalorder %s12, 1
        %s213 = scalar_select %p212, %s12, 1
        %s214 = smul.addr %s213, 18
        %s215 = smul.addr %s214, 4
        %s216 = scalar_lea.vmem %s0, %s215
      $region28: #{denoiser_forward.7} parent=23 // pred_fallthru
        _
      // Predicated region
      $region29: #{denoiser_forward.7} parent=23 // pred_check
        %p217 = pneg %p58
      $region30: #{denoiser_forward.7} parent=23 // pred_check_branch
        %219 = sbr.rel (%p217) target = $region32
      $region31: #{denoiser_forward.7} parent=23 // pred_region
        %p220 = scmp.lt.s32.totalorder %s12, 1
        %s221 = scalar_select %p220, %s12, 1
        %s222 = smul.addr %s221, 18
        %s223 = smul.addr %s222, 4
        %s224 = scalar_lea.vmem %s1, %s223
      $region32: #{denoiser_forward.7} parent=23 // pred_fallthru
        _
      // Predicated region
      $region33: #{denoiser_forward.7} parent=23 // pred_check
        %p225 = pneg %p84
      $region34: #{denoiser_forward.7} parent=23 // pred_check_branch
        %227 = sbr.rel (%p225) target = $region36
      $region35: #{denoiser_forward.7} parent=23 // pred_region
        %p228 = scmp.lt.s32.totalorder %s12, 1
        %s229 = scalar_select %p228, %s12, 1
        %s230 = smul.addr %s229, 18
        %s231 = smul.addr %s230, 4
        %s232 = scalar_lea.vmem %s2, %s231
      $region36: #{denoiser_forward.7} parent=23 // pred_fallthru
        _
      // Predicated region
      $region37: #{denoiser_forward.7} parent=23 // pred_check
        %p233 = pneg %p110
      $region38: #{denoiser_forward.7} parent=23 // pred_check_branch
        %235 = sbr.rel (%p233) target = $region40
      $region39: #{denoiser_forward.7} parent=23 // pred_region
        %p236 = scmp.lt.s32.totalorder %s12, 1
        %s237 = scalar_select %p236, %s12, 1
        %s238 = smul.addr %s237, 18
        %s239 = smul.addr %s238, 4
        %s240 = scalar_lea.vmem %s3, %s239
      $region40: #{denoiser_forward.7} parent=23 // pred_fallthru
        _
    $region24: #{denoiser_forward.7} parent=5 // pred_fallthru
      _
    %p241 = scmp.le.s32.totalorder 1, %s12
    %p242 = scmp.lt.s32.totalorder %s12, 3
    %p243 = pnand %p241, %p242
    %p244 = pneg %p243
    // Predicated region
    $region41: #{denoiser_forward.7} parent=5 // pred_check
      _
    $region42: #{denoiser_forward.7} parent=5 // pred_check_branch
      %246 = sbr.rel (%p243) target = $region44
    $region43: #{denoiser_forward.7} parent=5 // pred_region
      %s247 = ssub.s32 %s12, 1
      %p248 = scmp.lt.s32.totalorder %s17, 1
      %s249 = scalar_select %p248, %s17, 1
      %s250 = smul.addr %s249, 18
      %s251 = smul.addr %s250, 4
      %s252 = scalar_lea.vmem %s0, %s251
      %p253 = pneg %p38
      %p254 = pneg %p35
      %p255 = scmp.lt.s32.totalorder %s17, 1
      %s256 = scalar_select %p255, %s17, 1
      %s257 = smul.addr %s256, 18
      %s258 = smul.addr %s257, 4
      %s259 = scalar_lea.vmem %s1, %s258
      %p260 = pneg %p64
      %p261 = pneg %p61
      %p262 = scmp.lt.s32.totalorder %s17, 1
      %s263 = scalar_select %p262, %s17, 1
      %s264 = smul.addr %s263, 18
      %s265 = smul.addr %s264, 4
      %s266 = scalar_lea.vmem %s2, %s265
      %p267 = pneg %p90
      %p268 = pneg %p87
      %p269 = scmp.lt.s32.totalorder %s17, 1
      %s270 = scalar_select %p269, %s17, 1
      %s271 = smul.addr %s270, 18
      %s272 = smul.addr %s271, 4
      %s273 = scalar_lea.vmem %s3, %s272
      %p274 = pneg %p116
      %p275 = pneg %p113
      %p276 = pneg %p137
      %p277 = pneg %p134
      %p278 = pneg %p158
      %p279 = pneg %p155
      %p280 = pneg %p184
      %p281 = pneg %p181
      %p282 = scmp.lt.s32.totalorder %s17, 1
      %s283 = scalar_select %p282, %s17, 1
      %s284 = smul.addr %s283, 8
      %s285 = smul.addr %s284, 4
      %s286 = scalar_lea.vmem %s6, %s285
      %p287 = scmp.lt.s32.totalorder %s17, 1
      %s288 = scalar_select %p287, %s17, 1
      %s289 = smul.addr %s288, 18
      %s290 = smul.addr %s289, 4
      %s291 = scalar_lea.vmem %s0, %s290
      %p292 = scmp.lt.s32.totalorder %s17, 1
      %s293 = scalar_select %p292, %s17, 1
      %s294 = smul.addr %s293, 18
      %s295 = smul.addr %s294, 4
      %s296 = scalar_lea.vmem %s1, %s295
      %p297 = scmp.lt.s32.totalorder %s17, 1
      %s298 = scalar_select %p297, %s17, 1
      %s299 = smul.addr %s298, 18
      %s300 = smul.addr %s299, 4
      %s301 = scalar_lea.vmem %s2, %s300
      %p302 = scmp.lt.s32.totalorder %s17, 1
      %s303 = scalar_select %p302, %s17, 1
      %s304 = smul.addr %s303, 18
      %s305 = smul.addr %s304, 4
      %s306 = scalar_lea.vmem %s3, %s305
      %p307 = scmp.lt.s32.totalorder %s17, 1
      %s308 = scalar_select %p307, %s17, 1
      %s309 = smul.addr %s308, 8
      %s310 = smul.addr %s309, 4
      %s311 = scalar_lea.vmem %s6, %s310
      %v312 = vld [vmem:[%s291] sm:$0xf]
      %v313 = vld [vmem:[%s291 + $0x4] sm:$0x1]
      %v314 = vld [vmem:[%s291 + $0x8] sm:$0xf]
      %v315 = vld [vmem:[%s291 + $0xc] sm:$0x1]
      %v316 = vld [vmem:[%s291 + $0x10] sm:$0xf]
      %v317 = vld [vmem:[%s291 + $0x14] sm:$0x1]
      %v318 = vld [vmem:[%s291 + $0x18] sm:$0xf]
      %v319 = vld [vmem:[%s291 + $0x1c] sm:$0x1]
      %v320 = vld [vmem:[%s291 + $0x20] sm:$0xf]
      %v321 = vld [vmem:[%s291 + $0x24] sm:$0x1]
      %v322 = vld [vmem:[%s291 + $0x28] sm:$0xf]
      %v323 = vld [vmem:[%s291 + $0x2c] sm:$0x1]
      %v324 = vld [vmem:[%s291 + $0x30] sm:$0xf]
      %v325 = vld [vmem:[%s291 + $0x34] sm:$0x1]
      %v326 = vld [vmem:[%s291 + $0x38] sm:$0xf]
      %v327 = vld [vmem:[%s291 + $0x3c] sm:$0x1]
      %v328 = vld [vmem:[%s291 + $0x40] sm:$0xf]
      %v329 = vld [vmem:[%s291 + $0x44] sm:$0x1]
      %v330 = vunpack.c.l.bf16 %v312
      %v331 = vunpack.c.l.bf16 %v313
      %v332 = vunpack.c.l.bf16 %v314
      %v333 = vunpack.c.l.bf16 %v315
      %v334 = vunpack.c.l.bf16 %v316
      %v335 = vunpack.c.l.bf16 %v317
      %v336 = vunpack.c.l.bf16 %v318
      %v337 = vunpack.c.l.bf16 %v319
      %v338 = vunpack.c.l.bf16 %v320
      %v339 = vunpack.c.l.bf16 %v321
      %v340 = vunpack.c.l.bf16 %v322
      %v341 = vunpack.c.l.bf16 %v323
      %v342 = vunpack.c.l.bf16 %v324
      %v343 = vunpack.c.l.bf16 %v325
      %v344 = vunpack.c.l.bf16 %v326
      %v345 = vunpack.c.l.bf16 %v327
      %v346 = vunpack.c.l.bf16 %v328
      %v347 = vunpack.c.l.bf16 %v329
      %v348 = vld [vmem:[%s296] sm:$0xf]
      %v349 = vld [vmem:[%s296 + $0x8] sm:$0xf]
      %v350 = vld [vmem:[%s296 + $0x10] sm:$0xf]
      %v351 = vld [vmem:[%s296 + $0x18] sm:$0xf]
      %v352 = vld [vmem:[%s296 + $0x20] sm:$0xf]
      %v353 = vld [vmem:[%s296 + $0x28] sm:$0xf]
      %v354 = vld [vmem:[%s296 + $0x30] sm:$0xf]
      %v355 = vld [vmem:[%s296 + $0x38] sm:$0xf]
      %v356 = vld [vmem:[%s296 + $0x40] sm:$0xf]
      %v357 = vunpack.c.l.bf16 %v348
      %v358 = vunpack.c.l.bf16 %v349
      %v359 = vunpack.c.l.bf16 %v350
      %v360 = vunpack.c.l.bf16 %v351
      %v361 = vunpack.c.l.bf16 %v352
      %v362 = vunpack.c.l.bf16 %v353
      %v363 = vunpack.c.l.bf16 %v354
      %v364 = vunpack.c.l.bf16 %v355
      %v365 = vunpack.c.l.bf16 %v356
      %v366 = vld [vmem:[%s301] sm:$0xf]
      %v367 = vld [vmem:[%s301 + $0x4] sm:$0x1]
      %v368 = vld [vmem:[%s301 + $0x8] sm:$0xf]
      %v369 = vld [vmem:[%s301 + $0xc] sm:$0x1]
      %v370 = vld [vmem:[%s301 + $0x10] sm:$0xf]
      %v371 = vld [vmem:[%s301 + $0x14] sm:$0x1]
      %v372 = vld [vmem:[%s301 + $0x18] sm:$0xf]
      %v373 = vld [vmem:[%s301 + $0x1c] sm:$0x1]
      %v374 = vld [vmem:[%s301 + $0x20] sm:$0xf]
      %v375 = vld [vmem:[%s301 + $0x24] sm:$0x1]
      %v376 = vld [vmem:[%s301 + $0x28] sm:$0xf]
      %v377 = vld [vmem:[%s301 + $0x2c] sm:$0x1]
      %v378 = vld [vmem:[%s301 + $0x30] sm:$0xf]
      %v379 = vld [vmem:[%s301 + $0x34] sm:$0x1]
      %v380 = vld [vmem:[%s301 + $0x38] sm:$0xf]
      %v381 = vld [vmem:[%s301 + $0x3c] sm:$0x1]
      %v382 = vunpack.c.l.bf16 %v366
      %v383 = vunpack.c.l.bf16 %v367
      %v384 = vunpack.c.l.bf16 %v368
      %v385 = vunpack.c.l.bf16 %v369
      %v386 = vunpack.c.l.bf16 %v370
      %v387 = vunpack.c.l.bf16 %v371
      %v388 = vunpack.c.l.bf16 %v372
      %v389 = vunpack.c.l.bf16 %v373
      %v390 = vunpack.c.l.bf16 %v374
      %v391 = vunpack.c.l.bf16 %v375
      %v392 = vunpack.c.l.bf16 %v376
      %v393 = vunpack.c.l.bf16 %v377
      %v394 = vunpack.c.l.bf16 %v378
      %v395 = vunpack.c.l.bf16 %v379
      %v396 = vunpack.c.l.bf16 %v380
      %v397 = vunpack.c.l.bf16 %v381
      %v398 = vld [vmem:[%s306] sm:$0xf]
      %v399 = vld [vmem:[%s306 + $0x8] sm:$0xf]
      %v400 = vld [vmem:[%s306 + $0x10] sm:$0xf]
      %v401 = vld [vmem:[%s306 + $0x18] sm:$0xf]
      %v402 = vld [vmem:[%s306 + $0x20] sm:$0xf]
      %v403 = vld [vmem:[%s306 + $0x28] sm:$0xf]
      %v404 = vld [vmem:[%s306 + $0x30] sm:$0xf]
      %v405 = vld [vmem:[%s306 + $0x38] sm:$0xf]
      %v406 = vunpack.c.l.bf16 %v398
      %v407 = vunpack.c.l.bf16 %v399
      %v408 = vunpack.c.l.bf16 %v400
      %v409 = vunpack.c.l.bf16 %v401
      %v410 = vunpack.c.l.bf16 %v402
      %v411 = vunpack.c.l.bf16 %v403
      %v412 = vunpack.c.l.bf16 %v404
      %v413 = vunpack.c.l.bf16 %v405
      %v414 = vld [vmem:[%s4] sm:$0xff]
      %v415 = vld [vmem:[%s4 + $0x8] sm:$0xff]
      %v416 = vld [vmem:[%s4 + $0x10] sm:$0xff]
      %v417 = vld [vmem:[%s4 + $0x18] sm:$0xff]
      %v418 = vld [vmem:[%s4 + $0x20] sm:$0xff]
      %v419 = vld [vmem:[%s4 + $0x28] sm:$0xff]
      %v420 = vld [vmem:[%s4 + $0x30] sm:$0xff]
      %v421 = vld [vmem:[%s4 + $0x38] sm:$0xff]
      %v422 = vld [vmem:[%s4 + $0x40] sm:$0xff]
      %v423 = vld [vmem:[%s4 + $0x48] sm:$0xff]
      %v424 = vld [vmem:[%s4 + $0x50] sm:$0xff]
      %v425 = vld [vmem:[%s4 + $0x58] sm:$0xff]
      %v426 = vld [vmem:[%s4 + $0x60] sm:$0xff]
      %v427 = vld [vmem:[%s4 + $0x68] sm:$0xff]
      %v428 = vld [vmem:[%s4 + $0x70] sm:$0xff]
      %v429 = vld [vmem:[%s4 + $0x78] sm:$0xff]
      %v430 = vld [vmem:[%s4 + $0x80] sm:$0xff]
      %v431 = vld [vmem:[%s4 + $0x88] sm:$0xff]
      %v432 = vld [vmem:[%s5] sm:$0x1]
      %vm433 = vcmask 130048
      %v435 = vsel %vm433, %v357, 0
      %v438 = vsel %vm433, %v358, 0
      %v441 = vsel %vm433, %v359, 0
      %v444 = vsel %vm433, %v360, 0
      %v447 = vsel %vm433, %v361, 0
      %v450 = vsel %vm433, %v362, 0
      %v453 = vsel %vm433, %v363, 0
      %v456 = vsel %vm433, %v364, 0
      %458 = vmatpush.msra.mxu0 0.0
      %459 = vmatpush.msra.mxu0 0.0
      %460 = vmatpush.msra.mxu0 0.0
      %461 = vmatpush.msra.mxu0 0.0
      %462 = vmatpush.msra.mxu0 0.0
      %463 = vmatpush.msra.mxu0 0.0
      %464 = vmatpush.msra.mxu0 0.0
      %465 = vmatpush.msra.mxu0 0.0
      %466 = vmatpush.msra.mxu0 0.0
      %467 = vmatpush.msra.mxu0 0.0
      %468 = vmatpush.msra.mxu0 0.0
      %469 = vmatpush.msra.mxu0 0.0
      %470 = vmatpush.msra.mxu0 0.0
      %471 = vmatpush.msra.mxu0 0.0
      %472 = vmatpush.msra.mxu0 %v417
      %473 = vmatpush.msra.mxu0 %v416
      %474 = vmatmul.f32.gmra.mxu0 %v435
      %v475 = vpop.f32.mrf.mxu0
      %v476 = vadd.f32 0.0, %v475
      %477 = vmatmul.f32.gmra.mxu0 %v438
      %v478 = vpop.f32.mrf.mxu0
      %v479 = vadd.f32 0.0, %v478
      %480 = vmatmul.f32.gmra.mxu0 %v441
      %v481 = vpop.f32.mrf.mxu0
      %v482 = vadd.f32 0.0, %v481
      %483 = vmatmul.f32.gmra.mxu0 %v444
      %v484 = vpop.f32.mrf.mxu0
      %v485 = vadd.f32 0.0, %v484
      %486 = vmatmul.f32.gmra.mxu0 %v447
      %v487 = vpop.f32.mrf.mxu0
      %v488 = vadd.f32 0.0, %v487
      %489 = vmatmul.f32.gmra.mxu0 %v450
      %v490 = vpop.f32.mrf.mxu0
      %v491 = vadd.f32 0.0, %v490
      %492 = vmatmul.f32.gmra.mxu0 %v453
      %v493 = vpop.f32.mrf.mxu0
      %v494 = vadd.f32 0.0, %v493
      %495 = vmatmul.f32.gmra.mxu0 %v456
      %v496 = vpop.f32.mrf.mxu0
      %v497 = vadd.f32 0.0, %v496
      %498 = vdwg.mxu0
      %v500 = vsel %vm433, %v330, 0
      %v503 = vsel %vm433, %v332, 0
      %v506 = vsel %vm433, %v334, 0
      %v509 = vsel %vm433, %v336, 0
      %v512 = vsel %vm433, %v338, 0
      %v515 = vsel %vm433, %v340, 0
      %v518 = vsel %vm433, %v342, 0
      %v521 = vsel %vm433, %v344, 0
      %523 = vmatpush.msra.mxu0 0.0
      %524 = vmatpush.msra.mxu0 0.0
      %525 = vmatpush.msra.mxu0 0.0
      %526 = vmatpush.msra.mxu0 0.0
      %527 = vmatpush.msra.mxu0 0.0
      %528 = vmatpush.msra.mxu0 0.0
      %529 = vmatpush.msra.mxu0 0.0
      %530 = vmatpush.msra.mxu0 0.0
      %531 = vmatpush.msra.mxu0 0.0
      %532 = vmatpush.msra.mxu0 0.0
      %533 = vmatpush.msra.mxu0 0.0
      %534 = vmatpush.msra.mxu0 0.0
      %535 = vmatpush.msra.mxu0 0.0
      %536 = vmatpush.msra.mxu0 0.0
      %537 = vmatpush.msra.mxu0 %v415
      %538 = vmatpush.msra.mxu0 %v414
      %539 = vmatmul.f32.gmra.mxu0 %v500
      %v540 = vpop.f32.mrf.mxu0
      %v541 = vadd.f32 %v476, %v540
      %542 = vmatmul.f32.gmra.mxu0 %v503
      %v543 = vpop.f32.mrf.mxu0
      %v544 = vadd.f32 %v479, %v543
      %545 = vmatmul.f32.gmra.mxu0 %v506
      %v546 = vpop.f32.mrf.mxu0
      %v547 = vadd.f32 %v482, %v546
      %548 = vmatmul.f32.gmra.mxu0 %v509
      %v549 = vpop.f32.mrf.mxu0
      %v550 = vadd.f32 %v485, %v549
      %551 = vmatmul.f32.gmra.mxu0 %v512
      %v552 = vpop.f32.mrf.mxu0
      %v553 = vadd.f32 %v488, %v552
      %554 = vmatmul.f32.gmra.mxu0 %v515
      %v555 = vpop.f32.mrf.mxu0
      %v556 = vadd.f32 %v491, %v555
      %557 = vmatmul.f32.gmra.mxu0 %v518
      %v558 = vpop.f32.mrf.mxu0
      %v559 = vadd.f32 %v494, %v558
      %560 = vmatmul.f32.gmra.mxu0 %v521
      %v561 = vpop.f32.mrf.mxu0
      %v562 = vadd.f32 %v497, %v561
      %563 = vdwg.mxu0
      %vm572 = vcmask 1046528
      %v573 = vrot.slane %v330, 1
      %v574 = vrot.slane %v331, 1
      %v575 = vsel %vm572, %v573, %v574
      %v576 = vrot.slane %v332, 1
      %v577 = vrot.slane %v333, 1
      %v578 = vsel %vm572, %v576, %v577
      %v579 = vrot.slane %v334, 1
      %v580 = vrot.slane %v335, 1
      %v581 = vsel %vm572, %v579, %v580
      %v582 = vrot.slane %v336, 1
      %v583 = vrot.slane %v337, 1
      %v584 = vsel %vm572, %v582, %v583
      %v585 = vrot.slane %v338, 1
      %v586 = vrot.slane %v339, 1
      %v587 = vsel %vm572, %v585, %v586
      %v588 = vrot.slane %v340, 1
      %v589 = vrot.slane %v341, 1
      %v590 = vsel %vm572, %v588, %v589
      %v591 = vrot.slane %v342, 1
      %v592 = vrot.slane %v343, 1
      %v593 = vsel %vm572, %v591, %v592
      %v594 = vrot.slane %v344, 1
      %v595 = vrot.slane %v345, 1
      %v596 = vsel %vm572, %v594, %v595
      %v597 = vsel %vm433, %v575, 0
      %v599 = vsel %vm433, %v578, 0
      %v601 = vsel %vm433, %v581, 0
      %v603 = vsel %vm433, %v584, 0
      %v605 = vsel %vm433, %v587, 0
      %v607 = vsel %vm433, %v590, 0
      %v609 = vsel %vm433, %v593, 0
      %v611 = vsel %vm433, %v596, 0
      %613 = vmatpush.msra.mxu0 0.0
      %614 = vmatpush.msra.mxu0 0.0
      %615 = vmatpush.msra.mxu0 0.0
      %616 = vmatpush.msra.mxu0 0.0
      %617 = vmatpush.msra.mxu0 0.0
      %618 = vmatpush.msra.mxu0 0.0
      %619 = vmatpush.msra.mxu0 0.0
      %620 = vmatpush.msra.mxu0 0.0
      %621 = vmatpush.msra.mxu0 0.0
      %622 = vmatpush.msra.mxu0 0.0
      %623 = vmatpush.msra.mxu0 0.0
      %624 = vmatpush.msra.mxu0 0.0
      %625 = vmatpush.msra.mxu0 0.0
      %626 = vmatpush.msra.mxu0 0.0
      %627 = vmatpush.msra.mxu0 %v419
      %628 = vmatpush.msra.mxu0 %v418
      %629 = vmatmul.f32.gmra.mxu0 %v597
      %v630 = vpop.f32.mrf.mxu0
      %v631 = vadd.f32 0.0, %v630
      %632 = vmatmul.f32.gmra.mxu0 %v599
      %v633 = vpop.f32.mrf.mxu0
      %v634 = vadd.f32 0.0, %v633
      %635 = vmatmul.f32.gmra.mxu0 %v601
      %v636 = vpop.f32.mrf.mxu0
      %v637 = vadd.f32 0.0, %v636
      %638 = vmatmul.f32.gmra.mxu0 %v603
      %v639 = vpop.f32.mrf.mxu0
      %v640 = vadd.f32 0.0, %v639
      %641 = vmatmul.f32.gmra.mxu0 %v605
      %v642 = vpop.f32.mrf.mxu0
      %v643 = vadd.f32 0.0, %v642
      %644 = vmatmul.f32.gmra.mxu0 %v607
      %v645 = vpop.f32.mrf.mxu0
      %v646 = vadd.f32 0.0, %v645
      %647 = vmatmul.f32.gmra.mxu0 %v609
      %v648 = vpop.f32.mrf.mxu0
      %v649 = vadd.f32 0.0, %v648
      %650 = vmatmul.f32.gmra.mxu0 %v611
      %v651 = vpop.f32.mrf.mxu0
      %v652 = vadd.f32 0.0, %v651
      %653 = vdwg.mxu0
      %v654 = vadd.f32 %v541, %v631
      %v655 = vadd.f32 %v544, %v634
      %v656 = vadd.f32 %v547, %v637
      %v657 = vadd.f32 %v550, %v640
      %v658 = vadd.f32 %v553, %v643
      %v659 = vadd.f32 %v556, %v646
      %v660 = vadd.f32 %v559, %v649
      %v661 = vadd.f32 %v562, %v652
      %v663 = vsel %vm433, %v382, 0
      %v666 = vsel %vm433, %v384, 0
      %v669 = vsel %vm433, %v386, 0
      %v672 = vsel %vm433, %v388, 0
      %v675 = vsel %vm433, %v390, 0
      %v678 = vsel %vm433, %v392, 0
      %v681 = vsel %vm433, %v394, 0
      %v684 = vsel %vm433, %v396, 0
      %686 = vmatpush.msra.mxu0 0.0
      %687 = vmatpush.msra.mxu0 0.0
      %688 = vmatpush.msra.mxu0 0.0
      %689 = vmatpush.msra.mxu0 0.0
      %690 = vmatpush.msra.mxu0 0.0
      %691 = vmatpush.msra.mxu0 0.0
      %692 = vmatpush.msra.mxu0 0.0
      %693 = vmatpush.msra.mxu0 0.0
      %694 = vmatpush.msra.mxu0 0.0
      %695 = vmatpush.msra.mxu0 0.0
      %696 = vmatpush.msra.mxu0 0.0
      %697 = vmatpush.msra.mxu0 0.0
      %698 = vmatpush.msra.mxu0 0.0
      %699 = vmatpush.msra.mxu0 0.0
      %700 = vmatpush.msra.mxu0 %v421
      %701 = vmatpush.msra.mxu0 %v420
      %702 = vmatmul.f32.gmra.mxu0 %v663
      %v703 = vpop.f32.mrf.mxu0
      %v704 = vadd.f32 0.0, %v703
      %705 = vmatmul.f32.gmra.mxu0 %v666
      %v706 = vpop.f32.mrf.mxu0
      %v707 = vadd.f32 0.0, %v706
      %708 = vmatmul.f32.gmra.mxu0 %v669
      %v709 = vpop.f32.mrf.mxu0
      %v710 = vadd.f32 0.0, %v709
      %711 = vmatmul.f32.gmra.mxu0 %v672
      %v712 = vpop.f32.mrf.mxu0
      %v713 = vadd.f32 0.0, %v712
      %714 = vmatmul.f32.gmra.mxu0 %v675
      %v715 = vpop.f32.mrf.mxu0
      %v716 = vadd.f32 0.0, %v715
      %717 = vmatmul.f32.gmra.mxu0 %v678
      %v718 = vpop.f32.mrf.mxu0
      %v719 = vadd.f32 0.0, %v718
      %720 = vmatmul.f32.gmra.mxu0 %v681
      %v721 = vpop.f32.mrf.mxu0
      %v722 = vadd.f32 0.0, %v721
      %723 = vmatmul.f32.gmra.mxu0 %v684
      %v724 = vpop.f32.mrf.mxu0
      %v725 = vadd.f32 0.0, %v724
      %726 = vdwg.mxu0
      %v727 = vadd.f32 %v654, %v704
      %v728 = vadd.f32 %v655, %v707
      %v729 = vadd.f32 %v656, %v710
      %v730 = vadd.f32 %v657, %v713
      %v731 = vadd.f32 %v658, %v716
      %v732 = vadd.f32 %v659, %v719
      %v733 = vadd.f32 %v660, %v722
      %v734 = vadd.f32 %v661, %v725
      %v736 = vsel %vm433, %v406, 0
      %v739 = vsel %vm433, %v407, 0
      %v742 = vsel %vm433, %v408, 0
      %v745 = vsel %vm433, %v409, 0
      %v748 = vsel %vm433, %v410, 0
      %v751 = vsel %vm433, %v411, 0
      %v754 = vsel %vm433, %v412, 0
      %v757 = vsel %vm433, %v413, 0
      %759 = vmatpush.msra.mxu0 0.0
      %760 = vmatpush.msra.mxu0 0.0
      %761 = vmatpush.msra.mxu0 0.0
      %762 = vmatpush.msra.mxu0 0.0
      %763 = vmatpush.msra.mxu0 0.0
      %764 = vmatpush.msra.mxu0 0.0
      %765 = vmatpush.msra.mxu0 0.0
      %766 = vmatpush.msra.mxu0 0.0
      %767 = vmatpush.msra.mxu0 0.0
      %768 = vmatpush.msra.mxu0 0.0
      %769 = vmatpush.msra.mxu0 0.0
      %770 = vmatpush.msra.mxu0 0.0
      %771 = vmatpush.msra.mxu0 0.0
      %772 = vmatpush.msra.mxu0 0.0
      %773 = vmatpush.msra.mxu0 %v423
      %774 = vmatpush.msra.mxu0 %v422
      %775 = vmatmul.f32.gmra.mxu0 %v736
      %v776 = vpop.f32.mrf.mxu0
      %v777 = vadd.f32 0.0, %v776
      %778 = vmatmul.f32.gmra.mxu0 %v739
      %v779 = vpop.f32.mrf.mxu0
      %v780 = vadd.f32 0.0, %v779
      %781 = vmatmul.f32.gmra.mxu0 %v742
      %v782 = vpop.f32.mrf.mxu0
      %v783 = vadd.f32 0.0, %v782
      %784 = vmatmul.f32.gmra.mxu0 %v745
      %v785 = vpop.f32.mrf.mxu0
      %v786 = vadd.f32 0.0, %v785
      %787 = vmatmul.f32.gmra.mxu0 %v748
      %v788 = vpop.f32.mrf.mxu0
      %v789 = vadd.f32 0.0, %v788
      %790 = vmatmul.f32.gmra.mxu0 %v751
      %v791 = vpop.f32.mrf.mxu0
      %v792 = vadd.f32 0.0, %v791
      %793 = vmatmul.f32.gmra.mxu0 %v754
      %v794 = vpop.f32.mrf.mxu0
      %v795 = vadd.f32 0.0, %v794
      %796 = vmatmul.f32.gmra.mxu0 %v757
      %v797 = vpop.f32.mrf.mxu0
      %v798 = vadd.f32 0.0, %v797
      %799 = vdwg.mxu0
      %v800 = vadd.f32 %v727, %v777
      %v801 = vadd.f32 %v728, %v780
      %v802 = vadd.f32 %v729, %v783
      %v803 = vadd.f32 %v730, %v786
      %v804 = vadd.f32 %v731, %v789
      %v805 = vadd.f32 %v732, %v792
      %v806 = vadd.f32 %v733, %v795
      %v807 = vadd.f32 %v734, %v798
      %v816 = vrot.slane %v382, 1
      %v817 = vrot.slane %v383, 1
      %v818 = vsel %vm572, %v816, %v817
      %v819 = vrot.slane %v384, 1
      %v820 = vrot.slane %v385, 1
      %v821 = vsel %vm572, %v819, %v820
      %v822 = vrot.slane %v386, 1
      %v823 = vrot.slane %v387, 1
      %v824 = vsel %vm572, %v822, %v823
      %v825 = vrot.slane %v388, 1
      %v826 = vrot.slane %v389, 1
      %v827 = vsel %vm572, %v825, %v826
      %v828 = vrot.slane %v390, 1
      %v829 = vrot.slane %v391, 1
      %v830 = vsel %vm572, %v828, %v829
      %v831 = vrot.slane %v392, 1
      %v832 = vrot.slane %v393, 1
      %v833 = vsel %vm572, %v831, %v832
      %v834 = vrot.slane %v394, 1
      %v835 = vrot.slane %v395, 1
      %v836 = vsel %vm572, %v834, %v835
      %v837 = vrot.slane %v396, 1
      %v838 = vrot.slane %v397, 1
      %v839 = vsel %vm572, %v837, %v838
      %v840 = vsel %vm433, %v818, 0
      %v842 = vsel %vm433, %v821, 0
      %v844 = vsel %vm433, %v824, 0
      %v846 = vsel %vm433, %v827, 0
      %v848 = vsel %vm433, %v830, 0
      %v850 = vsel %vm433, %v833, 0
      %v852 = vsel %vm433, %v836, 0
      %v854 = vsel %vm433, %v839, 0
      %856 = vmatpush.msra.mxu0 0.0
      %857 = vmatpush.msra.mxu0 0.0
      %858 = vmatpush.msra.mxu0 0.0
      %859 = vmatpush.msra.mxu0 0.0
      %860 = vmatpush.msra.mxu0 0.0
      %861 = vmatpush.msra.mxu0 0.0
      %862 = vmatpush.msra.mxu0 0.0
      %863 = vmatpush.msra.mxu0 0.0
      %864 = vmatpush.msra.mxu0 0.0
      %865 = vmatpush.msra.mxu0 0.0
      %866 = vmatpush.msra.mxu0 0.0
      %867 = vmatpush.msra.mxu0 0.0
      %868 = vmatpush.msra.mxu0 0.0
      %869 = vmatpush.msra.mxu0 0.0
      %870 = vmatpush.msra.mxu0 %v425
      %871 = vmatpush.msra.mxu0 %v424
      %872 = vmatmul.f32.gmra.mxu0 %v840
      %v873 = vpop.f32.mrf.mxu0
      %v874 = vadd.f32 0.0, %v873
      %875 = vmatmul.f32.gmra.mxu0 %v842
      %v876 = vpop.f32.mrf.mxu0
      %v877 = vadd.f32 0.0, %v876
      %878 = vmatmul.f32.gmra.mxu0 %v844
      %v879 = vpop.f32.mrf.mxu0
      %v880 = vadd.f32 0.0, %v879
      %881 = vmatmul.f32.gmra.mxu0 %v846
      %v882 = vpop.f32.mrf.mxu0
      %v883 = vadd.f32 0.0, %v882
      %884 = vmatmul.f32.gmra.mxu0 %v848
      %v885 = vpop.f32.mrf.mxu0
      %v886 = vadd.f32 0.0, %v885
      %887 = vmatmul.f32.gmra.mxu0 %v850
      %v888 = vpop.f32.mrf.mxu0
      %v889 = vadd.f32 0.0, %v888
      %890 = vmatmul.f32.gmra.mxu0 %v852
      %v891 = vpop.f32.mrf.mxu0
      %v892 = vadd.f32 0.0, %v891
      %893 = vmatmul.f32.gmra.mxu0 %v854
      %v894 = vpop.f32.mrf.mxu0
      %v895 = vadd.f32 0.0, %v894
      %896 = vdwg.mxu0
      %v897 = vadd.f32 %v800, %v874
      %v898 = vadd.f32 %v801, %v877
      %v899 = vadd.f32 %v802, %v880
      %v900 = vadd.f32 %v803, %v883
      %v901 = vadd.f32 %v804, %v886
      %v902 = vadd.f32 %v805, %v889
      %v903 = vadd.f32 %v806, %v892
      %v904 = vadd.f32 %v807, %v895
      %v906 = vsel %vm433, %v346, 0
      %908 = vmatpush.msra.mxu0 0.0
      %909 = vmatpush.msra.mxu0 0.0
      %910 = vmatpush.msra.mxu0 0.0
      %911 = vmatpush.msra.mxu0 0.0
      %912 = vmatpush.msra.mxu0 0.0
      %913 = vmatpush.msra.mxu0 0.0
      %914 = vmatpush.msra.mxu0 0.0
      %915 = vmatpush.msra.mxu0 0.0
      %916 = vmatpush.msra.mxu0 0.0
      %917 = vmatpush.msra.mxu0 0.0
      %918 = vmatpush.msra.mxu0 0.0
      %919 = vmatpush.msra.mxu0 0.0
      %920 = vmatpush.msra.mxu0 0.0
      %921 = vmatpush.msra.mxu0 0.0
      %922 = vmatpush.msra.mxu0 %v427
      %923 = vmatpush.msra.mxu0 %v426
      %924 = vmatmul.f32.gmra.mxu0 %v503
      %v925 = vpop.f32.mrf.mxu0
      %v926 = vadd.f32 0.0, %v925
      %927 = vmatmul.f32.gmra.mxu0 %v506
      %v928 = vpop.f32.mrf.mxu0
      %v929 = vadd.f32 0.0, %v928
      %930 = vmatmul.f32.gmra.mxu0 %v509
      %v931 = vpop.f32.mrf.mxu0
      %v932 = vadd.f32 0.0, %v931
      %933 = vmatmul.f32.gmra.mxu0 %v512
      %v934 = vpop.f32.mrf.mxu0
      %v935 = vadd.f32 0.0, %v934
      %936 = vmatmul.f32.gmra.mxu0 %v515
      %v937 = vpop.f32.mrf.mxu0
      %v938 = vadd.f32 0.0, %v937
      %939 = vmatmul.f32.gmra.mxu0 %v518
      %v940 = vpop.f32.mrf.mxu0
      %v941 = vadd.f32 0.0, %v940
      %942 = vmatmul.f32.gmra.mxu0 %v521
      %v943 = vpop.f32.mrf.mxu0
      %v944 = vadd.f32 0.0, %v943
      %945 = vmatmul.f32.gmra.mxu0 %v906
      %v946 = vpop.f32.mrf.mxu0
      %v947 = vadd.f32 0.0, %v946
      %948 = vdwg.mxu0
      %v949 = vadd.f32 %v897, %v926
      %v950 = vadd.f32 %v898, %v929
      %v951 = vadd.f32 %v899, %v932
      %v952 = vadd.f32 %v900, %v935
      %v953 = vadd.f32 %v901, %v938
      %v954 = vadd.f32 %v902, %v941
      %v955 = vadd.f32 %v903, %v944
      %v956 = vadd.f32 %v904, %v947
      %v958 = vsel %vm433, %v365, 0
      %960 = vmatpush.msra.mxu0 0.0
      %961 = vmatpush.msra.mxu0 0.0
      %962 = vmatpush.msra.mxu0 0.0
      %963 = vmatpush.msra.mxu0 0.0
      %964 = vmatpush.msra.mxu0 0.0
      %965 = vmatpush.msra.mxu0 0.0
      %966 = vmatpush.msra.mxu0 0.0
      %967 = vmatpush.msra.mxu0 0.0
      %968 = vmatpush.msra.mxu0 0.0
      %969 = vmatpush.msra.mxu0 0.0
      %970 = vmatpush.msra.mxu0 0.0
      %971 = vmatpush.msra.mxu0 0.0
      %972 = vmatpush.msra.mxu0 0.0
      %973 = vmatpush.msra.mxu0 0.0
      %974 = vmatpush.msra.mxu0 %v429
      %975 = vmatpush.msra.mxu0 %v428
      %976 = vmatmul.f32.gmra.mxu0 %v438
      %v977 = vpop.f32.mrf.mxu0
      %v978 = vadd.f32 0.0, %v977
      %979 = vmatmul.f32.gmra.mxu0 %v441
      %v980 = vpop.f32.mrf.mxu0
      %v981 = vadd.f32 0.0, %v980
      %982 = vmatmul.f32.gmra.mxu0 %v444
      %v983 = vpop.f32.mrf.mxu0
      %v984 = vadd.f32 0.0, %v983
      %985 = vmatmul.f32.gmra.mxu0 %v447
      %v986 = vpop.f32.mrf.mxu0
      %v987 = vadd.f32 0.0, %v986
      %988 = vmatmul.f32.gmra.mxu0 %v450
      %v989 = vpop.f32.mrf.mxu0
      %v990 = vadd.f32 0.0, %v989
      %991 = vmatmul.f32.gmra.mxu0 %v453
      %v992 = vpop.f32.mrf.mxu0
      %v993 = vadd.f32 0.0, %v992
      %994 = vmatmul.f32.gmra.mxu0 %v456
      %v995 = vpop.f32.mrf.mxu0
      %v996 = vadd.f32 0.0, %v995
      %997 = vmatmul.f32.gmra.mxu0 %v958
      %v998 = vpop.f32.mrf.mxu0
      %v999 = vadd.f32 0.0, %v998
      %1000 = vdwg.mxu0
      %v1001 = vadd.f32 %v949, %v978
      %v1002 = vadd.f32 %v950, %v981
      %v1003 = vadd.f32 %v951, %v984
      %v1004 = vadd.f32 %v952, %v987
      %v1005 = vadd.f32 %v953, %v990
      %v1006 = vadd.f32 %v954, %v993
      %v1007 = vadd.f32 %v955, %v996
      %v1008 = vadd.f32 %v956, %v999
      %v1010 = vrot.slane %v346, 1
      %v1011 = vrot.slane %v347, 1
      %v1012 = vsel %vm572, %v1010, %v1011
      %v1013 = vsel %vm433, %v1012, 0
      %1015 = vmatpush.msra.mxu0 0.0
      %1016 = vmatpush.msra.mxu0 0.0
      %1017 = vmatpush.msra.mxu0 0.0
      %1018 = vmatpush.msra.mxu0 0.0
      %1019 = vmatpush.msra.mxu0 0.0
      %1020 = vmatpush.msra.mxu0 0.0
      %1021 = vmatpush.msra.mxu0 0.0
      %1022 = vmatpush.msra.mxu0 0.0
      %1023 = vmatpush.msra.mxu0 0.0
      %1024 = vmatpush.msra.mxu0 0.0
      %1025 = vmatpush.msra.mxu0 0.0
      %1026 = vmatpush.msra.mxu0 0.0
      %1027 = vmatpush.msra.mxu0 0.0
      %1028 = vmatpush.msra.mxu0 0.0
      %1029 = vmatpush.msra.mxu0 %v431
      %1030 = vmatpush.msra.mxu0 %v430
      %1031 = vmatmul.f32.gmra.mxu0 %v599
      %v1032 = vpop.f32.mrf.mxu0
      %v1033 = vadd.f32 0.0, %v1032
      %1034 = vmatmul.f32.gmra.mxu0 %v601
      %v1035 = vpop.f32.mrf.mxu0
      %v1036 = vadd.f32 0.0, %v1035
      %1037 = vmatmul.f32.gmra.mxu0 %v603
      %v1038 = vpop.f32.mrf.mxu0
      %v1039 = vadd.f32 0.0, %v1038
      %1040 = vmatmul.f32.gmra.mxu0 %v605
      %v1041 = vpop.f32.mrf.mxu0
      %v1042 = vadd.f32 0.0, %v1041
      %1043 = vmatmul.f32.gmra.mxu0 %v607
      %v1044 = vpop.f32.mrf.mxu0
      %v1045 = vadd.f32 0.0, %v1044
      %1046 = vmatmul.f32.gmra.mxu0 %v609
      %v1047 = vpop.f32.mrf.mxu0
      %v1048 = vadd.f32 0.0, %v1047
      %1049 = vmatmul.f32.gmra.mxu0 %v611
      %v1050 = vpop.f32.mrf.mxu0
      %v1051 = vadd.f32 0.0, %v1050
      %1052 = vmatmul.f32.gmra.mxu0 %v1013
      %v1053 = vpop.f32.mrf.mxu0
      %v1054 = vadd.f32 0.0, %v1053
      %1055 = vdwg.mxu0
      %v1056 = vadd.f32 %v1001, %v1033
      %v1057 = vadd.f32 %v1002, %v1036
      %v1058 = vadd.f32 %v1003, %v1039
      %v1059 = vadd.f32 %v1004, %v1042
      %v1060 = vadd.f32 %v1005, %v1045
      %v1061 = vadd.f32 %v1006, %v1048
      %v1062 = vadd.f32 %v1007, %v1051
      %v1063 = vadd.f32 %v1008, %v1054
      %v1065 = vperm.slane %v432, 0
      %v1067 = vadd.f32 %v1056, %v1065
      %v1068 = vadd.f32 %v1057, %v1065
      %v1069 = vadd.f32 %v1058, %v1065
      %v1070 = vadd.f32 %v1059, %v1065
      %v1071 = vadd.f32 %v1060, %v1065
      %v1072 = vadd.f32 %v1061, %v1065
      %v1073 = vadd.f32 %v1062, %v1065
      %v1074 = vadd.f32 %v1063, %v1065
      %v1075 = vmax.f32 %v1067, 0.0
      %v1076 = vmax.f32 %v1068, 0.0
      %v1077 = vmax.f32 %v1069, 0.0
      %v1078 = vmax.f32 %v1070, 0.0
      %v1079 = vmax.f32 %v1071, 0.0
      %v1080 = vmax.f32 %v1072, 0.0
      %v1081 = vmax.f32 %v1073, 0.0
      %v1082 = vmax.f32 %v1074, 0.0
      %v1083 = vpack.c.bf16 %v1075, %v1075
      %v1084 = vpack.c.bf16 %v1076, %v1076
      %v1085 = vpack.c.bf16 %v1077, %v1077
      %v1086 = vpack.c.bf16 %v1078, %v1078
      %v1087 = vpack.c.bf16 %v1079, %v1079
      %v1088 = vpack.c.bf16 %v1080, %v1080
      %v1089 = vpack.c.bf16 %v1081, %v1081
      %v1090 = vpack.c.bf16 %v1082, %v1082
      %vm1091 = vcmask 125952
      %1092 = vst.msk [vmem:[%s311] sm:$0xf] %vm1091, %v1083
      %1093 = vst.msk [vmem:[%s311 + $0x4] sm:$0xf] %vm1091, %v1084
      %1094 = vst.msk [vmem:[%s311 + $0x8] sm:$0xf] %vm1091, %v1085
      %1095 = vst.msk [vmem:[%s311 + $0xc] sm:$0xf] %vm1091, %v1086
      %1096 = vst.msk [vmem:[%s311 + $0x10] sm:$0xf] %vm1091, %v1087
      %1097 = vst.msk [vmem:[%s311 + $0x14] sm:$0xf] %vm1091, %v1088
      %1098 = vst.msk [vmem:[%s311 + $0x18] sm:$0xf] %vm1091, %v1089
      %1099 = vst.msk [vmem:[%s311 + $0x1c] sm:$0xf] %vm1091, %v1090
      %p1100 = scmp.lt.s32.totalorder %s17, 1
      %s1101 = scalar_select %p1100, %s17, 1
      %s1102 = smul.addr %s1101, 8
      %s1103 = smul.addr %s1102, 4
      %s1104 = scalar_lea.vmem %s6, %s1103
      // Predicated region
      $region45: #{denoiser_forward.7} parent=43 // pred_check
        %p1105 = pneg %p181
      $region46: #{denoiser_forward.7} parent=43 // pred_check_branch
        %1107 = sbr.rel (%p1105) target = $region48
      $region47: #{denoiser_forward.7} parent=43 // pred_region
        _
      $region48: #{denoiser_forward.7} parent=43 // pred_fallthru
        _
    $region44: #{denoiser_forward.7} parent=5 // pred_fallthru
      _
    %p1108 = scmp.le.s32.totalorder 2, %s12
    // Predicated region
    $region49: #{denoiser_forward.7} parent=5 // pred_check
      %p1109 = pneg %p1108
    $region50: #{denoiser_forward.7} parent=5 // pred_check_branch
      %1111 = sbr.rel (%p1109) target = $region52
    $region51: #{denoiser_forward.7} parent=5 // pred_region
      %s1112 = ssub.s32 %s12, 2
      // Predicated region
      $region53: #{denoiser_forward.7} parent=51 // pred_check
        %p1113 = pneg %p187
      $region54: #{denoiser_forward.7} parent=51 // pred_check_branch
        %1115 = sbr.rel (%p1113) target = $region56
      $region55: #{denoiser_forward.7} parent=51 // pred_region
        %p1116 = scmp.lt.s32.totalorder %s18, 1
        %s1117 = scalar_select %p1116, %s18, 1
        %s1118 = smul.addr %s1117, 8
        %s1119 = smul.addr %s1118, 4
        %s1120 = scalar_lea.vmem %s6, %s1119
      $region56: #{denoiser_forward.7} parent=51 // pred_fallthru
        _
    $region52: #{denoiser_forward.7} parent=5 // pred_fallthru
      _
  $region6: #{denoiser_forward.7} parent=0 // loop_footer
    %s16 = sadd.s32 1, %s12
  $region7: #{denoiser_forward.7} parent=0 // loop_footer_branch
    %11 = sbr.rel target = $region3
  $region8: #{denoiser_forward.7} parent=0 // loop_exit
    _

// kernel: denoiser_forward.6
$region0: #{denoiser_forward.6}
  #allocation0 [shape = 'u32[]', space=smem, size = 0x4, offset = 0x4, fixed_abs, tag = 'smem constant byte address 0x4 - core index']
  #allocation1 [shape = 'u32[72,128]{1,0:T(1,128)}', space=vmem, size = 0x9000, scoped, tag = 'internal scratch']
  %s0 = inlined_call_operand.vmem [shape: f32[2,18,18,1], index: 0, kind: input, shape index: {}]
  %s1 = inlined_call_operand.vmem [shape: f32[9,1,16], index: 1, kind: input, shape index: {}]
  %s2 = inlined_call_operand.vmem [shape: f32[1,16], index: 2, kind: input, shape index: {}]
  %s3 = inlined_call_operand.vmem [shape: bf16[2,256,16], index: 3, kind: output, shape index: {}]
  %s4 = sld [smem:[#allocation0]]
  $region45: #{denoiser_forward.6} parent=0
    _
  %s6 = ssub.s32 1, %s4
  %s7 = scalar_select 0, %s6, %s4
  loop: start=0, step=1, limit=4
  $region2: #{denoiser_forward.6} parent=0 // loop_pre_header
    _
  $region3: #{denoiser_forward.6} parent=0 // loop_header
    %s9 = sphi 0, %s13
    %p10 = scmp.ge.s32.totalorder %s9, 4
    %s19 = sphi 0, %s21
    %s22 = sphi 0, %s19
    %s23 = sphi 0, %s22
    %s39 = sphi 0, %s23
    %s43 = sphi 0, %s43
    %s45 = sphi 0, %s43
    %s46 = sphi 0, %s45
    %s60 = sphi 0, %s46
    %s64 = sphi 0, %s64
    %s66 = sphi 0, %s64
    %s67 = sphi 0, %s66
    %s81 = sphi 0, %s67
    %s87 = sphi 0, %s89
    %s90 = sphi 0, %s87
    %s91 = sphi 0, %s90
    %s107 = sphi 0, %s91
  $region4: #{denoiser_forward.6} parent=0 // loop_header_branch
    %12 = sbr.rel (%p10) target = $region8
  $region5: #{denoiser_forward.6} parent=0 // loop_body
    %s14 = ssub.s32 %s9, 1
    %s15 = ssub.s32 %s9, 2
    %s16 = sadd.s32 %s9, 1
    %s17 = ssub.s32 %s9, %s16
    %p18 = scmp.eq.s32.totalorder %s17, 0
    %s20 = sadd.s32 %s19, 1
    %s21 = scalar_select %p18, %s19, %s20
    %p24 = pneg %p18
    %p25 = scmp.eq.s32.totalorder %s9, 1
    %p26 = por %p24, %p25
    %p27 = scmp.ne.s32.totalorder %s19, %s22
    %p28 = scmp.eq.s32.totalorder %s9, 0
    %p29 = por %p27, %p28
    %p30 = scmp.ne.s32.totalorder %s19, %s22
    %p31 = scmp.eq.s32.totalorder %s14, 1
    %p32 = por %p30, %p31
    %p33 = scmp.ne.s32.totalorder %s22, %s23
    %p34 = scmp.eq.s32.totalorder %s14, 0
    %p35 = por %p33, %p34
    %p36 = scmp.ne.s32.totalorder %s22, %s23
    %p37 = scmp.eq.s32.totalorder %s15, 1
    %p38 = por %p36, %p37
    %p40 = scmp.ne.s32.totalorder %s23, %s39
    %p41 = scmp.eq.s32.totalorder %s15, 0
    %p42 = por %p40, %p41
    %s44 = sadd.s32 %s43, 1
    %p47 = scmp.eq.s32.totalorder %s9, 1
    %p48 = scmp.ne.s32.totalorder %s43, %s45
    %p49 = scmp.eq.s32.totalorder %s9, 0
    %p50 = por %p48, %p49
    %p51 = scmp.ne.s32.totalorder %s43, %s45
    %p52 = scmp.eq.s32.totalorder %s14, 1
    %p53 = por %p51, %p52
    %p54 = scmp.ne.s32.totalorder %s45, %s46
    %p55 = scmp.eq.s32.totalorder %s14, 0
    %p56 = por %p54, %p55
    %p57 = scmp.ne.s32.totalorder %s45, %s46
    %p58 = scmp.eq.s32.totalorder %s15, 1
    %p59 = por %p57, %p58
    %p61 = scmp.ne.s32.totalorder %s46, %s60
    %p62 = scmp.eq.s32.totalorder %s15, 0
    %p63 = por %p61, %p62
    %s65 = sadd.s32 %s64, 1
    %p68 = scmp.eq.s32.totalorder %s9, 1
    %p69 = scmp.ne.s32.totalorder %s64, %s66
    %p70 = scmp.eq.s32.totalorder %s9, 0
    %p71 = por %p69, %p70
    %p72 = scmp.ne.s32.totalorder %s64, %s66
    %p73 = scmp.eq.s32.totalorder %s14, 1
    %p74 = por %p72, %p73
    %p75 = scmp.ne.s32.totalorder %s66, %s67
    %p76 = scmp.eq.s32.totalorder %s14, 0
    %p77 = por %p75, %p76
    %p78 = scmp.ne.s32.totalorder %s66, %s67
    %p79 = scmp.eq.s32.totalorder %s15, 1
    %p80 = por %p78, %p79
    %p82 = scmp.ne.s32.totalorder %s67, %s81
    %p83 = scmp.eq.s32.totalorder %s15, 0
    %p84 = por %p82, %p83
    %s85 = ssub.s32 %s9, %s16
    %p86 = scmp.eq.s32.totalorder %s85, 0
    %s88 = sadd.s32 %s87, 1
    %s89 = scalar_select %p86, %s87, %s88
    %p92 = pneg %p86
    %p93 = scmp.eq.s32.totalorder %s9, 1
    %p94 = por %p92, %p93
    %p95 = scmp.ne.s32.totalorder %s87, %s90
    %p96 = scmp.eq.s32.totalorder %s9, 0
    %p97 = por %p95, %p96
    %p98 = scmp.ne.s32.totalorder %s87, %s90
    %p99 = scmp.eq.s32.totalorder %s14, 1
    %p100 = por %p98, %p99
    %p101 = scmp.ne.s32.totalorder %s90, %s91
    %p102 = scmp.eq.s32.totalorder %s14, 0
    %p103 = por %p101, %p102
    %p104 = scmp.ne.s32.totalorder %s90, %s91
    %p105 = scmp.eq.s32.totalorder %s15, 1
    %p106 = por %p104, %p105
    %p108 = scmp.ne.s32.totalorder %s91, %s107
    %p109 = scmp.eq.s32.totalorder %s15, 0
    %p110 = por %p108, %p109
    %p111 = scmp.le.s32.totalorder 1, %s9
    %p112 = scmp.lt.s32.totalorder %s9, 3
    %p113 = pnand %p111, %p112
    %p114 = pneg %p113
    // Predicated region
    $region9: #{denoiser_forward.6} parent=5 // pred_check
      _
    $region10: #{denoiser_forward.6} parent=5 // pred_check_branch
      %116 = sbr.rel (%p113) target = $region12
    $region11: #{denoiser_forward.6} parent=5 // pred_region
      %s117 = ssub.s32 %s9, 1
      // Predicated region
      $region13: #{denoiser_forward.6} parent=11 // pred_check
        %p118 = pneg %p56
      $region14: #{denoiser_forward.6} parent=11 // pred_check_branch
        %120 = sbr.rel (%p118) target = $region16
      $region15: #{denoiser_forward.6} parent=11 // pred_region
        _
      $region16: #{denoiser_forward.6} parent=11 // pred_fallthru
        _
      // Predicated region
      $region17: #{denoiser_forward.6} parent=11 // pred_check
        %p121 = pneg %p77
      $region18: #{denoiser_forward.6} parent=11 // pred_check_branch
        %123 = sbr.rel (%p121) target = $region20
      $region19: #{denoiser_forward.6} parent=11 // pred_region
        _
      $region20: #{denoiser_forward.6} parent=11 // pred_fallthru
        _
    $region12: #{denoiser_forward.6} parent=5 // pred_fallthru
      _
    %p124 = scmp.lt.s32.totalorder %s9, 2
    // Predicated region
    $region21: #{denoiser_forward.6} parent=5 // pred_check
      %p125 = pneg %p124
    $region22: #{denoiser_forward.6} parent=5 // pred_check_branch
      %127 = sbr.rel (%p125) target = $region24
    $region23: #{denoiser_forward.6} parent=5 // pred_region
      // Predicated region
      $region25: #{denoiser_forward.6} parent=23 // pred_check
        %p128 = pneg %p29
      $region26: #{denoiser_forward.6} parent=23 // pred_check_branch
        %130 = sbr.rel (%p128) target = $region28
      $region27: #{denoiser_forward.6} parent=23 // pred_region
        %p131 = scmp.lt.s32.totalorder %s9, 1
        %s132 = scalar_select %p131, %s9, 1
        %s133 = smul.addr %s132, 54
        %s134 = smul.addr %s133, 8
        %s135 = scalar_lea.vmem %s0, %s134
      $region28: #{denoiser_forward.6} parent=23 // pred_fallthru
        _
    $region24: #{denoiser_forward.6} parent=5 // pred_fallthru
      _
    %p136 = scmp.le.s32.totalorder 1, %s9
    %p137 = scmp.lt.s32.totalorder %s9, 3
    %p138 = pnand %p136, %p137
    %p139 = pneg %p138
    // Predicated region
    $region29: #{denoiser_forward.6} parent=5 // pred_check
      _
    $region30: #{denoiser_forward.6} parent=5 // pred_check_branch
      %141 = sbr.rel (%p138) target = $region32
    $region31: #{denoiser_forward.6} parent=5 // pred_region
      %s142 = ssub.s32 %s9, 1
      %p143 = scmp.lt.s32.totalorder %s14, 1
      %s144 = scalar_select %p143, %s14, 1
      %s145 = smul.addr %s144, 54
      %s146 = smul.addr %s145, 8
      %s147 = scalar_lea.vmem %s0, %s146
      %p148 = pneg %p35
      %p149 = pneg %p32
      %p150 = pneg %p56
      %p151 = pneg %p53
      %p152 = pneg %p77
      %p153 = pneg %p74
      %p154 = pneg %p103
      %p155 = pneg %p100
      %p156 = scmp.lt.s32.totalorder %s14, 1
      %s157 = scalar_select %p156, %s14, 1
      %s158 = smul.addr %s157, 32
      %s159 = smul.addr %s158, 4
      %s160 = scalar_lea.vmem %s3, %s159
      %p161 = scmp.lt.s32.totalorder %s14, 1
      %s162 = scalar_select %p161, %s14, 1
      %s163 = smul.addr %s162, 54
      %s164 = smul.addr %s163, 8
      %s165 = scalar_lea.vmem %s0, %s164
      %p166 = scmp.lt.s32.totalorder %s14, 1
      %s167 = scalar_select %p166, %s14, 1
      %s168 = smul.addr %s167, 32
      %s169 = smul.addr %s168, 4
      %s170 = scalar_lea.vmem %s3, %s169
      %v171 = vld [vmem:[%s165] sm:$0xff]
      %v172 = vld [vmem:[%s165 + $0x8] sm:$0xff]
      %v173 = vld [vmem:[%s165 + $0x10] sm:$0x3]
      %v174 = vld [vmem:[%s165 + $0x18] sm:$0xff]
      %v175 = vld [vmem:[%s165 + $0x20] sm:$0xff]
      %v176 = vld [vmem:[%s165 + $0x28] sm:$0x3]
      %v177 = vld [vmem:[%s165 + $0x30] sm:$0xff]
      %v178 = vld [vmem:[%s165 + $0x38] sm:$0xff]
      %v179 = vld [vmem:[%s165 + $0x40] sm:$0x3]
      %v180 = vld [vmem:[%s165 + $0x48] sm:$0xff]
      %v181 = vld [vmem:[%s165 + $0x50] sm:$0xff]
      %v182 = vld [vmem:[%s165 + $0x58] sm:$0x3]
      %v183 = vld [vmem:[%s165 + $0x60] sm:$0xff]
      %v184 = vld [vmem:[%s165 + $0x68] sm:$0xff]
      %v185 = vld [vmem:[%s165 + $0x70] sm:$0x3]
      %v186 = vld [vmem:[%s165 + $0x78] sm:$0xff]
      %v187 = vld [vmem:[%s165 + $0x80] sm:$0xff]
      %v188 = vld [vmem:[%s165 + $0x88] sm:$0x3]
      %v189 = vld [vmem:[%s165 + $0x90] sm:$0xff]
      %v190 = vld [vmem:[%s165 + $0x98] sm:$0xff]
      %v191 = vld [vmem:[%s165 + $0xa0] sm:$0x3]
      %v192 = vld [vmem:[%s165 + $0xa8] sm:$0xff]
      %v193 = vld [vmem:[%s165 + $0xb0] sm:$0xff]
      %v194 = vld [vmem:[%s165 + $0xb8] sm:$0x3]
      %v195 = vld [vmem:[%s165 + $0xc0] sm:$0xff]
      %v196 = vld [vmem:[%s165 + $0xc8] sm:$0xff]
      %v197 = vld [vmem:[%s165 + $0xd0] sm:$0x3]
      %v198 = vld [vmem:[%s165 + $0xd8] sm:$0xff]
      %v199 = vld [vmem:[%s165 + $0xe0] sm:$0xff]
      %v200 = vld [vmem:[%s165 + $0xe8] sm:$0x3]
      %v201 = vld [vmem:[%s165 + $0xf0] sm:$0xff]
      %v202 = vld [vmem:[%s165 + $0xf8] sm:$0xff]
      %v203 = vld [vmem:[%s165 + $0x100] sm:$0x3]
      %v204 = vld [vmem:[%s165 + $0x108] sm:$0xff]
      %v205 = vld [vmem:[%s165 + $0x110] sm:$0xff]
      %v206 = vld [vmem:[%s165 + $0x118] sm:$0x3]
      %v207 = vld [vmem:[%s165 + $0x120] sm:$0xff]
      %v208 = vld [vmem:[%s165 + $0x128] sm:$0xff]
      %v209 = vld [vmem:[%s165 + $0x130] sm:$0x3]
      %v210 = vld [vmem:[%s165 + $0x138] sm:$0xff]
      %v211 = vld [vmem:[%s165 + $0x140] sm:$0xff]
      %v212 = vld [vmem:[%s165 + $0x148] sm:$0x3]
      %v213 = vld [vmem:[%s165 + $0x150] sm:$0xff]
      %v214 = vld [vmem:[%s165 + $0x158] sm:$0xff]
      %v215 = vld [vmem:[%s165 + $0x160] sm:$0x3]
      %v216 = vld [vmem:[%s165 + $0x168] sm:$0xff]
      %v217 = vld [vmem:[%s165 + $0x170] sm:$0xff]
      %v218 = vld [vmem:[%s165 + $0x178] sm:$0x3]
      %v219 = vld [vmem:[%s165 + $0x180] sm:$0xff]
      %v220 = vld [vmem:[%s165 + $0x188] sm:$0xff]
      %v221 = vld [vmem:[%s165 + $0x190] sm:$0x3]
      %v222 = vld [vmem:[%s165 + $0x198] sm:$0xff]
      %v223 = vld [vmem:[%s165 + $0x1a0] sm:$0xff]
      %v224 = vld [vmem:[%s165 + $0x1a8] sm:$0x3]
      %v225 = vld [vmem:[%s1] sm:$0x1]
      %v226 = vld [vmem:[%s1 + $0x1] sm:$0x1]
      %v227 = vld [vmem:[%s1 + $0x2] sm:$0x1]
      %v228 = vld [vmem:[%s1 + $0x3] sm:$0x1]
      %v229 = vld [vmem:[%s1 + $0x4] sm:$0x1]
      %v230 = vld [vmem:[%s1 + $0x5] sm:$0x1]
      %v231 = vld [vmem:[%s1 + $0x6] sm:$0x1]
      %v232 = vld [vmem:[%s1 + $0x7] sm:$0x1]
      %v233 = vld [vmem:[%s1 + $0x8] sm:$0x1]
      %v234 = vld [vmem:[%s2] sm:$0x1]
      %236 = vset.pattern.permute.xlu0 0
      %237 = vperm.xlu0 %236, %v171
      %v238 = vpop.permute.xlu0 %237
      %241 = vset.pattern.permute.xlu0 0
      %242 = vperm.xlu0 %241, %v172
      %v243 = vpop.permute.xlu0 %242
      %246 = vset.pattern.permute.xlu0 0
      %247 = vperm.xlu0 %246, %v174
      %v248 = vpop.permute.xlu0 %247
      %251 = vset.pattern.permute.xlu0 0
      %252 = vperm.xlu0 %251, %v175
      %v253 = vpop.permute.xlu0 %252
      %256 = vset.pattern.permute.xlu0 0
      %257 = vperm.xlu0 %256, %v177
      %v258 = vpop.permute.xlu0 %257
      %261 = vset.pattern.permute.xlu0 0
      %262 = vperm.xlu0 %261, %v178
      %v263 = vpop.permute.xlu0 %262
      %266 = vset.pattern.permute.xlu0 0
      %267 = vperm.xlu0 %266, %v180
      %v268 = vpop.permute.xlu0 %267
      %271 = vset.pattern.permute.xlu0 0
      %272 = vperm.xlu0 %271, %v181
      %v273 = vpop.permute.xlu0 %272
      %276 = vset.pattern.permute.xlu0 0
      %277 = vperm.xlu0 %276, %v183
      %v278 = vpop.permute.xlu0 %277
      %281 = vset.pattern.permute.xlu0 0
      %282 = vperm.xlu0 %281, %v184
      %v283 = vpop.permute.xlu0 %282
      %286 = vset.pattern.permute.xlu0 0
      %287 = vperm.xlu0 %286, %v186
      %v288 = vpop.permute.xlu0 %287
      %291 = vset.pattern.permute.xlu0 0
      %292 = vperm.xlu0 %291, %v187
      %v293 = vpop.permute.xlu0 %292
      %296 = vset.pattern.permute.xlu0 0
      %297 = vperm.xlu0 %296, %v189
      %v298 = vpop.permute.xlu0 %297
      %301 = vset.pattern.permute.xlu0 0
      %302 = vperm.xlu0 %301, %v190
      %v303 = vpop.permute.xlu0 %302
      %306 = vset.pattern.permute.xlu0 0
      %307 = vperm.xlu0 %306, %v192
      %v308 = vpop.permute.xlu0 %307
      %311 = vset.pattern.permute.xlu0 0
      %312 = vperm.xlu0 %311, %v193
      %v313 = vpop.permute.xlu0 %312
      %316 = vset.pattern.permute.xlu0 0
      %317 = vperm.xlu0 %316, %v195
      %v318 = vpop.permute.xlu0 %317
      %321 = vset.pattern.permute.xlu0 0
      %322 = vperm.xlu0 %321, %v196
      %v323 = vpop.permute.xlu0 %322
      %326 = vset.pattern.permute.xlu0 0
      %327 = vperm.xlu0 %326, %v198
      %v328 = vpop.permute.xlu0 %327
      %331 = vset.pattern.permute.xlu0 0
      %332 = vperm.xlu0 %331, %v199
      %v333 = vpop.permute.xlu0 %332
      %336 = vset.pattern.permute.xlu0 0
      %337 = vperm.xlu0 %336, %v201
      %v338 = vpop.permute.xlu0 %337
      %341 = vset.pattern.permute.xlu0 0
      %342 = vperm.xlu0 %341, %v202
      %v343 = vpop.permute.xlu0 %342
      %346 = vset.pattern.permute.xlu0 0
      %347 = vperm.xlu0 %346, %v204
      %v348 = vpop.permute.xlu0 %347
      %351 = vset.pattern.permute.xlu0 0
      %352 = vperm.xlu0 %351, %v205
      %v353 = vpop.permute.xlu0 %352
      %356 = vset.pattern.permute.xlu0 0
      %357 = vperm.xlu0 %356, %v207
      %v358 = vpop.permute.xlu0 %357
      %361 = vset.pattern.permute.xlu0 0
      %362 = vperm.xlu0 %361, %v208
      %v363 = vpop.permute.xlu0 %362
      %366 = vset.pattern.permute.xlu0 0
      %367 = vperm.xlu0 %366, %v210
      %v368 = vpop.permute.xlu0 %367
      %371 = vset.pattern.permute.xlu0 0
      %372 = vperm.xlu0 %371, %v211
      %v373 = vpop.permute.xlu0 %372
      %376 = vset.pattern.permute.xlu0 0
      %377 = vperm.xlu0 %376, %v213
      %v378 = vpop.permute.xlu0 %377
      %381 = vset.pattern.permute.xlu0 0
      %382 = vperm.xlu0 %381, %v214
      %v383 = vpop.permute.xlu0 %382
      %386 = vset.pattern.permute.xlu0 0
      %387 = vperm.xlu0 %386, %v216
      %v388 = vpop.permute.xlu0 %387
      %391 = vset.pattern.permute.xlu0 0
      %392 = vperm.xlu0 %391, %v217
      %v393 = vpop.permute.xlu0 %392
      %v396 = vperm.slane %v225, 0
      %v398 = vmul.f32 %v238, %v396
      %v399 = vmul.f32 %v243, %v396
      %v400 = vmul.f32 %v248, %v396
      %v401 = vmul.f32 %v253, %v396
      %v402 = vmul.f32 %v258, %v396
      %v403 = vmul.f32 %v263, %v396
      %v404 = vmul.f32 %v268, %v396
      %v405 = vmul.f32 %v273, %v396
      %v406 = vmul.f32 %v278, %v396
      %v407 = vmul.f32 %v283, %v396
      %v408 = vmul.f32 %v288, %v396
      %v409 = vmul.f32 %v293, %v396
      %v410 = vmul.f32 %v298, %v396
      %v411 = vmul.f32 %v303, %v396
      %v412 = vmul.f32 %v308, %v396
      %v413 = vmul.f32 %v313, %v396
      %v414 = vmul.f32 %v318, %v396
      %v415 = vmul.f32 %v323, %v396
      %v416 = vmul.f32 %v328, %v396
      %v417 = vmul.f32 %v333, %v396
      %v418 = vmul.f32 %v338, %v396
      %v419 = vmul.f32 %v343, %v396
      %v420 = vmul.f32 %v348, %v396
      %v421 = vmul.f32 %v353, %v396
      %v422 = vmul.f32 %v358, %v396
      %v423 = vmul.f32 %v363, %v396
      %v424 = vmul.f32 %v368, %v396
      %v425 = vmul.f32 %v373, %v396
      %v426 = vmul.f32 %v378, %v396
      %v427 = vmul.f32 %v383, %v396
      %v428 = vmul.f32 %v388, %v396
      %v429 = vmul.f32 %v393, %v396
      %v430 = vadd.f32 %v398, 0.0
      %v431 = vadd.f32 %v399, 0.0
      %v432 = vadd.f32 %v400, 0.0
      %v433 = vadd.f32 %v401, 0.0
      %v434 = vadd.f32 %v402, 0.0
      %v435 = vadd.f32 %v403, 0.0
      %v436 = vadd.f32 %v404, 0.0
      %v437 = vadd.f32 %v405, 0.0
      %v438 = vadd.f32 %v406, 0.0
      %v439 = vadd.f32 %v407, 0.0
      %v440 = vadd.f32 %v408, 0.0
      %v441 = vadd.f32 %v409, 0.0
      %v442 = vadd.f32 %v410, 0.0
      %v443 = vadd.f32 %v411, 0.0
      %v444 = vadd.f32 %v412, 0.0
      %v445 = vadd.f32 %v413, 0.0
      %v446 = vadd.f32 %v414, 0.0
      %v447 = vadd.f32 %v415, 0.0
      %v448 = vadd.f32 %v416, 0.0
      %v449 = vadd.f32 %v417, 0.0
      %v450 = vadd.f32 %v418, 0.0
      %v451 = vadd.f32 %v419, 0.0
      %v452 = vadd.f32 %v420, 0.0
      %v453 = vadd.f32 %v421, 0.0
      %v454 = vadd.f32 %v422, 0.0
      %v455 = vadd.f32 %v423, 0.0
      %v456 = vadd.f32 %v424, 0.0
      %v457 = vadd.f32 %v425, 0.0
      %v458 = vadd.f32 %v426, 0.0
      %v459 = vadd.f32 %v427, 0.0
      %v460 = vadd.f32 %v428, 0.0
      %v461 = vadd.f32 %v429, 0.0
      %vm478 = vcmask 1046528
      %v479 = vrot.slane %v171, 1
      %v480 = vrot.slane %v172, 1
      %v481 = vsel %vm478, %v479, %v480
      %v482 = vrot.slane %v173, 1
      %v483 = vsel %vm478, %v480, %v482
      %v484 = vrot.slane %v174, 1
      %v485 = vrot.slane %v175, 1
      %v486 = vsel %vm478, %v484, %v485
      %v487 = vrot.slane %v176, 1
      %v488 = vsel %vm478, %v485, %v487
      %v489 = vrot.slane %v177, 1
      %v490 = vrot.slane %v178, 1
      %v491 = vsel %vm478, %v489, %v490
      %v492 = vrot.slane %v179, 1
      %v493 = vsel %vm478, %v490, %v492
      %v494 = vrot.slane %v180, 1
      %v495 = vrot.slane %v181, 1
      %v496 = vsel %vm478, %v494, %v495
      %v497 = vrot.slane %v182, 1
      %v498 = vsel %vm478, %v495, %v497
      %v499 = vrot.slane %v183, 1
      %v500 = vrot.slane %v184, 1
      %v501 = vsel %vm478, %v499, %v500
      %v502 = vrot.slane %v185, 1
      %v503 = vsel %vm478, %v500, %v502
      %v504 = vrot.slane %v186, 1
      %v505 = vrot.slane %v187, 1
      %v506 = vsel %vm478, %v504, %v505
      %v507 = vrot.slane %v188, 1
      %v508 = vsel %vm478, %v505, %v507
      %v509 = vrot.slane %v189, 1
      %v510 = vrot.slane %v190, 1
      %v511 = vsel %vm478, %v509, %v510
      %v512 = vrot.slane %v191, 1
      %v513 = vsel %vm478, %v510, %v512
      %v514 = vrot.slane %v192, 1
      %v515 = vrot.slane %v193, 1
      %v516 = vsel %vm478, %v514, %v515
      %v517 = vrot.slane %v194, 1
      %v518 = vsel %vm478, %v515, %v517
      %v519 = vrot.slane %v195, 1
      %v520 = vrot.slane %v196, 1
      %v521 = vsel %vm478, %v519, %v520
      %v522 = vrot.slane %v197, 1
      %v523 = vsel %vm478, %v520, %v522
      %v524 = vrot.slane %v198, 1
      %v525 = vrot.slane %v199, 1
      %v526 = vsel %vm478, %v524, %v525
      %v527 = vrot.slane %v200, 1
      %v528 = vsel %vm478, %v525, %v527
      %v529 = vrot.slane %v201, 1
      %v530 = vrot.slane %v202, 1
      %v531 = vsel %vm478, %v529, %v530
      %v532 = vrot.slane %v203, 1
      %v533 = vsel %vm478, %v530, %v532
      %v534 = vrot.slane %v204, 1
      %v535 = vrot.slane %v205, 1
      %v536 = vsel %vm478, %v534, %v535
      %v537 = vrot.slane %v206, 1
      %v538 = vsel %vm478, %v535, %v537
      %v539 = vrot.slane %v207, 1
      %v540 = vrot.slane %v208, 1
      %v541 = vsel %vm478, %v539, %v540
      %v542 = vrot.slane %v209, 1
      %v543 = vsel %vm478, %v540, %v542
      %v544 = vrot.slane %v210, 1
      %v545 = vrot.slane %v211, 1
      %v546 = vsel %vm478, %v544, %v545
      %v547 = vrot.slane %v212, 1
      %v548 = vsel %vm478, %v545, %v547
      %v549 = vrot.slane %v213, 1
      %v550 = vrot.slane %v214, 1
      %v551 = vsel %vm478, %v549, %v550
      %v552 = vrot.slane %v215, 1
      %v553 = vsel %vm478, %v550, %v552
      %v554 = vrot.slane %v216, 1
      %v555 = vrot.slane %v217, 1
      %v556 = vsel %vm478, %v554, %v555
      %v557 = vrot.slane %v218, 1
      %v558 = vsel %vm478, %v555, %v557
      %559 = vset.pattern.permute.xlu0 0
      %560 = vperm.xlu0 %559, %v481
      %v561 = vpop.permute.xlu0 %560
      %563 = vset.pattern.permute.xlu0 0
      %564 = vperm.xlu0 %563, %v483
      %v565 = vpop.permute.xlu0 %564
      %567 = vset.pattern.permute.xlu0 0
      %568 = vperm.xlu0 %567, %v486
      %v569 = vpop.permute.xlu0 %568
      %571 = vset.pattern.permute.xlu0 0
      %572 = vperm.xlu0 %571, %v488
      %v573 = vpop.permute.xlu0 %572
      %575 = vset.pattern.permute.xlu0 0
      %576 = vperm.xlu0 %575, %v491
      %v577 = vpop.permute.xlu0 %576
      %579 = vset.pattern.permute.xlu0 0
      %580 = vperm.xlu0 %579, %v493
      %v581 = vpop.permute.xlu0 %580
      %583 = vset.pattern.permute.xlu0 0
      %584 = vperm.xlu0 %583, %v496
      %v585 = vpop.permute.xlu0 %584
      %587 = vset.pattern.permute.xlu0 0
      %588 = vperm.xlu0 %587, %v498
      %v589 = vpop.permute.xlu0 %588
      %591 = vset.pattern.permute.xlu0 0
      %592 = vperm.xlu0 %591, %v501
      %v593 = vpop.permute.xlu0 %592
      %595 = vset.pattern.permute.xlu0 0
      %596 = vperm.xlu0 %595, %v503
      %v597 = vpop.permute.xlu0 %596
      %599 = vset.pattern.permute.xlu0 0
      %600 = vperm.xlu0 %599, %v506
      %v601 = vpop.permute.xlu0 %600
      %603 = vset.pattern.permute.xlu0 0
      %604 = vperm.xlu0 %603, %v508
      %v605 = vpop.permute.xlu0 %604
      %607 = vset.pattern.permute.xlu0 0
      %608 = vperm.xlu0 %607, %v511
      %v609 = vpop.permute.xlu0 %608
      %611 = vset.pattern.permute.xlu0 0
      %612 = vperm.xlu0 %611, %v513
      %v613 = vpop.permute.xlu0 %612
      %615 = vset.pattern.permute.xlu0 0
      %616 = vperm.xlu0 %615, %v516
      %v617 = vpop.permute.xlu0 %616
      %619 = vset.pattern.permute.xlu0 0
      %620 = vperm.xlu0 %619, %v518
      %v621 = vpop.permute.xlu0 %620
      %623 = vset.pattern.permute.xlu0 0
      %624 = vperm.xlu0 %623, %v521
      %v625 = vpop.permute.xlu0 %624
      %627 = vset.pattern.permute.xlu0 0
      %628 = vperm.xlu0 %627, %v523
      %v629 = vpop.permute.xlu0 %628
      %631 = vset.pattern.permute.xlu0 0
      %632 = vperm.xlu0 %631, %v526
      %v633 = vpop.permute.xlu0 %632
      %635 = vset.pattern.permute.xlu0 0
      %636 = vperm.xlu0 %635, %v528
      %v637 = vpop.permute.xlu0 %636
      %639 = vset.pattern.permute.xlu0 0
      %640 = vperm.xlu0 %639, %v531
      %v641 = vpop.permute.xlu0 %640
      %643 = vset.pattern.permute.xlu0 0
      %644 = vperm.xlu0 %643, %v533
      %v645 = vpop.permute.xlu0 %644
      %647 = vset.pattern.permute.xlu0 0
      %648 = vperm.xlu0 %647, %v536
      %v649 = vpop.permute.xlu0 %648
      %651 = vset.pattern.permute.xlu0 0
      %652 = vperm.xlu0 %651, %v538
      %v653 = vpop.permute.xlu0 %652
      %655 = vset.pattern.permute.xlu0 0
      %656 = vperm.xlu0 %655, %v541
      %v657 = vpop.permute.xlu0 %656
      %659 = vset.pattern.permute.xlu0 0
      %660 = vperm.xlu0 %659, %v543
      %v661 = vpop.permute.xlu0 %660
      %663 = vset.pattern.permute.xlu0 0
      %664 = vperm.xlu0 %663, %v546
      %v665 = vpop.permute.xlu0 %664
      %667 = vset.pattern.permute.xlu0 0
      %668 = vperm.xlu0 %667, %v548
      %v669 = vpop.permute.xlu0 %668
      %671 = vset.pattern.permute.xlu0 0
      %672 = vperm.xlu0 %671, %v551
      %v673 = vpop.permute.xlu0 %672
      %675 = vset.pattern.permute.xlu0 0
      %676 = vperm.xlu0 %675, %v553
      %v677 = vpop.permute.xlu0 %676
      %679 = vset.pattern.permute.xlu0 0
      %680 = vperm.xlu0 %679, %v556
      %v681 = vpop.permute.xlu0 %680
      %683 = vset.pattern.permute.xlu0 0
      %684 = vperm.xlu0 %683, %v558
      %v685 = vpop.permute.xlu0 %684
      %v688 = vperm.slane %v226, 0
      %v690 = vmul.f32 %v561, %v688
      %v691 = vmul.f32 %v565, %v688
      %v692 = vmul.f32 %v569, %v688
      %v693 = vmul.f32 %v573, %v688
      %v694 = vmul.f32 %v577, %v688
      %v695 = vmul.f32 %v581, %v688
      %v696 = vmul.f32 %v585, %v688
      %v697 = vmul.f32 %v589, %v688
      %v698 = vmul.f32 %v593, %v688
      %v699 = vmul.f32 %v597, %v688
      %v700 = vmul.f32 %v601, %v688
      %v701 = vmul.f32 %v605, %v688
      %v702 = vmul.f32 %v609, %v688
      %v703 = vmul.f32 %v613, %v688
      %v704 = vmul.f32 %v617, %v688
      %v705 = vmul.f32 %v621, %v688
      %v706 = vmul.f32 %v625, %v688
      %v707 = vmul.f32 %v629, %v688
      %v708 = vmul.f32 %v633, %v688
      %v709 = vmul.f32 %v637, %v688
      %v710 = vmul.f32 %v641, %v688
      %v711 = vmul.f32 %v645, %v688
      %v712 = vmul.f32 %v649, %v688
      %v713 = vmul.f32 %v653, %v688
      %v714 = vmul.f32 %v657, %v688
      %v715 = vmul.f32 %v661, %v688
      %v716 = vmul.f32 %v665, %v688
      %v717 = vmul.f32 %v669, %v688
      %v718 = vmul.f32 %v673, %v688
      %v719 = vmul.f32 %v677, %v688
      %v720 = vmul.f32 %v681, %v688
      %v721 = vmul.f32 %v685, %v688
      %v722 = vadd.f32 %v430, %v690
      %v723 = vadd.f32 %v431, %v691
      %v724 = vadd.f32 %v432, %v692
      %v725 = vadd.f32 %v433, %v693
      %v726 = vadd.f32 %v434, %v694
      %v727 = vadd.f32 %v435, %v695
      %v728 = vadd.f32 %v436, %v696
      %v729 = vadd.f32 %v437, %v697
      %v730 = vadd.f32 %v438, %v698
      %v731 = vadd.f32 %v439, %v699
      %v732 = vadd.f32 %v440, %v700
      %v733 = vadd.f32 %v441, %v701
      %v734 = vadd.f32 %v442, %v702
      %v735 = vadd.f32 %v443, %v703
      %v736 = vadd.f32 %v444, %v704
      %v737 = vadd.f32 %v445, %v705
      %v738 = vadd.f32 %v446, %v706
      %v739 = vadd.f32 %v447, %v707
      %v740 = vadd.f32 %v448, %v708
      %v741 = vadd.f32 %v449, %v709
      %v742 = vadd.f32 %v450, %v710
      %v743 = vadd.f32 %v451, %v711
      %v744 = vadd.f32 %v452, %v712
      %v745 = vadd.f32 %v453, %v713
      %v746 = vadd.f32 %v454, %v714
      %v747 = vadd.f32 %v455, %v715
      %v748 = vadd.f32 %v456, %v716
      %v749 = vadd.f32 %v457, %v717
      %v750 = vadd.f32 %v458, %v718
      %v751 = vadd.f32 %v459, %v719
      %v752 = vadd.f32 %v460, %v720
      %v753 = vadd.f32 %v461, %v721
      %vm754 = vcmask 1045504
      %v755 = vrot.slane %v171, 2
      %v756 = vrot.slane %v172, 2
      %v757 = vsel %vm754, %v755, %v756
      %v758 = vrot.slane %v173, 2
      %v759 = vsel %vm754, %v756, %v758
      %v760 = vrot.slane %v174, 2
      %v761 = vrot.slane %v175, 2
      %v762 = vsel %vm754, %v760, %v761
      %v763 = vrot.slane %v176, 2
      %v764 = vsel %vm754, %v761, %v763
      %v765 = vrot.slane %v177, 2
      %v766 = vrot.slane %v178, 2
      %v767 = vsel %vm754, %v765, %v766
      %v768 = vrot.slane %v179, 2
      %v769 = vsel %vm754, %v766, %v768
      %v770 = vrot.slane %v180, 2
      %v771 = vrot.slane %v181, 2
      %v772 = vsel %vm754, %v770, %v771
      %v773 = vrot.slane %v182, 2
      %v774 = vsel %vm754, %v771, %v773
      %v775 = vrot.slane %v183, 2
      %v776 = vrot.slane %v184, 2
      %v777 = vsel %vm754, %v775, %v776
      %v778 = vrot.slane %v185, 2
      %v779 = vsel %vm754, %v776, %v778
      %v780 = vrot.slane %v186, 2
      %v781 = vrot.slane %v187, 2
      %v782 = vsel %vm754, %v780, %v781
      %v783 = vrot.slane %v188, 2
      %v784 = vsel %vm754, %v781, %v783
      %v785 = vrot.slane %v189, 2
      %v786 = vrot.slane %v190, 2
      %v787 = vsel %vm754, %v785, %v786
      %v788 = vrot.slane %v191, 2
      %v789 = vsel %vm754, %v786, %v788
      %v790 = vrot.slane %v192, 2
      %v791 = vrot.slane %v193, 2
      %v792 = vsel %vm754, %v790, %v791
      %v793 = vrot.slane %v194, 2
      %v794 = vsel %vm754, %v791, %v793
      %v795 = vrot.slane %v195, 2
      %v796 = vrot.slane %v196, 2
      %v797 = vsel %vm754, %v795, %v796
      %v798 = vrot.slane %v197, 2
      %v799 = vsel %vm754, %v796, %v798
      %v800 = vrot.slane %v198, 2
      %v801 = vrot.slane %v199, 2
      %v802 = vsel %vm754, %v800, %v801
      %v803 = vrot.slane %v200, 2
      %v804 = vsel %vm754, %v801, %v803
      %v805 = vrot.slane %v201, 2
      %v806 = vrot.slane %v202, 2
      %v807 = vsel %vm754, %v805, %v806
      %v808 = vrot.slane %v203, 2
      %v809 = vsel %vm754, %v806, %v808
      %v810 = vrot.slane %v204, 2
      %v811 = vrot.slane %v205, 2
      %v812 = vsel %vm754, %v810, %v811
      %v813 = vrot.slane %v206, 2
      %v814 = vsel %vm754, %v811, %v813
      %v815 = vrot.slane %v207, 2
      %v816 = vrot.slane %v208, 2
      %v817 = vsel %vm754, %v815, %v816
      %v818 = vrot.slane %v209, 2
      %v819 = vsel %vm754, %v816, %v818
      %v820 = vrot.slane %v210, 2
      %v821 = vrot.slane %v211, 2
      %v822 = vsel %vm754, %v820, %v821
      %v823 = vrot.slane %v212, 2
      %v824 = vsel %vm754, %v821, %v823
      %v825 = vrot.slane %v213, 2
      %v826 = vrot.slane %v214, 2
      %v827 = vsel %vm754, %v825, %v826
      %v828 = vrot.slane %v215, 2
      %v829 = vsel %vm754, %v826, %v828
      %v830 = vrot.slane %v216, 2
      %v831 = vrot.slane %v217, 2
      %v832 = vsel %vm754, %v830, %v831
      %v833 = vrot.slane %v218, 2
      %v834 = vsel %vm754, %v831, %v833
      %835 = vset.pattern.permute.xlu0 0
      %836 = vperm.xlu0 %835, %v757
      %v837 = vpop.permute.xlu0 %836
      %839 = vset.pattern.permute.xlu0 0
      %840 = vperm.xlu0 %839, %v759
      %v841 = vpop.permute.xlu0 %840
      %843 = vset.pattern.permute.xlu0 0
      %844 = vperm.xlu0 %843, %v762
      %v845 = vpop.permute.xlu0 %844
      %847 = vset.pattern.permute.xlu0 0
      %848 = vperm.xlu0 %847, %v764
      %v849 = vpop.permute.xlu0 %848
      %851 = vset.pattern.permute.xlu0 0
      %852 = vperm.xlu0 %851, %v767
      %v853 = vpop.permute.xlu0 %852
      %855 = vset.pattern.permute.xlu0 0
      %856 = vperm.xlu0 %855, %v769
      %v857 = vpop.permute.xlu0 %856
      %859 = vset.pattern.permute.xlu0 0
      %860 = vperm.xlu0 %859, %v772
      %v861 = vpop.permute.xlu0 %860
      %863 = vset.pattern.permute.xlu0 0
      %864 = vperm.xlu0 %863, %v774
      %v865 = vpop.permute.xlu0 %864
      %867 = vset.pattern.permute.xlu0 0
      %868 = vperm.xlu0 %867, %v777
      %v869 = vpop.permute.xlu0 %868
      %871 = vset.pattern.permute.xlu0 0
      %872 = vperm.xlu0 %871, %v779
      %v873 = vpop.permute.xlu0 %872
      %875 = vset.pattern.permute.xlu0 0
      %876 = vperm.xlu0 %875, %v782
      %v877 = vpop.permute.xlu0 %876
      %879 = vset.pattern.permute.xlu0 0
      %880 = vperm.xlu0 %879, %v784
      %v881 = vpop.permute.xlu0 %880
      %883 = vset.pattern.permute.xlu0 0
      %884 = vperm.xlu0 %883, %v787
      %v885 = vpop.permute.xlu0 %884
      %887 = vset.pattern.permute.xlu0 0
      %888 = vperm.xlu0 %887, %v789
      %v889 = vpop.permute.xlu0 %888
      %891 = vset.pattern.permute.xlu0 0
      %892 = vperm.xlu0 %891, %v792
      %v893 = vpop.permute.xlu0 %892
      %895 = vset.pattern.permute.xlu0 0
      %896 = vperm.xlu0 %895, %v794
      %v897 = vpop.permute.xlu0 %896
      %899 = vset.pattern.permute.xlu0 0
      %900 = vperm.xlu0 %899, %v797
      %v901 = vpop.permute.xlu0 %900
      %903 = vset.pattern.permute.xlu0 0
      %904 = vperm.xlu0 %903, %v799
      %v905 = vpop.permute.xlu0 %904
      %907 = vset.pattern.permute.xlu0 0
      %908 = vperm.xlu0 %907, %v802
      %v909 = vpop.permute.xlu0 %908
      %911 = vset.pattern.permute.xlu0 0
      %912 = vperm.xlu0 %911, %v804
      %v913 = vpop.permute.xlu0 %912
      %915 = vset.pattern.permute.xlu0 0
      %916 = vperm.xlu0 %915, %v807
      %v917 = vpop.permute.xlu0 %916
      %919 = vset.pattern.permute.xlu0 0
      %920 = vperm.xlu0 %919, %v809
      %v921 = vpop.permute.xlu0 %920
      %923 = vset.pattern.permute.xlu0 0
      %924 = vperm.xlu0 %923, %v812
      %v925 = vpop.permute.xlu0 %924
      %927 = vset.pattern.permute.xlu0 0
      %928 = vperm.xlu0 %927, %v814
      %v929 = vpop.permute.xlu0 %928
      %931 = vset.pattern.permute.xlu0 0
      %932 = vperm.xlu0 %931, %v817
      %v933 = vpop.permute.xlu0 %932
      %935 = vset.pattern.permute.xlu0 0
      %936 = vperm.xlu0 %935, %v819
      %v937 = vpop.permute.xlu0 %936
      %939 = vset.pattern.permute.xlu0 0
      %940 = vperm.xlu0 %939, %v822
      %v941 = vpop.permute.xlu0 %940
      %943 = vset.pattern.permute.xlu0 0
      %944 = vperm.xlu0 %943, %v824
      %v945 = vpop.permute.xlu0 %944
      %947 = vset.pattern.permute.xlu0 0
      %948 = vperm.xlu0 %947, %v827
      %v949 = vpop.permute.xlu0 %948
      %951 = vset.pattern.permute.xlu0 0
      %952 = vperm.xlu0 %951, %v829
      %v953 = vpop.permute.xlu0 %952
      %955 = vset.pattern.permute.xlu0 0
      %956 = vperm.xlu0 %955, %v832
      %v957 = vpop.permute.xlu0 %956
      %959 = vset.pattern.permute.xlu0 0
      %960 = vperm.xlu0 %959, %v834
      %v961 = vpop.permute.xlu0 %960
      %v964 = vperm.slane %v227, 0
      %v966 = vmul.f32 %v837, %v964
      %v967 = vmul.f32 %v841, %v964
      %v968 = vmul.f32 %v845, %v964
      %v969 = vmul.f32 %v849, %v964
      %v970 = vmul.f32 %v853, %v964
      %v971 = vmul.f32 %v857, %v964
      %v972 = vmul.f32 %v861, %v964
      %v973 = vmul.f32 %v865, %v964
      %v974 = vmul.f32 %v869, %v964
      %v975 = vmul.f32 %v873, %v964
      %v976 = vmul.f32 %v877, %v964
      %v977 = vmul.f32 %v881, %v964
      %v978 = vmul.f32 %v885, %v964
      %v979 = vmul.f32 %v889, %v964
      %v980 = vmul.f32 %v893, %v964
      %v981 = vmul.f32 %v897, %v964
      %v982 = vmul.f32 %v901, %v964
      %v983 = vmul.f32 %v905, %v964
      %v984 = vmul.f32 %v909, %v964
      %v985 = vmul.f32 %v913, %v964
      %v986 = vmul.f32 %v917, %v964
      %v987 = vmul.f32 %v921, %v964
      %v988 = vmul.f32 %v925, %v964
      %v989 = vmul.f32 %v929, %v964
      %v990 = vmul.f32 %v933, %v964
      %v991 = vmul.f32 %v937, %v964
      %v992 = vmul.f32 %v941, %v964
      %v993 = vmul.f32 %v945, %v964
      %v994 = vmul.f32 %v949, %v964
      %v995 = vmul.f32 %v953, %v964
      %v996 = vmul.f32 %v957, %v964
      %v997 = vmul.f32 %v961, %v964
      %v998 = vadd.f32 %v722, %v966
      %v999 = vadd.f32 %v723, %v967
      %v1000 = vadd.f32 %v724, %v968
      %v1001 = vadd.f32 %v725, %v969
      %v1002 = vadd.f32 %v726, %v970
      %v1003 = vadd.f32 %v727, %v971
      %v1004 = vadd.f32 %v728, %v972
      %v1005 = vadd.f32 %v729, %v973
      %v1006 = vadd.f32 %v730, %v974
      %v1007 = vadd.f32 %v731, %v975
      %v1008 = vadd.f32 %v732, %v976
      %v1009 = vadd.f32 %v733, %v977
      %v1010 = vadd.f32 %v734, %v978
      %v1011 = vadd.f32 %v735, %v979
      %v1012 = vadd.f32 %v736, %v980
      %v1013 = vadd.f32 %v737, %v981
      %v1014 = vadd.f32 %v738, %v982
      %v1015 = vadd.f32 %v739, %v983
      %v1016 = vadd.f32 %v740, %v984
      %v1017 = vadd.f32 %v741, %v985
      %v1018 = vadd.f32 %v742, %v986
      %v1019 = vadd.f32 %v743, %v987
      %v1020 = vadd.f32 %v744, %v988
      %v1021 = vadd.f32 %v745, %v989
      %v1022 = vadd.f32 %v746, %v990
      %v1023 = vadd.f32 %v747, %v991
      %v1024 = vadd.f32 %v748, %v992
      %v1025 = vadd.f32 %v749, %v993
      %v1026 = vadd.f32 %v750, %v994
      %v1027 = vadd.f32 %v751, %v995
      %v1028 = vadd.f32 %v752, %v996
      %v1029 = vadd.f32 %v753, %v997
      %1031 = vset.pattern.permute.xlu0 0
      %1032 = vperm.xlu0 %1031, %v219
      %v1033 = vpop.permute.xlu0 %1032
      %1036 = vset.pattern.permute.xlu0 0
      %1037 = vperm.xlu0 %1036, %v220
      %v1038 = vpop.permute.xlu0 %1037
      %v1041 = vperm.slane %v228, 0
      %v1043 = vmul.f32 %v248, %v1041
      %v1044 = vmul.f32 %v253, %v1041
      %v1045 = vmul.f32 %v258, %v1041
      %v1046 = vmul.f32 %v263, %v1041
      %v1047 = vmul.f32 %v268, %v1041
      %v1048 = vmul.f32 %v273, %v1041
      %v1049 = vmul.f32 %v278, %v1041
      %v1050 = vmul.f32 %v283, %v1041
      %v1051 = vmul.f32 %v288, %v1041
      %v1052 = vmul.f32 %v293, %v1041
      %v1053 = vmul.f32 %v298, %v1041
      %v1054 = vmul.f32 %v303, %v1041
      %v1055 = vmul.f32 %v308, %v1041
      %v1056 = vmul.f32 %v313, %v1041
      %v1057 = vmul.f32 %v318, %v1041
      %v1058 = vmul.f32 %v323, %v1041
      %v1059 = vmul.f32 %v328, %v1041
      %v1060 = vmul.f32 %v333, %v1041
      %v1061 = vmul.f32 %v338, %v1041
      %v1062 = vmul.f32 %v343, %v1041
      %v1063 = vmul.f32 %v348, %v1041
      %v1064 = vmul.f32 %v353, %v1041
      %v1065 = vmul.f32 %v358, %v1041
      %v1066 = vmul.f32 %v363, %v1041
      %v1067 = vmul.f32 %v368, %v1041
      %v1068 = vmul.f32 %v373, %v1041
      %v1069 = vmul.f32 %v378, %v1041
      %v1070 = vmul.f32 %v383, %v1041
      %v1071 = vmul.f32 %v388, %v1041
      %v1072 = vmul.f32 %v393, %v1041
      %v1073 = vmul.f32 %v1033, %v1041
      %v1074 = vmul.f32 %v1038, %v1041
      %v1075 = vadd.f32 %v998, %v1043
      %v1076 = vadd.f32 %v999, %v1044
      %v1077 = vadd.f32 %v1000, %v1045
      %v1078 = vadd.f32 %v1001, %v1046
      %v1079 = vadd.f32 %v1002, %v1047
      %v1080 = vadd.f32 %v1003, %v1048
      %v1081 = vadd.f32 %v1004, %v1049
      %v1082 = vadd.f32 %v1005, %v1050
      %v1083 = vadd.f32 %v1006, %v1051
      %v1084 = vadd.f32 %v1007, %v1052
      %v1085 = vadd.f32 %v1008, %v1053
      %v1086 = vadd.f32 %v1009, %v1054
      %v1087 = vadd.f32 %v1010, %v1055
      %v1088 = vadd.f32 %v1011, %v1056
      %v1089 = vadd.f32 %v1012, %v1057
      %v1090 = vadd.f32 %v1013, %v1058
      %v1091 = vadd.f32 %v1014, %v1059
      %v1092 = vadd.f32 %v1015, %v1060
      %v1093 = vadd.f32 %v1016, %v1061
      %v1094 = vadd.f32 %v1017, %v1062
      %v1095 = vadd.f32 %v1018, %v1063
      %v1096 = vadd.f32 %v1019, %v1064
      %v1097 = vadd.f32 %v1020, %v1065
      %v1098 = vadd.f32 %v1021, %v1066
      %v1099 = vadd.f32 %v1022, %v1067
      %v1100 = vadd.f32 %v1023, %v1068
      %v1101 = vadd.f32 %v1024, %v1069
      %v1102 = vadd.f32 %v1025, %v1070
      %v1103 = vadd.f32 %v1026, %v1071
      %v1104 = vadd.f32 %v1027, %v1072
      %v1105 = vadd.f32 %v1028, %v1073
      %v1106 = vadd.f32 %v1029, %v1074
      %v1108 = vrot.slane %v219, 1
      %v1109 = vrot.slane %v220, 1
      %v1110 = vsel %vm478, %v1108, %v1109
      %v1111 = vrot.slane %v221, 1
      %v1112 = vsel %vm478, %v1109, %v1111
      %1113 = vset.pattern.permute.xlu0 0
      %1114 = vperm.xlu0 %1113, %v1110
      %v1115 = vpop.permute.xlu0 %1114
      %1117 = vset.pattern.permute.xlu0 0
      %1118 = vperm.xlu0 %1117, %v1112
      %v1119 = vpop.permute.xlu0 %1118
      %v1122 = vperm.slane %v229, 0
      %v1124 = vmul.f32 %v569, %v1122
      %v1125 = vmul.f32 %v573, %v1122
      %v1126 = vmul.f32 %v577, %v1122
      %v1127 = vmul.f32 %v581, %v1122
      %v1128 = vmul.f32 %v585, %v1122
      %v1129 = vmul.f32 %v589, %v1122
      %v1130 = vmul.f32 %v593, %v1122
      %v1131 = vmul.f32 %v597, %v1122
      %v1132 = vmul.f32 %v601, %v1122
      %v1133 = vmul.f32 %v605, %v1122
      %v1134 = vmul.f32 %v609, %v1122
      %v1135 = vmul.f32 %v613, %v1122
      %v1136 = vmul.f32 %v617, %v1122
      %v1137 = vmul.f32 %v621, %v1122
      %v1138 = vmul.f32 %v625, %v1122
      %v1139 = vmul.f32 %v629, %v1122
      %v1140 = vmul.f32 %v633, %v1122
      %v1141 = vmul.f32 %v637, %v1122
      %v1142 = vmul.f32 %v641, %v1122
      %v1143 = vmul.f32 %v645, %v1122
      %v1144 = vmul.f32 %v649, %v1122
      %v1145 = vmul.f32 %v653, %v1122
      %v1146 = vmul.f32 %v657, %v1122
      %v1147 = vmul.f32 %v661, %v1122
      %v1148 = vmul.f32 %v665, %v1122
      %v1149 = vmul.f32 %v669, %v1122
      %v1150 = vmul.f32 %v673, %v1122
      %v1151 = vmul.f32 %v677, %v1122
      %v1152 = vmul.f32 %v681, %v1122
      %v1153 = vmul.f32 %v685, %v1122
      %v1154 = vmul.f32 %v1115, %v1122
      %v1155 = vmul.f32 %v1119, %v1122
      %v1156 = vadd.f32 %v1075, %v1124
      %v1157 = vadd.f32 %v1076, %v1125
      %v1158 = vadd.f32 %v1077, %v1126
      %v1159 = vadd.f32 %v1078, %v1127
      %v1160 = vadd.f32 %v1079, %v1128
      %v1161 = vadd.f32 %v1080, %v1129
      %v1162 = vadd.f32 %v1081, %v1130
      %v1163 = vadd.f32 %v1082, %v1131
      %v1164 = vadd.f32 %v1083, %v1132
      %v1165 = vadd.f32 %v1084, %v1133
      %v1166 = vadd.f32 %v1085, %v1134
      %v1167 = vadd.f32 %v1086, %v1135
      %v1168 = vadd.f32 %v1087, %v1136
      %v1169 = vadd.f32 %v1088, %v1137
      %v1170 = vadd.f32 %v1089, %v1138
      %v1171 = vadd.f32 %v1090, %v1139
      %v1172 = vadd.f32 %v1091, %v1140
      %v1173 = vadd.f32 %v1092, %v1141
      %v1174 = vadd.f32 %v1093, %v1142
      %v1175 = vadd.f32 %v1094, %v1143
      %v1176 = vadd.f32 %v1095, %v1144
      %v1177 = vadd.f32 %v1096, %v1145
      %v1178 = vadd.f32 %v1097, %v1146
      %v1179 = vadd.f32 %v1098, %v1147
      %v1180 = vadd.f32 %v1099, %v1148
      %v1181 = vadd.f32 %v1100, %v1149
      %v1182 = vadd.f32 %v1101, %v1150
      %v1183 = vadd.f32 %v1102, %v1151
      %v1184 = vadd.f32 %v1103, %v1152
      %v1185 = vadd.f32 %v1104, %v1153
      %v1186 = vadd.f32 %v1105, %v1154
      %v1187 = vadd.f32 %v1106, %v1155
      %v1188 = vrot.slane %v219, 2
      %v1189 = vrot.slane %v220, 2
      %v1190 = vsel %vm754, %v1188, %v1189
      %v1191 = vrot.slane %v221, 2
      %v1192 = vsel %vm754, %v1189, %v1191
      %1193 = vset.pattern.permute.xlu0 0
      %1194 = vperm.xlu0 %1193, %v1190
      %v1195 = vpop.permute.xlu0 %1194
      %1197 = vset.pattern.permute.xlu0 0
      %1198 = vperm.xlu0 %1197, %v1192
      %v1199 = vpop.permute.xlu0 %1198
      %v1202 = vperm.slane %v230, 0
      %v1204 = vmul.f32 %v845, %v1202
      %v1205 = vmul.f32 %v849, %v1202
      %v1206 = vmul.f32 %v853, %v1202
      %v1207 = vmul.f32 %v857, %v1202
      %v1208 = vmul.f32 %v861, %v1202
      %v1209 = vmul.f32 %v865, %v1202
      %v1210 = vmul.f32 %v869, %v1202
      %v1211 = vmul.f32 %v873, %v1202
      %v1212 = vmul.f32 %v877, %v1202
      %v1213 = vmul.f32 %v881, %v1202
      %v1214 = vmul.f32 %v885, %v1202
      %v1215 = vmul.f32 %v889, %v1202
      %v1216 = vmul.f32 %v893, %v1202
      %v1217 = vmul.f32 %v897, %v1202
      %v1218 = vmul.f32 %v901, %v1202
      %v1219 = vmul.f32 %v905, %v1202
      %v1220 = vmul.f32 %v909, %v1202
      %v1221 = vmul.f32 %v913, %v1202
      %v1222 = vmul.f32 %v917, %v1202
      %v1223 = vmul.f32 %v921, %v1202
      %v1224 = vmul.f32 %v925, %v1202
      %v1225 = vmul.f32 %v929, %v1202
      %v1226 = vmul.f32 %v933, %v1202
      %v1227 = vmul.f32 %v937, %v1202
      %v1228 = vmul.f32 %v941, %v1202
      %v1229 = vmul.f32 %v945, %v1202
      %v1230 = vmul.f32 %v949, %v1202
      %v1231 = vmul.f32 %v953, %v1202
      %v1232 = vmul.f32 %v957, %v1202
      %v1233 = vmul.f32 %v961, %v1202
      %v1234 = vmul.f32 %v1195, %v1202
      %v1235 = vmul.f32 %v1199, %v1202
      %v1236 = vadd.f32 %v1156, %v1204
      %v1237 = vadd.f32 %v1157, %v1205
      %v1238 = vadd.f32 %v1158, %v1206
      %v1239 = vadd.f32 %v1159, %v1207
      %v1240 = vadd.f32 %v1160, %v1208
      %v1241 = vadd.f32 %v1161, %v1209
      %v1242 = vadd.f32 %v1162, %v1210
      %v1243 = vadd.f32 %v1163, %v1211
      %v1244 = vadd.f32 %v1164, %v1212
      %v1245 = vadd.f32 %v1165, %v1213
      %v1246 = vadd.f32 %v1166, %v1214
      %v1247 = vadd.f32 %v1167, %v1215
      %v1248 = vadd.f32 %v1168, %v1216
      %v1249 = vadd.f32 %v1169, %v1217
      %v1250 = vadd.f32 %v1170, %v1218
      %v1251 = vadd.f32 %v1171, %v1219
      %v1252 = vadd.f32 %v1172, %v1220
      %v1253 = vadd.f32 %v1173, %v1221
      %v1254 = vadd.f32 %v1174, %v1222
      %v1255 = vadd.f32 %v1175, %v1223
      %v1256 = vadd.f32 %v1176, %v1224
      %v1257 = vadd.f32 %v1177, %v1225
      %v1258 = vadd.f32 %v1178, %v1226
      %v1259 = vadd.f32 %v1179, %v1227
      %v1260 = vadd.f32 %v1180, %v1228
      %v1261 = vadd.f32 %v1181, %v1229
      %v1262 = vadd.f32 %v1182, %v1230
      %v1263 = vadd.f32 %v1183, %v1231
      %v1264 = vadd.f32 %v1184, %v1232
      %v1265 = vadd.f32 %v1185, %v1233
      %v1266 = vadd.f32 %v1186, %v1234
      %v1267 = vadd.f32 %v1187, %v1235
      %1269 = vset.pattern.permute.xlu0 0
      %1270 = vperm.xlu0 %1269, %v222
      %v1271 = vpop.permute.xlu0 %1270
      %1274 = vset.pattern.permute.xlu0 0
      %1275 = vperm.xlu0 %1274, %v223
      %v1276 = vpop.permute.xlu0 %1275
      %v1279 = vperm.slane %v231, 0
      %v1281 = vmul.f32 %v258, %v1279
      %v1282 = vmul.f32 %v263, %v1279
      %v1283 = vmul.f32 %v268, %v1279
      %v1284 = vmul.f32 %v273, %v1279
      %v1285 = vmul.f32 %v278, %v1279
      %v1286 = vmul.f32 %v283, %v1279
      %v1287 = vmul.f32 %v288, %v1279
      %v1288 = vmul.f32 %v293, %v1279
      %v1289 = vmul.f32 %v298, %v1279
      %v1290 = vmul.f32 %v303, %v1279
      %v1291 = vmul.f32 %v308, %v1279
      %v1292 = vmul.f32 %v313, %v1279
      %v1293 = vmul.f32 %v318, %v1279
      %v1294 = vmul.f32 %v323, %v1279
      %v1295 = vmul.f32 %v328, %v1279
      %v1296 = vmul.f32 %v333, %v1279
      %v1297 = vmul.f32 %v338, %v1279
      %v1298 = vmul.f32 %v343, %v1279
      %v1299 = vmul.f32 %v348, %v1279
      %v1300 = vmul.f32 %v353, %v1279
      %v1301 = vmul.f32 %v358, %v1279
      %v1302 = vmul.f32 %v363, %v1279
      %v1303 = vmul.f32 %v368, %v1279
      %v1304 = vmul.f32 %v373, %v1279
      %v1305 = vmul.f32 %v378, %v1279
      %v1306 = vmul.f32 %v383, %v1279
      %v1307 = vmul.f32 %v388, %v1279
      %v1308 = vmul.f32 %v393, %v1279
      %v1309 = vmul.f32 %v1033, %v1279
      %v1310 = vmul.f32 %v1038, %v1279
      %v1311 = vmul.f32 %v1271, %v1279
      %v1312 = vmul.f32 %v1276, %v1279
      %v1313 = vadd.f32 %v1236, %v1281
      %v1314 = vadd.f32 %v1237, %v1282
      %v1315 = vadd.f32 %v1238, %v1283
      %v1316 = vadd.f32 %v1239, %v1284
      %v1317 = vadd.f32 %v1240, %v1285
      %v1318 = vadd.f32 %v1241, %v1286
      %v1319 = vadd.f32 %v1242, %v1287
      %v1320 = vadd.f32 %v1243, %v1288
      %v1321 = vadd.f32 %v1244, %v1289
      %v1322 = vadd.f32 %v1245, %v1290
      %v1323 = vadd.f32 %v1246, %v1291
      %v1324 = vadd.f32 %v1247, %v1292
      %v1325 = vadd.f32 %v1248, %v1293
      %v1326 = vadd.f32 %v1249, %v1294
      %v1327 = vadd.f32 %v1250, %v1295
      %v1328 = vadd.f32 %v1251, %v1296
      %v1329 = vadd.f32 %v1252, %v1297
      %v1330 = vadd.f32 %v1253, %v1298
      %v1331 = vadd.f32 %v1254, %v1299
      %v1332 = vadd.f32 %v1255, %v1300
      %v1333 = vadd.f32 %v1256, %v1301
      %v1334 = vadd.f32 %v1257, %v1302
      %v1335 = vadd.f32 %v1258, %v1303
      %v1336 = vadd.f32 %v1259, %v1304
      %v1337 = vadd.f32 %v1260, %v1305
      %v1338 = vadd.f32 %v1261, %v1306
      %v1339 = vadd.f32 %v1262, %v1307
      %v1340 = vadd.f32 %v1263, %v1308
      %v1341 = vadd.f32 %v1264, %v1309
      %v1342 = vadd.f32 %v1265, %v1310
      %v1343 = vadd.f32 %v1266, %v1311
      %v1344 = vadd.f32 %v1267, %v1312
      %v1346 = vrot.slane %v222, 1
      %v1347 = vrot.slane %v223, 1
      %v1348 = vsel %vm478, %v1346, %v1347
      %v1349 = vrot.slane %v224, 1
      %v1350 = vsel %vm478, %v1347, %v1349
      %1351 = vset.pattern.permute.xlu0 0
      %1352 = vperm.xlu0 %1351, %v1348
      %v1353 = vpop.permute.xlu0 %1352
      %1355 = vset.pattern.permute.xlu0 0
      %1356 = vperm.xlu0 %1355, %v1350
      %v1357 = vpop.permute.xlu0 %1356
      %v1360 = vperm.slane %v232, 0
      %v1362 = vmul.f32 %v577, %v1360
      %v1363 = vmul.f32 %v581, %v1360
      %v1364 = vmul.f32 %v585, %v1360
      %v1365 = vmul.f32 %v589, %v1360
      %v1366 = vmul.f32 %v593, %v1360
      %v1367 = vmul.f32 %v597, %v1360
      %v1368 = vmul.f32 %v601, %v1360
      %v1369 = vmul.f32 %v605, %v1360
      %v1370 = vmul.f32 %v609, %v1360
      %v1371 = vmul.f32 %v613, %v1360
      %v1372 = vmul.f32 %v617, %v1360
      %v1373 = vmul.f32 %v621, %v1360
      %v1374 = vmul.f32 %v625, %v1360
      %v1375 = vmul.f32 %v629, %v1360
      %v1376 = vmul.f32 %v633, %v1360
      %v1377 = vmul.f32 %v637, %v1360
      %v1378 = vmul.f32 %v641, %v1360
      %v1379 = vmul.f32 %v645, %v1360
      %v1380 = vmul.f32 %v649, %v1360
      %v1381 = vmul.f32 %v653, %v1360
      %v1382 = vmul.f32 %v657, %v1360
      %v1383 = vmul.f32 %v661, %v1360
      %v1384 = vmul.f32 %v665, %v1360
      %v1385 = vmul.f32 %v669, %v1360
      %v1386 = vmul.f32 %v673, %v1360
      %v1387 = vmul.f32 %v677, %v1360
      %v1388 = vmul.f32 %v681, %v1360
      %v1389 = vmul.f32 %v685, %v1360
      %v1390 = vmul.f32 %v1115, %v1360
      %v1391 = vmul.f32 %v1119, %v1360
      %v1392 = vmul.f32 %v1353, %v1360
      %v1393 = vmul.f32 %v1357, %v1360
      %v1394 = vadd.f32 %v1313, %v1362
      %v1395 = vadd.f32 %v1314, %v1363
      %v1396 = vadd.f32 %v1315, %v1364
      %v1397 = vadd.f32 %v1316, %v1365
      %v1398 = vadd.f32 %v1317, %v1366
      %v1399 = vadd.f32 %v1318, %v1367
      %v1400 = vadd.f32 %v1319, %v1368
      %v1401 = vadd.f32 %v1320, %v1369
      %v1402 = vadd.f32 %v1321, %v1370
      %v1403 = vadd.f32 %v1322, %v1371
      %v1404 = vadd.f32 %v1323, %v1372
      %v1405 = vadd.f32 %v1324, %v1373
      %v1406 = vadd.f32 %v1325, %v1374
      %v1407 = vadd.f32 %v1326, %v1375
      %v1408 = vadd.f32 %v1327, %v1376
      %v1409 = vadd.f32 %v1328, %v1377
      %v1410 = vadd.f32 %v1329, %v1378
      %v1411 = vadd.f32 %v1330, %v1379
      %v1412 = vadd.f32 %v1331, %v1380
      %v1413 = vadd.f32 %v1332, %v1381
      %v1414 = vadd.f32 %v1333, %v1382
      %v1415 = vadd.f32 %v1334, %v1383
      %v1416 = vadd.f32 %v1335, %v1384
      %v1417 = vadd.f32 %v1336, %v1385
      %v1418 = vadd.f32 %v1337, %v1386
      %v1419 = vadd.f32 %v1338, %v1387
      %v1420 = vadd.f32 %v1339, %v1388
      %v1421 = vadd.f32 %v1340, %v1389
      %v1422 = vadd.f32 %v1341, %v1390
      %v1423 = vadd.f32 %v1342, %v1391
      %v1424 = vadd.f32 %v1343, %v1392
      %v1425 = vadd.f32 %v1344, %v1393
      %v1426 = vrot.slane %v222, 2
      %v1427 = vrot.slane %v223, 2
      %v1428 = vsel %vm754, %v1426, %v1427
      %v1429 = vrot.slane %v224, 2
      %v1430 = vsel %vm754, %v1427, %v1429
      %1431 = vset.pattern.permute.xlu0 0
      %1432 = vperm.xlu0 %1431, %v1428
      %v1433 = vpop.permute.xlu0 %1432
      %1435 = vset.pattern.permute.xlu0 0
      %1436 = vperm.xlu0 %1435, %v1430
      %v1437 = vpop.permute.xlu0 %1436
      %v1440 = vperm.slane %v233, 0
      %v1442 = vmul.f32 %v853, %v1440
      %v1443 = vmul.f32 %v857, %v1440
      %v1444 = vmul.f32 %v861, %v1440
      %v1445 = vmul.f32 %v865, %v1440
      %v1446 = vmul.f32 %v869, %v1440
      %v1447 = vmul.f32 %v873, %v1440
      %v1448 = vmul.f32 %v877, %v1440
      %v1449 = vmul.f32 %v881, %v1440
      %v1450 = vmul.f32 %v885, %v1440
      %v1451 = vmul.f32 %v889, %v1440
      %v1452 = vmul.f32 %v893, %v1440
      %v1453 = vmul.f32 %v897, %v1440
      %v1454 = vmul.f32 %v901, %v1440
      %v1455 = vmul.f32 %v905, %v1440
      %v1456 = vmul.f32 %v909, %v1440
      %v1457 = vmul.f32 %v913, %v1440
      %v1458 = vmul.f32 %v917, %v1440
      %v1459 = vmul.f32 %v921, %v1440
      %v1460 = vmul.f32 %v925, %v1440
      %v1461 = vmul.f32 %v929, %v1440
      %v1462 = vmul.f32 %v933, %v1440
      %v1463 = vmul.f32 %v937, %v1440
      %v1464 = vmul.f32 %v941, %v1440
      %v1465 = vmul.f32 %v945, %v1440
      %v1466 = vmul.f32 %v949, %v1440
      %v1467 = vmul.f32 %v953, %v1440
      %v1468 = vmul.f32 %v957, %v1440
      %v1469 = vmul.f32 %v961, %v1440
      %v1470 = vmul.f32 %v1195, %v1440
      %v1471 = vmul.f32 %v1199, %v1440
      %v1472 = vmul.f32 %v1433, %v1440
      %v1473 = vmul.f32 %v1437, %v1440
      %v1474 = vadd.f32 %v1394, %v1442
      %v1475 = vadd.f32 %v1395, %v1443
      %v1476 = vadd.f32 %v1396, %v1444
      %v1477 = vadd.f32 %v1397, %v1445
      %v1478 = vadd.f32 %v1398, %v1446
      %v1479 = vadd.f32 %v1399, %v1447
      %v1480 = vadd.f32 %v1400, %v1448
      %v1481 = vadd.f32 %v1401, %v1449
      %v1482 = vadd.f32 %v1402, %v1450
      %v1483 = vadd.f32 %v1403, %v1451
      %v1484 = vadd.f32 %v1404, %v1452
      %v1485 = vadd.f32 %v1405, %v1453
      %v1486 = vadd.f32 %v1406, %v1454
      %v1487 = vadd.f32 %v1407, %v1455
      %v1488 = vadd.f32 %v1408, %v1456
      %v1489 = vadd.f32 %v1409, %v1457
      %v1490 = vadd.f32 %v1410, %v1458
      %v1491 = vadd.f32 %v1411, %v1459
      %v1492 = vadd.f32 %v1412, %v1460
      %v1493 = vadd.f32 %v1413, %v1461
      %v1494 = vadd.f32 %v1414, %v1462
      %v1495 = vadd.f32 %v1415, %v1463
      %v1496 = vadd.f32 %v1416, %v1464
      %v1497 = vadd.f32 %v1417, %v1465
      %v1498 = vadd.f32 %v1418, %v1466
      %v1499 = vadd.f32 %v1419, %v1467
      %v1500 = vadd.f32 %v1420, %v1468
      %v1501 = vadd.f32 %v1421, %v1469
      %v1502 = vadd.f32 %v1422, %v1470
      %v1503 = vadd.f32 %v1423, %v1471
      %v1504 = vadd.f32 %v1424, %v1472
      %v1505 = vadd.f32 %v1425, %v1473
      %v1507 = vperm.slane %v234, 0
      %v1509 = vadd.f32 %v1474, %v1507
      %v1510 = vadd.f32 %v1475, %v1507
      %v1511 = vadd.f32 %v1476, %v1507
      %v1512 = vadd.f32 %v1477, %v1507
      %v1513 = vadd.f32 %v1478, %v1507
      %v1514 = vadd.f32 %v1479, %v1507
      %v1515 = vadd.f32 %v1480, %v1507
      %v1516 = vadd.f32 %v1481, %v1507
      %v1517 = vadd.f32 %v1482, %v1507
      %v1518 = vadd.f32 %v1483, %v1507
      %v1519 = vadd.f32 %v1484, %v1507
      %v1520 = vadd.f32 %v1485, %v1507
      %v1521 = vadd.f32 %v1486, %v1507
      %v1522 = vadd.f32 %v1487, %v1507
      %v1523 = vadd.f32 %v1488, %v1507
      %v1524 = vadd.f32 %v1489, %v1507
      %v1525 = vadd.f32 %v1490, %v1507
      %v1526 = vadd.f32 %v1491, %v1507
      %v1527 = vadd.f32 %v1492, %v1507
      %v1528 = vadd.f32 %v1493, %v1507
      %v1529 = vadd.f32 %v1494, %v1507
      %v1530 = vadd.f32 %v1495, %v1507
      %v1531 = vadd.f32 %v1496, %v1507
      %v1532 = vadd.f32 %v1497, %v1507
      %v1533 = vadd.f32 %v1498, %v1507
      %v1534 = vadd.f32 %v1499, %v1507
      %v1535 = vadd.f32 %v1500, %v1507
      %v1536 = vadd.f32 %v1501, %v1507
      %v1537 = vadd.f32 %v1502, %v1507
      %v1538 = vadd.f32 %v1503, %v1507
      %v1539 = vadd.f32 %v1504, %v1507
      %v1540 = vadd.f32 %v1505, %v1507
      %v1541 = vmax.f32 %v1509, 0.0
      %v1542 = vmax.f32 %v1510, 0.0
      %v1543 = vmax.f32 %v1511, 0.0
      %v1544 = vmax.f32 %v1512, 0.0
      %v1545 = vmax.f32 %v1513, 0.0
      %v1546 = vmax.f32 %v1514, 0.0
      %v1547 = vmax.f32 %v1515, 0.0
      %v1548 = vmax.f32 %v1516, 0.0
      %v1549 = vmax.f32 %v1517, 0.0
      %v1550 = vmax.f32 %v1518, 0.0
      %v1551 = vmax.f32 %v1519, 0.0
      %v1552 = vmax.f32 %v1520, 0.0
      %v1553 = vmax.f32 %v1521, 0.0
      %v1554 = vmax.f32 %v1522, 0.0
      %v1555 = vmax.f32 %v1523, 0.0
      %v1556 = vmax.f32 %v1524, 0.0
      %v1557 = vmax.f32 %v1525, 0.0
      %v1558 = vmax.f32 %v1526, 0.0
      %v1559 = vmax.f32 %v1527, 0.0
      %v1560 = vmax.f32 %v1528, 0.0
      %v1561 = vmax.f32 %v1529, 0.0
      %v1562 = vmax.f32 %v1530, 0.0
      %v1563 = vmax.f32 %v1531, 0.0
      %v1564 = vmax.f32 %v1532, 0.0
      %v1565 = vmax.f32 %v1533, 0.0
      %v1566 = vmax.f32 %v1534, 0.0
      %v1567 = vmax.f32 %v1535, 0.0
      %v1568 = vmax.f32 %v1536, 0.0
      %v1569 = vmax.f32 %v1537, 0.0
      %v1570 = vmax.f32 %v1538, 0.0
      %v1571 = vmax.f32 %v1539, 0.0
      %v1572 = vmax.f32 %v1540, 0.0
      %v1573 = vpack.c.bf16 %v1541, %v1541
      %v1574 = vpack.c.bf16 %v1542, %v1542
      %v1575 = vpack.c.bf16 %v1543, %v1543
      %v1576 = vpack.c.bf16 %v1544, %v1544
      %v1577 = vpack.c.bf16 %v1545, %v1545
      %v1578 = vpack.c.bf16 %v1546, %v1546
      %v1579 = vpack.c.bf16 %v1547, %v1547
      %v1580 = vpack.c.bf16 %v1548, %v1548
      %v1581 = vpack.c.bf16 %v1549, %v1549
      %v1582 = vpack.c.bf16 %v1550, %v1550
      %v1583 = vpack.c.bf16 %v1551, %v1551
      %v1584 = vpack.c.bf16 %v1552, %v1552
      %v1585 = vpack.c.bf16 %v1553, %v1553
      %v1586 = vpack.c.bf16 %v1554, %v1554
      %v1587 = vpack.c.bf16 %v1555, %v1555
      %v1588 = vpack.c.bf16 %v1556, %v1556
      %v1589 = vpack.c.bf16 %v1557, %v1557
      %v1590 = vpack.c.bf16 %v1558, %v1558
      %v1591 = vpack.c.bf16 %v1559, %v1559
      %v1592 = vpack.c.bf16 %v1560, %v1560
      %v1593 = vpack.c.bf16 %v1561, %v1561
      %v1594 = vpack.c.bf16 %v1562, %v1562
      %v1595 = vpack.c.bf16 %v1563, %v1563
      %v1596 = vpack.c.bf16 %v1564, %v1564
      %v1597 = vpack.c.bf16 %v1565, %v1565
      %v1598 = vpack.c.bf16 %v1566, %v1566
      %v1599 = vpack.c.bf16 %v1567, %v1567
      %v1600 = vpack.c.bf16 %v1568, %v1568
      %v1601 = vpack.c.bf16 %v1569, %v1569
      %v1602 = vpack.c.bf16 %v1570, %v1570
      %v1603 = vpack.c.bf16 %v1571, %v1571
      %v1604 = vpack.c.bf16 %v1572, %v1572
      %vm1605 = vcmask 125952
      %1606 = vst.msk [vmem:[%s170] sm:$0xf] %vm1605, %v1573
      %1607 = vst.msk [vmem:[%s170 + $0x4] sm:$0xf] %vm1605, %v1574
      %1608 = vst.msk [vmem:[%s170 + $0x8] sm:$0xf] %vm1605, %v1575
      %1609 = vst.msk [vmem:[%s170 + $0xc] sm:$0xf] %vm1605, %v1576
      %1610 = vst.msk [vmem:[%s170 + $0x10] sm:$0xf] %vm1605, %v1577
      %1611 = vst.msk [vmem:[%s170 + $0x14] sm:$0xf] %vm1605, %v1578
      %1612 = vst.msk [vmem:[%s170 + $0x18] sm:$0xf] %vm1605, %v1579
      %1613 = vst.msk [vmem:[%s170 + $0x1c] sm:$0xf] %vm1605, %v1580
      %1614 = vst.msk [vmem:[%s170 + $0x20] sm:$0xf] %vm1605, %v1581
      %1615 = vst.msk [vmem:[%s170 + $0x24] sm:$0xf] %vm1605, %v1582
      %1616 = vst.msk [vmem:[%s170 + $0x28] sm:$0xf] %vm1605, %v1583
      %1617 = vst.msk [vmem:[%s170 + $0x2c] sm:$0xf] %vm1605, %v1584
      %1618 = vst.msk [vmem:[%s170 + $0x30] sm:$0xf] %vm1605, %v1585
      %1619 = vst.msk [vmem:[%s170 + $0x34] sm:$0xf] %vm1605, %v1586
      %1620 = vst.msk [vmem:[%s170 + $0x38] sm:$0xf] %vm1605, %v1587
      %1621 = vst.msk [vmem:[%s170 + $0x3c] sm:$0xf] %vm1605, %v1588
      %1622 = vst.msk [vmem:[%s170 + $0x40] sm:$0xf] %vm1605, %v1589
      %1623 = vst.msk [vmem:[%s170 + $0x44] sm:$0xf] %vm1605, %v1590
      %1624 = vst.msk [vmem:[%s170 + $0x48] sm:$0xf] %vm1605, %v1591
      %1625 = vst.msk [vmem:[%s170 + $0x4c] sm:$0xf] %vm1605, %v1592
      %1626 = vst.msk [vmem:[%s170 + $0x50] sm:$0xf] %vm1605, %v1593
      %1627 = vst.msk [vmem:[%s170 + $0x54] sm:$0xf] %vm1605, %v1594
      %1628 = vst.msk [vmem:[%s170 + $0x58] sm:$0xf] %vm1605, %v1595
      %1629 = vst.msk [vmem:[%s170 + $0x5c] sm:$0xf] %vm1605, %v1596
      %1630 = vst.msk [vmem:[%s170 + $0x60] sm:$0xf] %vm1605, %v1597
      %1631 = vst.msk [vmem:[%s170 + $0x64] sm:$0xf] %vm1605, %v1598
      %1632 = vst.msk [vmem:[%s170 + $0x68] sm:$0xf] %vm1605, %v1599
      %1633 = vst.msk [vmem:[%s170 + $0x6c] sm:$0xf] %vm1605, %v1600
      %1634 = vst.msk [vmem:[%s170 + $0x70] sm:$0xf] %vm1605, %v1601
      %1635 = vst.msk [vmem:[%s170 + $0x74] sm:$0xf] %vm1605, %v1602
      %1636 = vst.msk [vmem:[%s170 + $0x78] sm:$0xf] %vm1605, %v1603
      %1637 = vst.msk [vmem:[%s170 + $0x7c] sm:$0xf] %vm1605, %v1604
      %p1638 = scmp.lt.s32.totalorder %s14, 1
      %s1639 = scalar_select %p1638, %s14, 1
      %s1640 = smul.addr %s1639, 32
      %s1641 = smul.addr %s1640, 4
      %s1642 = scalar_lea.vmem %s3, %s1641
      // Predicated region
      $region33: #{denoiser_forward.6} parent=31 // pred_check
        %p1643 = pneg %p100
      $region34: #{denoiser_forward.6} parent=31 // pred_check_branch
        %1645 = sbr.rel (%p1643) target = $region36
      $region35: #{denoiser_forward.6} parent=31 // pred_region
        _
      $region36: #{denoiser_forward.6} parent=31 // pred_fallthru
        _
    $region32: #{denoiser_forward.6} parent=5 // pred_fallthru
      _
    %p1646 = scmp.le.s32.totalorder 2, %s9
    // Predicated region
    $region37: #{denoiser_forward.6} parent=5 // pred_check
      %p1647 = pneg %p1646
    $region38: #{denoiser_forward.6} parent=5 // pred_check_branch
      %1649 = sbr.rel (%p1647) target = $region40
    $region39: #{denoiser_forward.6} parent=5 // pred_region
      %s1650 = ssub.s32 %s9, 2
      // Predicated region
      $region41: #{denoiser_forward.6} parent=39 // pred_check
        %p1651 = pneg %p106
      $region42: #{denoiser_forward.6} parent=39 // pred_check_branch
        %1653 = sbr.rel (%p1651) target = $region44
      $region43: #{denoiser_forward.6} parent=39 // pred_region
        %p1654 = scmp.lt.s32.totalorder %s15, 1
        %s1655 = scalar_select %p1654, %s15, 1
        %s1656 = smul.addr %s1655, 32
        %s1657 = smul.addr %s1656, 4
        %s1658 = scalar_lea.vmem %s3, %s1657
      $region44: #{denoiser_forward.6} parent=39 // pred_fallthru
        _
    $region40: #{denoiser_forward.6} parent=5 // pred_fallthru
      _
  $region6: #{denoiser_forward.6} parent=0 // loop_footer
    %s13 = sadd.s32 1, %s9
  $region7: #{denoiser_forward.6} parent=0 // loop_footer_branch
    %8 = sbr.rel target = $region3
  $region8: #{denoiser_forward.6} parent=0 // loop_exit
    _

// kernel: denoiser_forward.8
$region0: #{denoiser_forward.8}
  #allocation0 [shape = 'u32[]', space=smem, size = 0x4, offset = 0x4, fixed_abs, tag = 'smem constant byte address 0x4 - core index']
  #allocation1 [shape = 'u32[72,128]{1,0:T(1,128)}', space=vmem, size = 0x9000, scoped, tag = 'internal scratch']
  %s0 = inlined_call_operand.vmem [shape: bf16[2,5,5,16], index: 0, kind: input, shape index: {}]
  %s1 = inlined_call_operand.vmem [shape: bf16[2,5,5,16], index: 1, kind: input, shape index: {}]
  %s2 = inlined_call_operand.vmem [shape: bf16[2,5,5,16], index: 2, kind: input, shape index: {}]
  %s3 = inlined_call_operand.vmem [shape: bf16[2,5,5,16], index: 3, kind: input, shape index: {}]
  %s4 = inlined_call_operand.vmem [shape: f32[9,16,16], index: 4, kind: input, shape index: {}]
  %s5 = inlined_call_operand.vmem [shape: f32[1,16], index: 5, kind: input, shape index: {}]
  %s6 = inlined_call_operand.vmem [shape: bf16[2,16,16], index: 6, kind: output, shape index: {}]
  %s7 = sld [smem:[#allocation0]]
  $region57: #{denoiser_forward.8} parent=0
    _
  %s9 = ssub.s32 1, %s7
  %s10 = scalar_select 0, %s9, %s7
  loop: start=0, step=1, limit=4
  $region2: #{denoiser_forward.8} parent=0 // loop_pre_header
    _
  $region3: #{denoiser_forward.8} parent=0 // loop_header
    %s12 = sphi 0, %s16
    %p13 = scmp.ge.s32.totalorder %s12, 4
    %s22 = sphi 0, %s24
    %s25 = sphi 0, %s22
    %s26 = sphi 0, %s25
    %s42 = sphi 0, %s26
    %s48 = sphi 0, %s50
    %s51 = sphi 0, %s48
    %s52 = sphi 0, %s51
    %s68 = sphi 0, %s52
    %s74 = sphi 0, %s76
    %s77 = sphi 0, %s74
    %s78 = sphi 0, %s77
    %s94 = sphi 0, %s78
    %s100 = sphi 0, %s102
    %s103 = sphi 0, %s100
    %s104 = sphi 0, %s103
    %s120 = sphi 0, %s104
    %s124 = sphi 0, %s124
    %s126 = sphi 0, %s124
    %s127 = sphi 0, %s126
    %s141 = sphi 0, %s127
    %s145 = sphi 0, %s145
    %s147 = sphi 0, %s145
    %s148 = sphi 0, %s147
    %s162 = sphi 0, %s148
    %s168 = sphi 0, %s170
    %s171 = sphi 0, %s168
    %s172 = sphi 0, %s171
    %s188 = sphi 0, %s172
  $region4: #{denoiser_forward.8} parent=0 // loop_header_branch
    %15 = sbr.rel (%p13) target = $region8
  $region5: #{denoiser_forward.8} parent=0 // loop_body
    %s17 = ssub.s32 %s12, 1
    %s18 = ssub.s32 %s12, 2
    %s19 = sadd.s32 %s12, 1
    %s20 = ssub.s32 %s12, %s19
    %p21 = scmp.eq.s32.totalorder %s20, 0
    %s23 = sadd.s32 %s22, 1
    %s24 = scalar_select %p21, %s22, %s23
    %p27 = pneg %p21
    %p28 = scmp.eq.s32.totalorder %s12, 1
    %p29 = por %p27, %p28
    %p30 = scmp.ne.s32.totalorder %s22, %s25
    %p31 = scmp.eq.s32.totalorder %s12, 0
    %p32 = por %p30, %p31
    %p33 = scmp.ne.s32.totalorder %s22, %s25
    %p34 = scmp.eq.s32.totalorder %s17, 1
    %p35 = por %p33, %p34
    %p36 = scmp.ne.s32.totalorder %s25, %s26
    %p37 = scmp.eq.s32.totalorder %s17, 0
    %p38 = por %p36, %p37
    %p39 = scmp.ne.s32.totalorder %s25, %s26
    %p40 = scmp.eq.s32.totalorder %s18, 1
    %p41 = por %p39, %p40
    %p43 = scmp.ne.s32.totalorder %s26, %s42
    %p44 = scmp.eq.s32.totalorder %s18, 0
    %p45 = por %p43, %p44
    %s46 = ssub.s32 %s12, %s19
    %p47 = scmp.eq.s32.totalorder %s46, 0
    %s49 = sadd.s32 %s48, 1
    %s50 = scalar_select %p47, %s48, %s49
    %p53 = pneg %p47
    %p54 = scmp.eq.s32.totalorder %s12, 1
    %p55 = por %p53, %p54
    %p56 = scmp.ne.s32.totalorder %s48, %s51
    %p57 = scmp.eq.s32.totalorder %s12, 0
    %p58 = por %p56, %p57
    %p59 = scmp.ne.s32.totalorder %s48, %s51
    %p60 = scmp.eq.s32.totalorder %s17, 1
    %p61 = por %p59, %p60
    %p62 = scmp.ne.s32.totalorder %s51, %s52
    %p63 = scmp.eq.s32.totalorder %s17, 0
    %p64 = por %p62, %p63
    %p65 = scmp.ne.s32.totalorder %s51, %s52
    %p66 = scmp.eq.s32.totalorder %s18, 1
    %p67 = por %p65, %p66
    %p69 = scmp.ne.s32.totalorder %s52, %s68
    %p70 = scmp.eq.s32.totalorder %s18, 0
    %p71 = por %p69, %p70
    %s72 = ssub.s32 %s12, %s19
    %p73 = scmp.eq.s32.totalorder %s72, 0
    %s75 = sadd.s32 %s74, 1
    %s76 = scalar_select %p73, %s74, %s75
    %p79 = pneg %p73
    %p80 = scmp.eq.s32.totalorder %s12, 1
    %p81 = por %p79, %p80
    %p82 = scmp.ne.s32.totalorder %s74, %s77
    %p83 = scmp.eq.s32.totalorder %s12, 0
    %p84 = por %p82, %p83
    %p85 = scmp.ne.s32.totalorder %s74, %s77
    %p86 = scmp.eq.s32.totalorder %s17, 1
    %p87 = por %p85, %p86
    %p88 = scmp.ne.s32.totalorder %s77, %s78
    %p89 = scmp.eq.s32.totalorder %s17, 0
    %p90 = por %p88, %p89
    %p91 = scmp.ne.s32.totalorder %s77, %s78
    %p92 = scmp.eq.s32.totalorder %s18, 1
    %p93 = por %p91, %p92
    %p95 = scmp.ne.s32.totalorder %s78, %s94
    %p96 = scmp.eq.s32.totalorder %s18, 0
    %p97 = por %p95, %p96
    %s98 = ssub.s32 %s12, %s19
    %p99 = scmp.eq.s32.totalorder %s98, 0
    %s101 = sadd.s32 %s100, 1
    %s102 = scalar_select %p99, %s100, %s101
    %p105 = pneg %p99
    %p106 = scmp.eq.s32.totalorder %s12, 1
    %p107 = por %p105, %p106
    %p108 = scmp.ne.s32.totalorder %s100, %s103
    %p109 = scmp.eq.s32.totalorder %s12, 0
    %p110 = por %p108, %p109
    %p111 = scmp.ne.s32.totalorder %s100, %s103
    %p112 = scmp.eq.s32.totalorder %s17, 1
    %p113 = por %p111, %p112
    %p114 = scmp.ne.s32.totalorder %s103, %s104
    %p115 = scmp.eq.s32.totalorder %s17, 0
    %p116 = por %p114, %p115
    %p117 = scmp.ne.s32.totalorder %s103, %s104
    %p118 = scmp.eq.s32.totalorder %s18, 1
    %p119 = por %p117, %p118
    %p121 = scmp.ne.s32.totalorder %s104, %s120
    %p122 = scmp.eq.s32.totalorder %s18, 0
    %p123 = por %p121, %p122
    %s125 = sadd.s32 %s124, 1
    %p128 = scmp.eq.s32.totalorder %s12, 1
    %p129 = scmp.ne.s32.totalorder %s124, %s126
    %p130 = scmp.eq.s32.totalorder %s12, 0
    %p131 = por %p129, %p130
    %p132 = scmp.ne.s32.totalorder %s124, %s126
    %p133 = scmp.eq.s32.totalorder %s17, 1
    %p134 = por %p132, %p133
    %p135 = scmp.ne.s32.totalorder %s126, %s127
    %p136 = scmp.eq.s32.totalorder %s17, 0
    %p137 = por %p135, %p136
    %p138 = scmp.ne.s32.totalorder %s126, %s127
    %p139 = scmp.eq.s32.totalorder %s18, 1
    %p140 = por %p138, %p139
    %p142 = scmp.ne.s32.totalorder %s127, %s141
    %p143 = scmp.eq.s32.totalorder %s18, 0
    %p144 = por %p142, %p143
    %s146 = sadd.s32 %s145, 1
    %p149 = scmp.eq.s32.totalorder %s12, 1
    %p150 = scmp.ne.s32.totalorder %s145, %s147
    %p151 = scmp.eq.s32.totalorder %s12, 0
    %p152 = por %p150, %p151
    %p153 = scmp.ne.s32.totalorder %s145, %s147
    %p154 = scmp.eq.s32.totalorder %s17, 1
    %p155 = por %p153, %p154
    %p156 = scmp.ne.s32.totalorder %s147, %s148
    %p157 = scmp.eq.s32.totalorder %s17, 0
    %p158 = por %p156, %p157
    %p159 = scmp.ne.s32.totalorder %s147, %s148
    %p160 = scmp.eq.s32.totalorder %s18, 1
    %p161 = por %p159, %p160
    %p163 = scmp.ne.s32.totalorder %s148, %s162
    %p164 = scmp.eq.s32.totalorder %s18, 0
    %p165 = por %p163, %p164
    %s166 = ssub.s32 %s12, %s19
    %p167 = scmp.eq.s32.totalorder %s166, 0
    %s169 = sadd.s32 %s168, 1
    %s170 = scalar_select %p167, %s168, %s169
    %p173 = pneg %p167
    %p174 = scmp.eq.s32.totalorder %s12, 1
    %p175 = por %p173, %p174
    %p176 = scmp.ne.s32.totalorder %s168, %s171
    %p177 = scmp.eq.s32.totalorder %s12, 0
    %p178 = por %p176, %p177
    %p179 = scmp.ne.s32.totalorder %s168, %s171
    %p180 = scmp.eq.s32.totalorder %s17, 1
    %p181 = por %p179, %p180
    %p182 = scmp.ne.s32.totalorder %s171, %s172
    %p183 = scmp.eq.s32.totalorder %s17, 0
    %p184 = por %p182, %p183
    %p185 = scmp.ne.s32.totalorder %s171, %s172
    %p186 = scmp.eq.s32.totalorder %s18, 1
    %p187 = por %p185, %p186
    %p189 = scmp.ne.s32.totalorder %s172, %s188
    %p190 = scmp.eq.s32.totalorder %s18, 0
    %p191 = por %p189, %p190
    %p192 = scmp.le.s32.totalorder 1, %s12
    %p193 = scmp.lt.s32.totalorder %s12, 3
    %p194 = pnand %p192, %p193
    %p195 = pneg %p194
    // Predicated region
    $region9: #{denoiser_forward.8} parent=5 // pred_check
      _
    $region10: #{denoiser_forward.8} parent=5 // pred_check_branch
      %197 = sbr.rel (%p194) target = $region12
    $region11: #{denoiser_forward.8} parent=5 // pred_region
      %s198 = ssub.s32 %s12, 1
      // Predicated region
      $region13: #{denoiser_forward.8} parent=11 // pred_check
        %p199 = pneg %p137
      $region14: #{denoiser_forward.8} parent=11 // pred_check_branch
        %201 = sbr.rel (%p199) target = $region16
      $region15: #{denoiser_forward.8} parent=11 // pred_region
        _
      $region16: #{denoiser_forward.8} parent=11 // pred_fallthru
        _
      // Predicated region
      $region17: #{denoiser_forward.8} parent=11 // pred_check
        %p202 = pneg %p158
      $region18: #{denoiser_forward.8} parent=11 // pred_check_branch
        %204 = sbr.rel (%p202) target = $region20
      $region19: #{denoiser_forward.8} parent=11 // pred_region
        _
      $region20: #{denoiser_forward.8} parent=11 // pred_fallthru
        _
    $region12: #{denoiser_forward.8} parent=5 // pred_fallthru
      _
    %p205 = scmp.lt.s32.totalorder %s12, 2
    // Predicated region
    $region21: #{denoiser_forward.8} parent=5 // pred_check
      %p206 = pneg %p205
    $region22: #{denoiser_forward.8} parent=5 // pred_check_branch
      %208 = sbr.rel (%p206) target = $region24
    $region23: #{denoiser_forward.8} parent=5 // pred_region
      // Predicated region
      $region25: #{denoiser_forward.8} parent=23 // pred_check
        %p209 = pneg %p32
      $region26: #{denoiser_forward.8} parent=23 // pred_check_branch
        %211 = sbr.rel (%p209) target = $region28
      $region27: #{denoiser_forward.8} parent=23 // pred_region
        %p212 = scmp.lt.s32.totalorder %s12, 1
        %s213 = scalar_select %p212, %s12, 1
        %s214 = smul.addr %s213, 5
        %s215 = smul.addr %s214, 4
        %s216 = scalar_lea.vmem %s0, %s215
      $region28: #{denoiser_forward.8} parent=23 // pred_fallthru
        _
      // Predicated region
      $region29: #{denoiser_forward.8} parent=23 // pred_check
        %p217 = pneg %p58
      $region30: #{denoiser_forward.8} parent=23 // pred_check_branch
        %219 = sbr.rel (%p217) target = $region32
      $region31: #{denoiser_forward.8} parent=23 // pred_region
        %p220 = scmp.lt.s32.totalorder %s12, 1
        %s221 = scalar_select %p220, %s12, 1
        %s222 = smul.addr %s221, 5
        %s223 = smul.addr %s222, 4
        %s224 = scalar_lea.vmem %s1, %s223
      $region32: #{denoiser_forward.8} parent=23 // pred_fallthru
        _
      // Predicated region
      $region33: #{denoiser_forward.8} parent=23 // pred_check
        %p225 = pneg %p84
      $region34: #{denoiser_forward.8} parent=23 // pred_check_branch
        %227 = sbr.rel (%p225) target = $region36
      $region35: #{denoiser_forward.8} parent=23 // pred_region
        %p228 = scmp.lt.s32.totalorder %s12, 1
        %s229 = scalar_select %p228, %s12, 1
        %s230 = smul.addr %s229, 5
        %s231 = smul.addr %s230, 4
        %s232 = scalar_lea.vmem %s2, %s231
      $region36: #{denoiser_forward.8} parent=23 // pred_fallthru
        _
      // Predicated region
      $region37: #{denoiser_forward.8} parent=23 // pred_check
        %p233 = pneg %p110
      $region38: #{denoiser_forward.8} parent=23 // pred_check_branch
        %235 = sbr.rel (%p233) target = $region40
      $region39: #{denoiser_forward.8} parent=23 // pred_region
        %p236 = scmp.lt.s32.totalorder %s12, 1
        %s237 = scalar_select %p236, %s12, 1
        %s238 = smul.addr %s237, 5
        %s239 = smul.addr %s238, 4
        %s240 = scalar_lea.vmem %s3, %s239
      $region40: #{denoiser_forward.8} parent=23 // pred_fallthru
        _
    $region24: #{denoiser_forward.8} parent=5 // pred_fallthru
      _
    %p241 = scmp.le.s32.totalorder 1, %s12
    %p242 = scmp.lt.s32.totalorder %s12, 3
    %p243 = pnand %p241, %p242
    %p244 = pneg %p243
    // Predicated region
    $region41: #{denoiser_forward.8} parent=5 // pred_check
      _
    $region42: #{denoiser_forward.8} parent=5 // pred_check_branch
      %246 = sbr.rel (%p243) target = $region44
    $region43: #{denoiser_forward.8} parent=5 // pred_region
      %s247 = ssub.s32 %s12, 1
      %p248 = scmp.lt.s32.totalorder %s17, 1
      %s249 = scalar_select %p248, %s17, 1
      %s250 = smul.addr %s249, 5
      %s251 = smul.addr %s250, 4
      %s252 = scalar_lea.vmem %s0, %s251
      %p253 = pneg %p38
      %p254 = pneg %p35
      %p255 = scmp.lt.s32.totalorder %s17, 1
      %s256 = scalar_select %p255, %s17, 1
      %s257 = smul.addr %s256, 5
      %s258 = smul.addr %s257, 4
      %s259 = scalar_lea.vmem %s1, %s258
      %p260 = pneg %p64
      %p261 = pneg %p61
      %p262 = scmp.lt.s32.totalorder %s17, 1
      %s263 = scalar_select %p262, %s17, 1
      %s264 = smul.addr %s263, 5
      %s265 = smul.addr %s264, 4
      %s266 = scalar_lea.vmem %s2, %s265
      %p267 = pneg %p90
      %p268 = pneg %p87
      %p269 = scmp.lt.s32.totalorder %s17, 1
      %s270 = scalar_select %p269, %s17, 1
      %s271 = smul.addr %s270, 5
      %s272 = smul.addr %s271, 4
      %s273 = scalar_lea.vmem %s3, %s272
      %p274 = pneg %p116
      %p275 = pneg %p113
      %p276 = pneg %p137
      %p277 = pneg %p134
      %p278 = pneg %p158
      %p279 = pneg %p155
      %p280 = pneg %p184
      %p281 = pneg %p181
      %p282 = scmp.lt.s32.totalorder %s17, 1
      %s283 = scalar_select %p282, %s17, 1
      %s284 = smul.addr %s283, 2
      %s285 = smul.addr %s284, 4
      %s286 = scalar_lea.vmem %s6, %s285
      %p287 = scmp.lt.s32.totalorder %s17, 1
      %s288 = scalar_select %p287, %s17, 1
      %s289 = smul.addr %s288, 5
      %s290 = smul.addr %s289, 4
      %s291 = scalar_lea.vmem %s0, %s290
      %p292 = scmp.lt.s32.totalorder %s17, 1
      %s293 = scalar_select %p292, %s17, 1
      %s294 = smul.addr %s293, 5
      %s295 = smul.addr %s294, 4
      %s296 = scalar_lea.vmem %s1, %s295
      %p297 = scmp.lt.s32.totalorder %s17, 1
      %s298 = scalar_select %p297, %s17, 1
      %s299 = smul.addr %s298, 5
      %s300 = smul.addr %s299, 4
      %s301 = scalar_lea.vmem %s2, %s300
      %p302 = scmp.lt.s32.totalorder %s17, 1
      %s303 = scalar_select %p302, %s17, 1
      %s304 = smul.addr %s303, 5
      %s305 = smul.addr %s304, 4
      %s306 = scalar_lea.vmem %s3, %s305
      %p307 = scmp.lt.s32.totalorder %s17, 1
      %s308 = scalar_select %p307, %s17, 1
      %s309 = smul.addr %s308, 2
      %s310 = smul.addr %s309, 4
      %s311 = scalar_lea.vmem %s6, %s310
      %v312 = vld [vmem:[%s291] sm:$0x7]
      %v313 = vld [vmem:[%s291 + $0x4] sm:$0x7]
      %v314 = vld [vmem:[%s291 + $0x8] sm:$0x7]
      %v315 = vld [vmem:[%s291 + $0xc] sm:$0x7]
      %v316 = vld [vmem:[%s291 + $0x10] sm:$0x7]
      %v317 = vunpack.c.l.bf16 %v312
      %v318 = vunpack.c.l.bf16 %v313
      %v319 = vunpack.c.l.bf16 %v314
      %v320 = vunpack.c.l.bf16 %v315
      %v321 = vunpack.c.l.bf16 %v316
      %v322 = vld [vmem:[%s296] sm:$0x7]
      %v323 = vld [vmem:[%s296 + $0x4] sm:$0x7]
      %v324 = vld [vmem:[%s296 + $0x8] sm:$0x7]
      %v325 = vld [vmem:[%s296 + $0xc] sm:$0x7]
      %v326 = vld [vmem:[%s296 + $0x10] sm:$0x7]
      %v327 = vunpack.c.l.bf16 %v322
      %v328 = vunpack.c.l.bf16 %v323
      %v329 = vunpack.c.l.bf16 %v324
      %v330 = vunpack.c.l.bf16 %v325
      %v331 = vunpack.c.l.bf16 %v326
      %v332 = vld [vmem:[%s301] sm:$0x7]
      %v333 = vld [vmem:[%s301 + $0x4] sm:$0x7]
      %v334 = vld [vmem:[%s301 + $0x8] sm:$0x7]
      %v335 = vld [vmem:[%s301 + $0xc] sm:$0x7]
      %v336 = vunpack.c.l.bf16 %v332
      %v337 = vunpack.c.l.bf16 %v333
      %v338 = vunpack.c.l.bf16 %v334
      %v339 = vunpack.c.l.bf16 %v335
      %v340 = vld [vmem:[%s306] sm:$0x7]
      %v341 = vld [vmem:[%s306 + $0x4] sm:$0x7]
      %v342 = vld [vmem:[%s306 + $0x8] sm:$0x7]
      %v343 = vld [vmem:[%s306 + $0xc] sm:$0x7]
      %v344 = vunpack.c.l.bf16 %v340
      %v345 = vunpack.c.l.bf16 %v341
      %v346 = vunpack.c.l.bf16 %v342
      %v347 = vunpack.c.l.bf16 %v343
      %v348 = vld [vmem:[%s4] sm:$0xff]
      %v349 = vld [vmem:[%s4 + $0x8] sm:$0xff]
      %v350 = vld [vmem:[%s4 + $0x10] sm:$0xff]
      %v351 = vld [vmem:[%s4 + $0x18] sm:$0xff]
      %v352 = vld [vmem:[%s4 + $0x20] sm:$0xff]
      %v353 = vld [vmem:[%s4 + $0x28] sm:$0xff]
      %v354 = vld [vmem:[%s4 + $0x30] sm:$0xff]
      %v355 = vld [vmem:[%s4 + $0x38] sm:$0xff]
      %v356 = vld [vmem:[%s4 + $0x40] sm:$0xff]
      %v357 = vld [vmem:[%s4 + $0x48] sm:$0xff]
      %v358 = vld [vmem:[%s4 + $0x50] sm:$0xff]
      %v359 = vld [vmem:[%s4 + $0x58] sm:$0xff]
      %v360 = vld [vmem:[%s4 + $0x60] sm:$0xff]
      %v361 = vld [vmem:[%s4 + $0x68] sm:$0xff]
      %v362 = vld [vmem:[%s4 + $0x70] sm:$0xff]
      %v363 = vld [vmem:[%s4 + $0x78] sm:$0xff]
      %v364 = vld [vmem:[%s4 + $0x80] sm:$0xff]
      %v365 = vld [vmem:[%s4 + $0x88] sm:$0xff]
      %v366 = vld [vmem:[%s5] sm:$0x1]
      %371 = vst [vmem:[#allocation1] ss:$2 sm:$0xff] %v327
      %s372 = scalar_lea.vmem [#allocation1], 1
      %373 = vst [vmem:[%s372] ss:$2 sm:$0xff] %v328
      %s374 = scalar_lea.vmem [#allocation1], 16
      %375 = vst [vmem:[%s374] ss:$2 sm:$0xff] %v329
      %s376 = scalar_lea.vmem [#allocation1], 17
      %377 = vst [vmem:[%s376] ss:$2 sm:$0xff] %v330
      %v378 = vld.sshfl [vmem:[#allocation1] sm:$0xff pattern:$0x75316420]
      %v379 = vld.sshfl [vmem:[#allocation1 + $0x10] sm:$0xff pattern:$0x75316420]
      %vm380 = vcmask 130048
      %v381 = vsel %vm380, %v378, 0
      %v383 = vsel %vm380, %v379, 0
      %385 = vmatpush.msra.mxu0 0.0
      %386 = vmatpush.msra.mxu0 0.0
      %387 = vmatpush.msra.mxu0 0.0
      %388 = vmatpush.msra.mxu0 0.0
      %389 = vmatpush.msra.mxu0 0.0
      %390 = vmatpush.msra.mxu0 0.0
      %391 = vmatpush.msra.mxu0 0.0
      %392 = vmatpush.msra.mxu0 0.0
      %393 = vmatpush.msra.mxu0 0.0
      %394 = vmatpush.msra.mxu0 0.0
      %395 = vmatpush.msra.mxu0 0.0
      %396 = vmatpush.msra.mxu0 0.0
      %397 = vmatpush.msra.mxu0 0.0
      %398 = vmatpush.msra.mxu0 0.0
      %399 = vmatpush.msra.mxu0 %v351
      %400 = vmatpush.msra.mxu0 %v350
      %401 = vmatmul.f32.gmra.mxu0 %v381
      %v402 = vpop.f32.mrf.mxu0
      %v403 = vadd.f32 0.0, %v402
      %404 = vmatmul.f32.gmra.mxu0 %v383
      %v405 = vpop.f32.mrf.mxu0
      %v406 = vadd.f32 0.0, %v405
      %407 = vdwg.mxu0
      %412 = vst [vmem:[#allocation1] ss:$2 sm:$0xff] %v317
      %s413 = scalar_lea.vmem [#allocation1], 1
      %414 = vst [vmem:[%s413] ss:$2 sm:$0xff] %v318
      %s415 = scalar_lea.vmem [#allocation1], 16
      %416 = vst [vmem:[%s415] ss:$2 sm:$0xff] %v319
      %s417 = scalar_lea.vmem [#allocation1], 17
      %418 = vst [vmem:[%s417] ss:$2 sm:$0xff] %v320
      %v419 = vld.sshfl [vmem:[#allocation1] sm:$0xff pattern:$0x75316420]
      %v420 = vld.sshfl [vmem:[#allocation1 + $0x10] sm:$0xff pattern:$0x75316420]
      %v421 = vsel %vm380, %v419, 0
      %v423 = vsel %vm380, %v420, 0
      %425 = vmatpush.msra.mxu0 0.0
      %426 = vmatpush.msra.mxu0 0.0
      %427 = vmatpush.msra.mxu0 0.0
      %428 = vmatpush.msra.mxu0 0.0
      %429 = vmatpush.msra.mxu0 0.0
      %430 = vmatpush.msra.mxu0 0.0
      %431 = vmatpush.msra.mxu0 0.0
      %432 = vmatpush.msra.mxu0 0.0
      %433 = vmatpush.msra.mxu0 0.0
      %434 = vmatpush.msra.mxu0 0.0
      %435 = vmatpush.msra.mxu0 0.0
      %436 = vmatpush.msra.mxu0 0.0
      %437 = vmatpush.msra.mxu0 0.0
      %438 = vmatpush.msra.mxu0 0.0
      %439 = vmatpush.msra.mxu0 %v349
      %440 = vmatpush.msra.mxu0 %v348
      %441 = vmatmul.f32.gmra.mxu0 %v421
      %v442 = vpop.f32.mrf.mxu0
      %v443 = vadd.f32 %v403, %v442
      %444 = vmatmul.f32.gmra.mxu0 %v423
      %v445 = vpop.f32.mrf.mxu0
      %v446 = vadd.f32 %v406, %v445
      %447 = vdwg.mxu0
      %v448 = vrot.slane %v317, 4
      %v449 = vrot.slane %v318, 4
      %v450 = vrot.slane %v319, 4
      %v451 = vrot.slane %v320, 4
      %vm452 = vcmask 1042432
      %vm453 = vcmask 1046532
      %vm454 = vmor %vm452, %vm453
      %v455 = vrot.slane %v317, 5
      %v456 = vrot.slane %v455, 4
      %v457 = vrot.slane %v448, 5
      %v458 = vsel %vm454, %v456, %v457
      %v459 = vrot.slane %v318, 5
      %v460 = vrot.slane %v459, 4
      %v461 = vrot.slane %v449, 5
      %v462 = vsel %vm454, %v460, %v461
      %v463 = vrot.slane %v319, 5
      %v464 = vrot.slane %v463, 4
      %v465 = vrot.slane %v450, 5
      %v466 = vsel %vm454, %v464, %v465
      %v467 = vrot.slane %v320, 5
      %v468 = vrot.slane %v467, 4
      %v469 = vrot.slane %v451, 5
      %v470 = vsel %vm454, %v468, %v469
      %471 = vst [vmem:[#allocation1] ss:$2 sm:$0xff] %v458
      %s472 = scalar_lea.vmem [#allocation1], 1
      %473 = vst [vmem:[%s472] ss:$2 sm:$0xff] %v462
      %s474 = scalar_lea.vmem [#allocation1], 16
      %475 = vst [vmem:[%s474] ss:$2 sm:$0xff] %v466
      %s476 = scalar_lea.vmem [#allocation1], 17
      %477 = vst [vmem:[%s476] ss:$2 sm:$0xff] %v470
      %v478 = vld.sshfl [vmem:[#allocation1] sm:$0xff pattern:$0x75316420]
      %v479 = vld.sshfl [vmem:[#allocation1 + $0x10] sm:$0xff pattern:$0x75316420]
      %v480 = vsel %vm380, %v478, 0
      %v482 = vsel %vm380, %v479, 0
      %484 = vmatpush.msra.mxu0 0.0
      %485 = vmatpush.msra.mxu0 0.0
      %486 = vmatpush.msra.mxu0 0.0
      %487 = vmatpush.msra.mxu0 0.0
      %488 = vmatpush.msra.mxu0 0.0
      %489 = vmatpush.msra.mxu0 0.0
      %490 = vmatpush.msra.mxu0 0.0
      %491 = vmatpush.msra.mxu0 0.0
      %492 = vmatpush.msra.mxu0 0.0
      %493 = vmatpush.msra.mxu0 0.0
      %494 = vmatpush.msra.mxu0 0.0
      %495 = vmatpush.msra.mxu0 0.0
      %496 = vmatpush.msra.mxu0 0.0
      %497 = vmatpush.msra.mxu0 0.0
      %498 = vmatpush.msra.mxu0 %v353
      %499 = vmatpush.msra.mxu0 %v352
      %500 = vmatmul.f32.gmra.mxu0 %v480
      %v501 = vpop.f32.mrf.mxu0
      %v502 = vadd.f32 0.0, %v501
      %503 = vmatmul.f32.gmra.mxu0 %v482
      %v504 = vpop.f32.mrf.mxu0
      %v505 = vadd.f32 0.0, %v504
      %506 = vdwg.mxu0
      %v507 = vadd.f32 %v443, %v502
      %v508 = vadd.f32 %v446, %v505
      %513 = vst [vmem:[#allocation1] ss:$2 sm:$0xff] %v336
      %s514 = scalar_lea.vmem [#allocation1], 1
      %515 = vst [vmem:[%s514] ss:$2 sm:$0xff] %v337
      %s516 = scalar_lea.vmem [#allocation1], 16
      %517 = vst [vmem:[%s516] ss:$2 sm:$0xff] %v338
      %s518 = scalar_lea.vmem [#allocation1], 17
      %519 = vst [vmem:[%s518] ss:$2 sm:$0xff] %v339
      %v520 = vld.sshfl [vmem:[#allocation1] sm:$0xff pattern:$0x75316420]
      %v521 = vld.sshfl [vmem:[#allocation1 + $0x10] sm:$0xff pattern:$0x75316420]
      %v522 = vsel %vm380, %v520, 0
      %v524 = vsel %vm380, %v521, 0
      %526 = vmatpush.msra.mxu0 0.0
      %527 = vmatpush.msra.mxu0 0.0
      %528 = vmatpush.msra.mxu0 0.0
      %529 = vmatpush.msra.mxu0 0.0
      %530 = vmatpush.msra.mxu0 0.0
      %531 = vmatpush.msra.mxu0 0.0
      %532 = vmatpush.msra.mxu0 0.0
      %533 = vmatpush.msra.mxu0 0.0
      %534 = vmatpush.msra.mxu0 0.0
      %535 = vmatpush.msra.mxu0 0.0
      %536 = vmatpush.msra.mxu0 0.0
      %537 = vmatpush.msra.mxu0 0.0
      %538 = vmatpush.msra.mxu0 0.0
      %539 = vmatpush.msra.mxu0 0.0
      %540 = vmatpush.msra.mxu0 %v355
      %541 = vmatpush.msra.mxu0 %v354
      %542 = vmatmul.f32.gmra.mxu0 %v522
      %v543 = vpop.f32.mrf.mxu0
      %v544 = vadd.f32 0.0, %v543
      %545 = vmatmul.f32.gmra.mxu0 %v524
      %v546 = vpop.f32.mrf.mxu0
      %v547 = vadd.f32 0.0, %v546
      %548 = vdwg.mxu0
      %v549 = vadd.f32 %v507, %v544
      %v550 = vadd.f32 %v508, %v547
      %555 = vst [vmem:[#allocation1] ss:$2 sm:$0xff] %v344
      %s556 = scalar_lea.vmem [#allocation1], 1
      %557 = vst [vmem:[%s556] ss:$2 sm:$0xff] %v345
      %s558 = scalar_lea.vmem [#allocation1], 16
      %559 = vst [vmem:[%s558] ss:$2 sm:$0xff] %v346
      %s560 = scalar_lea.vmem [#allocation1], 17
      %561 = vst [vmem:[%s560] ss:$2 sm:$0xff] %v347
      %v562 = vld.sshfl [vmem:[#allocation1] sm:$0xff pattern:$0x75316420]
      %v563 = vld.sshfl [vmem:[#allocation1 + $0x10] sm:$0xff pattern:$0x75316420]
      %v564 = vsel %vm380, %v562, 0
      %v566 = vsel %vm380, %v563, 0
      %568 = vmatpush.msra.mxu0 0.0
      %569 = vmatpush.msra.mxu0 0.0
      %570 = vmatpush.msra.mxu0 0.0
      %571 = vmatpush.msra.mxu0 0.0
      %572 = vmatpush.msra.mxu0 0.0
      %573 = vmatpush.msra.mxu0 0.0
      %574 = vmatpush.msra.mxu0 0.0
      %575 = vmatpush.msra.mxu0 0.0
      %576 = vmatpush.msra.mxu0 0.0
      %577 = vmatpush.msra.mxu0 0.0
      %578 = vmatpush.msra.mxu0 0.0
      %579 = vmatpush.msra.mxu0 0.0
      %580 = vmatpush.msra.mxu0 0.0
      %581 = vmatpush.msra.mxu0 0.0
      %582 = vmatpush.msra.mxu0 %v357
      %583 = vmatpush.msra.mxu0 %v356
      %584 = vmatmul.f32.gmra.mxu0 %v564
      %v585 = vpop.f32.mrf.mxu0
      %v586 = vadd.f32 0.0, %v585
      %587 = vmatmul.f32.gmra.mxu0 %v566
      %v588 = vpop.f32.mrf.mxu0
      %v589 = vadd.f32 0.0, %v588
      %590 = vdwg.mxu0
      %v591 = vadd.f32 %v549, %v586
      %v592 = vadd.f32 %v550, %v589
      %v593 = vrot.slane %v336, 4
      %v594 = vrot.slane %v337, 4
      %v595 = vrot.slane %v338, 4
      %v596 = vrot.slane %v339, 4
      %v597 = vrot.slane %v336, 5
      %v598 = vrot.slane %v597, 4
      %v599 = vrot.slane %v593, 5
      %v600 = vsel %vm454, %v598, %v599
      %v601 = vrot.slane %v337, 5
      %v602 = vrot.slane %v601, 4
      %v603 = vrot.slane %v594, 5
      %v604 = vsel %vm454, %v602, %v603
      %v605 = vrot.slane %v338, 5
      %v606 = vrot.slane %v605, 4
      %v607 = vrot.slane %v595, 5
      %v608 = vsel %vm454, %v606, %v607
      %v609 = vrot.slane %v339, 5
      %v610 = vrot.slane %v609, 4
      %v611 = vrot.slane %v596, 5
      %v612 = vsel %vm454, %v610, %v611
      %613 = vst [vmem:[#allocation1] ss:$2 sm:$0xff] %v600
      %s614 = scalar_lea.vmem [#allocation1], 1
      %615 = vst [vmem:[%s614] ss:$2 sm:$0xff] %v604
      %s616 = scalar_lea.vmem [#allocation1], 16
      %617 = vst [vmem:[%s616] ss:$2 sm:$0xff] %v608
      %s618 = scalar_lea.vmem [#allocation1], 17
      %619 = vst [vmem:[%s618] ss:$2 sm:$0xff] %v612
      %v620 = vld.sshfl [vmem:[#allocation1] sm:$0xff pattern:$0x75316420]
      %v621 = vld.sshfl [vmem:[#allocation1 + $0x10] sm:$0xff pattern:$0x75316420]
      %v622 = vsel %vm380, %v620, 0
      %v624 = vsel %vm380, %v621, 0
      %626 = vmatpush.msra.mxu0 0.0
      %627 = vmatpush.msra.mxu0 0.0
      %628 = vmatpush.msra.mxu0 0.0
      %629 = vmatpush.msra.mxu0 0.0
      %630 = vmatpush.msra.mxu0 0.0
      %631 = vmatpush.msra.mxu0 0.0
      %632 = vmatpush.msra.mxu0 0.0
      %633 = vmatpush.msra.mxu0 0.0
      %634 = vmatpush.msra.mxu0 0.0
      %635 = vmatpush.msra.mxu0 0.0
      %636 = vmatpush.msra.mxu0 0.0
      %637 = vmatpush.msra.mxu0 0.0
      %638 = vmatpush.msra.mxu0 0.0
      %639 = vmatpush.msra.mxu0 0.0
      %640 = vmatpush.msra.mxu0 %v359
      %641 = vmatpush.msra.mxu0 %v358
      %642 = vmatmul.f32.gmra.mxu0 %v622
      %v643 = vpop.f32.mrf.mxu0
      %v644 = vadd.f32 0.0, %v643
      %645 = vmatmul.f32.gmra.mxu0 %v624
      %v646 = vpop.f32.mrf.mxu0
      %v647 = vadd.f32 0.0, %v646
      %648 = vdwg.mxu0
      %v649 = vadd.f32 %v591, %v644
      %v650 = vadd.f32 %v592, %v647
      %652 = vst [vmem:[#allocation1] ss:$2 sm:$0xff] %v318
      %s653 = scalar_lea.vmem [#allocation1], 1
      %654 = vst [vmem:[%s653] ss:$2 sm:$0xff] %v319
      %s655 = scalar_lea.vmem [#allocation1], 16
      %656 = vst [vmem:[%s655] ss:$2 sm:$0xff] %v320
      %s657 = scalar_lea.vmem [#allocation1], 17
      %658 = vst [vmem:[%s657] ss:$2 sm:$0xff] %v321
      %v659 = vld.sshfl [vmem:[#allocation1] sm:$0xff pattern:$0x75316420]
      %v660 = vld.sshfl [vmem:[#allocation1 + $0x10] sm:$0xff pattern:$0x75316420]
      %v661 = vsel %vm380, %v659, 0
      %v663 = vsel %vm380, %v660, 0
      %665 = vmatpush.msra.mxu0 0.0
      %666 = vmatpush.msra.mxu0 0.0
      %667 = vmatpush.msra.mxu0 0.0
      %668 = vmatpush.msra.mxu0 0.0
      %669 = vmatpush.msra.mxu0 0.0
      %670 = vmatpush.msra.mxu0 0.0
      %671 = vmatpush.msra.mxu0 0.0
      %672 = vmatpush.msra.mxu0 0.0
      %673 = vmatpush.msra.mxu0 0.0
      %674 = vmatpush.msra.mxu0 0.0
      %675 = vmatpush.msra.mxu0 0.0
      %676 = vmatpush.msra.mxu0 0.0
      %677 = vmatpush.msra.mxu0 0.0
      %678 = vmatpush.msra.mxu0 0.0
      %679 = vmatpush.msra.mxu0 %v361
      %680 = vmatpush.msra.mxu0 %v360
      %681 = vmatmul.f32.gmra.mxu0 %v661
      %v682 = vpop.f32.mrf.mxu0
      %v683 = vadd.f32 0.0, %v682
      %684 = vmatmul.f32.gmra.mxu0 %v663
      %v685 = vpop.f32.mrf.mxu0
      %v686 = vadd.f32 0.0, %v685
      %687 = vdwg.mxu0
      %v688 = vadd.f32 %v649, %v683
      %v689 = vadd.f32 %v650, %v686
      %691 = vst [vmem:[#allocation1] ss:$2 sm:$0xff] %v328
      %s692 = scalar_lea.vmem [#allocation1], 1
      %693 = vst [vmem:[%s692] ss:$2 sm:$0xff] %v329
      %s694 = scalar_lea.vmem [#allocation1], 16
      %695 = vst [vmem:[%s694] ss:$2 sm:$0xff] %v330
      %s696 = scalar_lea.vmem [#allocation1], 17
      %697 = vst [vmem:[%s696] ss:$2 sm:$0xff] %v331
      %v698 = vld.sshfl [vmem:[#allocation1] sm:$0xff pattern:$0x75316420]
      %v699 = vld.sshfl [vmem:[#allocation1 + $0x10] sm:$0xff pattern:$0x75316420]
      %v700 = vsel %vm380, %v698, 0
      %v702 = vsel %vm380, %v699, 0
      %704 = vmatpush.msra.mxu0 0.0
      %705 = vmatpush.msra.mxu0 0.0
      %706 = vmatpush.msra.mxu0 0.0
      %707 = vmatpush.msra.mxu0 0.0
      %708 = vmatpush.msra.mxu0 0.0
      %709 = vmatpush.msra.mxu0 0.0
      %710 = vmatpush.msra.mxu0 0.0
      %711 = vmatpush.msra.mxu0 0.0
      %712 = vmatpush.msra.mxu0 0.0
      %713 = vmatpush.msra.mxu0 0.0
      %714 = vmatpush.msra.mxu0 0.0
      %715 = vmatpush.msra.mxu0 0.0
      %716 = vmatpush.msra.mxu0 0.0
      %717 = vmatpush.msra.mxu0 0.0
      %718 = vmatpush.msra.mxu0 %v363
      %719 = vmatpush.msra.mxu0 %v362
      %720 = vmatmul.f32.gmra.mxu0 %v700
      %v721 = vpop.f32.mrf.mxu0
      %v722 = vadd.f32 0.0, %v721
      %723 = vmatmul.f32.gmra.mxu0 %v702
      %v724 = vpop.f32.mrf.mxu0
      %v725 = vadd.f32 0.0, %v724
      %726 = vdwg.mxu0
      %v727 = vadd.f32 %v688, %v722
      %v728 = vadd.f32 %v689, %v725
      %v729 = vrot.slane %v321, 4
      %v730 = vrot.slane %v321, 5
      %v731 = vrot.slane %v730, 4
      %v732 = vrot.slane %v729, 5
      %v733 = vsel %vm454, %v731, %v732
      %734 = vst [vmem:[#allocation1] ss:$2 sm:$0xff] %v462
      %s735 = scalar_lea.vmem [#allocation1], 1
      %736 = vst [vmem:[%s735] ss:$2 sm:$0xff] %v466
      %s737 = scalar_lea.vmem [#allocation1], 16
      %738 = vst [vmem:[%s737] ss:$2 sm:$0xff] %v470
      %s739 = scalar_lea.vmem [#allocation1], 17
      %740 = vst [vmem:[%s739] ss:$2 sm:$0xff] %v733
      %v741 = vld.sshfl [vmem:[#allocation1] sm:$0xff pattern:$0x75316420]
      %v742 = vld.sshfl [vmem:[#allocation1 + $0x10] sm:$0xff pattern:$0x75316420]
      %v743 = vsel %vm380, %v741, 0
      %v745 = vsel %vm380, %v742, 0
      %747 = vmatpush.msra.mxu0 0.0
      %748 = vmatpush.msra.mxu0 0.0
      %749 = vmatpush.msra.mxu0 0.0
      %750 = vmatpush.msra.mxu0 0.0
      %751 = vmatpush.msra.mxu0 0.0
      %752 = vmatpush.msra.mxu0 0.0
      %753 = vmatpush.msra.mxu0 0.0
      %754 = vmatpush.msra.mxu0 0.0
      %755 = vmatpush.msra.mxu0 0.0
      %756 = vmatpush.msra.mxu0 0.0
      %757 = vmatpush.msra.mxu0 0.0
      %758 = vmatpush.msra.mxu0 0.0
      %759 = vmatpush.msra.mxu0 0.0
      %760 = vmatpush.msra.mxu0 0.0
      %761 = vmatpush.msra.mxu0 %v365
      %762 = vmatpush.msra.mxu0 %v364
      %763 = vmatmul.f32.gmra.mxu0 %v743
      %v764 = vpop.f32.mrf.mxu0
      %v765 = vadd.f32 0.0, %v764
      %766 = vmatmul.f32.gmra.mxu0 %v745
      %v767 = vpop.f32.mrf.mxu0
      %v768 = vadd.f32 0.0, %v767
      %769 = vdwg.mxu0
      %v770 = vadd.f32 %v727, %v765
      %v771 = vadd.f32 %v728, %v768
      %v773 = vperm.slane %v366, 0
      %v775 = vadd.f32 %v770, %v773
      %v776 = vadd.f32 %v771, %v773
      %v777 = vmax.f32 %v775, 0.0
      %v778 = vmax.f32 %v776, 0.0
      %v779 = vpack.c.bf16 %v777, %v777
      %v780 = vpack.c.bf16 %v778, %v778
      %vm781 = vcmask 125952
      %782 = vst.msk [vmem:[%s311] sm:$0xf] %vm781, %v779
      %783 = vst.msk [vmem:[%s311 + $0x4] sm:$0xf] %vm781, %v780
      %p784 = scmp.lt.s32.totalorder %s17, 1
      %s785 = scalar_select %p784, %s17, 1
      %s786 = smul.addr %s785, 2
      %s787 = smul.addr %s786, 4
      %s788 = scalar_lea.vmem %s6, %s787
      // Predicated region
      $region45: #{denoiser_forward.8} parent=43 // pred_check
        %p789 = pneg %p181
      $region46: #{denoiser_forward.8} parent=43 // pred_check_branch
        %791 = sbr.rel (%p789) target = $region48
      $region47: #{denoiser_forward.8} parent=43 // pred_region
        _
      $region48: #{denoiser_forward.8} parent=43 // pred_fallthru
        _
    $region44: #{denoiser_forward.8} parent=5 // pred_fallthru
      _
    %p792 = scmp.le.s32.totalorder 2, %s12
    // Predicated region
    $region49: #{denoiser_forward.8} parent=5 // pred_check
      %p793 = pneg %p792
    $region50: #{denoiser_forward.8} parent=5 // pred_check_branch
      %795 = sbr.rel (%p793) target = $region52
    $region51: #{denoiser_forward.8} parent=5 // pred_region
      %s796 = ssub.s32 %s12, 2
      // Predicated region
      $region53: #{denoiser_forward.8} parent=51 // pred_check
        %p797 = pneg %p187
      $region54: #{denoiser_forward.8} parent=51 // pred_check_branch
        %799 = sbr.rel (%p797) target = $region56
      $region55: #{denoiser_forward.8} parent=51 // pred_region
        %p800 = scmp.lt.s32.totalorder %s18, 1
        %s801 = scalar_select %p800, %s18, 1
        %s802 = smul.addr %s801, 2
        %s803 = smul.addr %s802, 4
        %s804 = scalar_lea.vmem %s6, %s803
      $region56: #{denoiser_forward.8} parent=51 // pred_fallthru
        _
    $region52: #{denoiser_forward.8} parent=5 // pred_fallthru
      _
  $region6: #{denoiser_forward.8} parent=0 // loop_footer
    %s16 = sadd.s32 1, %s12
  $region7: #{denoiser_forward.8} parent=0 // loop_footer_branch
    %11 = sbr.rel target = $region3
  $region8: #{denoiser_forward.8} parent=0 // loop_exit
    _

// kernel: denoiser_forward.9
$region0: #{denoiser_forward.9}
  #allocation0 [shape = 'u32[]', space=smem, size = 0x4, offset = 0x4, fixed_abs, tag = 'smem constant byte address 0x4 - core index']
  #allocation1 [shape = 'u32[72,128]{1,0:T(1,128)}', space=vmem, size = 0x9000, scoped, tag = 'internal scratch']
  %s0 = inlined_call_operand.vmem [shape: bf16[2,3,3,16], index: 0, kind: input, shape index: {}]
  %s1 = inlined_call_operand.vmem [shape: bf16[2,3,3,16], index: 1, kind: input, shape index: {}]
  %s2 = inlined_call_operand.vmem [shape: bf16[2,3,3,16], index: 2, kind: input, shape index: {}]
  %s3 = inlined_call_operand.vmem [shape: bf16[2,3,3,16], index: 3, kind: input, shape index: {}]
  %s4 = inlined_call_operand.vmem [shape: f32[9,16,16], index: 4, kind: input, shape index: {}]
  %s5 = inlined_call_operand.vmem [shape: f32[1,16], index: 5, kind: input, shape index: {}]
  %s6 = inlined_call_operand.vmem [shape: bf16[2,4,16], index: 6, kind: output, shape index: {}]
  %s7 = sld [smem:[#allocation0]]
  $region57: #{denoiser_forward.9} parent=0
    _
  %s9 = ssub.s32 1, %s7
  %s10 = scalar_select 0, %s9, %s7
  loop: start=0, step=1, limit=4
  $region2: #{denoiser_forward.9} parent=0 // loop_pre_header
    _
  $region3: #{denoiser_forward.9} parent=0 // loop_header
    %s12 = sphi 0, %s16
    %p13 = scmp.ge.s32.totalorder %s12, 4
    %s22 = sphi 0, %s24
    %s25 = sphi 0, %s22
    %s26 = sphi 0, %s25
    %s42 = sphi 0, %s26
    %s48 = sphi 0, %s50
    %s51 = sphi 0, %s48
    %s52 = sphi 0, %s51
    %s68 = sphi 0, %s52
    %s74 = sphi 0, %s76
    %s77 = sphi 0, %s74
    %s78 = sphi 0, %s77
    %s94 = sphi 0, %s78
    %s100 = sphi 0, %s102
    %s103 = sphi 0, %s100
    %s104 = sphi 0, %s103
    %s120 = sphi 0, %s104
    %s124 = sphi 0, %s124
    %s126 = sphi 0, %s124
    %s127 = sphi 0, %s126
    %s141 = sphi 0, %s127
    %s145 = sphi 0, %s145
    %s147 = sphi 0, %s145
    %s148 = sphi 0, %s147
    %s162 = sphi 0, %s148
    %s168 = sphi 0, %s170
    %s171 = sphi 0, %s168
    %s172 = sphi 0, %s171
    %s188 = sphi 0, %s172
  $region4: #{denoiser_forward.9} parent=0 // loop_header_branch
    %15 = sbr.rel (%p13) target = $region8
  $region5: #{denoiser_forward.9} parent=0 // loop_body
    %s17 = ssub.s32 %s12, 1
    %s18 = ssub.s32 %s12, 2
    %s19 = sadd.s32 %s12, 1
    %s20 = ssub.s32 %s12, %s19
    %p21 = scmp.eq.s32.totalorder %s20, 0
    %s23 = sadd.s32 %s22, 1
    %s24 = scalar_select %p21, %s22, %s23
    %p27 = pneg %p21
    %p28 = scmp.eq.s32.totalorder %s12, 1
    %p29 = por %p27, %p28
    %p30 = scmp.ne.s32.totalorder %s22, %s25
    %p31 = scmp.eq.s32.totalorder %s12, 0
    %p32 = por %p30, %p31
    %p33 = scmp.ne.s32.totalorder %s22, %s25
    %p34 = scmp.eq.s32.totalorder %s17, 1
    %p35 = por %p33, %p34
    %p36 = scmp.ne.s32.totalorder %s25, %s26
    %p37 = scmp.eq.s32.totalorder %s17, 0
    %p38 = por %p36, %p37
    %p39 = scmp.ne.s32.totalorder %s25, %s26
    %p40 = scmp.eq.s32.totalorder %s18, 1
    %p41 = por %p39, %p40
    %p43 = scmp.ne.s32.totalorder %s26, %s42
    %p44 = scmp.eq.s32.totalorder %s18, 0
    %p45 = por %p43, %p44
    %s46 = ssub.s32 %s12, %s19
    %p47 = scmp.eq.s32.totalorder %s46, 0
    %s49 = sadd.s32 %s48, 1
    %s50 = scalar_select %p47, %s48, %s49
    %p53 = pneg %p47
    %p54 = scmp.eq.s32.totalorder %s12, 1
    %p55 = por %p53, %p54
    %p56 = scmp.ne.s32.totalorder %s48, %s51
    %p57 = scmp.eq.s32.totalorder %s12, 0
    %p58 = por %p56, %p57
    %p59 = scmp.ne.s32.totalorder %s48, %s51
    %p60 = scmp.eq.s32.totalorder %s17, 1
    %p61 = por %p59, %p60
    %p62 = scmp.ne.s32.totalorder %s51, %s52
    %p63 = scmp.eq.s32.totalorder %s17, 0
    %p64 = por %p62, %p63
    %p65 = scmp.ne.s32.totalorder %s51, %s52
    %p66 = scmp.eq.s32.totalorder %s18, 1
    %p67 = por %p65, %p66
    %p69 = scmp.ne.s32.totalorder %s52, %s68
    %p70 = scmp.eq.s32.totalorder %s18, 0
    %p71 = por %p69, %p70
    %s72 = ssub.s32 %s12, %s19
    %p73 = scmp.eq.s32.totalorder %s72, 0
    %s75 = sadd.s32 %s74, 1
    %s76 = scalar_select %p73, %s74, %s75
    %p79 = pneg %p73
    %p80 = scmp.eq.s32.totalorder %s12, 1
    %p81 = por %p79, %p80
    %p82 = scmp.ne.s32.totalorder %s74, %s77
    %p83 = scmp.eq.s32.totalorder %s12, 0
    %p84 = por %p82, %p83
    %p85 = scmp.ne.s32.totalorder %s74, %s77
    %p86 = scmp.eq.s32.totalorder %s17, 1
    %p87 = por %p85, %p86
    %p88 = scmp.ne.s32.totalorder %s77, %s78
    %p89 = scmp.eq.s32.totalorder %s17, 0
    %p90 = por %p88, %p89
    %p91 = scmp.ne.s32.totalorder %s77, %s78
    %p92 = scmp.eq.s32.totalorder %s18, 1
    %p93 = por %p91, %p92
    %p95 = scmp.ne.s32.totalorder %s78, %s94
    %p96 = scmp.eq.s32.totalorder %s18, 0
    %p97 = por %p95, %p96
    %s98 = ssub.s32 %s12, %s19
    %p99 = scmp.eq.s32.totalorder %s98, 0
    %s101 = sadd.s32 %s100, 1
    %s102 = scalar_select %p99, %s100, %s101
    %p105 = pneg %p99
    %p106 = scmp.eq.s32.totalorder %s12, 1
    %p107 = por %p105, %p106
    %p108 = scmp.ne.s32.totalorder %s100, %s103
    %p109 = scmp.eq.s32.totalorder %s12, 0
    %p110 = por %p108, %p109
    %p111 = scmp.ne.s32.totalorder %s100, %s103
    %p112 = scmp.eq.s32.totalorder %s17, 1
    %p113 = por %p111, %p112
    %p114 = scmp.ne.s32.totalorder %s103, %s104
    %p115 = scmp.eq.s32.totalorder %s17, 0
    %p116 = por %p114, %p115
    %p117 = scmp.ne.s32.totalorder %s103, %s104
    %p118 = scmp.eq.s32.totalorder %s18, 1
    %p119 = por %p117, %p118
    %p121 = scmp.ne.s32.totalorder %s104, %s120
    %p122 = scmp.eq.s32.totalorder %s18, 0
    %p123 = por %p121, %p122
    %s125 = sadd.s32 %s124, 1
    %p128 = scmp.eq.s32.totalorder %s12, 1
    %p129 = scmp.ne.s32.totalorder %s124, %s126
    %p130 = scmp.eq.s32.totalorder %s12, 0
    %p131 = por %p129, %p130
    %p132 = scmp.ne.s32.totalorder %s124, %s126
    %p133 = scmp.eq.s32.totalorder %s17, 1
    %p134 = por %p132, %p133
    %p135 = scmp.ne.s32.totalorder %s126, %s127
    %p136 = scmp.eq.s32.totalorder %s17, 0
    %p137 = por %p135, %p136
    %p138 = scmp.ne.s32.totalorder %s126, %s127
    %p139 = scmp.eq.s32.totalorder %s18, 1
    %p140 = por %p138, %p139
    %p142 = scmp.ne.s32.totalorder %s127, %s141
    %p143 = scmp.eq.s32.totalorder %s18, 0
    %p144 = por %p142, %p143
    %s146 = sadd.s32 %s145, 1
    %p149 = scmp.eq.s32.totalorder %s12, 1
    %p150 = scmp.ne.s32.totalorder %s145, %s147
    %p151 = scmp.eq.s32.totalorder %s12, 0
    %p152 = por %p150, %p151
    %p153 = scmp.ne.s32.totalorder %s145, %s147
    %p154 = scmp.eq.s32.totalorder %s17, 1
    %p155 = por %p153, %p154
    %p156 = scmp.ne.s32.totalorder %s147, %s148
    %p157 = scmp.eq.s32.totalorder %s17, 0
    %p158 = por %p156, %p157
    %p159 = scmp.ne.s32.totalorder %s147, %s148
    %p160 = scmp.eq.s32.totalorder %s18, 1
    %p161 = por %p159, %p160
    %p163 = scmp.ne.s32.totalorder %s148, %s162
    %p164 = scmp.eq.s32.totalorder %s18, 0
    %p165 = por %p163, %p164
    %s166 = ssub.s32 %s12, %s19
    %p167 = scmp.eq.s32.totalorder %s166, 0
    %s169 = sadd.s32 %s168, 1
    %s170 = scalar_select %p167, %s168, %s169
    %p173 = pneg %p167
    %p174 = scmp.eq.s32.totalorder %s12, 1
    %p175 = por %p173, %p174
    %p176 = scmp.ne.s32.totalorder %s168, %s171
    %p177 = scmp.eq.s32.totalorder %s12, 0
    %p178 = por %p176, %p177
    %p179 = scmp.ne.s32.totalorder %s168, %s171
    %p180 = scmp.eq.s32.totalorder %s17, 1
    %p181 = por %p179, %p180
    %p182 = scmp.ne.s32.totalorder %s171, %s172
    %p183 = scmp.eq.s32.totalorder %s17, 0
    %p184 = por %p182, %p183
    %p185 = scmp.ne.s32.totalorder %s171, %s172
    %p186 = scmp.eq.s32.totalorder %s18, 1
    %p187 = por %p185, %p186
    %p189 = scmp.ne.s32.totalorder %s172, %s188
    %p190 = scmp.eq.s32.totalorder %s18, 0
    %p191 = por %p189, %p190
    %p192 = scmp.le.s32.totalorder 1, %s12
    %p193 = scmp.lt.s32.totalorder %s12, 3
    %p194 = pnand %p192, %p193
    %p195 = pneg %p194
    // Predicated region
    $region9: #{denoiser_forward.9} parent=5 // pred_check
      _
    $region10: #{denoiser_forward.9} parent=5 // pred_check_branch
      %197 = sbr.rel (%p194) target = $region12
    $region11: #{denoiser_forward.9} parent=5 // pred_region
      %s198 = ssub.s32 %s12, 1
      // Predicated region
      $region13: #{denoiser_forward.9} parent=11 // pred_check
        %p199 = pneg %p137
      $region14: #{denoiser_forward.9} parent=11 // pred_check_branch
        %201 = sbr.rel (%p199) target = $region16
      $region15: #{denoiser_forward.9} parent=11 // pred_region
        _
      $region16: #{denoiser_forward.9} parent=11 // pred_fallthru
        _
      // Predicated region
      $region17: #{denoiser_forward.9} parent=11 // pred_check
        %p202 = pneg %p158
      $region18: #{denoiser_forward.9} parent=11 // pred_check_branch
        %204 = sbr.rel (%p202) target = $region20
      $region19: #{denoiser_forward.9} parent=11 // pred_region
        _
      $region20: #{denoiser_forward.9} parent=11 // pred_fallthru
        _
    $region12: #{denoiser_forward.9} parent=5 // pred_fallthru
      _
    %p205 = scmp.lt.s32.totalorder %s12, 2
    // Predicated region
    $region21: #{denoiser_forward.9} parent=5 // pred_check
      %p206 = pneg %p205
    $region22: #{denoiser_forward.9} parent=5 // pred_check_branch
      %208 = sbr.rel (%p206) target = $region24
    $region23: #{denoiser_forward.9} parent=5 // pred_region
      // Predicated region
      $region25: #{denoiser_forward.9} parent=23 // pred_check
        %p209 = pneg %p32
      $region26: #{denoiser_forward.9} parent=23 // pred_check_branch
        %211 = sbr.rel (%p209) target = $region28
      $region27: #{denoiser_forward.9} parent=23 // pred_region
        %p212 = scmp.lt.s32.totalorder %s12, 1
        %s213 = scalar_select %p212, %s12, 1
        %s214 = smul.addr %s213, 3
        %s215 = smul.addr %s214, 2
        %s216 = scalar_lea.vmem %s0, %s215
      $region28: #{denoiser_forward.9} parent=23 // pred_fallthru
        _
      // Predicated region
      $region29: #{denoiser_forward.9} parent=23 // pred_check
        %p217 = pneg %p58
      $region30: #{denoiser_forward.9} parent=23 // pred_check_branch
        %219 = sbr.rel (%p217) target = $region32
      $region31: #{denoiser_forward.9} parent=23 // pred_region
        %p220 = scmp.lt.s32.totalorder %s12, 1
        %s221 = scalar_select %p220, %s12, 1
        %s222 = smul.addr %s221, 3
        %s223 = smul.addr %s222, 2
        %s224 = scalar_lea.vmem %s1, %s223
      $region32: #{denoiser_forward.9} parent=23 // pred_fallthru
        _
      // Predicated region
      $region33: #{denoiser_forward.9} parent=23 // pred_check
        %p225 = pneg %p84
      $region34: #{denoiser_forward.9} parent=23 // pred_check_branch
        %227 = sbr.rel (%p225) target = $region36
      $region35: #{denoiser_forward.9} parent=23 // pred_region
        %p228 = scmp.lt.s32.totalorder %s12, 1
        %s229 = scalar_select %p228, %s12, 1
        %s230 = smul.addr %s229, 3
        %s231 = smul.addr %s230, 2
        %s232 = scalar_lea.vmem %s2, %s231
      $region36: #{denoiser_forward.9} parent=23 // pred_fallthru
        _
      // Predicated region
      $region37: #{denoiser_forward.9} parent=23 // pred_check
        %p233 = pneg %p110
      $region38: #{denoiser_forward.9} parent=23 // pred_check_branch
        %235 = sbr.rel (%p233) target = $region40
      $region39: #{denoiser_forward.9} parent=23 // pred_region
        %p236 = scmp.lt.s32.totalorder %s12, 1
        %s237 = scalar_select %p236, %s12, 1
        %s238 = smul.addr %s237, 3
        %s239 = smul.addr %s238, 2
        %s240 = scalar_lea.vmem %s3, %s239
      $region40: #{denoiser_forward.9} parent=23 // pred_fallthru
        _
    $region24: #{denoiser_forward.9} parent=5 // pred_fallthru
      _
    %p241 = scmp.le.s32.totalorder 1, %s12
    %p242 = scmp.lt.s32.totalorder %s12, 3
    %p243 = pnand %p241, %p242
    %p244 = pneg %p243
    // Predicated region
    $region41: #{denoiser_forward.9} parent=5 // pred_check
      _
    $region42: #{denoiser_forward.9} parent=5 // pred_check_branch
      %246 = sbr.rel (%p243) target = $region44
    $region43: #{denoiser_forward.9} parent=5 // pred_region
      %s247 = ssub.s32 %s12, 1
      %p248 = scmp.lt.s32.totalorder %s17, 1
      %s249 = scalar_select %p248, %s17, 1
      %s250 = smul.addr %s249, 3
      %s251 = smul.addr %s250, 2
      %s252 = scalar_lea.vmem %s0, %s251
      %p253 = pneg %p38
      %p254 = pneg %p35
      %p255 = scmp.lt.s32.totalorder %s17, 1
      %s256 = scalar_select %p255, %s17, 1
      %s257 = smul.addr %s256, 3
      %s258 = smul.addr %s257, 2
      %s259 = scalar_lea.vmem %s1, %s258
      %p260 = pneg %p64
      %p261 = pneg %p61
      %p262 = scmp.lt.s32.totalorder %s17, 1
      %s263 = scalar_select %p262, %s17, 1
      %s264 = smul.addr %s263, 3
      %s265 = smul.addr %s264, 2
      %s266 = scalar_lea.vmem %s2, %s265
      %p267 = pneg %p90
      %p268 = pneg %p87
      %p269 = scmp.lt.s32.totalorder %s17, 1
      %s270 = scalar_select %p269, %s17, 1
      %s271 = smul.addr %s270, 3
      %s272 = smul.addr %s271, 2
      %s273 = scalar_lea.vmem %s3, %s272
      %p274 = pneg %p116
      %p275 = pneg %p113
      %p276 = pneg %p137
      %p277 = pneg %p134
      %p278 = pneg %p158
      %p279 = pneg %p155
      %p280 = pneg %p184
      %p281 = pneg %p181
      %p282 = scmp.lt.s32.totalorder %s17, 1
      %s283 = scalar_select %p282, %s17, 1
      %s284 = smul.addr %s283, 2
      %s285 = scalar_lea.vmem %s6, %s284
      %p286 = scmp.lt.s32.totalorder %s17, 1
      %s287 = scalar_select %p286, %s17, 1
      %s288 = smul.addr %s287, 3
      %s289 = smul.addr %s288, 2
      %s290 = scalar_lea.vmem %s0, %s289
      %p291 = scmp.lt.s32.totalorder %s17, 1
      %s292 = scalar_select %p291, %s17, 1
      %s293 = smul.addr %s292, 3
      %s294 = smul.addr %s293, 2
      %s295 = scalar_lea.vmem %s1, %s294
      %p296 = scmp.lt.s32.totalorder %s17, 1
      %s297 = scalar_select %p296, %s17, 1
      %s298 = smul.addr %s297, 3
      %s299 = smul.addr %s298, 2
      %s300 = scalar_lea.vmem %s2, %s299
      %p301 = scmp.lt.s32.totalorder %s17, 1
      %s302 = scalar_select %p301, %s17, 1
      %s303 = smul.addr %s302, 3
      %s304 = smul.addr %s303, 2
      %s305 = scalar_lea.vmem %s3, %s304
      %p306 = scmp.lt.s32.totalorder %s17, 1
      %s307 = scalar_select %p306, %s17, 1
      %s308 = smul.addr %s307, 2
      %s309 = scalar_lea.vmem %s6, %s308
      %v310 = vld [vmem:[%s290] sm:$0x3]
      %v311 = vld [vmem:[%s290 + $0x2] sm:$0x3]
      %v312 = vld [vmem:[%s290 + $0x4] sm:$0x3]
      %v313 = vunpack.c.l.bf16 %v310
      %v314 = vunpack.c.l.bf16 %v311
      %v315 = vunpack.c.l.bf16 %v312
      %v316 = vld [vmem:[%s295] sm:$0x3]
      %v317 = vld [vmem:[%s295 + $0x2] sm:$0x3]
      %v318 = vld [vmem:[%s295 + $0x4] sm:$0x3]
      %v319 = vunpack.c.l.bf16 %v316
      %v320 = vunpack.c.l.bf16 %v317
      %v321 = vunpack.c.l.bf16 %v318
      %v322 = vld [vmem:[%s300] sm:$0x3]
      %v323 = vld [vmem:[%s300 + $0x2] sm:$0x3]
      %v324 = vunpack.c.l.bf16 %v322
      %v325 = vunpack.c.l.bf16 %v323
      %v326 = vld [vmem:[%s305] sm:$0x3]
      %v327 = vld [vmem:[%s305 + $0x2] sm:$0x3]
      %v328 = vunpack.c.l.bf16 %v326
      %v329 = vunpack.c.l.bf16 %v327
      %v330 = vld [vmem:[%s4] sm:$0xff]
      %v331 = vld [vmem:[%s4 + $0x8] sm:$0xff]
      %v332 = vld [vmem:[%s4 + $0x10] sm:$0xff]
      %v333 = vld [vmem:[%s4 + $0x18] sm:$0xff]
      %v334 = vld [vmem:[%s4 + $0x20] sm:$0xff]
      %v335 = vld [vmem:[%s4 + $0x28] sm:$0xff]
      %v336 = vld [vmem:[%s4 + $0x30] sm:$0xff]
      %v337 = vld [vmem:[%s4 + $0x38] sm:$0xff]
      %v338 = vld [vmem:[%s4 + $0x40] sm:$0xff]
      %v339 = vld [vmem:[%s4 + $0x48] sm:$0xff]
      %v340 = vld [vmem:[%s4 + $0x50] sm:$0xff]
      %v341 = vld [vmem:[%s4 + $0x58] sm:$0xff]
      %v342 = vld [vmem:[%s4 + $0x60] sm:$0xff]
      %v343 = vld [vmem:[%s4 + $0x68] sm:$0xff]
      %v344 = vld [vmem:[%s4 + $0x70] sm:$0xff]
      %v345 = vld [vmem:[%s4 + $0x78] sm:$0xff]
      %v346 = vld [vmem:[%s4 + $0x80] sm:$0xff]
      %v347 = vld [vmem:[%s4 + $0x88] sm:$0xff]
      %v348 = vld [vmem:[%s5] sm:$0x1]
      %351 = vst [vmem:[#allocation1] ss:$4 sm:$0xff] %v319
      %s352 = scalar_lea.vmem [#allocation1], 1
      %353 = vst [vmem:[%s352] ss:$4 sm:$0xff] %v320
      %v354 = vld.sshfl [vmem:[#allocation1] sm:$0xff pattern:$0x73625140]
      %vm355 = vcmask 130048
      %v356 = vsel %vm355, %v354, 0
      %358 = vmatpush.msra.mxu0 0.0
      %359 = vmatpush.msra.mxu0 0.0
      %360 = vmatpush.msra.mxu0 0.0
      %361 = vmatpush.msra.mxu0 0.0
      %362 = vmatpush.msra.mxu0 0.0
      %363 = vmatpush.msra.mxu0 0.0
      %364 = vmatpush.msra.mxu0 0.0
      %365 = vmatpush.msra.mxu0 0.0
      %366 = vmatpush.msra.mxu0 0.0
      %367 = vmatpush.msra.mxu0 0.0
      %368 = vmatpush.msra.mxu0 0.0
      %369 = vmatpush.msra.mxu0 0.0
      %370 = vmatpush.msra.mxu0 0.0
      %371 = vmatpush.msra.mxu0 0.0
      %372 = vmatpush.msra.mxu0 %v333
      %373 = vmatpush.msra.mxu0 %v332
      %374 = vmatmul.f32.gmra.mxu0 %v356
      %v375 = vpop.f32.mrf.mxu0
      %v376 = vadd.f32 0.0, %v375
      %377 = vdwg.mxu0
      %380 = vst [vmem:[#allocation1] ss:$4 sm:$0xff] %v313
      %s381 = scalar_lea.vmem [#allocation1], 1
      %382 = vst [vmem:[%s381] ss:$4 sm:$0xff] %v314
      %v383 = vld.sshfl [vmem:[#allocation1] sm:$0xff pattern:$0x73625140]
      %v384 = vsel %vm355, %v383, 0
      %386 = vmatpush.msra.mxu0 0.0
      %387 = vmatpush.msra.mxu0 0.0
      %388 = vmatpush.msra.mxu0 0.0
      %389 = vmatpush.msra.mxu0 0.0
      %390 = vmatpush.msra.mxu0 0.0
      %391 = vmatpush.msra.mxu0 0.0
      %392 = vmatpush.msra.mxu0 0.0
      %393 = vmatpush.msra.mxu0 0.0
      %394 = vmatpush.msra.mxu0 0.0
      %395 = vmatpush.msra.mxu0 0.0
      %396 = vmatpush.msra.mxu0 0.0
      %397 = vmatpush.msra.mxu0 0.0
      %398 = vmatpush.msra.mxu0 0.0
      %399 = vmatpush.msra.mxu0 0.0
      %400 = vmatpush.msra.mxu0 %v331
      %401 = vmatpush.msra.mxu0 %v330
      %402 = vmatmul.f32.gmra.mxu0 %v384
      %v403 = vpop.f32.mrf.mxu0
      %v404 = vadd.f32 %v376, %v403
      %405 = vdwg.mxu0
      %v406 = vrot.slane %v313, 2
      %v407 = vrot.slane %v314, 2
      %vm408 = vcmask 1041408
      %v409 = vsel %vm408, %v313, %v406
      %vm410 = vcmask 1043458
      %v411 = vsel %vm410, %v313, %v406
      %v412 = vrot.slane %v411, 2
      %v413 = vsel %vm408, %v314, %v407
      %v414 = vsel %vm410, %v314, %v407
      %v415 = vrot.slane %v414, 2
      %vm416 = vcmask 1040384
      %vm417 = vcmask 1042434
      %vm418 = vmor %vm416, %vm417
      %vm419 = vcmask 1044484
      %vm420 = vmor %vm418, %vm419
      %vm421 = vcmask 1046534
      %vm422 = vmor %vm420, %vm421
      %v423 = vrot.slane %v409, 7
      %v424 = vrot.slane %v423, 2
      %v425 = vrot.slane %v412, 7
      %v426 = vsel %vm422, %v424, %v425
      %v427 = vrot.slane %v413, 7
      %v428 = vrot.slane %v427, 2
      %v429 = vrot.slane %v415, 7
      %v430 = vsel %vm422, %v428, %v429
      %431 = vst [vmem:[#allocation1] ss:$4 sm:$0xff] %v426
      %s432 = scalar_lea.vmem [#allocation1], 1
      %433 = vst [vmem:[%s432] ss:$4 sm:$0xff] %v430
      %v434 = vld.sshfl [vmem:[#allocation1] sm:$0xff pattern:$0x73625140]
      %v435 = vsel %vm355, %v434, 0
      %437 = vmatpush.msra.mxu0 0.0
      %438 = vmatpush.msra.mxu0 0.0
      %439 = vmatpush.msra.mxu0 0.0
      %440 = vmatpush.msra.mxu0 0.0
      %441 = vmatpush.msra.mxu0 0.0
      %442 = vmatpush.msra.mxu0 0.0
      %443 = vmatpush.msra.mxu0 0.0
      %444 = vmatpush.msra.mxu0 0.0
      %445 = vmatpush.msra.mxu0 0.0
      %446 = vmatpush.msra.mxu0 0.0
      %447 = vmatpush.msra.mxu0 0.0
      %448 = vmatpush.msra.mxu0 0.0
      %449 = vmatpush.msra.mxu0 0.0
      %450 = vmatpush.msra.mxu0 0.0
      %451 = vmatpush.msra.mxu0 %v335
      %452 = vmatpush.msra.mxu0 %v334
      %453 = vmatmul.f32.gmra.mxu0 %v435
      %v454 = vpop.f32.mrf.mxu0
      %v455 = vadd.f32 0.0, %v454
      %456 = vdwg.mxu0
      %v457 = vadd.f32 %v404, %v455
      %460 = vst [vmem:[#allocation1] ss:$4 sm:$0xff] %v324
      %s461 = scalar_lea.vmem [#allocation1], 1
      %462 = vst [vmem:[%s461] ss:$4 sm:$0xff] %v325
      %v463 = vld.sshfl [vmem:[#allocation1] sm:$0xff pattern:$0x73625140]
      %v464 = vsel %vm355, %v463, 0
      %466 = vmatpush.msra.mxu0 0.0
      %467 = vmatpush.msra.mxu0 0.0
      %468 = vmatpush.msra.mxu0 0.0
      %469 = vmatpush.msra.mxu0 0.0
      %470 = vmatpush.msra.mxu0 0.0
      %471 = vmatpush.msra.mxu0 0.0
      %472 = vmatpush.msra.mxu0 0.0
      %473 = vmatpush.msra.mxu0 0.0
      %474 = vmatpush.msra.mxu0 0.0
      %475 = vmatpush.msra.mxu0 0.0
      %476 = vmatpush.msra.mxu0 0.0
      %477 = vmatpush.msra.mxu0 0.0
      %478 = vmatpush.msra.mxu0 0.0
      %479 = vmatpush.msra.mxu0 0.0
      %480 = vmatpush.msra.mxu0 %v337
      %481 = vmatpush.msra.mxu0 %v336
      %482 = vmatmul.f32.gmra.mxu0 %v464
      %v483 = vpop.f32.mrf.mxu0
      %v484 = vadd.f32 0.0, %v483
      %485 = vdwg.mxu0
      %v486 = vadd.f32 %v457, %v484
      %489 = vst [vmem:[#allocation1] ss:$4 sm:$0xff] %v328
      %s490 = scalar_lea.vmem [#allocation1], 1
      %491 = vst [vmem:[%s490] ss:$4 sm:$0xff] %v329
      %v492 = vld.sshfl [vmem:[#allocation1] sm:$0xff pattern:$0x73625140]
      %v493 = vsel %vm355, %v492, 0
      %495 = vmatpush.msra.mxu0 0.0
      %496 = vmatpush.msra.mxu0 0.0
      %497 = vmatpush.msra.mxu0 0.0
      %498 = vmatpush.msra.mxu0 0.0
      %499 = vmatpush.msra.mxu0 0.0
      %500 = vmatpush.msra.mxu0 0.0
      %501 = vmatpush.msra.mxu0 0.0
      %502 = vmatpush.msra.mxu0 0.0
      %503 = vmatpush.msra.mxu0 0.0
      %504 = vmatpush.msra.mxu0 0.0
      %505 = vmatpush.msra.mxu0 0.0
      %506 = vmatpush.msra.mxu0 0.0
      %507 = vmatpush.msra.mxu0 0.0
      %508 = vmatpush.msra.mxu0 0.0
      %509 = vmatpush.msra.mxu0 %v339
      %510 = vmatpush.msra.mxu0 %v338
      %511 = vmatmul.f32.gmra.mxu0 %v493
      %v512 = vpop.f32.mrf.mxu0
      %v513 = vadd.f32 0.0, %v512
      %514 = vdwg.mxu0
      %v515 = vadd.f32 %v486, %v513
      %v516 = vrot.slane %v324, 2
      %v517 = vrot.slane %v325, 2
      %v518 = vsel %vm408, %v324, %v516
      %v519 = vsel %vm410, %v324, %v516
      %v520 = vrot.slane %v519, 2
      %v521 = vsel %vm408, %v325, %v517
      %v522 = vsel %vm410, %v325, %v517
      %v523 = vrot.slane %v522, 2
      %v524 = vrot.slane %v518, 7
      %v525 = vrot.slane %v524, 2
      %v526 = vrot.slane %v520, 7
      %v527 = vsel %vm422, %v525, %v526
      %v528 = vrot.slane %v521, 7
      %v529 = vrot.slane %v528, 2
      %v530 = vrot.slane %v523, 7
      %v531 = vsel %vm422, %v529, %v530
      %532 = vst [vmem:[#allocation1] ss:$4 sm:$0xff] %v527
      %s533 = scalar_lea.vmem [#allocation1], 1
      %534 = vst [vmem:[%s533] ss:$4 sm:$0xff] %v531
      %v535 = vld.sshfl [vmem:[#allocation1] sm:$0xff pattern:$0x73625140]
      %v536 = vsel %vm355, %v535, 0
      %538 = vmatpush.msra.mxu0 0.0
      %539 = vmatpush.msra.mxu0 0.0
      %540 = vmatpush.msra.mxu0 0.0
      %541 = vmatpush.msra.mxu0 0.0
      %542 = vmatpush.msra.mxu0 0.0
      %543 = vmatpush.msra.mxu0 0.0
      %544 = vmatpush.msra.mxu0 0.0
      %545 = vmatpush.msra.mxu0 0.0
      %546 = vmatpush.msra.mxu0 0.0
      %547 = vmatpush.msra.mxu0 0.0
      %548 = vmatpush.msra.mxu0 0.0
      %549 = vmatpush.msra.mxu0 0.0
      %550 = vmatpush.msra.mxu0 0.0
      %551 = vmatpush.msra.mxu0 0.0
      %552 = vmatpush.msra.mxu0 %v341
      %553 = vmatpush.msra.mxu0 %v340
      %554 = vmatmul.f32.gmra.mxu0 %v536
      %v555 = vpop.f32.mrf.mxu0
      %v556 = vadd.f32 0.0, %v555
      %557 = vdwg.mxu0
      %v558 = vadd.f32 %v515, %v556
      %560 = vst [vmem:[#allocation1] ss:$4 sm:$0xff] %v314
      %s561 = scalar_lea.vmem [#allocation1], 1
      %562 = vst [vmem:[%s561] ss:$4 sm:$0xff] %v315
      %v563 = vld.sshfl [vmem:[#allocation1] sm:$0xff pattern:$0x73625140]
      %v564 = vsel %vm355, %v563, 0
      %566 = vmatpush.msra.mxu0 0.0
      %567 = vmatpush.msra.mxu0 0.0
      %568 = vmatpush.msra.mxu0 0.0
      %569 = vmatpush.msra.mxu0 0.0
      %570 = vmatpush.msra.mxu0 0.0
      %571 = vmatpush.msra.mxu0 0.0
      %572 = vmatpush.msra.mxu0 0.0
      %573 = vmatpush.msra.mxu0 0.0
      %574 = vmatpush.msra.mxu0 0.0
      %575 = vmatpush.msra.mxu0 0.0
      %576 = vmatpush.msra.mxu0 0.0
      %577 = vmatpush.msra.mxu0 0.0
      %578 = vmatpush.msra.mxu0 0.0
      %579 = vmatpush.msra.mxu0 0.0
      %580 = vmatpush.msra.mxu0 %v343
      %581 = vmatpush.msra.mxu0 %v342
      %582 = vmatmul.f32.gmra.mxu0 %v564
      %v583 = vpop.f32.mrf.mxu0
      %v584 = vadd.f32 0.0, %v583
      %585 = vdwg.mxu0
      %v586 = vadd.f32 %v558, %v584
      %588 = vst [vmem:[#allocation1] ss:$4 sm:$0xff] %v320
      %s589 = scalar_lea.vmem [#allocation1], 1
      %590 = vst [vmem:[%s589] ss:$4 sm:$0xff] %v321
      %v591 = vld.sshfl [vmem:[#allocation1] sm:$0xff pattern:$0x73625140]
      %v592 = vsel %vm355, %v591, 0
      %594 = vmatpush.msra.mxu0 0.0
      %595 = vmatpush.msra.mxu0 0.0
      %596 = vmatpush.msra.mxu0 0.0
      %597 = vmatpush.msra.mxu0 0.0
      %598 = vmatpush.msra.mxu0 0.0
      %599 = vmatpush.msra.mxu0 0.0
      %600 = vmatpush.msra.mxu0 0.0
      %601 = vmatpush.msra.mxu0 0.0
      %602 = vmatpush.msra.mxu0 0.0
      %603 = vmatpush.msra.mxu0 0.0
      %604 = vmatpush.msra.mxu0 0.0
      %605 = vmatpush.msra.mxu0 0.0
      %606 = vmatpush.msra.mxu0 0.0
      %607 = vmatpush.msra.mxu0 0.0
      %608 = vmatpush.msra.mxu0 %v345
      %609 = vmatpush.msra.mxu0 %v344
      %610 = vmatmul.f32.gmra.mxu0 %v592
      %v611 = vpop.f32.mrf.mxu0
      %v612 = vadd.f32 0.0, %v611
      %613 = vdwg.mxu0
      %v614 = vadd.f32 %v586, %v612
      %v615 = vrot.slane %v315, 2
      %v616 = vsel %vm408, %v315, %v615
      %v617 = vsel %vm410, %v315, %v615
      %v618 = vrot.slane %v617, 2
      %v619 = vrot.slane %v616, 7
      %v620 = vrot.slane %v619, 2
      %v621 = vrot.slane %v618, 7
      %v622 = vsel %vm422, %v620, %v621
      %623 = vst [vmem:[#allocation1] ss:$4 sm:$0xff] %v430
      %s624 = scalar_lea.vmem [#allocation1], 1
      %625 = vst [vmem:[%s624] ss:$4 sm:$0xff] %v622
      %v626 = vld.sshfl [vmem:[#allocation1] sm:$0xff pattern:$0x73625140]
      %v627 = vsel %vm355, %v626, 0
      %629 = vmatpush.msra.mxu0 0.0
      %630 = vmatpush.msra.mxu0 0.0
      %631 = vmatpush.msra.mxu0 0.0
      %632 = vmatpush.msra.mxu0 0.0
      %633 = vmatpush.msra.mxu0 0.0
      %634 = vmatpush.msra.mxu0 0.0
      %635 = vmatpush.msra.mxu0 0.0
      %636 = vmatpush.msra.mxu0 0.0
      %637 = vmatpush.msra.mxu0 0.0
      %638 = vmatpush.msra.mxu0 0.0
      %639 = vmatpush.msra.mxu0 0.0
      %640 = vmatpush.msra.mxu0 0.0
      %641 = vmatpush.msra.mxu0 0.0
      %642 = vmatpush.msra.mxu0 0.0
      %643 = vmatpush.msra.mxu0 %v347
      %644 = vmatpush.msra.mxu0 %v346
      %645 = vmatmul.f32.gmra.mxu0 %v627
      %v646 = vpop.f32.mrf.mxu0
      %v647 = vadd.f32 0.0, %v646
      %648 = vdwg.mxu0
      %v649 = vadd.f32 %v614, %v647
      %v651 = vperm.slane %v348, 0
      %v653 = vadd.f32 %v649, %v651
      %v654 = vmax.f32 %v653, 0.0
      %v655 = vpack.c.bf16 %v654, %v654
      %vm656 = vcmask 123904
      %657 = vst.msk [vmem:[%s309] sm:$0x3] %vm656, %v655
      %p658 = scmp.lt.s32.totalorder %s17, 1
      %s659 = scalar_select %p658, %s17, 1
      %s660 = smul.addr %s659, 2
      %s661 = scalar_lea.vmem %s6, %s660
      // Predicated region
      $region45: #{denoiser_forward.9} parent=43 // pred_check
        %p662 = pneg %p181
      $region46: #{denoiser_forward.9} parent=43 // pred_check_branch
        %664 = sbr.rel (%p662) target = $region48
      $region47: #{denoiser_forward.9} parent=43 // pred_region
        _
      $region48: #{denoiser_forward.9} parent=43 // pred_fallthru
        _
    $region44: #{denoiser_forward.9} parent=5 // pred_fallthru
      _
    %p665 = scmp.le.s32.totalorder 2, %s12
    // Predicated region
    $region49: #{denoiser_forward.9} parent=5 // pred_check
      %p666 = pneg %p665
    $region50: #{denoiser_forward.9} parent=5 // pred_check_branch
      %668 = sbr.rel (%p666) target = $region52
    $region51: #{denoiser_forward.9} parent=5 // pred_region
      %s669 = ssub.s32 %s12, 2
      // Predicated region
      $region53: #{denoiser_forward.9} parent=51 // pred_check
        %p670 = pneg %p187
      $region54: #{denoiser_forward.9} parent=51 // pred_check_branch
        %672 = sbr.rel (%p670) target = $region56
      $region55: #{denoiser_forward.9} parent=51 // pred_region
        %p673 = scmp.lt.s32.totalorder %s18, 1
        %s674 = scalar_select %p673, %s18, 1
        %s675 = smul.addr %s674, 2
        %s676 = scalar_lea.vmem %s6, %s675
      $region56: #{denoiser_forward.9} parent=51 // pred_fallthru
        _
    $region52: #{denoiser_forward.9} parent=5 // pred_fallthru
      _
  $region6: #{denoiser_forward.9} parent=0 // loop_footer
    %s16 = sadd.s32 1, %s12
  $region7: #{denoiser_forward.9} parent=0 // loop_footer_branch
    %11 = sbr.rel target = $region3
  $region8: #{denoiser_forward.9} parent=0 // loop_exit
    _

// kernel: denoiser_forward.10
$region0: #{denoiser_forward.10}
  #allocation0 [shape = 'u32[]', space=smem, size = 0x4, offset = 0x4, fixed_abs, tag = 'smem constant byte address 0x4 - core index']
  #allocation1 [shape = 'u32[72,128]{1,0:T(1,128)}', space=vmem, size = 0x9000, scoped, tag = 'internal scratch']
  %s0 = inlined_call_operand.vmem [shape: bf16[2,4,16], index: 0, kind: input, shape index: {}]
  %s1 = inlined_call_operand.vmem [shape: f32[16,16], index: 1, kind: input, shape index: {}]
  %s2 = inlined_call_operand.vmem [shape: f32[1,16], index: 2, kind: input, shape index: {}]
  %s3 = inlined_call_operand.vmem [shape: f32[16,16], index: 3, kind: input, shape index: {}]
  %s4 = inlined_call_operand.vmem [shape: f32[1,16], index: 4, kind: input, shape index: {}]
  %s5 = inlined_call_operand.vmem [shape: f32[16,16], index: 5, kind: input, shape index: {}]
  %s6 = inlined_call_operand.vmem [shape: f32[1,16], index: 6, kind: input, shape index: {}]
  %s7 = inlined_call_operand.vmem [shape: f32[4,4,16], index: 7, kind: input, shape index: {}]
  %s8 = inlined_call_operand.vmem [shape: f32[1,16], index: 8, kind: input, shape index: {}]
  %s9 = inlined_call_operand.vmem [shape: bf16[2,4,16], index: 9, kind: output, shape index: {}]
  %s10 = sld [smem:[#allocation0]]
  $region69: #{denoiser_forward.10} parent=0
    _
  %s12 = ssub.s32 1, %s10
  %s13 = scalar_select 0, %s12, %s10
  loop: start=0, step=1, limit=4
  $region2: #{denoiser_forward.10} parent=0 // loop_pre_header
    _
  $region3: #{denoiser_forward.10} parent=0 // loop_header
    %s15 = sphi 0, %s19
    %p16 = scmp.ge.s32.totalorder %s15, 4
    %s25 = sphi 0, %s27
    %s28 = sphi 0, %s25
    %s29 = sphi 0, %s28
    %s45 = sphi 0, %s29
    %s49 = sphi 0, %s49
    %s51 = sphi 0, %s49
    %s52 = sphi 0, %s51
    %s66 = sphi 0, %s52
    %s70 = sphi 0, %s70
    %s72 = sphi 0, %s70
    %s73 = sphi 0, %s72
    %s87 = sphi 0, %s73
    %s91 = sphi 0, %s91
    %s93 = sphi 0, %s91
    %s94 = sphi 0, %s93
    %s108 = sphi 0, %s94
    %s112 = sphi 0, %s112
    %s114 = sphi 0, %s112
    %s115 = sphi 0, %s114
    %s129 = sphi 0, %s115
    %s133 = sphi 0, %s133
    %s135 = sphi 0, %s133
    %s136 = sphi 0, %s135
    %s150 = sphi 0, %s136
    %s154 = sphi 0, %s154
    %s156 = sphi 0, %s154
    %s157 = sphi 0, %s156
    %s171 = sphi 0, %s157
    %s175 = sphi 0, %s175
    %s177 = sphi 0, %s175
    %s178 = sphi 0, %s177
    %s192 = sphi 0, %s178
    %s196 = sphi 0, %s196
    %s198 = sphi 0, %s196
    %s199 = sphi 0, %s198
    %s213 = sphi 0, %s199
    %s219 = sphi 0, %s221
    %s222 = sphi 0, %s219
    %s223 = sphi 0, %s222
    %s239 = sphi 0, %s223
  $region4: #{denoiser_forward.10} parent=0 // loop_header_branch
    %18 = sbr.rel (%p16) target = $region8
  $region5: #{denoiser_forward.10} parent=0 // loop_body
    %s20 = ssub.s32 %s15, 1
    %s21 = ssub.s32 %s15, 2
    %s22 = sadd.s32 %s15, 1
    %s23 = ssub.s32 %s15, %s22
    %p24 = scmp.eq.s32.totalorder %s23, 0
    %s26 = sadd.s32 %s25, 1
    %s27 = scalar_select %p24, %s25, %s26
    %p30 = pneg %p24
    %p31 = scmp.eq.s32.totalorder %s15, 1
    %p32 = por %p30, %p31
    %p33 = scmp.ne.s32.totalorder %s25, %s28
    %p34 = scmp.eq.s32.totalorder %s15, 0
    %p35 = por %p33, %p34
    %p36 = scmp.ne.s32.totalorder %s25, %s28
    %p37 = scmp.eq.s32.totalorder %s20, 1
    %p38 = por %p36, %p37
    %p39 = scmp.ne.s32.totalorder %s28, %s29
    %p40 = scmp.eq.s32.totalorder %s20, 0
    %p41 = por %p39, %p40
    %p42 = scmp.ne.s32.totalorder %s28, %s29
    %p43 = scmp.eq.s32.totalorder %s21, 1
    %p44 = por %p42, %p43
    %p46 = scmp.ne.s32.totalorder %s29, %s45
    %p47 = scmp.eq.s32.totalorder %s21, 0
    %p48 = por %p46, %p47
    %s50 = sadd.s32 %s49, 1
    %p53 = scmp.eq.s32.totalorder %s15, 1
    %p54 = scmp.ne.s32.totalorder %s49, %s51
    %p55 = scmp.eq.s32.totalorder %s15, 0
    %p56 = por %p54, %p55
    %p57 = scmp.ne.s32.totalorder %s49, %s51
    %p58 = scmp.eq.s32.totalorder %s20, 1
    %p59 = por %p57, %p58
    %p60 = scmp.ne.s32.totalorder %s51, %s52
    %p61 = scmp.eq.s32.totalorder %s20, 0
    %p62 = por %p60, %p61
    %p63 = scmp.ne.s32.totalorder %s51, %s52
    %p64 = scmp.eq.s32.totalorder %s21, 1
    %p65 = por %p63, %p64
    %p67 = scmp.ne.s32.totalorder %s52, %s66
    %p68 = scmp.eq.s32.totalorder %s21, 0
    %p69 = por %p67, %p68
    %s71 = sadd.s32 %s70, 1
    %p74 = scmp.eq.s32.totalorder %s15, 1
    %p75 = scmp.ne.s32.totalorder %s70, %s72
    %p76 = scmp.eq.s32.totalorder %s15, 0
    %p77 = por %p75, %p76
    %p78 = scmp.ne.s32.totalorder %s70, %s72
    %p79 = scmp.eq.s32.totalorder %s20, 1
    %p80 = por %p78, %p79
    %p81 = scmp.ne.s32.totalorder %s72, %s73
    %p82 = scmp.eq.s32.totalorder %s20, 0
    %p83 = por %p81, %p82
    %p84 = scmp.ne.s32.totalorder %s72, %s73
    %p85 = scmp.eq.s32.totalorder %s21, 1
    %p86 = por %p84, %p85
    %p88 = scmp.ne.s32.totalorder %s73, %s87
    %p89 = scmp.eq.s32.totalorder %s21, 0
    %p90 = por %p88, %p89
    %s92 = sadd.s32 %s91, 1
    %p95 = scmp.eq.s32.totalorder %s15, 1
    %p96 = scmp.ne.s32.totalorder %s91, %s93
    %p97 = scmp.eq.s32.totalorder %s15, 0
    %p98 = por %p96, %p97
    %p99 = scmp.ne.s32.totalorder %s91, %s93
    %p100 = scmp.eq.s32.totalorder %s20, 1
    %p101 = por %p99, %p100
    %p102 = scmp.ne.s32.totalorder %s93, %s94
    %p103 = scmp.eq.s32.totalorder %s20, 0
    %p104 = por %p102, %p103
    %p105 = scmp.ne.s32.totalorder %s93, %s94
    %p106 = scmp.eq.s32.totalorder %s21, 1
    %p107 = por %p105, %p106
    %p109 = scmp.ne.s32.totalorder %s94, %s108
    %p110 = scmp.eq.s32.totalorder %s21, 0
    %p111 = por %p109, %p110
    %s113 = sadd.s32 %s112, 1
    %p116 = scmp.eq.s32.totalorder %s15, 1
    %p117 = scmp.ne.s32.totalorder %s112, %s114
    %p118 = scmp.eq.s32.totalorder %s15, 0
    %p119 = por %p117, %p118
    %p120 = scmp.ne.s32.totalorder %s112, %s114
    %p121 = scmp.eq.s32.totalorder %s20, 1
    %p122 = por %p120, %p121
    %p123 = scmp.ne.s32.totalorder %s114, %s115
    %p124 = scmp.eq.s32.totalorder %s20, 0
    %p125 = por %p123, %p124
    %p126 = scmp.ne.s32.totalorder %s114, %s115
    %p127 = scmp.eq.s32.totalorder %s21, 1
    %p128 = por %p126, %p127
    %p130 = scmp.ne.s32.totalorder %s115, %s129
    %p131 = scmp.eq.s32.totalorder %s21, 0
    %p132 = por %p130, %p131
    %s134 = sadd.s32 %s133, 1
    %p137 = scmp.eq.s32.totalorder %s15, 1
    %p138 = scmp.ne.s32.totalorder %s133, %s135
    %p139 = scmp.eq.s32.totalorder %s15, 0
    %p140 = por %p138, %p139
    %p141 = scmp.ne.s32.totalorder %s133, %s135
    %p142 = scmp.eq.s32.totalorder %s20, 1
    %p143 = por %p141, %p142
    %p144 = scmp.ne.s32.totalorder %s135, %s136
    %p145 = scmp.eq.s32.totalorder %s20, 0
    %p146 = por %p144, %p145
    %p147 = scmp.ne.s32.totalorder %s135, %s136
    %p148 = scmp.eq.s32.totalorder %s21, 1
    %p149 = por %p147, %p148
    %p151 = scmp.ne.s32.totalorder %s136, %s150
    %p152 = scmp.eq.s32.totalorder %s21, 0
    %p153 = por %p151, %p152
    %s155 = sadd.s32 %s154, 1
    %p158 = scmp.eq.s32.totalorder %s15, 1
    %p159 = scmp.ne.s32.totalorder %s154, %s156
    %p160 = scmp.eq.s32.totalorder %s15, 0
    %p161 = por %p159, %p160
    %p162 = scmp.ne.s32.totalorder %s154, %s156
    %p163 = scmp.eq.s32.totalorder %s20, 1
    %p164 = por %p162, %p163
    %p165 = scmp.ne.s32.totalorder %s156, %s157
    %p166 = scmp.eq.s32.totalorder %s20, 0
    %p167 = por %p165, %p166
    %p168 = scmp.ne.s32.totalorder %s156, %s157
    %p169 = scmp.eq.s32.totalorder %s21, 1
    %p170 = por %p168, %p169
    %p172 = scmp.ne.s32.totalorder %s157, %s171
    %p173 = scmp.eq.s32.totalorder %s21, 0
    %p174 = por %p172, %p173
    %s176 = sadd.s32 %s175, 1
    %p179 = scmp.eq.s32.totalorder %s15, 1
    %p180 = scmp.ne.s32.totalorder %s175, %s177
    %p181 = scmp.eq.s32.totalorder %s15, 0
    %p182 = por %p180, %p181
    %p183 = scmp.ne.s32.totalorder %s175, %s177
    %p184 = scmp.eq.s32.totalorder %s20, 1
    %p185 = por %p183, %p184
    %p186 = scmp.ne.s32.totalorder %s177, %s178
    %p187 = scmp.eq.s32.totalorder %s20, 0
    %p188 = por %p186, %p187
    %p189 = scmp.ne.s32.totalorder %s177, %s178
    %p190 = scmp.eq.s32.totalorder %s21, 1
    %p191 = por %p189, %p190
    %p193 = scmp.ne.s32.totalorder %s178, %s192
    %p194 = scmp.eq.s32.totalorder %s21, 0
    %p195 = por %p193, %p194
    %s197 = sadd.s32 %s196, 1
    %p200 = scmp.eq.s32.totalorder %s15, 1
    %p201 = scmp.ne.s32.totalorder %s196, %s198
    %p202 = scmp.eq.s32.totalorder %s15, 0
    %p203 = por %p201, %p202
    %p204 = scmp.ne.s32.totalorder %s196, %s198
    %p205 = scmp.eq.s32.totalorder %s20, 1
    %p206 = por %p204, %p205
    %p207 = scmp.ne.s32.totalorder %s198, %s199
    %p208 = scmp.eq.s32.totalorder %s20, 0
    %p209 = por %p207, %p208
    %p210 = scmp.ne.s32.totalorder %s198, %s199
    %p211 = scmp.eq.s32.totalorder %s21, 1
    %p212 = por %p210, %p211
    %p214 = scmp.ne.s32.totalorder %s199, %s213
    %p215 = scmp.eq.s32.totalorder %s21, 0
    %p216 = por %p214, %p215
    %s217 = ssub.s32 %s15, %s22
    %p218 = scmp.eq.s32.totalorder %s217, 0
    %s220 = sadd.s32 %s219, 1
    %s221 = scalar_select %p218, %s219, %s220
    %p224 = pneg %p218
    %p225 = scmp.eq.s32.totalorder %s15, 1
    %p226 = por %p224, %p225
    %p227 = scmp.ne.s32.totalorder %s219, %s222
    %p228 = scmp.eq.s32.totalorder %s15, 0
    %p229 = por %p227, %p228
    %p230 = scmp.ne.s32.totalorder %s219, %s222
    %p231 = scmp.eq.s32.totalorder %s20, 1
    %p232 = por %p230, %p231
    %p233 = scmp.ne.s32.totalorder %s222, %s223
    %p234 = scmp.eq.s32.totalorder %s20, 0
    %p235 = por %p233, %p234
    %p236 = scmp.ne.s32.totalorder %s222, %s223
    %p237 = scmp.eq.s32.totalorder %s21, 1
    %p238 = por %p236, %p237
    %p240 = scmp.ne.s32.totalorder %s223, %s239
    %p241 = scmp.eq.s32.totalorder %s21, 0
    %p242 = por %p240, %p241
    %p243 = scmp.le.s32.totalorder 1, %s15
    %p244 = scmp.lt.s32.totalorder %s15, 3
    %p245 = pnand %p243, %p244
    %p246 = pneg %p245
    // Predicated region
    $region9: #{denoiser_forward.10} parent=5 // pred_check
      _
    $region10: #{denoiser_forward.10} parent=5 // pred_check_branch
      %248 = sbr.rel (%p245) target = $region12
    $region11: #{denoiser_forward.10} parent=5 // pred_region
      %s249 = ssub.s32 %s15, 1
      // Predicated region
      $region13: #{denoiser_forward.10} parent=11 // pred_check
        %p250 = pneg %p62
      $region14: #{denoiser_forward.10} parent=11 // pred_check_branch
        %252 = sbr.rel (%p250) target = $region16
      $region15: #{denoiser_forward.10} parent=11 // pred_region
        _
      $region16: #{denoiser_forward.10} parent=11 // pred_fallthru
        _
      // Predicated region
      $region17: #{denoiser_forward.10} parent=11 // pred_check
        %p253 = pneg %p83
      $region18: #{denoiser_forward.10} parent=11 // pred_check_branch
        %255 = sbr.rel (%p253) target = $region20
      $region19: #{denoiser_forward.10} parent=11 // pred_region
        _
      $region20: #{denoiser_forward.10} parent=11 // pred_fallthru
        _
      // Predicated region
      $region21: #{denoiser_forward.10} parent=11 // pred_check
        %p256 = pneg %p104
      $region22: #{denoiser_forward.10} parent=11 // pred_check_branch
        %258 = sbr.rel (%p256) target = $region24
      $region23: #{denoiser_forward.10} parent=11 // pred_region
        _
      $region24: #{denoiser_forward.10} parent=11 // pred_fallthru
        _
      // Predicated region
      $region25: #{denoiser_forward.10} parent=11 // pred_check
        %p259 = pneg %p125
      $region26: #{denoiser_forward.10} parent=11 // pred_check_branch
        %261 = sbr.rel (%p259) target = $region28
      $region27: #{denoiser_forward.10} parent=11 // pred_region
        _
      $region28: #{denoiser_forward.10} parent=11 // pred_fallthru
        _
      // Predicated region
      $region29: #{denoiser_forward.10} parent=11 // pred_check
        %p262 = pneg %p146
      $region30: #{denoiser_forward.10} parent=11 // pred_check_branch
        %264 = sbr.rel (%p262) target = $region32
      $region31: #{denoiser_forward.10} parent=11 // pred_region
        _
      $region32: #{denoiser_forward.10} parent=11 // pred_fallthru
        _
      // Predicated region
      $region33: #{denoiser_forward.10} parent=11 // pred_check
        %p265 = pneg %p167
      $region34: #{denoiser_forward.10} parent=11 // pred_check_branch
        %267 = sbr.rel (%p265) target = $region36
      $region35: #{denoiser_forward.10} parent=11 // pred_region
        _
      $region36: #{denoiser_forward.10} parent=11 // pred_fallthru
        _
      // Predicated region
      $region37: #{denoiser_forward.10} parent=11 // pred_check
        %p268 = pneg %p188
      $region38: #{denoiser_forward.10} parent=11 // pred_check_branch
        %270 = sbr.rel (%p268) target = $region40
      $region39: #{denoiser_forward.10} parent=11 // pred_region
        _
      $region40: #{denoiser_forward.10} parent=11 // pred_fallthru
        _
      // Predicated region
      $region41: #{denoiser_forward.10} parent=11 // pred_check
        %p271 = pneg %p209
      $region42: #{denoiser_forward.10} parent=11 // pred_check_branch
        %273 = sbr.rel (%p271) target = $region44
      $region43: #{denoiser_forward.10} parent=11 // pred_region
        _
      $region44: #{denoiser_forward.10} parent=11 // pred_fallthru
        _
    $region12: #{denoiser_forward.10} parent=5 // pred_fallthru
      _
    %p274 = scmp.lt.s32.totalorder %s15, 2
    // Predicated region
    $region45: #{denoiser_forward.10} parent=5 // pred_check
      %p275 = pneg %p274
    $region46: #{denoiser_forward.10} parent=5 // pred_check_branch
      %277 = sbr.rel (%p275) target = $region48
    $region47: #{denoiser_forward.10} parent=5 // pred_region
      // Predicated region
      $region49: #{denoiser_forward.10} parent=47 // pred_check
        %p278 = pneg %p35
      $region50: #{denoiser_forward.10} parent=47 // pred_check_branch
        %280 = sbr.rel (%p278) target = $region52
      $region51: #{denoiser_forward.10} parent=47 // pred_region
        %p281 = scmp.lt.s32.totalorder %s15, 1
        %s282 = scalar_select %p281, %s15, 1
        %s283 = smul.addr %s282, 2
        %s284 = scalar_lea.vmem %s0, %s283
      $region52: #{denoiser_forward.10} parent=47 // pred_fallthru
        _
    $region48: #{denoiser_forward.10} parent=5 // pred_fallthru
      _
    %p285 = scmp.le.s32.totalorder 1, %s15
    %p286 = scmp.lt.s32.totalorder %s15, 3
    %p287 = pnand %p285, %p286
    %p288 = pneg %p287
    // Predicated region
    $region53: #{denoiser_forward.10} parent=5 // pred_check
      _
    $region54: #{denoiser_forward.10} parent=5 // pred_check_branch
      %290 = sbr.rel (%p287) target = $region56
    $region55: #{denoiser_forward.10} parent=5 // pred_region
      %s291 = ssub.s32 %s15, 1
      %p292 = scmp.lt.s32.totalorder %s20, 1
      %s293 = scalar_select %p292, %s20, 1
      %s294 = smul.addr %s293, 2
      %s295 = scalar_lea.vmem %s0, %s294
      %p296 = pneg %p41
      %p297 = pneg %p38
      %p298 = pneg %p62
      %p299 = pneg %p59
      %p300 = pneg %p83
      %p301 = pneg %p80
      %p302 = pneg %p104
      %p303 = pneg %p101
      %p304 = pneg %p125
      %p305 = pneg %p122
      %p306 = pneg %p146
      %p307 = pneg %p143
      %p308 = pneg %p167
      %p309 = pneg %p164
      %p310 = pneg %p188
      %p311 = pneg %p185
      %p312 = pneg %p209
      %p313 = pneg %p206
      %p314 = pneg %p235
      %p315 = pneg %p232
      %p316 = scmp.lt.s32.totalorder %s20, 1
      %s317 = scalar_select %p316, %s20, 1
      %s318 = smul.addr %s317, 2
      %s319 = scalar_lea.vmem %s9, %s318
      %p320 = scmp.lt.s32.totalorder %s20, 1
      %s321 = scalar_select %p320, %s20, 1
      %s322 = smul.addr %s321, 2
      %s323 = scalar_lea.vmem %s0, %s322
      %p324 = scmp.lt.s32.totalorder %s20, 1
      %s325 = scalar_select %p324, %s20, 1
      %s326 = smul.addr %s325, 2
      %s327 = scalar_lea.vmem %s9, %s326
      %v328 = vld [vmem:[%s323] sm:$0x3]
      %v329 = vunpack.c.l.bf16 %v328
      %v330 = vld [vmem:[%s1] sm:$0xff]
      %v331 = vld [vmem:[%s1 + $0x8] sm:$0xff]
      %v332 = vld [vmem:[%s2] sm:$0x1]
      %v334 = vperm.slane %v332, 0
      %vm336 = vcmask 130048
      %v338 = vsel %vm336, %v329, 0
      %340 = vmatpush.msra.mxu0 0.0
      %341 = vmatpush.msra.mxu0 0.0
      %342 = vmatpush.msra.mxu0 0.0
      %343 = vmatpush.msra.mxu0 0.0
      %344 = vmatpush.msra.mxu0 0.0
      %345 = vmatpush.msra.mxu0 0.0
      %346 = vmatpush.msra.mxu0 0.0
      %347 = vmatpush.msra.mxu0 0.0
      %348 = vmatpush.msra.mxu0 0.0
      %349 = vmatpush.msra.mxu0 0.0
      %350 = vmatpush.msra.mxu0 0.0
      %351 = vmatpush.msra.mxu0 0.0
      %352 = vmatpush.msra.mxu0 0.0
      %353 = vmatpush.msra.mxu0 0.0
      %354 = vmatpush.msra.mxu0 %v331
      %355 = vmatpush.msra.mxu0 %v330
      %356 = vmatmul.f32.gmra.mxu0 %v338
      %v357 = vpop.f32.mrf.mxu0
      %v358 = vadd.f32 %v334, %v357
      %359 = vdwg.mxu0
      %v360 = vld [vmem:[%s3] sm:$0xff]
      %v361 = vld [vmem:[%s3 + $0x8] sm:$0xff]
      %v362 = vld [vmem:[%s4] sm:$0x1]
      %v364 = vperm.slane %v362, 0
      %366 = vmatpush.msra.mxu0 0.0
      %367 = vmatpush.msra.mxu0 0.0
      %368 = vmatpush.msra.mxu0 0.0
      %369 = vmatpush.msra.mxu0 0.0
      %370 = vmatpush.msra.mxu0 0.0
      %371 = vmatpush.msra.mxu0 0.0
      %372 = vmatpush.msra.mxu0 0.0
      %373 = vmatpush.msra.mxu0 0.0
      %374 = vmatpush.msra.mxu0 0.0
      %375 = vmatpush.msra.mxu0 0.0
      %376 = vmatpush.msra.mxu0 0.0
      %377 = vmatpush.msra.mxu0 0.0
      %378 = vmatpush.msra.mxu0 0.0
      %379 = vmatpush.msra.mxu0 0.0
      %380 = vmatpush.msra.mxu0 %v361
      %381 = vmatpush.msra.mxu0 %v360
      %382 = vmatmul.f32.gmra.mxu0 %v338
      %v383 = vpop.f32.mrf.mxu0
      %v384 = vadd.f32 %v364, %v383
      %385 = vdwg.mxu0
      %v386 = vld [vmem:[%s5] sm:$0xff]
      %v387 = vld [vmem:[%s5 + $0x8] sm:$0xff]
      %v388 = vld [vmem:[%s6] sm:$0x1]
      %v390 = vperm.slane %v388, 0
      %392 = vmatpush.msra.mxu0 0.0
      %393 = vmatpush.msra.mxu0 0.0
      %394 = vmatpush.msra.mxu0 0.0
      %395 = vmatpush.msra.mxu0 0.0
      %396 = vmatpush.msra.mxu0 0.0
      %397 = vmatpush.msra.mxu0 0.0
      %398 = vmatpush.msra.mxu0 0.0
      %399 = vmatpush.msra.mxu0 0.0
      %400 = vmatpush.msra.mxu0 0.0
      %401 = vmatpush.msra.mxu0 0.0
      %402 = vmatpush.msra.mxu0 0.0
      %403 = vmatpush.msra.mxu0 0.0
      %404 = vmatpush.msra.mxu0 0.0
      %405 = vmatpush.msra.mxu0 0.0
      %406 = vmatpush.msra.mxu0 %v387
      %407 = vmatpush.msra.mxu0 %v386
      %408 = vmatmul.f32.gmra.mxu0 %v338
      %v409 = vpop.f32.mrf.mxu0
      %v410 = vadd.f32 %v390, %v409
      %411 = vdwg.mxu0
      %413 = vrot.lane.b32.xlu0 %v358, 124
      %v414 = vpop.permute.xlu0 %413
      %415 = vrot.lane.b32.xlu0 %v358, 120
      %v416 = vpop.permute.xlu0 %415
      %417 = vrot.lane.b32.xlu0 %v358, 116
      %v418 = vpop.permute.xlu0 %417
      %420 = vrot.lane.b32.xlu0 %v384, 124
      %v421 = vpop.permute.xlu0 %420
      %422 = vrot.lane.b32.xlu0 %v384, 120
      %v423 = vpop.permute.xlu0 %422
      %424 = vrot.lane.b32.xlu0 %v384, 116
      %v425 = vpop.permute.xlu0 %424
      %427 = vrot.lane.b32.xlu0 %v410, 124
      %v428 = vpop.permute.xlu0 %427
      %429 = vrot.lane.b32.xlu0 %v410, 120
      %v430 = vpop.permute.xlu0 %429
      %431 = vrot.lane.b32.xlu0 %v410, 116
      %v432 = vpop.permute.xlu0 %431
      %vm433 = vcmask 31744
      %v434 = vsel %vm433, %v358, 0
      %v436 = vsel %vm433, %v384, 0
      %438 = vmatpush.xpose.msra.mxu0 0.0
      %439 = vmatpush.xpose.msra.mxu0 0.0
      %440 = vmatpush.xpose.msra.mxu0 0.0
      %441 = vmatpush.xpose.msra.mxu0 0.0
      %442 = vmatpush.xpose.msra.mxu0 0.0
      %443 = vmatpush.xpose.msra.mxu0 0.0
      %444 = vmatpush.xpose.msra.mxu0 0.0
      %445 = vmatpush.xpose.msra.mxu0 0.0
      %446 = vmatpush.xpose.msra.mxu0 0.0
      %447 = vmatpush.xpose.msra.mxu0 0.0
      %448 = vmatpush.xpose.msra.mxu0 0.0
      %449 = vmatpush.xpose.msra.mxu0 0.0
      %450 = vmatpush.xpose.msra.mxu0 0.0
      %451 = vmatpush.xpose.msra.mxu0 0.0
      %452 = vmatpush.xpose.msra.mxu0 0.0
      %453 = vmatpush.xpose.msra.mxu0 %v436
      %454 = vmatmul.f32.gmra.mxu0 %v434
      %v455 = vpop.f32.mrf.mxu0
      %v456 = vadd.f32 0.0, %v455
      %457 = vdwg.mxu0
      %v458 = vsel %vm433, %v414, 0
      %v460 = vsel %vm433, %v421, 0
      %462 = vmatpush.xpose.msra.mxu0 0.0
      %463 = vmatpush.xpose.msra.mxu0 0.0
      %464 = vmatpush.xpose.msra.mxu0 0.0
      %465 = vmatpush.xpose.msra.mxu0 0.0
      %466 = vmatpush.xpose.msra.mxu0 0.0
      %467 = vmatpush.xpose.msra.mxu0 0.0
      %468 = vmatpush.xpose.msra.mxu0 0.0
      %469 = vmatpush.xpose.msra.mxu0 0.0
      %470 = vmatpush.xpose.msra.mxu0 0.0
      %471 = vmatpush.xpose.msra.mxu0 0.0
      %472 = vmatpush.xpose.msra.mxu0 0.0
      %473 = vmatpush.xpose.msra.mxu0 0.0
      %474 = vmatpush.xpose.msra.mxu0 0.0
      %475 = vmatpush.xpose.msra.mxu0 0.0
      %476 = vmatpush.xpose.msra.mxu0 0.0
      %477 = vmatpush.xpose.msra.mxu0 %v460
      %478 = vmatmul.f32.gmra.mxu0 %v458
      %v479 = vpop.f32.mrf.mxu0
      %v480 = vadd.f32 0.0, %v479
      %481 = vdwg.mxu0
      %v482 = vsel %vm433, %v416, 0
      %v484 = vsel %vm433, %v423, 0
      %486 = vmatpush.xpose.msra.mxu0 0.0
      %487 = vmatpush.xpose.msra.mxu0 0.0
      %488 = vmatpush.xpose.msra.mxu0 0.0
      %489 = vmatpush.xpose.msra.mxu0 0.0
      %490 = vmatpush.xpose.msra.mxu0 0.0
      %491 = vmatpush.xpose.msra.mxu0 0.0
      %492 = vmatpush.xpose.msra.mxu0 0.0
      %493 = vmatpush.xpose.msra.mxu0 0.0
      %494 = vmatpush.xpose.msra.mxu0 0.0
      %495 = vmatpush.xpose.msra.mxu0 0.0
      %496 = vmatpush.xpose.msra.mxu0 0.0
      %497 = vmatpush.xpose.msra.mxu0 0.0
      %498 = vmatpush.xpose.msra.mxu0 0.0
      %499 = vmatpush.xpose.msra.mxu0 0.0
      %500 = vmatpush.xpose.msra.mxu0 0.0
      %501 = vmatpush.xpose.msra.mxu0 %v484
      %502 = vmatmul.f32.gmra.mxu0 %v482
      %v503 = vpop.f32.mrf.mxu0
      %v504 = vadd.f32 0.0, %v503
      %505 = vdwg.mxu0
      %v506 = vsel %vm433, %v418, 0
      %v508 = vsel %vm433, %v425, 0
      %510 = vmatpush.xpose.msra.mxu0 0.0
      %511 = vmatpush.xpose.msra.mxu0 0.0
      %512 = vmatpush.xpose.msra.mxu0 0.0
      %513 = vmatpush.xpose.msra.mxu0 0.0
      %514 = vmatpush.xpose.msra.mxu0 0.0
      %515 = vmatpush.xpose.msra.mxu0 0.0
      %516 = vmatpush.xpose.msra.mxu0 0.0
      %517 = vmatpush.xpose.msra.mxu0 0.0
      %518 = vmatpush.xpose.msra.mxu0 0.0
      %519 = vmatpush.xpose.msra.mxu0 0.0
      %520 = vmatpush.xpose.msra.mxu0 0.0
      %521 = vmatpush.xpose.msra.mxu0 0.0
      %522 = vmatpush.xpose.msra.mxu0 0.0
      %523 = vmatpush.xpose.msra.mxu0 0.0
      %524 = vmatpush.xpose.msra.mxu0 0.0
      %525 = vmatpush.xpose.msra.mxu0 %v508
      %526 = vmatmul.f32.gmra.mxu0 %v506
      %v527 = vpop.f32.mrf.mxu0
      %v528 = vadd.f32 0.0, %v527
      %529 = vdwg.mxu0
      %v530 = vmul.f32 %v456, 0.5
      %v531 = vmul.f32 %v480, 0.5
      %v532 = vmul.f32 %v504, 0.5
      %v533 = vmul.f32 %v528, 0.5
      %vm534 = vcmask 27648
      %v535 = vsel %vm534, %v530, -inf
      %536 = vmax.xlane.f32.xlu0 %v535
      %v537 = vpop.xlane.xlu0 %536
      %v538 = vsel %vm534, %v531, -inf
      %539 = vmax.xlane.f32.xlu0 %v538
      %v540 = vpop.xlane.xlu0 %539
      %v541 = vsel %vm534, %v532, -inf
      %542 = vmax.xlane.f32.xlu0 %v541
      %v543 = vpop.xlane.xlu0 %542
      %v544 = vsel %vm534, %v533, -inf
      %545 = vmax.xlane.f32.xlu0 %v544
      %v546 = vpop.xlane.xlu0 %545
      %v547 = vsub.f32 %v530, %v537
      %v548 = vsub.f32 %v531, %v540
      %v549 = vsub.f32 %v532, %v543
      %v550 = vsub.f32 %v533, %v546
      %v551 = vmul.f32 %v547, 1.442695
      %v552 = vpow.pop %v551
      %v553 = vmul.f32 %v548, 1.442695
      %v554 = vpow.pop %v553
      %v555 = vmul.f32 %v549, 1.442695
      %v556 = vpow.pop %v555
      %v557 = vmul.f32 %v550, 1.442695
      %v558 = vpow.pop %v557
      %v559 = vsel %vm534, %v552, 0.0
      %560 = vadd.xlane.f32.xlu0 %v559
      %v561 = vpop.xlane.xlu0 %560
      %v562 = vsel %vm534, %v554, 0.0
      %563 = vadd.xlane.f32.xlu0 %v562
      %v564 = vpop.xlane.xlu0 %563
      %v565 = vsel %vm534, %v556, 0.0
      %566 = vadd.xlane.f32.xlu0 %v565
      %v567 = vpop.xlane.xlu0 %566
      %v568 = vsel %vm534, %v558, 0.0
      %569 = vadd.xlane.f32.xlu0 %v568
      %v570 = vpop.xlane.xlu0 %569
      %v571 = vrcp.pop %v561
      %v572 = vrcp.pop %v564
      %v573 = vrcp.pop %v567
      %v574 = vrcp.pop %v570
      %v575 = vmul.f32 %v552, %v571
      %v576 = vmul.f32 %v554, %v572
      %v577 = vmul.f32 %v556, %v573
      %v578 = vmul.f32 %v558, %v574
      %v580 = vsel %vm433, %v575, 0
      %vm582 = vcmask 1043456
      %v583 = vsel %vm582, %v410, 0
      %585 = vmatpush.msra.mxu0 0.0
      %586 = vmatpush.msra.mxu0 0.0
      %587 = vmatpush.msra.mxu0 0.0
      %588 = vmatpush.msra.mxu0 0.0
      %589 = vmatpush.msra.mxu0 0.0
      %590 = vmatpush.msra.mxu0 0.0
      %591 = vmatpush.msra.mxu0 0.0
      %592 = vmatpush.msra.mxu0 0.0
      %593 = vmatpush.msra.mxu0 0.0
      %594 = vmatpush.msra.mxu0 0.0
      %595 = vmatpush.msra.mxu0 0.0
      %596 = vmatpush.msra.mxu0 0.0
      %597 = vmatpush.msra.mxu0 0.0
      %598 = vmatpush.msra.mxu0 0.0
      %599 = vmatpush.msra.mxu0 0.0
      %600 = vmatpush.msra.mxu0 %v583
      %601 = vmatmul.f32.gmra.mxu0 %v580
      %v602 = vpop.f32.mrf.mxu0
      %v603 = vadd.f32 0.0, %v602
      %604 = vdwg.mxu0
      %v606 = vsel %vm433, %v576, 0
      %v608 = vsel %vm582, %v428, 0
      %610 = vmatpush.msra.mxu0 0.0
      %611 = vmatpush.msra.mxu0 0.0
      %612 = vmatpush.msra.mxu0 0.0
      %613 = vmatpush.msra.mxu0 0.0
      %614 = vmatpush.msra.mxu0 0.0
      %615 = vmatpush.msra.mxu0 0.0
      %616 = vmatpush.msra.mxu0 0.0
      %617 = vmatpush.msra.mxu0 0.0
      %618 = vmatpush.msra.mxu0 0.0
      %619 = vmatpush.msra.mxu0 0.0
      %620 = vmatpush.msra.mxu0 0.0
      %621 = vmatpush.msra.mxu0 0.0
      %622 = vmatpush.msra.mxu0 0.0
      %623 = vmatpush.msra.mxu0 0.0
      %624 = vmatpush.msra.mxu0 0.0
      %625 = vmatpush.msra.mxu0 %v608
      %626 = vmatmul.f32.gmra.mxu0 %v606
      %v627 = vpop.f32.mrf.mxu0
      %v628 = vadd.f32 0.0, %v627
      %629 = vdwg.mxu0
      %v631 = vsel %vm433, %v577, 0
      %v633 = vsel %vm582, %v430, 0
      %635 = vmatpush.msra.mxu0 0.0
      %636 = vmatpush.msra.mxu0 0.0
      %637 = vmatpush.msra.mxu0 0.0
      %638 = vmatpush.msra.mxu0 0.0
      %639 = vmatpush.msra.mxu0 0.0
      %640 = vmatpush.msra.mxu0 0.0
      %641 = vmatpush.msra.mxu0 0.0
      %642 = vmatpush.msra.mxu0 0.0
      %643 = vmatpush.msra.mxu0 0.0
      %644 = vmatpush.msra.mxu0 0.0
      %645 = vmatpush.msra.mxu0 0.0
      %646 = vmatpush.msra.mxu0 0.0
      %647 = vmatpush.msra.mxu0 0.0
      %648 = vmatpush.msra.mxu0 0.0
      %649 = vmatpush.msra.mxu0 0.0
      %650 = vmatpush.msra.mxu0 %v633
      %651 = vmatmul.f32.gmra.mxu0 %v631
      %v652 = vpop.f32.mrf.mxu0
      %v653 = vadd.f32 0.0, %v652
      %654 = vdwg.mxu0
      %v656 = vsel %vm433, %v578, 0
      %v658 = vsel %vm582, %v432, 0
      %660 = vmatpush.msra.mxu0 0.0
      %661 = vmatpush.msra.mxu0 0.0
      %662 = vmatpush.msra.mxu0 0.0
      %663 = vmatpush.msra.mxu0 0.0
      %664 = vmatpush.msra.mxu0 0.0
      %665 = vmatpush.msra.mxu0 0.0
      %666 = vmatpush.msra.mxu0 0.0
      %667 = vmatpush.msra.mxu0 0.0
      %668 = vmatpush.msra.mxu0 0.0
      %669 = vmatpush.msra.mxu0 0.0
      %670 = vmatpush.msra.mxu0 0.0
      %671 = vmatpush.msra.mxu0 0.0
      %672 = vmatpush.msra.mxu0 0.0
      %673 = vmatpush.msra.mxu0 0.0
      %674 = vmatpush.msra.mxu0 0.0
      %675 = vmatpush.msra.mxu0 %v658
      %676 = vmatmul.f32.gmra.mxu0 %v656
      %v677 = vpop.f32.mrf.mxu0
      %v678 = vadd.f32 0.0, %v677
      %679 = vdwg.mxu0
      %v680 = vld [vmem:[%s7] sm:$0xf]
      %v681 = vld [vmem:[%s7 + $0x4] sm:$0xf]
      %v682 = vld [vmem:[%s7 + $0x8] sm:$0xf]
      %v683 = vld [vmem:[%s7 + $0xc] sm:$0xf]
      %v685 = vsel %vm433, %v603, 0
      %v688 = vsel %vm582, %v680, 0
      %690 = vmatpush.msra.mxu0 0.0
      %691 = vmatpush.msra.mxu0 0.0
      %692 = vmatpush.msra.mxu0 0.0
      %693 = vmatpush.msra.mxu0 0.0
      %694 = vmatpush.msra.mxu0 0.0
      %695 = vmatpush.msra.mxu0 0.0
      %696 = vmatpush.msra.mxu0 0.0
      %697 = vmatpush.msra.mxu0 0.0
      %698 = vmatpush.msra.mxu0 0.0
      %699 = vmatpush.msra.mxu0 0.0
      %700 = vmatpush.msra.mxu0 0.0
      %701 = vmatpush.msra.mxu0 0.0
      %702 = vmatpush.msra.mxu0 0.0
      %703 = vmatpush.msra.mxu0 0.0
      %704 = vmatpush.msra.mxu0 0.0
      %705 = vmatpush.msra.mxu0 %v688
      %706 = vmatmul.f32.gmra.mxu0 %v685
      %v707 = vpop.f32.mrf.mxu0
      %v708 = vadd.f32 0.0, %v707
      %709 = vdwg.mxu0
      %v711 = vsel %vm433, %v628, 0
      %v714 = vsel %vm582, %v681, 0
      %716 = vmatpush.msra.mxu0 0.0
      %717 = vmatpush.msra.mxu0 0.0
      %718 = vmatpush.msra.mxu0 0.0
      %719 = vmatpush.msra.mxu0 0.0
      %720 = vmatpush.msra.mxu0 0.0
      %721 = vmatpush.msra.mxu0 0.0
      %722 = vmatpush.msra.mxu0 0.0
      %723 = vmatpush.msra.mxu0 0.0
      %724 = vmatpush.msra.mxu0 0.0
      %725 = vmatpush.msra.mxu0 0.0
      %726 = vmatpush.msra.mxu0 0.0
      %727 = vmatpush.msra.mxu0 0.0
      %728 = vmatpush.msra.mxu0 0.0
      %729 = vmatpush.msra.mxu0 0.0
      %730 = vmatpush.msra.mxu0 0.0
      %731 = vmatpush.msra.mxu0 %v714
      %732 = vmatmul.f32.gmra.mxu0 %v711
      %v733 = vpop.f32.mrf.mxu0
      %v734 = vadd.f32 0.0, %v733
      %735 = vdwg.mxu0
      %v737 = vsel %vm433, %v653, 0
      %v740 = vsel %vm582, %v682, 0
      %742 = vmatpush.msra.mxu0 0.0
      %743 = vmatpush.msra.mxu0 0.0
      %744 = vmatpush.msra.mxu0 0.0
      %745 = vmatpush.msra.mxu0 0.0
      %746 = vmatpush.msra.mxu0 0.0
      %747 = vmatpush.msra.mxu0 0.0
      %748 = vmatpush.msra.mxu0 0.0
      %749 = vmatpush.msra.mxu0 0.0
      %750 = vmatpush.msra.mxu0 0.0
      %751 = vmatpush.msra.mxu0 0.0
      %752 = vmatpush.msra.mxu0 0.0
      %753 = vmatpush.msra.mxu0 0.0
      %754 = vmatpush.msra.mxu0 0.0
      %755 = vmatpush.msra.mxu0 0.0
      %756 = vmatpush.msra.mxu0 0.0
      %757 = vmatpush.msra.mxu0 %v740
      %758 = vmatmul.f32.gmra.mxu0 %v737
      %v759 = vpop.f32.mrf.mxu0
      %v760 = vadd.f32 0.0, %v759
      %761 = vdwg.mxu0
      %v763 = vsel %vm433, %v678, 0
      %v766 = vsel %vm582, %v683, 0
      %768 = vmatpush.msra.mxu0 0.0
      %769 = vmatpush.msra.mxu0 0.0
      %770 = vmatpush.msra.mxu0 0.0
      %771 = vmatpush.msra.mxu0 0.0
      %772 = vmatpush.msra.mxu0 0.0
      %773 = vmatpush.msra.mxu0 0.0
      %774 = vmatpush.msra.mxu0 0.0
      %775 = vmatpush.msra.mxu0 0.0
      %776 = vmatpush.msra.mxu0 0.0
      %777 = vmatpush.msra.mxu0 0.0
      %778 = vmatpush.msra.mxu0 0.0
      %779 = vmatpush.msra.mxu0 0.0
      %780 = vmatpush.msra.mxu0 0.0
      %781 = vmatpush.msra.mxu0 0.0
      %782 = vmatpush.msra.mxu0 0.0
      %783 = vmatpush.msra.mxu0 %v766
      %784 = vmatmul.f32.gmra.mxu0 %v763
      %v785 = vpop.f32.mrf.mxu0
      %v786 = vadd.f32 0.0, %v785
      %787 = vdwg.mxu0
      %vm788 = vcmask 125952
      %v789 = vsel %vm788, %v708, 0.0
      %v790 = vsel %vm788, %v734, 0.0
      %v791 = vadd.f32 %v789, %v790
      %v792 = vsel %vm788, %v760, 0.0
      %v793 = vadd.f32 %v791, %v792
      %v794 = vsel %vm788, %v786, 0.0
      %v795 = vadd.f32 %v793, %v794
      %v796 = vld [vmem:[%s8] sm:$0x1]
      %v798 = vperm.slane %v796, 0
      %v800 = vadd.f32 %v795, %v798
      %v801 = vpack.c.bf16 %v800, %v800
      %vm802 = vcmask 123904
      %803 = vst.msk [vmem:[%s327] sm:$0x3] %vm802, %v801
      %p804 = scmp.lt.s32.totalorder %s20, 1
      %s805 = scalar_select %p804, %s20, 1
      %s806 = smul.addr %s805, 2
      %s807 = scalar_lea.vmem %s9, %s806
      // Predicated region
      $region57: #{denoiser_forward.10} parent=55 // pred_check
        %p808 = pneg %p232
      $region58: #{denoiser_forward.10} parent=55 // pred_check_branch
        %810 = sbr.rel (%p808) target = $region60
      $region59: #{denoiser_forward.10} parent=55 // pred_region
        _
      $region60: #{denoiser_forward.10} parent=55 // pred_fallthru
        _
    $region56: #{denoiser_forward.10} parent=5 // pred_fallthru
      _
    %p811 = scmp.le.s32.totalorder 2, %s15
    // Predicated region
    $region61: #{denoiser_forward.10} parent=5 // pred_check
      %p812 = pneg %p811
    $region62: #{denoiser_forward.10} parent=5 // pred_check_branch
      %814 = sbr.rel (%p812) target = $region64
    $region63: #{denoiser_forward.10} parent=5 // pred_region
      %s815 = ssub.s32 %s15, 2
      // Predicated region
      $region65: #{denoiser_forward.10} parent=63 // pred_check
        %p816 = pneg %p238
      $region66: #{denoiser_forward.10} parent=63 // pred_check_branch
        %818 = sbr.rel (%p816) target = $region68
      $region67: #{denoiser_forward.10} parent=63 // pred_region
        %p819 = scmp.lt.s32.totalorder %s21, 1
        %s820 = scalar_select %p819, %s21, 1
        %s821 = smul.addr %s820, 2
        %s822 = scalar_lea.vmem %s9, %s821
      $region68: #{denoiser_forward.10} parent=63 // pred_fallthru
        _
    $region64: #{denoiser_forward.10} parent=5 // pred_fallthru
      _
  $region6: #{denoiser_forward.10} parent=0 // loop_footer
    %s19 = sadd.s32 1, %s15
  $region7: #{denoiser_forward.10} parent=0 // loop_footer_branch
    %14 = sbr.rel target = $region3
  $region8: #{denoiser_forward.10} parent=0 // loop_exit
    _

// kernel: denoiser_forward.11
$region0: #{denoiser_forward.11}
  #allocation0 [shape = 'u32[]', space=smem, size = 0x4, offset = 0x4, fixed_abs, tag = 'smem constant byte address 0x4 - core index']
  #allocation1 [shape = 'u32[72,128]{1,0:T(1,128)}', space=vmem, size = 0x9000, scoped, tag = 'internal scratch']
  #allocation2 [shape = 'f32[1]{0:T(128)S(6)}', space=smem, size = 0x200, scoped, tag = 'scoped memory for denoiser_forward.11']
  #allocation3 [shape = 'f32[1]{0:T(128)S(6)}', space=smem, size = 0x200, scoped, tag = 'scoped memory for denoiser_forward.11']
  %s0 = inlined_call_operand.vmem [shape: bf16[2,20,20,16], index: 0, kind: input, shape index: {}]
  %s1 = inlined_call_operand.vmem [shape: bf16[2,20,20,16], index: 1, kind: input, shape index: {}]
  %s2 = inlined_call_operand.vmem [shape: f32[9,16], index: 2, kind: input, shape index: {}]
  %s3 = inlined_call_operand.vmem [shape: f32[9], index: 3, kind: input, shape index: {}]
  %s4 = inlined_call_operand.<no memory space> [shape: f32[1], index: 4, kind: input, shape index: {}]
  %s5 = inlined_call_operand.<no memory space> [shape: f32[1], index: 5, kind: input, shape index: {}]
  %s6 = inlined_call_operand.hbm [shape: f32[2,16,16], index: 6, kind: output, shape index: {}]
  %s7 = sld [smem:[#allocation0]]
  $region61: #{denoiser_forward.11} parent=0
    _
  %s9 = ssub.s32 1, %s7
  %s10 = scalar_select 0, %s9, %s7
  %11 = sst [smem:[#allocation2]] %s4
  %12 = sst [smem:[#allocation3]] %s5
  $region1: #{denoiser_forward.11} parent=0
    #allocation4 [shape = 'u8[512]{0}', space=smem, size = 0x200, scoped, tag = 'input window, operand 3, single buffered']
    #allocation5 [shape = 's32[2]{0}', space=sflag, size = 0x8, scoped, tag = 'scoped memory for denoiser_forward.11']
    #allocation6 [shape = 's32[2]{0}', space=sflag, size = 0x8, scoped, tag = 'scoped memory for denoiser_forward.11']
    #allocation7 [shape = 'u8[16384]{0}', space=vmem, size = 0x4000, scoped, tag = 'output window, operand 0']
    %13 = vsyncpa [#allocation6], 0
    %14 = vsyncpa [#allocation5], 0
    %s15 = scalar_lea.sflag [#allocation5], 1
    %16 = vsyncpa %s15, 0
    loop: start=0, step=1, limit=4
    $region2: #{denoiser_forward.11} parent=1 // loop_pre_header
      _
    $region3: #{denoiser_forward.11} parent=1 // loop_header
      %s18 = sphi 0, %s22
      %p19 = scmp.ge.s32.totalorder %s18, 4
      %s28 = sphi 0, %s30
      %s31 = sphi 0, %s28
      %s32 = sphi 0, %s31
      %s48 = sphi 0, %s32
      %s54 = sphi 0, %s56
      %s57 = sphi 0, %s54
      %s58 = sphi 0, %s57
      %s74 = sphi 0, %s58
      %s78 = sphi 0, %s78
      %s80 = sphi 0, %s78
      %s81 = sphi 0, %s80
      %s95 = sphi 0, %s81
      %s99 = sphi 0, %s99
      %s101 = sphi 0, %s99
      %s102 = sphi 0, %s101
      %s116 = sphi 0, %s102
      %s120 = sphi 0, %s120
      %s122 = sphi 0, %s120
      %s123 = sphi 0, %s122
      %s137 = sphi 0, %s123
      %s141 = sphi 0, %s141
      %s143 = sphi 0, %s141
      %s144 = sphi 0, %s143
      %s158 = sphi 0, %s144
      %s164 = sphi 0, %s166
      %s167 = sphi 0, %s164
      %s168 = sphi 0, %s167
      %s184 = sphi 0, %s168
    $region4: #{denoiser_forward.11} parent=1 // loop_header_branch
      %21 = sbr.rel (%p19) target = $region8
    $region5: #{denoiser_forward.11} parent=1 // loop_body
      %s23 = ssub.s32 %s18, 1
      %s24 = ssub.s32 %s18, 2
      %s25 = sadd.s32 %s18, 1
      %s26 = ssub.s32 %s18, %s25
      %p27 = scmp.eq.s32.totalorder %s26, 0
      %s29 = sadd.s32 %s28, 1
      %s30 = scalar_select %p27, %s28, %s29
      %p33 = pneg %p27
      %p34 = scmp.eq.s32.totalorder %s18, 1
      %p35 = por %p33, %p34
      %p36 = scmp.ne.s32.totalorder %s28, %s31
      %p37 = scmp.eq.s32.totalorder %s18, 0
      %p38 = por %p36, %p37
      %p39 = scmp.ne.s32.totalorder %s28, %s31
      %p40 = scmp.eq.s32.totalorder %s23, 1
      %p41 = por %p39, %p40
      %p42 = scmp.ne.s32.totalorder %s31, %s32
      %p43 = scmp.eq.s32.totalorder %s23, 0
      %p44 = por %p42, %p43
      %p45 = scmp.ne.s32.totalorder %s31, %s32
      %p46 = scmp.eq.s32.totalorder %s24, 1
      %p47 = por %p45, %p46
      %p49 = scmp.ne.s32.totalorder %s32, %s48
      %p50 = scmp.eq.s32.totalorder %s24, 0
      %p51 = por %p49, %p50
      %s52 = ssub.s32 %s18, %s25
      %p53 = scmp.eq.s32.totalorder %s52, 0
      %s55 = sadd.s32 %s54, 1
      %s56 = scalar_select %p53, %s54, %s55
      %p59 = pneg %p53
      %p60 = scmp.eq.s32.totalorder %s18, 1
      %p61 = por %p59, %p60
      %p62 = scmp.ne.s32.totalorder %s54, %s57
      %p63 = scmp.eq.s32.totalorder %s18, 0
      %p64 = por %p62, %p63
      %p65 = scmp.ne.s32.totalorder %s54, %s57
      %p66 = scmp.eq.s32.totalorder %s23, 1
      %p67 = por %p65, %p66
      %p68 = scmp.ne.s32.totalorder %s57, %s58
      %p69 = scmp.eq.s32.totalorder %s23, 0
      %p70 = por %p68, %p69
      %p71 = scmp.ne.s32.totalorder %s57, %s58
      %p72 = scmp.eq.s32.totalorder %s24, 1
      %p73 = por %p71, %p72
      %p75 = scmp.ne.s32.totalorder %s58, %s74
      %p76 = scmp.eq.s32.totalorder %s24, 0
      %p77 = por %p75, %p76
      %s79 = sadd.s32 %s78, 1
      %p82 = scmp.eq.s32.totalorder %s18, 1
      %p83 = scmp.ne.s32.totalorder %s78, %s80
      %p84 = scmp.eq.s32.totalorder %s18, 0
      %p85 = por %p83, %p84
      %p86 = scmp.ne.s32.totalorder %s78, %s80
      %p87 = scmp.eq.s32.totalorder %s23, 1
      %p88 = por %p86, %p87
      %p89 = scmp.ne.s32.totalorder %s80, %s81
      %p90 = scmp.eq.s32.totalorder %s23, 0
      %p91 = por %p89, %p90
      %p92 = scmp.ne.s32.totalorder %s80, %s81
      %p93 = scmp.eq.s32.totalorder %s24, 1
      %p94 = por %p92, %p93
      %p96 = scmp.ne.s32.totalorder %s81, %s95
      %p97 = scmp.eq.s32.totalorder %s24, 0
      %p98 = por %p96, %p97
      %s100 = sadd.s32 %s99, 1
      %p103 = scmp.eq.s32.totalorder %s18, 1
      %p104 = scmp.ne.s32.totalorder %s99, %s101
      %p105 = scmp.eq.s32.totalorder %s18, 0
      %p106 = por %p104, %p105
      %p107 = scmp.ne.s32.totalorder %s99, %s101
      %p108 = scmp.eq.s32.totalorder %s23, 1
      %p109 = por %p107, %p108
      %p110 = scmp.ne.s32.totalorder %s101, %s102
      %p111 = scmp.eq.s32.totalorder %s23, 0
      %p112 = por %p110, %p111
      %p113 = scmp.ne.s32.totalorder %s101, %s102
      %p114 = scmp.eq.s32.totalorder %s24, 1
      %p115 = por %p113, %p114
      %p117 = scmp.ne.s32.totalorder %s102, %s116
      %p118 = scmp.eq.s32.totalorder %s24, 0
      %p119 = por %p117, %p118
      %s121 = sadd.s32 %s120, 1
      %p124 = scmp.eq.s32.totalorder %s18, 1
      %p125 = scmp.ne.s32.totalorder %s120, %s122
      %p126 = scmp.eq.s32.totalorder %s18, 0
      %p127 = por %p125, %p126
      %p128 = scmp.ne.s32.totalorder %s120, %s122
      %p129 = scmp.eq.s32.totalorder %s23, 1
      %p130 = por %p128, %p129
      %p131 = scmp.ne.s32.totalorder %s122, %s123
      %p132 = scmp.eq.s32.totalorder %s23, 0
      %p133 = por %p131, %p132
      %p134 = scmp.ne.s32.totalorder %s122, %s123
      %p135 = scmp.eq.s32.totalorder %s24, 1
      %p136 = por %p134, %p135
      %p138 = scmp.ne.s32.totalorder %s123, %s137
      %p139 = scmp.eq.s32.totalorder %s24, 0
      %p140 = por %p138, %p139
      %s142 = sadd.s32 %s141, 1
      %p145 = scmp.eq.s32.totalorder %s18, 1
      %p146 = scmp.ne.s32.totalorder %s141, %s143
      %p147 = scmp.eq.s32.totalorder %s18, 0
      %p148 = por %p146, %p147
      %p149 = scmp.ne.s32.totalorder %s141, %s143
      %p150 = scmp.eq.s32.totalorder %s23, 1
      %p151 = por %p149, %p150
      %p152 = scmp.ne.s32.totalorder %s143, %s144
      %p153 = scmp.eq.s32.totalorder %s23, 0
      %p154 = por %p152, %p153
      %p155 = scmp.ne.s32.totalorder %s143, %s144
      %p156 = scmp.eq.s32.totalorder %s24, 1
      %p157 = por %p155, %p156
      %p159 = scmp.ne.s32.totalorder %s144, %s158
      %p160 = scmp.eq.s32.totalorder %s24, 0
      %p161 = por %p159, %p160
      %s162 = ssub.s32 %s18, %s25
      %p163 = scmp.eq.s32.totalorder %s162, 0
      %s165 = sadd.s32 %s164, 1
      %s166 = scalar_select %p163, %s164, %s165
      %p169 = pneg %p163
      %p170 = scmp.eq.s32.totalorder %s18, 1
      %p171 = por %p169, %p170
      %p172 = scmp.ne.s32.totalorder %s164, %s167
      %p173 = scmp.eq.s32.totalorder %s18, 0
      %p174 = por %p172, %p173
      %p175 = scmp.ne.s32.totalorder %s164, %s167
      %p176 = scmp.eq.s32.totalorder %s23, 1
      %p177 = por %p175, %p176
      %p178 = scmp.ne.s32.totalorder %s167, %s168
      %p179 = scmp.eq.s32.totalorder %s23, 0
      %p180 = por %p178, %p179
      %p181 = scmp.ne.s32.totalorder %s167, %s168
      %p182 = scmp.eq.s32.totalorder %s24, 1
      %p183 = por %p181, %p182
      %p185 = scmp.ne.s32.totalorder %s168, %s184
      %p186 = scmp.eq.s32.totalorder %s24, 0
      %p187 = por %p185, %p186
      %p188 = scmp.le.s32.totalorder 1, %s18
      %p189 = scmp.lt.s32.totalorder %s18, 3
      %p190 = pnand %p188, %p189
      %p191 = pneg %p190
      // Predicated region
      $region9: #{denoiser_forward.11} parent=5 // pred_check
        _
      $region10: #{denoiser_forward.11} parent=5 // pred_check_branch
        %193 = sbr.rel (%p190) target = $region12
      $region11: #{denoiser_forward.11} parent=5 // pred_region
        %s194 = ssub.s32 %s18, 1
        // Predicated region
        $region13: #{denoiser_forward.11} parent=11 // pred_check
          %p195 = pneg %p91
        $region14: #{denoiser_forward.11} parent=11 // pred_check_branch
          %197 = sbr.rel (%p195) target = $region16
        $region15: #{denoiser_forward.11} parent=11 // pred_region
          _
        $region16: #{denoiser_forward.11} parent=11 // pred_fallthru
          _
        // Predicated region
        $region17: #{denoiser_forward.11} parent=11 // pred_check
          %p198 = pneg %p112
        $region18: #{denoiser_forward.11} parent=11 // pred_check_branch
          %200 = sbr.rel (%p198) target = $region20
        $region19: #{denoiser_forward.11} parent=11 // pred_region
          %202 = vsyncadd [#allocation6], 0
          %s204 = sshll.u32 %s3, 4
          %s205 = int_to_ptr.vmem [resolvable:$true] %s204
          %207 = dma.vmem_to_smem %s205, 16, [#allocation4], [#allocation6]
        $region20: #{denoiser_forward.11} parent=11 // pred_fallthru
          _
        // Predicated region
        $region21: #{denoiser_forward.11} parent=11 // pred_check
          %p208 = pneg %p133
        $region22: #{denoiser_forward.11} parent=11 // pred_check_branch
          %210 = sbr.rel (%p208) target = $region24
        $region23: #{denoiser_forward.11} parent=11 // pred_region
          _
        $region24: #{denoiser_forward.11} parent=11 // pred_fallthru
          _
        // Predicated region
        $region25: #{denoiser_forward.11} parent=11 // pred_check
          %p211 = pneg %p154
        $region26: #{denoiser_forward.11} parent=11 // pred_check_branch
          %213 = sbr.rel (%p211) target = $region28
        $region27: #{denoiser_forward.11} parent=11 // pred_region
          _
        $region28: #{denoiser_forward.11} parent=11 // pred_fallthru
          _
      $region12: #{denoiser_forward.11} parent=5 // pred_fallthru
        _
      %p214 = scmp.lt.s32.totalorder %s18, 2
      // Predicated region
      $region29: #{denoiser_forward.11} parent=5 // pred_check
        %p215 = pneg %p214
      $region30: #{denoiser_forward.11} parent=5 // pred_check_branch
        %217 = sbr.rel (%p215) target = $region32
      $region31: #{denoiser_forward.11} parent=5 // pred_region
        // Predicated region
        $region33: #{denoiser_forward.11} parent=31 // pred_check
          %p218 = pneg %p38
        $region34: #{denoiser_forward.11} parent=31 // pred_check_branch
          %220 = sbr.rel (%p218) target = $region36
        $region35: #{denoiser_forward.11} parent=31 // pred_region
          %p221 = scmp.lt.s32.totalorder %s18, 1
          %s222 = scalar_select %p221, %s18, 1
          %s223 = smul.addr %s222, 60
          %s224 = smul.addr %s223, 4
          %s225 = scalar_lea.vmem %s0, %s224
        $region36: #{denoiser_forward.11} parent=31 // pred_fallthru
          _
        // Predicated region
        $region37: #{denoiser_forward.11} parent=31 // pred_check
          %p226 = pneg %p64
        $region38: #{denoiser_forward.11} parent=31 // pred_check_branch
          %228 = sbr.rel (%p226) target = $region40
        $region39: #{denoiser_forward.11} parent=31 // pred_region
          %p229 = scmp.lt.s32.totalorder %s18, 1
          %s230 = scalar_select %p229, %s18, 1
          %s231 = smul.addr %s230, 60
          %s232 = smul.addr %s231, 4
          %s233 = scalar_lea.vmem %s1, %s232
        $region40: #{denoiser_forward.11} parent=31 // pred_fallthru
          _
      $region32: #{denoiser_forward.11} parent=5 // pred_fallthru
        _
      %p234 = scmp.le.s32.totalorder 1, %s18
      %p235 = scmp.lt.s32.totalorder %s18, 3
      %p236 = pnand %p234, %p235
      %p237 = pneg %p236
      // Predicated region
      $region41: #{denoiser_forward.11} parent=5 // pred_check
        _
      $region42: #{denoiser_forward.11} parent=5 // pred_check_branch
        %239 = sbr.rel (%p236) target = $region44
      $region43: #{denoiser_forward.11} parent=5 // pred_region
        %s240 = ssub.s32 %s18, 1
        // Predicated region
        $region45: #{denoiser_forward.11} parent=43 // pred_check
          %p241 = pneg %p112
        $region46: #{denoiser_forward.11} parent=43 // pred_check_branch
          %243 = sbr.rel (%p241) target = $region48
        $region47: #{denoiser_forward.11} parent=43 // pred_region
          %245 = dma.done [#allocation6], 16
        $region48: #{denoiser_forward.11} parent=43 // pred_fallthru
          _
        %246 = sfence
        %p247 = scmp.lt.s32.totalorder %s23, 1
        %s248 = scalar_select %p247, %s23, 1
        %s249 = smul.addr %s248, 60
        %s250 = smul.addr %s249, 4
        %s251 = scalar_lea.vmem %s0, %s250
        %p252 = pneg %p44
        %p253 = pneg %p41
        %p254 = scmp.lt.s32.totalorder %s23, 1
        %s255 = scalar_select %p254, %s23, 1
        %s256 = smul.addr %s255, 60
        %s257 = smul.addr %s256, 4
        %s258 = scalar_lea.vmem %s1, %s257
        %p259 = pneg %p70
        %p260 = pneg %p67
        %p261 = pneg %p91
        %p262 = pneg %p88
        %p263 = pneg %p112
        %p264 = pneg %p109
        %p265 = pneg %p133
        %p266 = pneg %p130
        %p267 = pneg %p154
        %p268 = pneg %p151
        %p269 = pneg %p180
        %p270 = pneg %p177
        %s271 = sand.u32 %s167, 1
        %s272 = scalar_lea.sflag [#allocation5], %s271
        %s273 = sand.u32 %s167, 1
        %s274 = smul.addr %s273, 16
        %s275 = scalar_lea.vmem [#allocation7], %s274
        %p276 = scmp.lt.s32.totalorder %s23, 1
        %s277 = scalar_select %p276, %s23, 1
        %s278 = smul.addr %s277, 60
        %s279 = smul.addr %s278, 4
        %s280 = scalar_lea.vmem %s0, %s279
        %p281 = scmp.lt.s32.totalorder %s23, 1
        %s282 = scalar_select %p281, %s23, 1
        %s283 = smul.addr %s282, 60
        %s284 = smul.addr %s283, 4
        %s285 = scalar_lea.vmem %s1, %s284
        %v286 = vld [vmem:[%s280] sm:$0xf]
        %v287 = vld [vmem:[%s280 + $0x4] sm:$0xf]
        %v288 = vld [vmem:[%s280 + $0x8] sm:$0x3]
        %v289 = vld [vmem:[%s280 + $0xc] sm:$0xf]
        %v290 = vld [vmem:[%s280 + $0x10] sm:$0xf]
        %v291 = vld [vmem:[%s280 + $0x14] sm:$0x3]
        %v292 = vld [vmem:[%s280 + $0x18] sm:$0xf]
        %v293 = vld [vmem:[%s280 + $0x1c] sm:$0xf]
        %v294 = vld [vmem:[%s280 + $0x20] sm:$0x3]
        %v295 = vld [vmem:[%s280 + $0x24] sm:$0xf]
        %v296 = vld [vmem:[%s280 + $0x28] sm:$0xf]
        %v297 = vld [vmem:[%s280 + $0x2c] sm:$0x3]
        %v298 = vld [vmem:[%s280 + $0x30] sm:$0xf]
        %v299 = vld [vmem:[%s280 + $0x34] sm:$0xf]
        %v300 = vld [vmem:[%s280 + $0x38] sm:$0x3]
        %v301 = vld [vmem:[%s280 + $0x3c] sm:$0xf]
        %v302 = vld [vmem:[%s280 + $0x40] sm:$0xf]
        %v303 = vld [vmem:[%s280 + $0x44] sm:$0x3]
        %v304 = vld [vmem:[%s280 + $0x48] sm:$0xf]
        %v305 = vld [vmem:[%s280 + $0x4c] sm:$0xf]
        %v306 = vld [vmem:[%s280 + $0x50] sm:$0x3]
        %v307 = vld [vmem:[%s280 + $0x54] sm:$0xf]
        %v308 = vld [vmem:[%s280 + $0x58] sm:$0xf]
        %v309 = vld [vmem:[%s280 + $0x5c] sm:$0x3]
        %v310 = vld [vmem:[%s280 + $0x60] sm:$0xf]
        %v311 = vld [vmem:[%s280 + $0x64] sm:$0xf]
        %v312 = vld [vmem:[%s280 + $0x68] sm:$0x3]
        %v313 = vld [vmem:[%s280 + $0x6c] sm:$0xf]
        %v314 = vld [vmem:[%s280 + $0x70] sm:$0xf]
        %v315 = vld [vmem:[%s280 + $0x74] sm:$0x3]
        %v316 = vld [vmem:[%s280 + $0x78] sm:$0xf]
        %v317 = vld [vmem:[%s280 + $0x7c] sm:$0xf]
        %v318 = vld [vmem:[%s280 + $0x80] sm:$0x3]
        %v319 = vld [vmem:[%s280 + $0x84] sm:$0xf]
        %v320 = vld [vmem:[%s280 + $0x88] sm:$0xf]
        %v321 = vld [vmem:[%s280 + $0x8c] sm:$0x3]
        %v322 = vld [vmem:[%s280 + $0x90] sm:$0xf]
        %v323 = vld [vmem:[%s280 + $0x94] sm:$0xf]
        %v324 = vld [vmem:[%s280 + $0x98] sm:$0x3]
        %v325 = vld [vmem:[%s280 + $0x9c] sm:$0xf]
        %v326 = vld [vmem:[%s280 + $0xa0] sm:$0xf]
        %v327 = vld [vmem:[%s280 + $0xa4] sm:$0x3]
        %v328 = vld [vmem:[%s280 + $0xa8] sm:$0xf]
        %v329 = vld [vmem:[%s280 + $0xac] sm:$0xf]
        %v330 = vld [vmem:[%s280 + $0xb0] sm:$0x3]
        %v331 = vld [vmem:[%s280 + $0xb4] sm:$0xf]
        %v332 = vld [vmem:[%s280 + $0xb8] sm:$0xf]
        %v333 = vld [vmem:[%s280 + $0xbc] sm:$0x3]
        %v334 = vld [vmem:[%s280 + $0xc0] sm:$0xf]
        %v335 = vld [vmem:[%s280 + $0xc4] sm:$0xf]
        %v336 = vld [vmem:[%s280 + $0xc8] sm:$0x3]
        %v337 = vld [vmem:[%s280 + $0xcc] sm:$0xf]
        %v338 = vld [vmem:[%s280 + $0xd0] sm:$0xf]
        %v339 = vld [vmem:[%s280 + $0xd4] sm:$0x3]
        %v340 = vld [vmem:[%s280 + $0xd8] sm:$0xf]
        %v341 = vld [vmem:[%s280 + $0xdc] sm:$0xf]
        %v342 = vld [vmem:[%s280 + $0xe0] sm:$0x3]
        %v343 = vld [vmem:[%s280 + $0xe4] sm:$0xf]
        %v344 = vld [vmem:[%s280 + $0xe8] sm:$0xf]
        %v345 = vld [vmem:[%s280 + $0xec] sm:$0x3]
        %v346 = vunpack.c.l.bf16 %v286
        %v347 = vunpack.c.l.bf16 %v287
        %v348 = vunpack.c.l.bf16 %v288
        %v349 = vunpack.c.l.bf16 %v289
        %v350 = vunpack.c.l.bf16 %v290
        %v351 = vunpack.c.l.bf16 %v291
        %v352 = vunpack.c.l.bf16 %v292
        %v353 = vunpack.c.l.bf16 %v293
        %v354 = vunpack.c.l.bf16 %v294
        %v355 = vunpack.c.l.bf16 %v295
        %v356 = vunpack.c.l.bf16 %v296
        %v357 = vunpack.c.l.bf16 %v297
        %v358 = vunpack.c.l.bf16 %v298
        %v359 = vunpack.c.l.bf16 %v299
        %v360 = vunpack.c.l.bf16 %v300
        %v361 = vunpack.c.l.bf16 %v301
        %v362 = vunpack.c.l.bf16 %v302
        %v363 = vunpack.c.l.bf16 %v303
        %v364 = vunpack.c.l.bf16 %v304
        %v365 = vunpack.c.l.bf16 %v305
        %v366 = vunpack.c.l.bf16 %v306
        %v367 = vunpack.c.l.bf16 %v307
        %v368 = vunpack.c.l.bf16 %v308
        %v369 = vunpack.c.l.bf16 %v309
        %v370 = vunpack.c.l.bf16 %v310
        %v371 = vunpack.c.l.bf16 %v311
        %v372 = vunpack.c.l.bf16 %v312
        %v373 = vunpack.c.l.bf16 %v313
        %v374 = vunpack.c.l.bf16 %v314
        %v375 = vunpack.c.l.bf16 %v315
        %v376 = vunpack.c.l.bf16 %v316
        %v377 = vunpack.c.l.bf16 %v317
        %v378 = vunpack.c.l.bf16 %v318
        %v379 = vunpack.c.l.bf16 %v319
        %v380 = vunpack.c.l.bf16 %v320
        %v381 = vunpack.c.l.bf16 %v321
        %v382 = vunpack.c.l.bf16 %v322
        %v383 = vunpack.c.l.bf16 %v323
        %v384 = vunpack.c.l.bf16 %v324
        %v385 = vunpack.c.l.bf16 %v325
        %v386 = vunpack.c.l.bf16 %v326
        %v387 = vunpack.c.l.bf16 %v327
        %v388 = vunpack.c.l.bf16 %v328
        %v389 = vunpack.c.l.bf16 %v329
        %v390 = vunpack.c.l.bf16 %v330
        %v391 = vunpack.c.l.bf16 %v331
        %v392 = vunpack.c.l.bf16 %v332
        %v393 = vunpack.c.l.bf16 %v333
        %v394 = vunpack.c.l.bf16 %v334
        %v395 = vunpack.c.l.bf16 %v335
        %v396 = vunpack.c.l.bf16 %v336
        %v397 = vunpack.c.l.bf16 %v337
        %v398 = vunpack.c.l.bf16 %v338
        %v399 = vunpack.c.l.bf16 %v339
        %v400 = vunpack.c.l.bf16 %v340
        %v401 = vunpack.c.l.bf16 %v341
        %v402 = vunpack.c.l.bf16 %v342
        %v403 = vunpack.c.l.bf16 %v343
        %v404 = vunpack.c.l.bf16 %v344
        %v405 = vunpack.c.l.bf16 %v345
        %v406 = vld [vmem:[%s285] sm:$0xf]
        %v407 = vld [vmem:[%s285 + $0x4] sm:$0xf]
        %v408 = vld [vmem:[%s285 + $0x8] sm:$0x3]
        %v409 = vld [vmem:[%s285 + $0xc] sm:$0xf]
        %v410 = vld [vmem:[%s285 + $0x10] sm:$0xf]
        %v411 = vld [vmem:[%s285 + $0x14] sm:$0x3]
        %v412 = vld [vmem:[%s285 + $0x18] sm:$0xf]
        %v413 = vld [vmem:[%s285 + $0x1c] sm:$0xf]
        %v414 = vld [vmem:[%s285 + $0x20] sm:$0x3]
        %v415 = vld [vmem:[%s285 + $0x24] sm:$0xf]
        %v416 = vld [vmem:[%s285 + $0x28] sm:$0xf]
        %v417 = vld [vmem:[%s285 + $0x2c] sm:$0x3]
        %v418 = vld [vmem:[%s285 + $0x30] sm:$0xf]
        %v419 = vld [vmem:[%s285 + $0x34] sm:$0xf]
        %v420 = vld [vmem:[%s285 + $0x38] sm:$0x3]
        %v421 = vld [vmem:[%s285 + $0x3c] sm:$0xf]
        %v422 = vld [vmem:[%s285 + $0x40] sm:$0xf]
        %v423 = vld [vmem:[%s285 + $0x44] sm:$0x3]
        %v424 = vld [vmem:[%s285 + $0x48] sm:$0xf]
        %v425 = vld [vmem:[%s285 + $0x4c] sm:$0xf]
        %v426 = vld [vmem:[%s285 + $0x50] sm:$0x3]
        %v427 = vld [vmem:[%s285 + $0x54] sm:$0xf]
        %v428 = vld [vmem:[%s285 + $0x58] sm:$0xf]
        %v429 = vld [vmem:[%s285 + $0x5c] sm:$0x3]
        %v430 = vld [vmem:[%s285 + $0x60] sm:$0xf]
        %v431 = vld [vmem:[%s285 + $0x64] sm:$0xf]
        %v432 = vld [vmem:[%s285 + $0x68] sm:$0x3]
        %v433 = vld [vmem:[%s285 + $0x6c] sm:$0xf]
        %v434 = vld [vmem:[%s285 + $0x70] sm:$0xf]
        %v435 = vld [vmem:[%s285 + $0x74] sm:$0x3]
        %v436 = vld [vmem:[%s285 + $0x78] sm:$0xf]
        %v437 = vld [vmem:[%s285 + $0x7c] sm:$0xf]
        %v438 = vld [vmem:[%s285 + $0x80] sm:$0x3]
        %v439 = vld [vmem:[%s285 + $0x84] sm:$0xf]
        %v440 = vld [vmem:[%s285 + $0x88] sm:$0xf]
        %v441 = vld [vmem:[%s285 + $0x8c] sm:$0x3]
        %v442 = vld [vmem:[%s285 + $0x90] sm:$0xf]
        %v443 = vld [vmem:[%s285 + $0x94] sm:$0xf]
        %v444 = vld [vmem:[%s285 + $0x98] sm:$0x3]
        %v445 = vld [vmem:[%s285 + $0x9c] sm:$0xf]
        %v446 = vld [vmem:[%s285 + $0xa0] sm:$0xf]
        %v447 = vld [vmem:[%s285 + $0xa4] sm:$0x3]
        %v448 = vld [vmem:[%s285 + $0xa8] sm:$0xf]
        %v449 = vld [vmem:[%s285 + $0xac] sm:$0xf]
        %v450 = vld [vmem:[%s285 + $0xb0] sm:$0x3]
        %v451 = vld [vmem:[%s285 + $0xb4] sm:$0xf]
        %v452 = vld [vmem:[%s285 + $0xb8] sm:$0xf]
        %v453 = vld [vmem:[%s285 + $0xbc] sm:$0x3]
        %v454 = vld [vmem:[%s285 + $0xc0] sm:$0xf]
        %v455 = vld [vmem:[%s285 + $0xc4] sm:$0xf]
        %v456 = vld [vmem:[%s285 + $0xc8] sm:$0x3]
        %v457 = vld [vmem:[%s285 + $0xcc] sm:$0xf]
        %v458 = vld [vmem:[%s285 + $0xd0] sm:$0xf]
        %v459 = vld [vmem:[%s285 + $0xd4] sm:$0x3]
        %v460 = vld [vmem:[%s285 + $0xd8] sm:$0xf]
        %v461 = vld [vmem:[%s285 + $0xdc] sm:$0xf]
        %v462 = vld [vmem:[%s285 + $0xe0] sm:$0x3]
        %v463 = vld [vmem:[%s285 + $0xe4] sm:$0xf]
        %v464 = vld [vmem:[%s285 + $0xe8] sm:$0xf]
        %v465 = vld [vmem:[%s285 + $0xec] sm:$0x3]
        %v466 = vunpack.c.l.bf16 %v406
        %v467 = vunpack.c.l.bf16 %v407
        %v468 = vunpack.c.l.bf16 %v408
        %v469 = vunpack.c.l.bf16 %v409
        %v470 = vunpack.c.l.bf16 %v410
        %v471 = vunpack.c.l.bf16 %v411
        %v472 = vunpack.c.l.bf16 %v412
        %v473 = vunpack.c.l.bf16 %v413
        %v474 = vunpack.c.l.bf16 %v414
        %v475 = vunpack.c.l.bf16 %v415
        %v476 = vunpack.c.l.bf16 %v416
        %v477 = vunpack.c.l.bf16 %v417
        %v478 = vunpack.c.l.bf16 %v418
        %v479 = vunpack.c.l.bf16 %v419
        %v480 = vunpack.c.l.bf16 %v420
        %v481 = vunpack.c.l.bf16 %v421
        %v482 = vunpack.c.l.bf16 %v422
        %v483 = vunpack.c.l.bf16 %v423
        %v484 = vunpack.c.l.bf16 %v424
        %v485 = vunpack.c.l.bf16 %v425
        %v486 = vunpack.c.l.bf16 %v426
        %v487 = vunpack.c.l.bf16 %v427
        %v488 = vunpack.c.l.bf16 %v428
        %v489 = vunpack.c.l.bf16 %v429
        %v490 = vunpack.c.l.bf16 %v430
        %v491 = vunpack.c.l.bf16 %v431
        %v492 = vunpack.c.l.bf16 %v432
        %v493 = vunpack.c.l.bf16 %v433
        %v494 = vunpack.c.l.bf16 %v434
        %v495 = vunpack.c.l.bf16 %v435
        %v496 = vunpack.c.l.bf16 %v436
        %v497 = vunpack.c.l.bf16 %v437
        %v498 = vunpack.c.l.bf16 %v438
        %v499 = vunpack.c.l.bf16 %v439
        %v500 = vunpack.c.l.bf16 %v440
        %v501 = vunpack.c.l.bf16 %v441
        %v502 = vunpack.c.l.bf16 %v442
        %v503 = vunpack.c.l.bf16 %v443
        %v504 = vunpack.c.l.bf16 %v444
        %v505 = vunpack.c.l.bf16 %v445
        %v506 = vunpack.c.l.bf16 %v446
        %v507 = vunpack.c.l.bf16 %v447
        %v508 = vunpack.c.l.bf16 %v448
        %v509 = vunpack.c.l.bf16 %v449
        %v510 = vunpack.c.l.bf16 %v450
        %v511 = vunpack.c.l.bf16 %v451
        %v512 = vunpack.c.l.bf16 %v452
        %v513 = vunpack.c.l.bf16 %v453
        %v514 = vunpack.c.l.bf16 %v454
        %v515 = vunpack.c.l.bf16 %v455
        %v516 = vunpack.c.l.bf16 %v456
        %v517 = vunpack.c.l.bf16 %v457
        %v518 = vunpack.c.l.bf16 %v458
        %v519 = vunpack.c.l.bf16 %v459
        %v520 = vunpack.c.l.bf16 %v460
        %v521 = vunpack.c.l.bf16 %v461
        %v522 = vunpack.c.l.bf16 %v462
        %v523 = vunpack.c.l.bf16 %v463
        %v524 = vunpack.c.l.bf16 %v464
        %v525 = vunpack.c.l.bf16 %v465
        %v526 = vadd.f32 %v346, %v466
        %v527 = vadd.f32 %v347, %v467
        %v528 = vadd.f32 %v348, %v468
        %v529 = vadd.f32 %v349, %v469
        %v530 = vadd.f32 %v350, %v470
        %v531 = vadd.f32 %v351, %v471
        %v532 = vadd.f32 %v352, %v472
        %v533 = vadd.f32 %v353, %v473
        %v534 = vadd.f32 %v354, %v474
        %v535 = vadd.f32 %v355, %v475
        %v536 = vadd.f32 %v356, %v476
        %v537 = vadd.f32 %v357, %v477
        %v538 = vadd.f32 %v358, %v478
        %v539 = vadd.f32 %v359, %v479
        %v540 = vadd.f32 %v360, %v480
        %v541 = vadd.f32 %v361, %v481
        %v542 = vadd.f32 %v362, %v482
        %v543 = vadd.f32 %v363, %v483
        %v544 = vadd.f32 %v364, %v484
        %v545 = vadd.f32 %v365, %v485
        %v546 = vadd.f32 %v366, %v486
        %v547 = vadd.f32 %v367, %v487
        %v548 = vadd.f32 %v368, %v488
        %v549 = vadd.f32 %v369, %v489
        %v550 = vadd.f32 %v370, %v490
        %v551 = vadd.f32 %v371, %v491
        %v552 = vadd.f32 %v372, %v492
        %v553 = vadd.f32 %v373, %v493
        %v554 = vadd.f32 %v374, %v494
        %v555 = vadd.f32 %v375, %v495
        %v556 = vadd.f32 %v376, %v496
        %v557 = vadd.f32 %v377, %v497
        %v558 = vadd.f32 %v378, %v498
        %v559 = vadd.f32 %v379, %v499
        %v560 = vadd.f32 %v380, %v500
        %v561 = vadd.f32 %v381, %v501
        %v562 = vadd.f32 %v382, %v502
        %v563 = vadd.f32 %v383, %v503
        %v564 = vadd.f32 %v384, %v504
        %v565 = vadd.f32 %v385, %v505
        %v566 = vadd.f32 %v386, %v506
        %v567 = vadd.f32 %v387, %v507
        %v568 = vadd.f32 %v388, %v508
        %v569 = vadd.f32 %v389, %v509
        %v570 = vadd.f32 %v390, %v510
        %v571 = vadd.f32 %v391, %v511
        %v572 = vadd.f32 %v392, %v512
        %v573 = vadd.f32 %v393, %v513
        %v574 = vadd.f32 %v394, %v514
        %v575 = vadd.f32 %v395, %v515
        %v576 = vadd.f32 %v396, %v516
        %v577 = vadd.f32 %v397, %v517
        %v578 = vadd.f32 %v398, %v518
        %v579 = vadd.f32 %v399, %v519
        %v580 = vadd.f32 %v400, %v520
        %v581 = vadd.f32 %v401, %v521
        %v582 = vadd.f32 %v402, %v522
        %v583 = vadd.f32 %v403, %v523
        %v584 = vadd.f32 %v404, %v524
        %v585 = vadd.f32 %v405, %v525
        %v586 = vld [vmem:[%s2] sm:$0xff]
        %v587 = vld [vmem:[%s2 + $0x8] sm:$0x1]
        %v588 = vperm.slane %v586, 0
        %v589 = vmul.f32 %v526, %v588
        %v590 = vmul.f32 %v527, %v588
        %v591 = vmul.f32 %v528, %v588
        %v592 = vmul.f32 %v529, %v588
        %v593 = vmul.f32 %v530, %v588
        %v594 = vmul.f32 %v531, %v588
        %v595 = vmul.f32 %v532, %v588
        %v596 = vmul.f32 %v533, %v588
        %v597 = vmul.f32 %v534, %v588
        %v598 = vmul.f32 %v535, %v588
        %v599 = vmul.f32 %v536, %v588
        %v600 = vmul.f32 %v537, %v588
        %v601 = vmul.f32 %v538, %v588
        %v602 = vmul.f32 %v539, %v588
        %v603 = vmul.f32 %v540, %v588
        %v604 = vmul.f32 %v541, %v588
        %v605 = vmul.f32 %v542, %v588
        %v606 = vmul.f32 %v543, %v588
        %v607 = vmul.f32 %v544, %v588
        %v608 = vmul.f32 %v545, %v588
        %v609 = vmul.f32 %v546, %v588
        %v610 = vmul.f32 %v547, %v588
        %v611 = vmul.f32 %v548, %v588
        %v612 = vmul.f32 %v549, %v588
        %v613 = vmul.f32 %v550, %v588
        %v614 = vmul.f32 %v551, %v588
        %v615 = vmul.f32 %v552, %v588
        %v616 = vmul.f32 %v553, %v588
        %v617 = vmul.f32 %v554, %v588
        %v618 = vmul.f32 %v555, %v588
        %v619 = vmul.f32 %v556, %v588
        %v620 = vmul.f32 %v557, %v588
        %v621 = vmul.f32 %v558, %v588
        %v622 = vmul.f32 %v559, %v588
        %v623 = vmul.f32 %v560, %v588
        %v624 = vmul.f32 %v561, %v588
        %v625 = vmul.f32 %v562, %v588
        %v626 = vmul.f32 %v563, %v588
        %v627 = vmul.f32 %v564, %v588
        %v628 = vmul.f32 %v565, %v588
        %v629 = vmul.f32 %v566, %v588
        %v630 = vmul.f32 %v567, %v588
        %v631 = vmul.f32 %v568, %v588
        %v632 = vmul.f32 %v569, %v588
        %v633 = vmul.f32 %v570, %v588
        %v634 = vmul.f32 %v571, %v588
        %v635 = vmul.f32 %v572, %v588
        %v636 = vmul.f32 %v573, %v588
        %v637 = vmul.f32 %v574, %v588
        %v638 = vmul.f32 %v575, %v588
        %v639 = vmul.f32 %v576, %v588
        %v640 = vmul.f32 %v577, %v588
        %v641 = vmul.f32 %v578, %v588
        %v642 = vmul.f32 %v579, %v588
        %vm643 = vcmask 130048
        %v644 = vsel %vm643, %v589, 0.0
        %645 = vadd.xlane.f32.xlu0 %v644
        %v646 = vpop.xlane.xlu0 %645
        %v647 = vsel %vm643, %v590, 0.0
        %648 = vadd.xlane.f32.xlu0 %v647
        %v649 = vpop.xlane.xlu0 %648
        %vm650 = vcmask 123904
        %v651 = vsel %vm650, %v591, 0.0
        %652 = vadd.xlane.f32.xlu0 %v651
        %v653 = vpop.xlane.xlu0 %652
        %v654 = vsel %vm643, %v592, 0.0
        %655 = vadd.xlane.f32.xlu0 %v654
        %v656 = vpop.xlane.xlu0 %655
        %v657 = vsel %vm643, %v593, 0.0
        %658 = vadd.xlane.f32.xlu0 %v657
        %v659 = vpop.xlane.xlu0 %658
        %v660 = vsel %vm650, %v594, 0.0
        %661 = vadd.xlane.f32.xlu0 %v660
        %v662 = vpop.xlane.xlu0 %661
        %v663 = vsel %vm643, %v595, 0.0
        %664 = vadd.xlane.f32.xlu0 %v663
        %v665 = vpop.xlane.xlu0 %664
        %v666 = vsel %vm643, %v596, 0.0
        %667 = vadd.xlane.f32.xlu0 %v666
        %v668 = vpop.xlane.xlu0 %667
        %v669 = vsel %vm650, %v597, 0.0
        %670 = vadd.xlane.f32.xlu0 %v669
        %v671 = vpop.xlane.xlu0 %670
        %v672 = vsel %vm643, %v598, 0.0
        %673 = vadd.xlane.f32.xlu0 %v672
        %v674 = vpop.xlane.xlu0 %673
        %v675 = vsel %vm643, %v599, 0.0
        %676 = vadd.xlane.f32.xlu0 %v675
        %v677 = vpop.xlane.xlu0 %676
        %v678 = vsel %vm650, %v600, 0.0
        %679 = vadd.xlane.f32.xlu0 %v678
        %v680 = vpop.xlane.xlu0 %679
        %v681 = vsel %vm643, %v601, 0.0
        %682 = vadd.xlane.f32.xlu0 %v681
        %v683 = vpop.xlane.xlu0 %682
        %v684 = vsel %vm643, %v602, 0.0
        %685 = vadd.xlane.f32.xlu0 %v684
        %v686 = vpop.xlane.xlu0 %685
        %v687 = vsel %vm650, %v603, 0.0
        %688 = vadd.xlane.f32.xlu0 %v687
        %v689 = vpop.xlane.xlu0 %688
        %v690 = vsel %vm643, %v604, 0.0
        %691 = vadd.xlane.f32.xlu0 %v690
        %v692 = vpop.xlane.xlu0 %691
        %v693 = vsel %vm643, %v605, 0.0
        %694 = vadd.xlane.f32.xlu0 %v693
        %v695 = vpop.xlane.xlu0 %694
        %v696 = vsel %vm650, %v606, 0.0
        %697 = vadd.xlane.f32.xlu0 %v696
        %v698 = vpop.xlane.xlu0 %697
        %v699 = vsel %vm643, %v607, 0.0
        %700 = vadd.xlane.f32.xlu0 %v699
        %v701 = vpop.xlane.xlu0 %700
        %v702 = vsel %vm643, %v608, 0.0
        %703 = vadd.xlane.f32.xlu0 %v702
        %v704 = vpop.xlane.xlu0 %703
        %v705 = vsel %vm650, %v609, 0.0
        %706 = vadd.xlane.f32.xlu0 %v705
        %v707 = vpop.xlane.xlu0 %706
        %v708 = vsel %vm643, %v610, 0.0
        %709 = vadd.xlane.f32.xlu0 %v708
        %v710 = vpop.xlane.xlu0 %709
        %v711 = vsel %vm643, %v611, 0.0
        %712 = vadd.xlane.f32.xlu0 %v711
        %v713 = vpop.xlane.xlu0 %712
        %v714 = vsel %vm650, %v612, 0.0
        %715 = vadd.xlane.f32.xlu0 %v714
        %v716 = vpop.xlane.xlu0 %715
        %v717 = vsel %vm643, %v613, 0.0
        %718 = vadd.xlane.f32.xlu0 %v717
        %v719 = vpop.xlane.xlu0 %718
        %v720 = vsel %vm643, %v614, 0.0
        %721 = vadd.xlane.f32.xlu0 %v720
        %v722 = vpop.xlane.xlu0 %721
        %v723 = vsel %vm650, %v615, 0.0
        %724 = vadd.xlane.f32.xlu0 %v723
        %v725 = vpop.xlane.xlu0 %724
        %v726 = vsel %vm643, %v616, 0.0
        %727 = vadd.xlane.f32.xlu0 %v726
        %v728 = vpop.xlane.xlu0 %727
        %v729 = vsel %vm643, %v617, 0.0
        %730 = vadd.xlane.f32.xlu0 %v729
        %v731 = vpop.xlane.xlu0 %730
        %v732 = vsel %vm650, %v618, 0.0
        %733 = vadd.xlane.f32.xlu0 %v732
        %v734 = vpop.xlane.xlu0 %733
        %v735 = vsel %vm643, %v619, 0.0
        %736 = vadd.xlane.f32.xlu0 %v735
        %v737 = vpop.xlane.xlu0 %736
        %v738 = vsel %vm643, %v620, 0.0
        %739 = vadd.xlane.f32.xlu0 %v738
        %v740 = vpop.xlane.xlu0 %739
        %v741 = vsel %vm650, %v621, 0.0
        %742 = vadd.xlane.f32.xlu0 %v741
        %v743 = vpop.xlane.xlu0 %742
        %v744 = vsel %vm643, %v622, 0.0
        %745 = vadd.xlane.f32.xlu0 %v744
        %v746 = vpop.xlane.xlu0 %745
        %v747 = vsel %vm643, %v623, 0.0
        %748 = vadd.xlane.f32.xlu0 %v747
        %v749 = vpop.xlane.xlu0 %748
        %v750 = vsel %vm650, %v624, 0.0
        %751 = vadd.xlane.f32.xlu0 %v750
        %v752 = vpop.xlane.xlu0 %751
        %v753 = vsel %vm643, %v625, 0.0
        %754 = vadd.xlane.f32.xlu0 %v753
        %v755 = vpop.xlane.xlu0 %754
        %v756 = vsel %vm643, %v626, 0.0
        %757 = vadd.xlane.f32.xlu0 %v756
        %v758 = vpop.xlane.xlu0 %757
        %v759 = vsel %vm650, %v627, 0.0
        %760 = vadd.xlane.f32.xlu0 %v759
        %v761 = vpop.xlane.xlu0 %760
        %v762 = vsel %vm643, %v628, 0.0
        %763 = vadd.xlane.f32.xlu0 %v762
        %v764 = vpop.xlane.xlu0 %763
        %v765 = vsel %vm643, %v629, 0.0
        %766 = vadd.xlane.f32.xlu0 %v765
        %v767 = vpop.xlane.xlu0 %766
        %v768 = vsel %vm650, %v630, 0.0
        %769 = vadd.xlane.f32.xlu0 %v768
        %v770 = vpop.xlane.xlu0 %769
        %v771 = vsel %vm643, %v631, 0.0
        %772 = vadd.xlane.f32.xlu0 %v771
        %v773 = vpop.xlane.xlu0 %772
        %v774 = vsel %vm643, %v632, 0.0
        %775 = vadd.xlane.f32.xlu0 %v774
        %v776 = vpop.xlane.xlu0 %775
        %v777 = vsel %vm650, %v633, 0.0
        %778 = vadd.xlane.f32.xlu0 %v777
        %v779 = vpop.xlane.xlu0 %778
        %v780 = vsel %vm643, %v634, 0.0
        %781 = vadd.xlane.f32.xlu0 %v780
        %v782 = vpop.xlane.xlu0 %781
        %v783 = vsel %vm643, %v635, 0.0
        %784 = vadd.xlane.f32.xlu0 %v783
        %v785 = vpop.xlane.xlu0 %784
        %v786 = vsel %vm650, %v636, 0.0
        %787 = vadd.xlane.f32.xlu0 %v786
        %v788 = vpop.xlane.xlu0 %787
        %v789 = vsel %vm643, %v637, 0.0
        %790 = vadd.xlane.f32.xlu0 %v789
        %v791 = vpop.xlane.xlu0 %790
        %v792 = vsel %vm643, %v638, 0.0
        %793 = vadd.xlane.f32.xlu0 %v792
        %v794 = vpop.xlane.xlu0 %793
        %v795 = vsel %vm650, %v639, 0.0
        %796 = vadd.xlane.f32.xlu0 %v795
        %v797 = vpop.xlane.xlu0 %796
        %v798 = vsel %vm643, %v640, 0.0
        %799 = vadd.xlane.f32.xlu0 %v798
        %v800 = vpop.xlane.xlu0 %799
        %v801 = vsel %vm643, %v641, 0.0
        %802 = vadd.xlane.f32.xlu0 %v801
        %v803 = vpop.xlane.xlu0 %802
        %v804 = vsel %vm650, %v642, 0.0
        %805 = vadd.xlane.f32.xlu0 %v804
        %v806 = vpop.xlane.xlu0 %805
        %v807 = vadd.f32 %v646, 0.0
        %v808 = vadd.f32 %v649, 0.0
        %v809 = vadd.f32 %v653, 0.0
        %v810 = vadd.f32 %v656, 0.0
        %v811 = vadd.f32 %v659, 0.0
        %v812 = vadd.f32 %v662, 0.0
        %v813 = vadd.f32 %v665, 0.0
        %v814 = vadd.f32 %v668, 0.0
        %v815 = vadd.f32 %v671, 0.0
        %v816 = vadd.f32 %v674, 0.0
        %v817 = vadd.f32 %v677, 0.0
        %v818 = vadd.f32 %v680, 0.0
        %v819 = vadd.f32 %v683, 0.0
        %v820 = vadd.f32 %v686, 0.0
        %v821 = vadd.f32 %v689, 0.0
        %v822 = vadd.f32 %v692, 0.0
        %v823 = vadd.f32 %v695, 0.0
        %v824 = vadd.f32 %v698, 0.0
        %v825 = vadd.f32 %v701, 0.0
        %v826 = vadd.f32 %v704, 0.0
        %v827 = vadd.f32 %v707, 0.0
        %v828 = vadd.f32 %v710, 0.0
        %v829 = vadd.f32 %v713, 0.0
        %v830 = vadd.f32 %v716, 0.0
        %v831 = vadd.f32 %v719, 0.0
        %v832 = vadd.f32 %v722, 0.0
        %v833 = vadd.f32 %v725, 0.0
        %v834 = vadd.f32 %v728, 0.0
        %v835 = vadd.f32 %v731, 0.0
        %v836 = vadd.f32 %v734, 0.0
        %v837 = vadd.f32 %v737, 0.0
        %v838 = vadd.f32 %v740, 0.0
        %v839 = vadd.f32 %v743, 0.0
        %v840 = vadd.f32 %v746, 0.0
        %v841 = vadd.f32 %v749, 0.0
        %v842 = vadd.f32 %v752, 0.0
        %v843 = vadd.f32 %v755, 0.0
        %v844 = vadd.f32 %v758, 0.0
        %v845 = vadd.f32 %v761, 0.0
        %v846 = vadd.f32 %v764, 0.0
        %v847 = vadd.f32 %v767, 0.0
        %v848 = vadd.f32 %v770, 0.0
        %v849 = vadd.f32 %v773, 0.0
        %v850 = vadd.f32 %v776, 0.0
        %v851 = vadd.f32 %v779, 0.0
        %v852 = vadd.f32 %v782, 0.0
        %v853 = vadd.f32 %v785, 0.0
        %v854 = vadd.f32 %v788, 0.0
        %v855 = vadd.f32 %v791, 0.0
        %v856 = vadd.f32 %v794, 0.0
        %v857 = vadd.f32 %v797, 0.0
        %v858 = vadd.f32 %v800, 0.0
        %v859 = vadd.f32 %v803, 0.0
        %v860 = vadd.f32 %v806, 0.0
        %v861 = vperm.slane %v586, 1
        %v862 = vmul.f32 %v526, %v861
        %v863 = vmul.f32 %v527, %v861
        %v864 = vmul.f32 %v528, %v861
        %v865 = vmul.f32 %v529, %v861
        %v866 = vmul.f32 %v530, %v861
        %v867 = vmul.f32 %v531, %v861
        %v868 = vmul.f32 %v532, %v861
        %v869 = vmul.f32 %v533, %v861
        %v870 = vmul.f32 %v534, %v861
        %v871 = vmul.f32 %v535, %v861
        %v872 = vmul.f32 %v536, %v861
        %v873 = vmul.f32 %v537, %v861
        %v874 = vmul.f32 %v538, %v861
        %v875 = vmul.f32 %v539, %v861
        %v876 = vmul.f32 %v540, %v861
        %v877 = vmul.f32 %v541, %v861
        %v878 = vmul.f32 %v542, %v861
        %v879 = vmul.f32 %v543, %v861
        %v880 = vmul.f32 %v544, %v861
        %v881 = vmul.f32 %v545, %v861
        %v882 = vmul.f32 %v546, %v861
        %v883 = vmul.f32 %v547, %v861
        %v884 = vmul.f32 %v548, %v861
        %v885 = vmul.f32 %v549, %v861
        %v886 = vmul.f32 %v550, %v861
        %v887 = vmul.f32 %v551, %v861
        %v888 = vmul.f32 %v552, %v861
        %v889 = vmul.f32 %v553, %v861
        %v890 = vmul.f32 %v554, %v861
        %v891 = vmul.f32 %v555, %v861
        %v892 = vmul.f32 %v556, %v861
        %v893 = vmul.f32 %v557, %v861
        %v894 = vmul.f32 %v558, %v861
        %v895 = vmul.f32 %v559, %v861
        %v896 = vmul.f32 %v560, %v861
        %v897 = vmul.f32 %v561, %v861
        %v898 = vmul.f32 %v562, %v861
        %v899 = vmul.f32 %v563, %v861
        %v900 = vmul.f32 %v564, %v861
        %v901 = vmul.f32 %v565, %v861
        %v902 = vmul.f32 %v566, %v861
        %v903 = vmul.f32 %v567, %v861
        %v904 = vmul.f32 %v568, %v861
        %v905 = vmul.f32 %v569, %v861
        %v906 = vmul.f32 %v570, %v861
        %v907 = vmul.f32 %v571, %v861
        %v908 = vmul.f32 %v572, %v861
        %v909 = vmul.f32 %v573, %v861
        %v910 = vmul.f32 %v574, %v861
        %v911 = vmul.f32 %v575, %v861
        %v912 = vmul.f32 %v576, %v861
        %v913 = vmul.f32 %v577, %v861
        %v914 = vmul.f32 %v578, %v861
        %v915 = vmul.f32 %v579, %v861
        %vm916 = vcmask 130049
        %v917 = vsel %vm916, %v862, 0.0
        %918 = vadd.xlane.f32.xlu0 %v917
        %v919 = vpop.xlane.xlu0 %918
        %v920 = vsel %vm643, %v863, 0.0
        %921 = vadd.xlane.f32.xlu0 %v920
        %v922 = vpop.xlane.xlu0 %921
        %vm923 = vcmask 124928
        %v924 = vsel %vm923, %v864, 0.0
        %925 = vadd.xlane.f32.xlu0 %v924
        %v926 = vpop.xlane.xlu0 %925
        %v927 = vsel %vm916, %v865, 0.0
        %928 = vadd.xlane.f32.xlu0 %v927
        %v929 = vpop.xlane.xlu0 %928
        %v930 = vsel %vm643, %v866, 0.0
        %931 = vadd.xlane.f32.xlu0 %v930
        %v932 = vpop.xlane.xlu0 %931
        %v933 = vsel %vm923, %v867, 0.0
        %934 = vadd.xlane.f32.xlu0 %v933
        %v935 = vpop.xlane.xlu0 %934
        %v936 = vsel %vm916, %v868, 0.0
        %937 = vadd.xlane.f32.xlu0 %v936
        %v938 = vpop.xlane.xlu0 %937
        %v939 = vsel %vm643, %v869, 0.0
        %940 = vadd.xlane.f32.xlu0 %v939
        %v941 = vpop.xlane.xlu0 %940
        %v942 = vsel %vm923, %v870, 0.0
        %943 = vadd.xlane.f32.xlu0 %v942
        %v944 = vpop.xlane.xlu0 %943
        %v945 = vsel %vm916, %v871, 0.0
        %946 = vadd.xlane.f32.xlu0 %v945
        %v947 = vpop.xlane.xlu0 %946
        %v948 = vsel %vm643, %v872, 0.0
        %949 = vadd.xlane.f32.xlu0 %v948
        %v950 = vpop.xlane.xlu0 %949
        %v951 = vsel %vm923, %v873, 0.0
        %952 = vadd.xlane.f32.xlu0 %v951
        %v953 = vpop.xlane.xlu0 %952
        %v954 = vsel %vm916, %v874, 0.0
        %955 = vadd.xlane.f32.xlu0 %v954
        %v956 = vpop.xlane.xlu0 %955
        %v957 = vsel %vm643, %v875, 0.0
        %958 = vadd.xlane.f32.xlu0 %v957
        %v959 = vpop.xlane.xlu0 %958
        %v960 = vsel %vm923, %v876, 0.0
        %961 = vadd.xlane.f32.xlu0 %v960
        %v962 = vpop.xlane.xlu0 %961
        %v963 = vsel %vm916, %v877, 0.0
        %964 = vadd.xlane.f32.xlu0 %v963
        %v965 = vpop.xlane.xlu0 %964
        %v966 = vsel %vm643, %v878, 0.0
        %967 = vadd.xlane.f32.xlu0 %v966
        %v968 = vpop.xlane.xlu0 %967
        %v969 = vsel %vm923, %v879, 0.0
        %970 = vadd.xlane.f32.xlu0 %v969
        %v971 = vpop.xlane.xlu0 %970
        %v972 = vsel %vm916, %v880, 0.0
        %973 = vadd.xlane.f32.xlu0 %v972
        %v974 = vpop.xlane.xlu0 %973
        %v975 = vsel %vm643, %v881, 0.0
        %976 = vadd.xlane.f32.xlu0 %v975
        %v977 = vpop.xlane.xlu0 %976
        %v978 = vsel %vm923, %v882, 0.0
        %979 = vadd.xlane.f32.xlu0 %v978
        %v980 = vpop.xlane.xlu0 %979
        %v981 = vsel %vm916, %v883, 0.0
        %982 = vadd.xlane.f32.xlu0 %v981
        %v983 = vpop.xlane.xlu0 %982
        %v984 = vsel %vm643, %v884, 0.0
        %985 = vadd.xlane.f32.xlu0 %v984
        %v986 = vpop.xlane.xlu0 %985
        %v987 = vsel %vm923, %v885, 0.0
        %988 = vadd.xlane.f32.xlu0 %v987
        %v989 = vpop.xlane.xlu0 %988
        %v990 = vsel %vm916, %v886, 0.0
        %991 = vadd.xlane.f32.xlu0 %v990
        %v992 = vpop.xlane.xlu0 %991
        %v993 = vsel %vm643, %v887, 0.0
        %994 = vadd.xlane.f32.xlu0 %v993
        %v995 = vpop.xlane.xlu0 %994
        %v996 = vsel %vm923, %v888, 0.0
        %997 = vadd.xlane.f32.xlu0 %v996
        %v998 = vpop.xlane.xlu0 %997
        %v999 = vsel %vm916, %v889, 0.0
        %1000 = vadd.xlane.f32.xlu0 %v999
        %v1001 = vpop.xlane.xlu0 %1000
        %v1002 = vsel %vm643, %v890, 0.0
        %1003 = vadd.xlane.f32.xlu0 %v1002
        %v1004 = vpop.xlane.xlu0 %1003
        %v1005 = vsel %vm923, %v891, 0.0
        %1006 = vadd.xlane.f32.xlu0 %v1005
        %v1007 = vpop.xlane.xlu0 %1006
        %v1008 = vsel %vm916, %v892, 0.0
        %1009 = vadd.xlane.f32.xlu0 %v1008
        %v1010 = vpop.xlane.xlu0 %1009
        %v1011 = vsel %vm643, %v893, 0.0
        %1012 = vadd.xlane.f32.xlu0 %v1011
        %v1013 = vpop.xlane.xlu0 %1012
        %v1014 = vsel %vm923, %v894, 0.0
        %1015 = vadd.xlane.f32.xlu0 %v1014
        %v1016 = vpop.xlane.xlu0 %1015
        %v1017 = vsel %vm916, %v895, 0.0
        %1018 = vadd.xlane.f32.xlu0 %v1017
        %v1019 = vpop.xlane.xlu0 %1018
        %v1020 = vsel %vm643, %v896, 0.0
        %1021 = vadd.xlane.f32.xlu0 %v1020
        %v1022 = vpop.xlane.xlu0 %1021
        %v1023 = vsel %vm923, %v897, 0.0
        %1024 = vadd.xlane.f32.xlu0 %v1023
        %v1025 = vpop.xlane.xlu0 %1024
        %v1026 = vsel %vm916, %v898, 0.0
        %1027 = vadd.xlane.f32.xlu0 %v1026
        %v1028 = vpop.xlane.xlu0 %1027
        %v1029 = vsel %vm643, %v899, 0.0
        %1030 = vadd.xlane.f32.xlu0 %v1029
        %v1031 = vpop.xlane.xlu0 %1030
        %v1032 = vsel %vm923, %v900, 0.0
        %1033 = vadd.xlane.f32.xlu0 %v1032
        %v1034 = vpop.xlane.xlu0 %1033
        %v1035 = vsel %vm916, %v901, 0.0
        %1036 = vadd.xlane.f32.xlu0 %v1035
        %v1037 = vpop.xlane.xlu0 %1036
        %v1038 = vsel %vm643, %v902, 0.0
        %1039 = vadd.xlane.f32.xlu0 %v1038
        %v1040 = vpop.xlane.xlu0 %1039
        %v1041 = vsel %vm923, %v903, 0.0
        %1042 = vadd.xlane.f32.xlu0 %v1041
        %v1043 = vpop.xlane.xlu0 %1042
        %v1044 = vsel %vm916, %v904, 0.0
        %1045 = vadd.xlane.f32.xlu0 %v1044
        %v1046 = vpop.xlane.xlu0 %1045
        %v1047 = vsel %vm643, %v905, 0.0
        %1048 = vadd.xlane.f32.xlu0 %v1047
        %v1049 = vpop.xlane.xlu0 %1048
        %v1050 = vsel %vm923, %v906, 0.0
        %1051 = vadd.xlane.f32.xlu0 %v1050
        %v1052 = vpop.xlane.xlu0 %1051
        %v1053 = vsel %vm916, %v907, 0.0
        %1054 = vadd.xlane.f32.xlu0 %v1053
        %v1055 = vpop.xlane.xlu0 %1054
        %v1056 = vsel %vm643, %v908, 0.0
        %1057 = vadd.xlane.f32.xlu0 %v1056
        %v1058 = vpop.xlane.xlu0 %1057
        %v1059 = vsel %vm923, %v909, 0.0
        %1060 = vadd.xlane.f32.xlu0 %v1059
        %v1061 = vpop.xlane.xlu0 %1060
        %v1062 = vsel %vm916, %v910, 0.0
        %1063 = vadd.xlane.f32.xlu0 %v1062
        %v1064 = vpop.xlane.xlu0 %1063
        %v1065 = vsel %vm643, %v911, 0.0
        %1066 = vadd.xlane.f32.xlu0 %v1065
        %v1067 = vpop.xlane.xlu0 %1066
        %v1068 = vsel %vm923, %v912, 0.0
        %1069 = vadd.xlane.f32.xlu0 %v1068
        %v1070 = vpop.xlane.xlu0 %1069
        %v1071 = vsel %vm916, %v913, 0.0
        %1072 = vadd.xlane.f32.xlu0 %v1071
        %v1073 = vpop.xlane.xlu0 %1072
        %v1074 = vsel %vm643, %v914, 0.0
        %1075 = vadd.xlane.f32.xlu0 %v1074
        %v1076 = vpop.xlane.xlu0 %1075
        %v1077 = vsel %vm923, %v915, 0.0
        %1078 = vadd.xlane.f32.xlu0 %v1077
        %v1079 = vpop.xlane.xlu0 %1078
        %vm1134 = vcmask 1046528
        %v1135 = vrot.slane %v919, 1
        %v1136 = vrot.slane %v922, 1
        %v1137 = vsel %vm1134, %v1135, %v1136
        %v1138 = vrot.slane %v926, 1
        %v1139 = vsel %vm1134, %v1136, %v1138
        %v1140 = vrot.slane %v929, 1
        %v1141 = vrot.slane %v932, 1
        %v1142 = vsel %vm1134, %v1140, %v1141
        %v1143 = vrot.slane %v935, 1
        %v1144 = vsel %vm1134, %v1141, %v1143
        %v1145 = vrot.slane %v938, 1
        %v1146 = vrot.slane %v941, 1
        %v1147 = vsel %vm1134, %v1145, %v1146
        %v1148 = vrot.slane %v944, 1
        %v1149 = vsel %vm1134, %v1146, %v1148
        %v1150 = vrot.slane %v947, 1
        %v1151 = vrot.slane %v950, 1
        %v1152 = vsel %vm1134, %v1150, %v1151
        %v1153 = vrot.slane %v953, 1
        %v1154 = vsel %vm1134, %v1151, %v1153
        %v1155 = vrot.slane %v956, 1
        %v1156 = vrot.slane %v959, 1
        %v1157 = vsel %vm1134, %v1155, %v1156
        %v1158 = vrot.slane %v962, 1
        %v1159 = vsel %vm1134, %v1156, %v1158
        %v1160 = vrot.slane %v965, 1
        %v1161 = vrot.slane %v968, 1
        %v1162 = vsel %vm1134, %v1160, %v1161
        %v1163 = vrot.slane %v971, 1
        %v1164 = vsel %vm1134, %v1161, %v1163
        %v1165 = vrot.slane %v974, 1
        %v1166 = vrot.slane %v977, 1
        %v1167 = vsel %vm1134, %v1165, %v1166
        %v1168 = vrot.slane %v980, 1
        %v1169 = vsel %vm1134, %v1166, %v1168
        %v1170 = vrot.slane %v983, 1
        %v1171 = vrot.slane %v986, 1
        %v1172 = vsel %vm1134, %v1170, %v1171
        %v1173 = vrot.slane %v989, 1
        %v1174 = vsel %vm1134, %v1171, %v1173
        %v1175 = vrot.slane %v992, 1
        %v1176 = vrot.slane %v995, 1
        %v1177 = vsel %vm1134, %v1175, %v1176
        %v1178 = vrot.slane %v998, 1
        %v1179 = vsel %vm1134, %v1176, %v1178
        %v1180 = vrot.slane %v1001, 1
        %v1181 = vrot.slane %v1004, 1
        %v1182 = vsel %vm1134, %v1180, %v1181
        %v1183 = vrot.slane %v1007, 1
        %v1184 = vsel %vm1134, %v1181, %v1183
        %v1185 = vrot.slane %v1010, 1
        %v1186 = vrot.slane %v1013, 1
        %v1187 = vsel %vm1134, %v1185, %v1186
        %v1188 = vrot.slane %v1016, 1
        %v1189 = vsel %vm1134, %v1186, %v1188
        %v1190 = vrot.slane %v1019, 1
        %v1191 = vrot.slane %v1022, 1
        %v1192 = vsel %vm1134, %v1190, %v1191
        %v1193 = vrot.slane %v1025, 1
        %v1194 = vsel %vm1134, %v1191, %v1193
        %v1195 = vrot.slane %v1028, 1
        %v1196 = vrot.slane %v1031, 1
        %v1197 = vsel %vm1134, %v1195, %v1196
        %v1198 = vrot.slane %v1034, 1
        %v1199 = vsel %vm1134, %v1196, %v1198
        %v1200 = vrot.slane %v1037, 1
        %v1201 = vrot.slane %v1040, 1
        %v1202 = vsel %vm1134, %v1200, %v1201
        %v1203 = vrot.slane %v1043, 1
        %v1204 = vsel %vm1134, %v1201, %v1203
        %v1205 = vrot.slane %v1046, 1
        %v1206 = vrot.slane %v1049, 1
        %v1207 = vsel %vm1134, %v1205, %v1206
        %v1208 = vrot.slane %v1052, 1
        %v1209 = vsel %vm1134, %v1206, %v1208
        %v1210 = vrot.slane %v1055, 1
        %v1211 = vrot.slane %v1058, 1
        %v1212 = vsel %vm1134, %v1210, %v1211
        %v1213 = vrot.slane %v1061, 1
        %v1214 = vsel %vm1134, %v1211, %v1213
        %v1215 = vrot.slane %v1064, 1
        %v1216 = vrot.slane %v1067, 1
        %v1217 = vsel %vm1134, %v1215, %v1216
        %v1218 = vrot.slane %v1070, 1
        %v1219 = vsel %vm1134, %v1216, %v1218
        %v1220 = vrot.slane %v1073, 1
        %v1221 = vrot.slane %v1076, 1
        %v1222 = vsel %vm1134, %v1220, %v1221
        %v1223 = vrot.slane %v1079, 1
        %v1224 = vsel %vm1134, %v1221, %v1223
        %v1279 = vadd.f32 %v807, %v1137
        %v1280 = vadd.f32 %v808, %v1139
        %v1281 = vadd.f32 %v809, %v1138
        %v1282 = vadd.f32 %v810, %v1142
        %v1283 = vadd.f32 %v811, %v1144
        %v1284 = vadd.f32 %v812, %v1143
        %v1285 = vadd.f32 %v813, %v1147
        %v1286 = vadd.f32 %v814, %v1149
        %v1287 = vadd.f32 %v815, %v1148
        %v1288 = vadd.f32 %v816, %v1152
        %v1289 = vadd.f32 %v817, %v1154
        %v1290 = vadd.f32 %v818, %v1153
        %v1291 = vadd.f32 %v819, %v1157
        %v1292 = vadd.f32 %v820, %v1159
        %v1293 = vadd.f32 %v821, %v1158
        %v1294 = vadd.f32 %v822, %v1162
        %v1295 = vadd.f32 %v823, %v1164
        %v1296 = vadd.f32 %v824, %v1163
        %v1297 = vadd.f32 %v825, %v1167
        %v1298 = vadd.f32 %v826, %v1169
        %v1299 = vadd.f32 %v827, %v1168
        %v1300 = vadd.f32 %v828, %v1172
        %v1301 = vadd.f32 %v829, %v1174
        %v1302 = vadd.f32 %v830, %v1173
        %v1303 = vadd.f32 %v831, %v1177
        %v1304 = vadd.f32 %v832, %v1179
        %v1305 = vadd.f32 %v833, %v1178
        %v1306 = vadd.f32 %v834, %v1182
        %v1307 = vadd.f32 %v835, %v1184
        %v1308 = vadd.f32 %v836, %v1183
        %v1309 = vadd.f32 %v837, %v1187
        %v1310 = vadd.f32 %v838, %v1189
        %v1311 = vadd.f32 %v839, %v1188
        %v1312 = vadd.f32 %v840, %v1192
        %v1313 = vadd.f32 %v841, %v1194
        %v1314 = vadd.f32 %v842, %v1193
        %v1315 = vadd.f32 %v843, %v1197
        %v1316 = vadd.f32 %v844, %v1199
        %v1317 = vadd.f32 %v845, %v1198
        %v1318 = vadd.f32 %v846, %v1202
        %v1319 = vadd.f32 %v847, %v1204
        %v1320 = vadd.f32 %v848, %v1203
        %v1321 = vadd.f32 %v849, %v1207
        %v1322 = vadd.f32 %v850, %v1209
        %v1323 = vadd.f32 %v851, %v1208
        %v1324 = vadd.f32 %v852, %v1212
        %v1325 = vadd.f32 %v853, %v1214
        %v1326 = vadd.f32 %v854, %v1213
        %v1327 = vadd.f32 %v855, %v1217
        %v1328 = vadd.f32 %v856, %v1219
        %v1329 = vadd.f32 %v857, %v1218
        %v1330 = vadd.f32 %v858, %v1222
        %v1331 = vadd.f32 %v859, %v1224
        %v1332 = vadd.f32 %v860, %v1223
        %v1333 = vperm.slane %v586, 2
        %v1334 = vmul.f32 %v526, %v1333
        %v1335 = vmul.f32 %v527, %v1333
        %v1336 = vmul.f32 %v528, %v1333
        %v1337 = vmul.f32 %v529, %v1333
        %v1338 = vmul.f32 %v530, %v1333
        %v1339 = vmul.f32 %v531, %v1333
        %v1340 = vmul.f32 %v532, %v1333
        %v1341 = vmul.f32 %v533, %v1333
        %v1342 = vmul.f32 %v534, %v1333
        %v1343 = vmul.f32 %v535, %v1333
        %v1344 = vmul.f32 %v536, %v1333
        %v1345 = vmul.f32 %v537, %v1333
        %v1346 = vmul.f32 %v538, %v1333
        %v1347 = vmul.f32 %v539, %v1333
        %v1348 = vmul.f32 %v540, %v1333
        %v1349 = vmul.f32 %v541, %v1333
        %v1350 = vmul.f32 %v542, %v1333
        %v1351 = vmul.f32 %v543, %v1333
        %v1352 = vmul.f32 %v544, %v1333
        %v1353 = vmul.f32 %v545, %v1333
        %v1354 = vmul.f32 %v546, %v1333
        %v1355 = vmul.f32 %v547, %v1333
        %v1356 = vmul.f32 %v548, %v1333
        %v1357 = vmul.f32 %v549, %v1333
        %v1358 = vmul.f32 %v550, %v1333
        %v1359 = vmul.f32 %v551, %v1333
        %v1360 = vmul.f32 %v552, %v1333
        %v1361 = vmul.f32 %v553, %v1333
        %v1362 = vmul.f32 %v554, %v1333
        %v1363 = vmul.f32 %v555, %v1333
        %v1364 = vmul.f32 %v556, %v1333
        %v1365 = vmul.f32 %v557, %v1333
        %v1366 = vmul.f32 %v558, %v1333
        %v1367 = vmul.f32 %v559, %v1333
        %v1368 = vmul.f32 %v560, %v1333
        %v1369 = vmul.f32 %v561, %v1333
        %v1370 = vmul.f32 %v562, %v1333
        %v1371 = vmul.f32 %v563, %v1333
        %v1372 = vmul.f32 %v564, %v1333
        %v1373 = vmul.f32 %v565, %v1333
        %v1374 = vmul.f32 %v566, %v1333
        %v1375 = vmul.f32 %v567, %v1333
        %v1376 = vmul.f32 %v568, %v1333
        %v1377 = vmul.f32 %v569, %v1333
        %v1378 = vmul.f32 %v570, %v1333
        %v1379 = vmul.f32 %v571, %v1333
        %v1380 = vmul.f32 %v572, %v1333
        %v1381 = vmul.f32 %v573, %v1333
        %v1382 = vmul.f32 %v574, %v1333
        %v1383 = vmul.f32 %v575, %v1333
        %v1384 = vmul.f32 %v576, %v1333
        %v1385 = vmul.f32 %v577, %v1333
        %v1386 = vmul.f32 %v578, %v1333
        %v1387 = vmul.f32 %v579, %v1333
        %vm1388 = vcmask 130050
        %v1389 = vsel %vm1388, %v1334, 0.0
        %1390 = vadd.xlane.f32.xlu0 %v1389
        %v1391 = vpop.xlane.xlu0 %1390
        %v1392 = vsel %vm643, %v1335, 0.0
        %1393 = vadd.xlane.f32.xlu0 %v1392
        %v1394 = vpop.xlane.xlu0 %1393
        %vm1395 = vcmask 125952
        %v1396 = vsel %vm1395, %v1336, 0.0
        %1397 = vadd.xlane.f32.xlu0 %v1396
        %v1398 = vpop.xlane.xlu0 %1397
        %v1399 = vsel %vm1388, %v1337, 0.0
        %1400 = vadd.xlane.f32.xlu0 %v1399
        %v1401 = vpop.xlane.xlu0 %1400
        %v1402 = vsel %vm643, %v1338, 0.0
        %1403 = vadd.xlane.f32.xlu0 %v1402
        %v1404 = vpop.xlane.xlu0 %1403
        %v1405 = vsel %vm1395, %v1339, 0.0
        %1406 = vadd.xlane.f32.xlu0 %v1405
        %v1407 = vpop.xlane.xlu0 %1406
        %v1408 = vsel %vm1388, %v1340, 0.0
        %1409 = vadd.xlane.f32.xlu0 %v1408
        %v1410 = vpop.xlane.xlu0 %1409
        %v1411 = vsel %vm643, %v1341, 0.0
        %1412 = vadd.xlane.f32.xlu0 %v1411
        %v1413 = vpop.xlane.xlu0 %1412
        %v1414 = vsel %vm1395, %v1342, 0.0
        %1415 = vadd.xlane.f32.xlu0 %v1414
        %v1416 = vpop.xlane.xlu0 %1415
        %v1417 = vsel %vm1388, %v1343, 0.0
        %1418 = vadd.xlane.f32.xlu0 %v1417
        %v1419 = vpop.xlane.xlu0 %1418
        %v1420 = vsel %vm643, %v1344, 0.0
        %1421 = vadd.xlane.f32.xlu0 %v1420
        %v1422 = vpop.xlane.xlu0 %1421
        %v1423 = vsel %vm1395, %v1345, 0.0
        %1424 = vadd.xlane.f32.xlu0 %v1423
        %v1425 = vpop.xlane.xlu0 %1424
        %v1426 = vsel %vm1388, %v1346, 0.0
        %1427 = vadd.xlane.f32.xlu0 %v1426
        %v1428 = vpop.xlane.xlu0 %1427
        %v1429 = vsel %vm643, %v1347, 0.0
        %1430 = vadd.xlane.f32.xlu0 %v1429
        %v1431 = vpop.xlane.xlu0 %1430
        %v1432 = vsel %vm1395, %v1348, 0.0
        %1433 = vadd.xlane.f32.xlu0 %v1432
        %v1434 = vpop.xlane.xlu0 %1433
        %v1435 = vsel %vm1388, %v1349, 0.0
        %1436 = vadd.xlane.f32.xlu0 %v1435
        %v1437 = vpop.xlane.xlu0 %1436
        %v1438 = vsel %vm643, %v1350, 0.0
        %1439 = vadd.xlane.f32.xlu0 %v1438
        %v1440 = vpop.xlane.xlu0 %1439
        %v1441 = vsel %vm1395, %v1351, 0.0
        %1442 = vadd.xlane.f32.xlu0 %v1441
        %v1443 = vpop.xlane.xlu0 %1442
        %v1444 = vsel %vm1388, %v1352, 0.0
        %1445 = vadd.xlane.f32.xlu0 %v1444
        %v1446 = vpop.xlane.xlu0 %1445
        %v1447 = vsel %vm643, %v1353, 0.0
        %1448 = vadd.xlane.f32.xlu0 %v1447
        %v1449 = vpop.xlane.xlu0 %1448
        %v1450 = vsel %vm1395, %v1354, 0.0
        %1451 = vadd.xlane.f32.xlu0 %v1450
        %v1452 = vpop.xlane.xlu0 %1451
        %v1453 = vsel %vm1388, %v1355, 0.0
        %1454 = vadd.xlane.f32.xlu0 %v1453
        %v1455 = vpop.xlane.xlu0 %1454
        %v1456 = vsel %vm643, %v1356, 0.0
        %1457 = vadd.xlane.f32.xlu0 %v1456
        %v1458 = vpop.xlane.xlu0 %1457
        %v1459 = vsel %vm1395, %v1357, 0.0
        %1460 = vadd.xlane.f32.xlu0 %v1459
        %v1461 = vpop.xlane.xlu0 %1460
        %v1462 = vsel %vm1388, %v1358, 0.0
        %1463 = vadd.xlane.f32.xlu0 %v1462
        %v1464 = vpop.xlane.xlu0 %1463
        %v1465 = vsel %vm643, %v1359, 0.0
        %1466 = vadd.xlane.f32.xlu0 %v1465
        %v1467 = vpop.xlane.xlu0 %1466
        %v1468 = vsel %vm1395, %v1360, 0.0
        %1469 = vadd.xlane.f32.xlu0 %v1468
        %v1470 = vpop.xlane.xlu0 %1469
        %v1471 = vsel %vm1388, %v1361, 0.0
        %1472 = vadd.xlane.f32.xlu0 %v1471
        %v1473 = vpop.xlane.xlu0 %1472
        %v1474 = vsel %vm643, %v1362, 0.0
        %1475 = vadd.xlane.f32.xlu0 %v1474
        %v1476 = vpop.xlane.xlu0 %1475
        %v1477 = vsel %vm1395, %v1363, 0.0
        %1478 = vadd.xlane.f32.xlu0 %v1477
        %v1479 = vpop.xlane.xlu0 %1478
        %v1480 = vsel %vm1388, %v1364, 0.0
        %1481 = vadd.xlane.f32.xlu0 %v1480
        %v1482 = vpop.xlane.xlu0 %1481
        %v1483 = vsel %vm643, %v1365, 0.0
        %1484 = vadd.xlane.f32.xlu0 %v1483
        %v1485 = vpop.xlane.xlu0 %1484
        %v1486 = vsel %vm1395, %v1366, 0.0
        %1487 = vadd.xlane.f32.xlu0 %v1486
        %v1488 = vpop.xlane.xlu0 %1487
        %v1489 = vsel %vm1388, %v1367, 0.0
        %1490 = vadd.xlane.f32.xlu0 %v1489
        %v1491 = vpop.xlane.xlu0 %1490
        %v1492 = vsel %vm643, %v1368, 0.0
        %1493 = vadd.xlane.f32.xlu0 %v1492
        %v1494 = vpop.xlane.xlu0 %1493
        %v1495 = vsel %vm1395, %v1369, 0.0
        %1496 = vadd.xlane.f32.xlu0 %v1495
        %v1497 = vpop.xlane.xlu0 %1496
        %v1498 = vsel %vm1388, %v1370, 0.0
        %1499 = vadd.xlane.f32.xlu0 %v1498
        %v1500 = vpop.xlane.xlu0 %1499
        %v1501 = vsel %vm643, %v1371, 0.0
        %1502 = vadd.xlane.f32.xlu0 %v1501
        %v1503 = vpop.xlane.xlu0 %1502
        %v1504 = vsel %vm1395, %v1372, 0.0
        %1505 = vadd.xlane.f32.xlu0 %v1504
        %v1506 = vpop.xlane.xlu0 %1505
        %v1507 = vsel %vm1388, %v1373, 0.0
        %1508 = vadd.xlane.f32.xlu0 %v1507
        %v1509 = vpop.xlane.xlu0 %1508
        %v1510 = vsel %vm643, %v1374, 0.0
        %1511 = vadd.xlane.f32.xlu0 %v1510
        %v1512 = vpop.xlane.xlu0 %1511
        %v1513 = vsel %vm1395, %v1375, 0.0
        %1514 = vadd.xlane.f32.xlu0 %v1513
        %v1515 = vpop.xlane.xlu0 %1514
        %v1516 = vsel %vm1388, %v1376, 0.0
        %1517 = vadd.xlane.f32.xlu0 %v1516
        %v1518 = vpop.xlane.xlu0 %1517
        %v1519 = vsel %vm643, %v1377, 0.0
        %1520 = vadd.xlane.f32.xlu0 %v1519
        %v1521 = vpop.xlane.xlu0 %1520
        %v1522 = vsel %vm1395, %v1378, 0.0
        %1523 = vadd.xlane.f32.xlu0 %v1522
        %v1524 = vpop.xlane.xlu0 %1523
        %v1525 = vsel %vm1388, %v1379, 0.0
        %1526 = vadd.xlane.f32.xlu0 %v1525
        %v1527 = vpop.xlane.xlu0 %1526
        %v1528 = vsel %vm643, %v1380, 0.0
        %1529 = vadd.xlane.f32.xlu0 %v1528
        %v1530 = vpop.xlane.xlu0 %1529
        %v1531 = vsel %vm1395, %v1381, 0.0
        %1532 = vadd.xlane.f32.xlu0 %v1531
        %v1533 = vpop.xlane.xlu0 %1532
        %v1534 = vsel %vm1388, %v1382, 0.0
        %1535 = vadd.xlane.f32.xlu0 %v1534
        %v1536 = vpop.xlane.xlu0 %1535
        %v1537 = vsel %vm643, %v1383, 0.0
        %1538 = vadd.xlane.f32.xlu0 %v1537
        %v1539 = vpop.xlane.xlu0 %1538
        %v1540 = vsel %vm1395, %v1384, 0.0
        %1541 = vadd.xlane.f32.xlu0 %v1540
        %v1542 = vpop.xlane.xlu0 %1541
        %v1543 = vsel %vm1388, %v1385, 0.0
        %1544 = vadd.xlane.f32.xlu0 %v1543
        %v1545 = vpop.xlane.xlu0 %1544
        %v1546 = vsel %vm643, %v1386, 0.0
        %1547 = vadd.xlane.f32.xlu0 %v1546
        %v1548 = vpop.xlane.xlu0 %1547
        %v1549 = vsel %vm1395, %v1387, 0.0
        %1550 = vadd.xlane.f32.xlu0 %v1549
        %v1551 = vpop.xlane.xlu0 %1550
        %vm1606 = vcmask 1045504
        %v1607 = vrot.slane %v1391, 2
        %v1608 = vrot.slane %v1394, 2
        %v1609 = vsel %vm1606, %v1607, %v1608
        %v1610 = vrot.slane %v1398, 2
        %v1611 = vsel %vm1606, %v1608, %v1610
        %v1612 = vrot.slane %v1401, 2
        %v1613 = vrot.slane %v1404, 2
        %v1614 = vsel %vm1606, %v1612, %v1613
        %v1615 = vrot.slane %v1407, 2
        %v1616 = vsel %vm1606, %v1613, %v1615
        %v1617 = vrot.slane %v1410, 2
        %v1618 = vrot.slane %v1413, 2
        %v1619 = vsel %vm1606, %v1617, %v1618
        %v1620 = vrot.slane %v1416, 2
        %v1621 = vsel %vm1606, %v1618, %v1620
        %v1622 = vrot.slane %v1419, 2
        %v1623 = vrot.slane %v1422, 2
        %v1624 = vsel %vm1606, %v1622, %v1623
        %v1625 = vrot.slane %v1425, 2
        %v1626 = vsel %vm1606, %v1623, %v1625
        %v1627 = vrot.slane %v1428, 2
        %v1628 = vrot.slane %v1431, 2
        %v1629 = vsel %vm1606, %v1627, %v1628
        %v1630 = vrot.slane %v1434, 2
        %v1631 = vsel %vm1606, %v1628, %v1630
        %v1632 = vrot.slane %v1437, 2
        %v1633 = vrot.slane %v1440, 2
        %v1634 = vsel %vm1606, %v1632, %v1633
        %v1635 = vrot.slane %v1443, 2
        %v1636 = vsel %vm1606, %v1633, %v1635
        %v1637 = vrot.slane %v1446, 2
        %v1638 = vrot.slane %v1449, 2
        %v1639 = vsel %vm1606, %v1637, %v1638
        %v1640 = vrot.slane %v1452, 2
        %v1641 = vsel %vm1606, %v1638, %v1640
        %v1642 = vrot.slane %v1455, 2
        %v1643 = vrot.slane %v1458, 2
        %v1644 = vsel %vm1606, %v1642, %v1643
        %v1645 = vrot.slane %v1461, 2
        %v1646 = vsel %vm1606, %v1643, %v1645
        %v1647 = vrot.slane %v1464, 2
        %v1648 = vrot.slane %v1467, 2
        %v1649 = vsel %vm1606, %v1647, %v1648
        %v1650 = vrot.slane %v1470, 2
        %v1651 = vsel %vm1606, %v1648, %v1650
        %v1652 = vrot.slane %v1473, 2
        %v1653 = vrot.slane %v1476, 2
        %v1654 = vsel %vm1606, %v1652, %v1653
        %v1655 = vrot.slane %v1479, 2
        %v1656 = vsel %vm1606, %v1653, %v1655
        %v1657 = vrot.slane %v1482, 2
        %v1658 = vrot.slane %v1485, 2
        %v1659 = vsel %vm1606, %v1657, %v1658
        %v1660 = vrot.slane %v1488, 2
        %v1661 = vsel %vm1606, %v1658, %v1660
        %v1662 = vrot.slane %v1491, 2
        %v1663 = vrot.slane %v1494, 2
        %v1664 = vsel %vm1606, %v1662, %v1663
        %v1665 = vrot.slane %v1497, 2
        %v1666 = vsel %vm1606, %v1663, %v1665
        %v1667 = vrot.slane %v1500, 2
        %v1668 = vrot.slane %v1503, 2
        %v1669 = vsel %vm1606, %v1667, %v1668
        %v1670 = vrot.slane %v1506, 2
        %v1671 = vsel %vm1606, %v1668, %v1670
        %v1672 = vrot.slane %v1509, 2
        %v1673 = vrot.slane %v1512, 2
        %v1674 = vsel %vm1606, %v1672, %v1673
        %v1675 = vrot.slane %v1515, 2
        %v1676 = vsel %vm1606, %v1673, %v1675
        %v1677 = vrot.slane %v1518, 2
        %v1678 = vrot.slane %v1521, 2
        %v1679 = vsel %vm1606, %v1677, %v1678
        %v1680 = vrot.slane %v1524, 2
        %v1681 = vsel %vm1606, %v1678, %v1680
        %v1682 = vrot.slane %v1527, 2
        %v1683 = vrot.slane %v1530, 2
        %v1684 = vsel %vm1606, %v1682, %v1683
        %v1685 = vrot.slane %v1533, 2
        %v1686 = vsel %vm1606, %v1683, %v1685
        %v1687 = vrot.slane %v1536, 2
        %v1688 = vrot.slane %v1539, 2
        %v1689 = vsel %vm1606, %v1687, %v1688
        %v1690 = vrot.slane %v1542, 2
        %v1691 = vsel %vm1606, %v1688, %v1690
        %v1692 = vrot.slane %v1545, 2
        %v1693 = vrot.slane %v1548, 2
        %v1694 = vsel %vm1606, %v1692, %v1693
        %v1695 = vrot.slane %v1551, 2
        %v1696 = vsel %vm1606, %v1693, %v1695
        %v1751 = vadd.f32 %v1279, %v1609
        %v1752 = vadd.f32 %v1280, %v1611
        %v1753 = vadd.f32 %v1281, %v1610
        %v1754 = vadd.f32 %v1282, %v1614
        %v1755 = vadd.f32 %v1283, %v1616
        %v1756 = vadd.f32 %v1284, %v1615
        %v1757 = vadd.f32 %v1285, %v1619
        %v1758 = vadd.f32 %v1286, %v1621
        %v1759 = vadd.f32 %v1287, %v1620
        %v1760 = vadd.f32 %v1288, %v1624
        %v1761 = vadd.f32 %v1289, %v1626
        %v1762 = vadd.f32 %v1290, %v1625
        %v1763 = vadd.f32 %v1291, %v1629
        %v1764 = vadd.f32 %v1292, %v1631
        %v1765 = vadd.f32 %v1293, %v1630
        %v1766 = vadd.f32 %v1294, %v1634
        %v1767 = vadd.f32 %v1295, %v1636
        %v1768 = vadd.f32 %v1296, %v1635
        %v1769 = vadd.f32 %v1297, %v1639
        %v1770 = vadd.f32 %v1298, %v1641
        %v1771 = vadd.f32 %v1299, %v1640
        %v1772 = vadd.f32 %v1300, %v1644
        %v1773 = vadd.f32 %v1301, %v1646
        %v1774 = vadd.f32 %v1302, %v1645
        %v1775 = vadd.f32 %v1303, %v1649
        %v1776 = vadd.f32 %v1304, %v1651
        %v1777 = vadd.f32 %v1305, %v1650
        %v1778 = vadd.f32 %v1306, %v1654
        %v1779 = vadd.f32 %v1307, %v1656
        %v1780 = vadd.f32 %v1308, %v1655
        %v1781 = vadd.f32 %v1309, %v1659
        %v1782 = vadd.f32 %v1310, %v1661
        %v1783 = vadd.f32 %v1311, %v1660
        %v1784 = vadd.f32 %v1312, %v1664
        %v1785 = vadd.f32 %v1313, %v1666
        %v1786 = vadd.f32 %v1314, %v1665
        %v1787 = vadd.f32 %v1315, %v1669
        %v1788 = vadd.f32 %v1316, %v1671
        %v1789 = vadd.f32 %v1317, %v1670
        %v1790 = vadd.f32 %v1318, %v1674
        %v1791 = vadd.f32 %v1319, %v1676
        %v1792 = vadd.f32 %v1320, %v1675
        %v1793 = vadd.f32 %v1321, %v1679
        %v1794 = vadd.f32 %v1322, %v1681
        %v1795 = vadd.f32 %v1323, %v1680
        %v1796 = vadd.f32 %v1324, %v1684
        %v1797 = vadd.f32 %v1325, %v1686
        %v1798 = vadd.f32 %v1326, %v1685
        %v1799 = vadd.f32 %v1327, %v1689
        %v1800 = vadd.f32 %v1328, %v1691
        %v1801 = vadd.f32 %v1329, %v1690
        %v1802 = vadd.f32 %v1330, %v1694
        %v1803 = vadd.f32 %v1331, %v1696
        %v1804 = vadd.f32 %v1332, %v1695
        %v1805 = vperm.slane %v586, 3
        %v1806 = vmul.f32 %v529, %v1805
        %v1807 = vmul.f32 %v530, %v1805
        %v1808 = vmul.f32 %v531, %v1805
        %v1809 = vmul.f32 %v532, %v1805
        %v1810 = vmul.f32 %v533, %v1805
        %v1811 = vmul.f32 %v534, %v1805
        %v1812 = vmul.f32 %v535, %v1805
        %v1813 = vmul.f32 %v536, %v1805
        %v1814 = vmul.f32 %v537, %v1805
        %v1815 = vmul.f32 %v538, %v1805
        %v1816 = vmul.f32 %v539, %v1805
        %v1817 = vmul.f32 %v540, %v1805
        %v1818 = vmul.f32 %v541, %v1805
        %v1819 = vmul.f32 %v542, %v1805
        %v1820 = vmul.f32 %v543, %v1805
        %v1821 = vmul.f32 %v544, %v1805
        %v1822 = vmul.f32 %v545, %v1805
        %v1823 = vmul.f32 %v546, %v1805
        %v1824 = vmul.f32 %v547, %v1805
        %v1825 = vmul.f32 %v548, %v1805
        %v1826 = vmul.f32 %v549, %v1805
        %v1827 = vmul.f32 %v550, %v1805
        %v1828 = vmul.f32 %v551, %v1805
        %v1829 = vmul.f32 %v552, %v1805
        %v1830 = vmul.f32 %v553, %v1805
        %v1831 = vmul.f32 %v554, %v1805
        %v1832 = vmul.f32 %v555, %v1805
        %v1833 = vmul.f32 %v556, %v1805
        %v1834 = vmul.f32 %v557, %v1805
        %v1835 = vmul.f32 %v558, %v1805
        %v1836 = vmul.f32 %v559, %v1805
        %v1837 = vmul.f32 %v560, %v1805
        %v1838 = vmul.f32 %v561, %v1805
        %v1839 = vmul.f32 %v562, %v1805
        %v1840 = vmul.f32 %v563, %v1805
        %v1841 = vmul.f32 %v564, %v1805
        %v1842 = vmul.f32 %v565, %v1805
        %v1843 = vmul.f32 %v566, %v1805
        %v1844 = vmul.f32 %v567, %v1805
        %v1845 = vmul.f32 %v568, %v1805
        %v1846 = vmul.f32 %v569, %v1805
        %v1847 = vmul.f32 %v570, %v1805
        %v1848 = vmul.f32 %v571, %v1805
        %v1849 = vmul.f32 %v572, %v1805
        %v1850 = vmul.f32 %v573, %v1805
        %v1851 = vmul.f32 %v574, %v1805
        %v1852 = vmul.f32 %v575, %v1805
        %v1853 = vmul.f32 %v576, %v1805
        %v1854 = vmul.f32 %v577, %v1805
        %v1855 = vmul.f32 %v578, %v1805
        %v1856 = vmul.f32 %v579, %v1805
        %v1857 = vmul.f32 %v580, %v1805
        %v1858 = vmul.f32 %v581, %v1805
        %v1859 = vmul.f32 %v582, %v1805
        %v1860 = vsel %vm643, %v1806, 0.0
        %1861 = vadd.xlane.f32.xlu0 %v1860
        %v1862 = vpop.xlane.xlu0 %1861
        %v1863 = vsel %vm643, %v1807, 0.0
        %1864 = vadd.xlane.f32.xlu0 %v1863
        %v1865 = vpop.xlane.xlu0 %1864
        %v1866 = vsel %vm650, %v1808, 0.0
        %1867 = vadd.xlane.f32.xlu0 %v1866
        %v1868 = vpop.xlane.xlu0 %1867
        %v1869 = vsel %vm643, %v1809, 0.0
        %1870 = vadd.xlane.f32.xlu0 %v1869
        %v1871 = vpop.xlane.xlu0 %1870
        %v1872 = vsel %vm643, %v1810, 0.0
        %1873 = vadd.xlane.f32.xlu0 %v1872
        %v1874 = vpop.xlane.xlu0 %1873
        %v1875 = vsel %vm650, %v1811, 0.0
        %1876 = vadd.xlane.f32.xlu0 %v1875
        %v1877 = vpop.xlane.xlu0 %1876
        %v1878 = vsel %vm643, %v1812, 0.0
        %1879 = vadd.xlane.f32.xlu0 %v1878
        %v1880 = vpop.xlane.xlu0 %1879
        %v1881 = vsel %vm643, %v1813, 0.0
        %1882 = vadd.xlane.f32.xlu0 %v1881
        %v1883 = vpop.xlane.xlu0 %1882
        %v1884 = vsel %vm650, %v1814, 0.0
        %1885 = vadd.xlane.f32.xlu0 %v1884
        %v1886 = vpop.xlane.xlu0 %1885
        %v1887 = vsel %vm643, %v1815, 0.0
        %1888 = vadd.xlane.f32.xlu0 %v1887
        %v1889 = vpop.xlane.xlu0 %1888
        %v1890 = vsel %vm643, %v1816, 0.0
        %1891 = vadd.xlane.f32.xlu0 %v1890
        %v1892 = vpop.xlane.xlu0 %1891
        %v1893 = vsel %vm650, %v1817, 0.0
        %1894 = vadd.xlane.f32.xlu0 %v1893
        %v1895 = vpop.xlane.xlu0 %1894
        %v1896 = vsel %vm643, %v1818, 0.0
        %1897 = vadd.xlane.f32.xlu0 %v1896
        %v1898 = vpop.xlane.xlu0 %1897
        %v1899 = vsel %vm643, %v1819, 0.0
        %1900 = vadd.xlane.f32.xlu0 %v1899
        %v1901 = vpop.xlane.xlu0 %1900
        %v1902 = vsel %vm650, %v1820, 0.0
        %1903 = vadd.xlane.f32.xlu0 %v1902
        %v1904 = vpop.xlane.xlu0 %1903
        %v1905 = vsel %vm643, %v1821, 0.0
        %1906 = vadd.xlane.f32.xlu0 %v1905
        %v1907 = vpop.xlane.xlu0 %1906
        %v1908 = vsel %vm643, %v1822, 0.0
        %1909 = vadd.xlane.f32.xlu0 %v1908
        %v1910 = vpop.xlane.xlu0 %1909
        %v1911 = vsel %vm650, %v1823, 0.0
        %1912 = vadd.xlane.f32.xlu0 %v1911
        %v1913 = vpop.xlane.xlu0 %1912
        %v1914 = vsel %vm643, %v1824, 0.0
        %1915 = vadd.xlane.f32.xlu0 %v1914
        %v1916 = vpop.xlane.xlu0 %1915
        %v1917 = vsel %vm643, %v1825, 0.0
        %1918 = vadd.xlane.f32.xlu0 %v1917
        %v1919 = vpop.xlane.xlu0 %1918
        %v1920 = vsel %vm650, %v1826, 0.0
        %1921 = vadd.xlane.f32.xlu0 %v1920
        %v1922 = vpop.xlane.xlu0 %1921
        %v1923 = vsel %vm643, %v1827, 0.0
        %1924 = vadd.xlane.f32.xlu0 %v1923
        %v1925 = vpop.xlane.xlu0 %1924
        %v1926 = vsel %vm643, %v1828, 0.0
        %1927 = vadd.xlane.f32.xlu0 %v1926
        %v1928 = vpop.xlane.xlu0 %1927
        %v1929 = vsel %vm650, %v1829, 0.0
        %1930 = vadd.xlane.f32.xlu0 %v1929
        %v1931 = vpop.xlane.xlu0 %1930
        %v1932 = vsel %vm643, %v1830, 0.0
        %1933 = vadd.xlane.f32.xlu0 %v1932
        %v1934 = vpop.xlane.xlu0 %1933
        %v1935 = vsel %vm643, %v1831, 0.0
        %1936 = vadd.xlane.f32.xlu0 %v1935
        %v1937 = vpop.xlane.xlu0 %1936
        %v1938 = vsel %vm650, %v1832, 0.0
        %1939 = vadd.xlane.f32.xlu0 %v1938
        %v1940 = vpop.xlane.xlu0 %1939
        %v1941 = vsel %vm643, %v1833, 0.0
        %1942 = vadd.xlane.f32.xlu0 %v1941
        %v1943 = vpop.xlane.xlu0 %1942
        %v1944 = vsel %vm643, %v1834, 0.0
        %1945 = vadd.xlane.f32.xlu0 %v1944
        %v1946 = vpop.xlane.xlu0 %1945
        %v1947 = vsel %vm650, %v1835, 0.0
        %1948 = vadd.xlane.f32.xlu0 %v1947
        %v1949 = vpop.xlane.xlu0 %1948
        %v1950 = vsel %vm643, %v1836, 0.0
        %1951 = vadd.xlane.f32.xlu0 %v1950
        %v1952 = vpop.xlane.xlu0 %1951
        %v1953 = vsel %vm643, %v1837, 0.0
        %1954 = vadd.xlane.f32.xlu0 %v1953
        %v1955 = vpop.xlane.xlu0 %1954
        %v1956 = vsel %vm650, %v1838, 0.0
        %1957 = vadd.xlane.f32.xlu0 %v1956
        %v1958 = vpop.xlane.xlu0 %1957
        %v1959 = vsel %vm643, %v1839, 0.0
        %1960 = vadd.xlane.f32.xlu0 %v1959
        %v1961 = vpop.xlane.xlu0 %1960
        %v1962 = vsel %vm643, %v1840, 0.0
        %1963 = vadd.xlane.f32.xlu0 %v1962
        %v1964 = vpop.xlane.xlu0 %1963
        %v1965 = vsel %vm650, %v1841, 0.0
        %1966 = vadd.xlane.f32.xlu0 %v1965
        %v1967 = vpop.xlane.xlu0 %1966
        %v1968 = vsel %vm643, %v1842, 0.0
        %1969 = vadd.xlane.f32.xlu0 %v1968
        %v1970 = vpop.xlane.xlu0 %1969
        %v1971 = vsel %vm643, %v1843, 0.0
        %1972 = vadd.xlane.f32.xlu0 %v1971
        %v1973 = vpop.xlane.xlu0 %1972
        %v1974 = vsel %vm650, %v1844, 0.0
        %1975 = vadd.xlane.f32.xlu0 %v1974
        %v1976 = vpop.xlane.xlu0 %1975
        %v1977 = vsel %vm643, %v1845, 0.0
        %1978 = vadd.xlane.f32.xlu0 %v1977
        %v1979 = vpop.xlane.xlu0 %1978
        %v1980 = vsel %vm643, %v1846, 0.0
        %1981 = vadd.xlane.f32.xlu0 %v1980
        %v1982 = vpop.xlane.xlu0 %1981
        %v1983 = vsel %vm650, %v1847, 0.0
        %1984 = vadd.xlane.f32.xlu0 %v1983
        %v1985 = vpop.xlane.xlu0 %1984
        %v1986 = vsel %vm643, %v1848, 0.0
        %1987 = vadd.xlane.f32.xlu0 %v1986
        %v1988 = vpop.xlane.xlu0 %1987
        %v1989 = vsel %vm643, %v1849, 0.0
        %1990 = vadd.xlane.f32.xlu0 %v1989
        %v1991 = vpop.xlane.xlu0 %1990
        %v1992 = vsel %vm650, %v1850, 0.0
        %1993 = vadd.xlane.f32.xlu0 %v1992
        %v1994 = vpop.xlane.xlu0 %1993
        %v1995 = vsel %vm643, %v1851, 0.0
        %1996 = vadd.xlane.f32.xlu0 %v1995
        %v1997 = vpop.xlane.xlu0 %1996
        %v1998 = vsel %vm643, %v1852, 0.0
        %1999 = vadd.xlane.f32.xlu0 %v1998
        %v2000 = vpop.xlane.xlu0 %1999
        %v2001 = vsel %vm650, %v1853, 0.0
        %2002 = vadd.xlane.f32.xlu0 %v2001
        %v2003 = vpop.xlane.xlu0 %2002
        %v2004 = vsel %vm643, %v1854, 0.0
        %2005 = vadd.xlane.f32.xlu0 %v2004
        %v2006 = vpop.xlane.xlu0 %2005
        %v2007 = vsel %vm643, %v1855, 0.0
        %2008 = vadd.xlane.f32.xlu0 %v2007
        %v2009 = vpop.xlane.xlu0 %2008
        %v2010 = vsel %vm650, %v1856, 0.0
        %2011 = vadd.xlane.f32.xlu0 %v2010
        %v2012 = vpop.xlane.xlu0 %2011
        %v2013 = vsel %vm643, %v1857, 0.0
        %2014 = vadd.xlane.f32.xlu0 %v2013
        %v2015 = vpop.xlane.xlu0 %2014
        %v2016 = vsel %vm643, %v1858, 0.0
        %2017 = vadd.xlane.f32.xlu0 %v2016
        %v2018 = vpop.xlane.xlu0 %2017
        %v2019 = vsel %vm650, %v1859, 0.0
        %2020 = vadd.xlane.f32.xlu0 %v2019
        %v2021 = vpop.xlane.xlu0 %2020
        %v2022 = vadd.f32 %v1751, %v1862
        %v2023 = vadd.f32 %v1752, %v1865
        %v2024 = vadd.f32 %v1753, %v1868
        %v2025 = vadd.f32 %v1754, %v1871
        %v2026 = vadd.f32 %v1755, %v1874
        %v2027 = vadd.f32 %v1756, %v1877
        %v2028 = vadd.f32 %v1757, %v1880
        %v2029 = vadd.f32 %v1758, %v1883
        %v2030 = vadd.f32 %v1759, %v1886
        %v2031 = vadd.f32 %v1760, %v1889
        %v2032 = vadd.f32 %v1761, %v1892
        %v2033 = vadd.f32 %v1762, %v1895
        %v2034 = vadd.f32 %v1763, %v1898
        %v2035 = vadd.f32 %v1764, %v1901
        %v2036 = vadd.f32 %v1765, %v1904
        %v2037 = vadd.f32 %v1766, %v1907
        %v2038 = vadd.f32 %v1767, %v1910
        %v2039 = vadd.f32 %v1768, %v1913
        %v2040 = vadd.f32 %v1769, %v1916
        %v2041 = vadd.f32 %v1770, %v1919
        %v2042 = vadd.f32 %v1771, %v1922
        %v2043 = vadd.f32 %v1772, %v1925
        %v2044 = vadd.f32 %v1773, %v1928
        %v2045 = vadd.f32 %v1774, %v1931
        %v2046 = vadd.f32 %v1775, %v1934
        %v2047 = vadd.f32 %v1776, %v1937
        %v2048 = vadd.f32 %v1777, %v1940
        %v2049 = vadd.f32 %v1778, %v1943
        %v2050 = vadd.f32 %v1779, %v1946
        %v2051 = vadd.f32 %v1780, %v1949
        %v2052 = vadd.f32 %v1781, %v1952
        %v2053 = vadd.f32 %v1782, %v1955
        %v2054 = vadd.f32 %v1783, %v1958
        %v2055 = vadd.f32 %v1784, %v1961
        %v2056 = vadd.f32 %v1785, %v1964
        %v2057 = vadd.f32 %v1786, %v1967
        %v2058 = vadd.f32 %v1787, %v1970
        %v2059 = vadd.f32 %v1788, %v1973
        %v2060 = vadd.f32 %v1789, %v1976
        %v2061 = vadd.f32 %v1790, %v1979
        %v2062 = vadd.f32 %v1791, %v1982
        %v2063 = vadd.f32 %v1792, %v1985
        %v2064 = vadd.f32 %v1793, %v1988
        %v2065 = vadd.f32 %v1794, %v1991
        %v2066 = vadd.f32 %v1795, %v1994
        %v2067 = vadd.f32 %v1796, %v1997
        %v2068 = vadd.f32 %v1797, %v2000
        %v2069 = vadd.f32 %v1798, %v2003
        %v2070 = vadd.f32 %v1799, %v2006
        %v2071 = vadd.f32 %v1800, %v2009
        %v2072 = vadd.f32 %v1801, %v2012
        %v2073 = vadd.f32 %v1802, %v2015
        %v2074 = vadd.f32 %v1803, %v2018
        %v2075 = vadd.f32 %v1804, %v2021
        %v2076 = vperm.slane %v586, 4
        %v2077 = vmul.f32 %v529, %v2076
        %v2078 = vmul.f32 %v530, %v2076
        %v2079 = vmul.f32 %v531, %v2076
        %v2080 = vmul.f32 %v532, %v2076
        %v2081 = vmul.f32 %v533, %v2076
        %v2082 = vmul.f32 %v534, %v2076
        %v2083 = vmul.f32 %v535, %v2076
        %v2084 = vmul.f32 %v536, %v2076
        %v2085 = vmul.f32 %v537, %v2076
        %v2086 = vmul.f32 %v538, %v2076
        %v2087 = vmul.f32 %v539, %v2076
        %v2088 = vmul.f32 %v540, %v2076
        %v2089 = vmul.f32 %v541, %v2076
        %v2090 = vmul.f32 %v542, %v2076
        %v2091 = vmul.f32 %v543, %v2076
        %v2092 = vmul.f32 %v544, %v2076
        %v2093 = vmul.f32 %v545, %v2076
        %v2094 = vmul.f32 %v546, %v2076
        %v2095 = vmul.f32 %v547, %v2076
        %v2096 = vmul.f32 %v548, %v2076
        %v2097 = vmul.f32 %v549, %v2076
        %v2098 = vmul.f32 %v550, %v2076
        %v2099 = vmul.f32 %v551, %v2076
        %v2100 = vmul.f32 %v552, %v2076
        %v2101 = vmul.f32 %v553, %v2076
        %v2102 = vmul.f32 %v554, %v2076
        %v2103 = vmul.f32 %v555, %v2076
        %v2104 = vmul.f32 %v556, %v2076
        %v2105 = vmul.f32 %v557, %v2076
        %v2106 = vmul.f32 %v558, %v2076
        %v2107 = vmul.f32 %v559, %v2076
        %v2108 = vmul.f32 %v560, %v2076
        %v2109 = vmul.f32 %v561, %v2076
        %v2110 = vmul.f32 %v562, %v2076
        %v2111 = vmul.f32 %v563, %v2076
        %v2112 = vmul.f32 %v564, %v2076
        %v2113 = vmul.f32 %v565, %v2076
        %v2114 = vmul.f32 %v566, %v2076
        %v2115 = vmul.f32 %v567, %v2076
        %v2116 = vmul.f32 %v568, %v2076
        %v2117 = vmul.f32 %v569, %v2076
        %v2118 = vmul.f32 %v570, %v2076
        %v2119 = vmul.f32 %v571, %v2076
        %v2120 = vmul.f32 %v572, %v2076
        %v2121 = vmul.f32 %v573, %v2076
        %v2122 = vmul.f32 %v574, %v2076
        %v2123 = vmul.f32 %v575, %v2076
        %v2124 = vmul.f32 %v576, %v2076
        %v2125 = vmul.f32 %v577, %v2076
        %v2126 = vmul.f32 %v578, %v2076
        %v2127 = vmul.f32 %v579, %v2076
        %v2128 = vmul.f32 %v580, %v2076
        %v2129 = vmul.f32 %v581, %v2076
        %v2130 = vmul.f32 %v582, %v2076
        %v2131 = vsel %vm916, %v2077, 0.0
        %2132 = vadd.xlane.f32.xlu0 %v2131
        %v2133 = vpop.xlane.xlu0 %2132
        %v2134 = vsel %vm643, %v2078, 0.0
        %2135 = vadd.xlane.f32.xlu0 %v2134
        %v2136 = vpop.xlane.xlu0 %2135
        %v2137 = vsel %vm923, %v2079, 0.0
        %2138 = vadd.xlane.f32.xlu0 %v2137
        %v2139 = vpop.xlane.xlu0 %2138
        %v2140 = vsel %vm916, %v2080, 0.0
        %2141 = vadd.xlane.f32.xlu0 %v2140
        %v2142 = vpop.xlane.xlu0 %2141
        %v2143 = vsel %vm643, %v2081, 0.0
        %2144 = vadd.xlane.f32.xlu0 %v2143
        %v2145 = vpop.xlane.xlu0 %2144
        %v2146 = vsel %vm923, %v2082, 0.0
        %2147 = vadd.xlane.f32.xlu0 %v2146
        %v2148 = vpop.xlane.xlu0 %2147
        %v2149 = vsel %vm916, %v2083, 0.0
        %2150 = vadd.xlane.f32.xlu0 %v2149
        %v2151 = vpop.xlane.xlu0 %2150
        %v2152 = vsel %vm643, %v2084, 0.0
        %2153 = vadd.xlane.f32.xlu0 %v2152
        %v2154 = vpop.xlane.xlu0 %2153
        %v2155 = vsel %vm923, %v2085, 0.0
        %2156 = vadd.xlane.f32.xlu0 %v2155
        %v2157 = vpop.xlane.xlu0 %2156
        %v2158 = vsel %vm916, %v2086, 0.0
        %2159 = vadd.xlane.f32.xlu0 %v2158
        %v2160 = vpop.xlane.xlu0 %2159
        %v2161 = vsel %vm643, %v2087, 0.0
        %2162 = vadd.xlane.f32.xlu0 %v2161
        %v2163 = vpop.xlane.xlu0 %2162
        %v2164 = vsel %vm923, %v2088, 0.0
        %2165 = vadd.xlane.f32.xlu0 %v2164
        %v2166 = vpop.xlane.xlu0 %2165
        %v2167 = vsel %vm916, %v2089, 0.0
        %2168 = vadd.xlane.f32.xlu0 %v2167
        %v2169 = vpop.xlane.xlu0 %2168
        %v2170 = vsel %vm643, %v2090, 0.0
        %2171 = vadd.xlane.f32.xlu0 %v2170
        %v2172 = vpop.xlane.xlu0 %2171
        %v2173 = vsel %vm923, %v2091, 0.0
        %2174 = vadd.xlane.f32.xlu0 %v2173
        %v2175 = vpop.xlane.xlu0 %2174
        %v2176 = vsel %vm916, %v2092, 0.0
        %2177 = vadd.xlane.f32.xlu0 %v2176
        %v2178 = vpop.xlane.xlu0 %2177
        %v2179 = vsel %vm643, %v2093, 0.0
        %2180 = vadd.xlane.f32.xlu0 %v2179
        %v2181 = vpop.xlane.xlu0 %2180
        %v2182 = vsel %vm923, %v2094, 0.0
        %2183 = vadd.xlane.f32.xlu0 %v2182
        %v2184 = vpop.xlane.xlu0 %2183
        %v2185 = vsel %vm916, %v2095, 0.0
        %2186 = vadd.xlane.f32.xlu0 %v2185
        %v2187 = vpop.xlane.xlu0 %2186
        %v2188 = vsel %vm643, %v2096, 0.0
        %2189 = vadd.xlane.f32.xlu0 %v2188
        %v2190 = vpop.xlane.xlu0 %2189
        %v2191 = vsel %vm923, %v2097, 0.0
        %2192 = vadd.xlane.f32.xlu0 %v2191
        %v2193 = vpop.xlane.xlu0 %2192
        %v2194 = vsel %vm916, %v2098, 0.0
        %2195 = vadd.xlane.f32.xlu0 %v2194
        %v2196 = vpop.xlane.xlu0 %2195
        %v2197 = vsel %vm643, %v2099, 0.0
        %2198 = vadd.xlane.f32.xlu0 %v2197
        %v2199 = vpop.xlane.xlu0 %2198
        %v2200 = vsel %vm923, %v2100, 0.0
        %2201 = vadd.xlane.f32.xlu0 %v2200
        %v2202 = vpop.xlane.xlu0 %2201
        %v2203 = vsel %vm916, %v2101, 0.0
        %2204 = vadd.xlane.f32.xlu0 %v2203
        %v2205 = vpop.xlane.xlu0 %2204
        %v2206 = vsel %vm643, %v2102, 0.0
        %2207 = vadd.xlane.f32.xlu0 %v2206
        %v2208 = vpop.xlane.xlu0 %2207
        %v2209 = vsel %vm923, %v2103, 0.0
        %2210 = vadd.xlane.f32.xlu0 %v2209
        %v2211 = vpop.xlane.xlu0 %2210
        %v2212 = vsel %vm916, %v2104, 0.0
        %2213 = vadd.xlane.f32.xlu0 %v2212
        %v2214 = vpop.xlane.xlu0 %2213
        %v2215 = vsel %vm643, %v2105, 0.0
        %2216 = vadd.xlane.f32.xlu0 %v2215
        %v2217 = vpop.xlane.xlu0 %2216
        %v2218 = vsel %vm923, %v2106, 0.0
        %2219 = vadd.xlane.f32.xlu0 %v2218
        %v2220 = vpop.xlane.xlu0 %2219
        %v2221 = vsel %vm916, %v2107, 0.0
        %2222 = vadd.xlane.f32.xlu0 %v2221
        %v2223 = vpop.xlane.xlu0 %2222
        %v2224 = vsel %vm643, %v2108, 0.0
        %2225 = vadd.xlane.f32.xlu0 %v2224
        %v2226 = vpop.xlane.xlu0 %2225
        %v2227 = vsel %vm923, %v2109, 0.0
        %2228 = vadd.xlane.f32.xlu0 %v2227
        %v2229 = vpop.xlane.xlu0 %2228
        %v2230 = vsel %vm916, %v2110, 0.0
        %2231 = vadd.xlane.f32.xlu0 %v2230
        %v2232 = vpop.xlane.xlu0 %2231
        %v2233 = vsel %vm643, %v2111, 0.0
        %2234 = vadd.xlane.f32.xlu0 %v2233
        %v2235 = vpop.xlane.xlu0 %2234
        %v2236 = vsel %vm923, %v2112, 0.0
        %2237 = vadd.xlane.f32.xlu0 %v2236
        %v2238 = vpop.xlane.xlu0 %2237
        %v2239 = vsel %vm916, %v2113, 0.0
        %2240 = vadd.xlane.f32.xlu0 %v2239
        %v2241 = vpop.xlane.xlu0 %2240
        %v2242 = vsel %vm643, %v2114, 0.0
        %2243 = vadd.xlane.f32.xlu0 %v2242
        %v2244 = vpop.xlane.xlu0 %2243
        %v2245 = vsel %vm923, %v2115, 0.0
        %2246 = vadd.xlane.f32.xlu0 %v2245
        %v2247 = vpop.xlane.xlu0 %2246
        %v2248 = vsel %vm916, %v2116, 0.0
        %2249 = vadd.xlane.f32.xlu0 %v2248
        %v2250 = vpop.xlane.xlu0 %2249
        %v2251 = vsel %vm643, %v2117, 0.0
        %2252 = vadd.xlane.f32.xlu0 %v2251
        %v2253 = vpop.xlane.xlu0 %2252
        %v2254 = vsel %vm923, %v2118, 0.0
        %2255 = vadd.xlane.f32.xlu0 %v2254
        %v2256 = vpop.xlane.xlu0 %2255
        %v2257 = vsel %vm916, %v2119, 0.0
        %2258 = vadd.xlane.f32.xlu0 %v2257
        %v2259 = vpop.xlane.xlu0 %2258
        %v2260 = vsel %vm643, %v2120, 0.0
        %2261 = vadd.xlane.f32.xlu0 %v2260
        %v2262 = vpop.xlane.xlu0 %2261
        %v2263 = vsel %vm923, %v2121, 0.0
        %2264 = vadd.xlane.f32.xlu0 %v2263
        %v2265 = vpop.xlane.xlu0 %2264
        %v2266 = vsel %vm916, %v2122, 0.0
        %2267 = vadd.xlane.f32.xlu0 %v2266
        %v2268 = vpop.xlane.xlu0 %2267
        %v2269 = vsel %vm643, %v2123, 0.0
        %2270 = vadd.xlane.f32.xlu0 %v2269
        %v2271 = vpop.xlane.xlu0 %2270
        %v2272 = vsel %vm923, %v2124, 0.0
        %2273 = vadd.xlane.f32.xlu0 %v2272
        %v2274 = vpop.xlane.xlu0 %2273
        %v2275 = vsel %vm916, %v2125, 0.0
        %2276 = vadd.xlane.f32.xlu0 %v2275
        %v2277 = vpop.xlane.xlu0 %2276
        %v2278 = vsel %vm643, %v2126, 0.0
        %2279 = vadd.xlane.f32.xlu0 %v2278
        %v2280 = vpop.xlane.xlu0 %2279
        %v2281 = vsel %vm923, %v2127, 0.0
        %2282 = vadd.xlane.f32.xlu0 %v2281
        %v2283 = vpop.xlane.xlu0 %2282
        %v2284 = vsel %vm916, %v2128, 0.0
        %2285 = vadd.xlane.f32.xlu0 %v2284
        %v2286 = vpop.xlane.xlu0 %2285
        %v2287 = vsel %vm643, %v2129, 0.0
        %2288 = vadd.xlane.f32.xlu0 %v2287
        %v2289 = vpop.xlane.xlu0 %2288
        %v2290 = vsel %vm923, %v2130, 0.0
        %2291 = vadd.xlane.f32.xlu0 %v2290
        %v2292 = vpop.xlane.xlu0 %2291
        %v2347 = vrot.slane %v2133, 1
        %v2348 = vrot.slane %v2136, 1
        %v2349 = vsel %vm1134, %v2347, %v2348
        %v2350 = vrot.slane %v2139, 1
        %v2351 = vsel %vm1134, %v2348, %v2350
        %v2352 = vrot.slane %v2142, 1
        %v2353 = vrot.slane %v2145, 1
        %v2354 = vsel %vm1134, %v2352, %v2353
        %v2355 = vrot.slane %v2148, 1
        %v2356 = vsel %vm1134, %v2353, %v2355
        %v2357 = vrot.slane %v2151, 1
        %v2358 = vrot.slane %v2154, 1
        %v2359 = vsel %vm1134, %v2357, %v2358
        %v2360 = vrot.slane %v2157, 1
        %v2361 = vsel %vm1134, %v2358, %v2360
        %v2362 = vrot.slane %v2160, 1
        %v2363 = vrot.slane %v2163, 1
        %v2364 = vsel %vm1134, %v2362, %v2363
        %v2365 = vrot.slane %v2166, 1
        %v2366 = vsel %vm1134, %v2363, %v2365
        %v2367 = vrot.slane %v2169, 1
        %v2368 = vrot.slane %v2172, 1
        %v2369 = vsel %vm1134, %v2367, %v2368
        %v2370 = vrot.slane %v2175, 1
        %v2371 = vsel %vm1134, %v2368, %v2370
        %v2372 = vrot.slane %v2178, 1
        %v2373 = vrot.slane %v2181, 1
        %v2374 = vsel %vm1134, %v2372, %v2373
        %v2375 = vrot.slane %v2184, 1
        %v2376 = vsel %vm1134, %v2373, %v2375
        %v2377 = vrot.slane %v2187, 1
        %v2378 = vrot.slane %v2190, 1
        %v2379 = vsel %vm1134, %v2377, %v2378
        %v2380 = vrot.slane %v2193, 1
        %v2381 = vsel %vm1134, %v2378, %v2380
        %v2382 = vrot.slane %v2196, 1
        %v2383 = vrot.slane %v2199, 1
        %v2384 = vsel %vm1134, %v2382, %v2383
        %v2385 = vrot.slane %v2202, 1
        %v2386 = vsel %vm1134, %v2383, %v2385
        %v2387 = vrot.slane %v2205, 1
        %v2388 = vrot.slane %v2208, 1
        %v2389 = vsel %vm1134, %v2387, %v2388
        %v2390 = vrot.slane %v2211, 1
        %v2391 = vsel %vm1134, %v2388, %v2390
        %v2392 = vrot.slane %v2214, 1
        %v2393 = vrot.slane %v2217, 1
        %v2394 = vsel %vm1134, %v2392, %v2393
        %v2395 = vrot.slane %v2220, 1
        %v2396 = vsel %vm1134, %v2393, %v2395
        %v2397 = vrot.slane %v2223, 1
        %v2398 = vrot.slane %v2226, 1
        %v2399 = vsel %vm1134, %v2397, %v2398
        %v2400 = vrot.slane %v2229, 1
        %v2401 = vsel %vm1134, %v2398, %v2400
        %v2402 = vrot.slane %v2232, 1
        %v2403 = vrot.slane %v2235, 1
        %v2404 = vsel %vm1134, %v2402, %v2403
        %v2405 = vrot.slane %v2238, 1
        %v2406 = vsel %vm1134, %v2403, %v2405
        %v2407 = vrot.slane %v2241, 1
        %v2408 = vrot.slane %v2244, 1
        %v2409 = vsel %vm1134, %v2407, %v2408
        %v2410 = vrot.slane %v2247, 1
        %v2411 = vsel %vm1134, %v2408, %v2410
        %v2412 = vrot.slane %v2250, 1
        %v2413 = vrot.slane %v2253, 1
        %v2414 = vsel %vm1134, %v2412, %v2413
        %v2415 = vrot.slane %v2256, 1
        %v2416 = vsel %vm1134, %v2413, %v2415
        %v2417 = vrot.slane %v2259, 1
        %v2418 = vrot.slane %v2262, 1
        %v2419 = vsel %vm1134, %v2417, %v2418
        %v2420 = vrot.slane %v2265, 1
        %v2421 = vsel %vm1134, %v2418, %v2420
        %v2422 = vrot.slane %v2268, 1
        %v2423 = vrot.slane %v2271, 1
        %v2424 = vsel %vm1134, %v2422, %v2423
        %v2425 = vrot.slane %v2274, 1
        %v2426 = vsel %vm1134, %v2423, %v2425
        %v2427 = vrot.slane %v2277, 1
        %v2428 = vrot.slane %v2280, 1
        %v2429 = vsel %vm1134, %v2427, %v2428
        %v2430 = vrot.slane %v2283, 1
        %v2431 = vsel %vm1134, %v2428, %v2430
        %v2432 = vrot.slane %v2286, 1
        %v2433 = vrot.slane %v2289, 1
        %v2434 = vsel %vm1134, %v2432, %v2433
        %v2435 = vrot.slane %v2292, 1
        %v2436 = vsel %vm1134, %v2433, %v2435
        %v2491 = vadd.f32 %v2022, %v2349
        %v2492 = vadd.f32 %v2023, %v2351
        %v2493 = vadd.f32 %v2024, %v2350
        %v2494 = vadd.f32 %v2025, %v2354
        %v2495 = vadd.f32 %v2026, %v2356
        %v2496 = vadd.f32 %v2027, %v2355
        %v2497 = vadd.f32 %v2028, %v2359
        %v2498 = vadd.f32 %v2029, %v2361
        %v2499 = vadd.f32 %v2030, %v2360
        %v2500 = vadd.f32 %v2031, %v2364
        %v2501 = vadd.f32 %v2032, %v2366
        %v2502 = vadd.f32 %v2033, %v2365
        %v2503 = vadd.f32 %v2034, %v2369
        %v2504 = vadd.f32 %v2035, %v2371
        %v2505 = vadd.f32 %v2036, %v2370
        %v2506 = vadd.f32 %v2037, %v2374
        %v2507 = vadd.f32 %v2038, %v2376
        %v2508 = vadd.f32 %v2039, %v2375
        %v2509 = vadd.f32 %v2040, %v2379
        %v2510 = vadd.f32 %v2041, %v2381
        %v2511 = vadd.f32 %v2042, %v2380
        %v2512 = vadd.f32 %v2043, %v2384
        %v2513 = vadd.f32 %v2044, %v2386
        %v2514 = vadd.f32 %v2045, %v2385
        %v2515 = vadd.f32 %v2046, %v2389
        %v2516 = vadd.f32 %v2047, %v2391
        %v2517 = vadd.f32 %v2048, %v2390
        %v2518 = vadd.f32 %v2049, %v2394
        %v2519 = vadd.f32 %v2050, %v2396
        %v2520 = vadd.f32 %v2051, %v2395
        %v2521 = vadd.f32 %v2052, %v2399
        %v2522 = vadd.f32 %v2053, %v2401
        %v2523 = vadd.f32 %v2054, %v2400
        %v2524 = vadd.f32 %v2055, %v2404
        %v2525 = vadd.f32 %v2056, %v2406
        %v2526 = vadd.f32 %v2057, %v2405
        %v2527 = vadd.f32 %v2058, %v2409
        %v2528 = vadd.f32 %v2059, %v2411
        %v2529 = vadd.f32 %v2060, %v2410
        %v2530 = vadd.f32 %v2061, %v2414
        %v2531 = vadd.f32 %v2062, %v2416
        %v2532 = vadd.f32 %v2063, %v2415
        %v2533 = vadd.f32 %v2064, %v2419
        %v2534 = vadd.f32 %v2065, %v2421
        %v2535 = vadd.f32 %v2066, %v2420
        %v2536 = vadd.f32 %v2067, %v2424
        %v2537 = vadd.f32 %v2068, %v2426
        %v2538 = vadd.f32 %v2069, %v2425
        %v2539 = vadd.f32 %v2070, %v2429
        %v2540 = vadd.f32 %v2071, %v2431
        %v2541 = vadd.f32 %v2072, %v2430
        %v2542 = vadd.f32 %v2073, %v2434
        %v2543 = vadd.f32 %v2074, %v2436
        %v2544 = vadd.f32 %v2075, %v2435
        %v2545 = vperm.slane %v586, 5
        %v2546 = vmul.f32 %v529, %v2545
        %v2547 = vmul.f32 %v530, %v2545
        %v2548 = vmul.f32 %v531, %v2545
        %v2549 = vmul.f32 %v532, %v2545
        %v2550 = vmul.f32 %v533, %v2545
        %v2551 = vmul.f32 %v534, %v2545
        %v2552 = vmul.f32 %v535, %v2545
        %v2553 = vmul.f32 %v536, %v2545
        %v2554 = vmul.f32 %v537, %v2545
        %v2555 = vmul.f32 %v538, %v2545
        %v2556 = vmul.f32 %v539, %v2545
        %v2557 = vmul.f32 %v540, %v2545
        %v2558 = vmul.f32 %v541, %v2545
        %v2559 = vmul.f32 %v542, %v2545
        %v2560 = vmul.f32 %v543, %v2545
        %v2561 = vmul.f32 %v544, %v2545
        %v2562 = vmul.f32 %v545, %v2545
        %v2563 = vmul.f32 %v546, %v2545
        %v2564 = vmul.f32 %v547, %v2545
        %v2565 = vmul.f32 %v548, %v2545
        %v2566 = vmul.f32 %v549, %v2545
        %v2567 = vmul.f32 %v550, %v2545
        %v2568 = vmul.f32 %v551, %v2545
        %v2569 = vmul.f32 %v552, %v2545
        %v2570 = vmul.f32 %v553, %v2545
        %v2571 = vmul.f32 %v554, %v2545
        %v2572 = vmul.f32 %v555, %v2545
        %v2573 = vmul.f32 %v556, %v2545
        %v2574 = vmul.f32 %v557, %v2545
        %v2575 = vmul.f32 %v558, %v2545
        %v2576 = vmul.f32 %v559, %v2545
        %v2577 = vmul.f32 %v560, %v2545
        %v2578 = vmul.f32 %v561, %v2545
        %v2579 = vmul.f32 %v562, %v2545
        %v2580 = vmul.f32 %v563, %v2545
        %v2581 = vmul.f32 %v564, %v2545
        %v2582 = vmul.f32 %v565, %v2545
        %v2583 = vmul.f32 %v566, %v2545
        %v2584 = vmul.f32 %v567, %v2545
        %v2585 = vmul.f32 %v568, %v2545
        %v2586 = vmul.f32 %v569, %v2545
        %v2587 = vmul.f32 %v570, %v2545
        %v2588 = vmul.f32 %v571, %v2545
        %v2589 = vmul.f32 %v572, %v2545
        %v2590 = vmul.f32 %v573, %v2545
        %v2591 = vmul.f32 %v574, %v2545
        %v2592 = vmul.f32 %v575, %v2545
        %v2593 = vmul.f32 %v576, %v2545
        %v2594 = vmul.f32 %v577, %v2545
        %v2595 = vmul.f32 %v578, %v2545
        %v2596 = vmul.f32 %v579, %v2545
        %v2597 = vmul.f32 %v580, %v2545
        %v2598 = vmul.f32 %v581, %v2545
        %v2599 = vmul.f32 %v582, %v2545
        %v2600 = vsel %vm1388, %v2546, 0.0
        %2601 = vadd.xlane.f32.xlu0 %v2600
        %v2602 = vpop.xlane.xlu0 %2601
        %v2603 = vsel %vm643, %v2547, 0.0
        %2604 = vadd.xlane.f32.xlu0 %v2603
        %v2605 = vpop.xlane.xlu0 %2604
        %v2606 = vsel %vm1395, %v2548, 0.0
        %2607 = vadd.xlane.f32.xlu0 %v2606
        %v2608 = vpop.xlane.xlu0 %2607
        %v2609 = vsel %vm1388, %v2549, 0.0
        %2610 = vadd.xlane.f32.xlu0 %v2609
        %v2611 = vpop.xlane.xlu0 %2610
        %v2612 = vsel %vm643, %v2550, 0.0
        %2613 = vadd.xlane.f32.xlu0 %v2612
        %v2614 = vpop.xlane.xlu0 %2613
        %v2615 = vsel %vm1395, %v2551, 0.0
        %2616 = vadd.xlane.f32.xlu0 %v2615
        %v2617 = vpop.xlane.xlu0 %2616
        %v2618 = vsel %vm1388, %v2552, 0.0
        %2619 = vadd.xlane.f32.xlu0 %v2618
        %v2620 = vpop.xlane.xlu0 %2619
        %v2621 = vsel %vm643, %v2553, 0.0
        %2622 = vadd.xlane.f32.xlu0 %v2621
        %v2623 = vpop.xlane.xlu0 %2622
        %v2624 = vsel %vm1395, %v2554, 0.0
        %2625 = vadd.xlane.f32.xlu0 %v2624
        %v2626 = vpop.xlane.xlu0 %2625
        %v2627 = vsel %vm1388, %v2555, 0.0
        %2628 = vadd.xlane.f32.xlu0 %v2627
        %v2629 = vpop.xlane.xlu0 %2628
        %v2630 = vsel %vm643, %v2556, 0.0
        %2631 = vadd.xlane.f32.xlu0 %v2630
        %v2632 = vpop.xlane.xlu0 %2631
        %v2633 = vsel %vm1395, %v2557, 0.0
        %2634 = vadd.xlane.f32.xlu0 %v2633
        %v2635 = vpop.xlane.xlu0 %2634
        %v2636 = vsel %vm1388, %v2558, 0.0
        %2637 = vadd.xlane.f32.xlu0 %v2636
        %v2638 = vpop.xlane.xlu0 %2637
        %v2639 = vsel %vm643, %v2559, 0.0
        %2640 = vadd.xlane.f32.xlu0 %v2639
        %v2641 = vpop.xlane.xlu0 %2640
        %v2642 = vsel %vm1395, %v2560, 0.0
        %2643 = vadd.xlane.f32.xlu0 %v2642
        %v2644 = vpop.xlane.xlu0 %2643
        %v2645 = vsel %vm1388, %v2561, 0.0
        %2646 = vadd.xlane.f32.xlu0 %v2645
        %v2647 = vpop.xlane.xlu0 %2646
        %v2648 = vsel %vm643, %v2562, 0.0
        %2649 = vadd.xlane.f32.xlu0 %v2648
        %v2650 = vpop.xlane.xlu0 %2649
        %v2651 = vsel %vm1395, %v2563, 0.0
        %2652 = vadd.xlane.f32.xlu0 %v2651
        %v2653 = vpop.xlane.xlu0 %2652
        %v2654 = vsel %vm1388, %v2564, 0.0
        %2655 = vadd.xlane.f32.xlu0 %v2654
        %v2656 = vpop.xlane.xlu0 %2655
        %v2657 = vsel %vm643, %v2565, 0.0
        %2658 = vadd.xlane.f32.xlu0 %v2657
        %v2659 = vpop.xlane.xlu0 %2658
        %v2660 = vsel %vm1395, %v2566, 0.0
        %2661 = vadd.xlane.f32.xlu0 %v2660
        %v2662 = vpop.xlane.xlu0 %2661
        %v2663 = vsel %vm1388, %v2567, 0.0
        %2664 = vadd.xlane.f32.xlu0 %v2663
        %v2665 = vpop.xlane.xlu0 %2664
        %v2666 = vsel %vm643, %v2568, 0.0
        %2667 = vadd.xlane.f32.xlu0 %v2666
        %v2668 = vpop.xlane.xlu0 %2667
        %v2669 = vsel %vm1395, %v2569, 0.0
        %2670 = vadd.xlane.f32.xlu0 %v2669
        %v2671 = vpop.xlane.xlu0 %2670
        %v2672 = vsel %vm1388, %v2570, 0.0
        %2673 = vadd.xlane.f32.xlu0 %v2672
        %v2674 = vpop.xlane.xlu0 %2673
        %v2675 = vsel %vm643, %v2571, 0.0
        %2676 = vadd.xlane.f32.xlu0 %v2675
        %v2677 = vpop.xlane.xlu0 %2676
        %v2678 = vsel %vm1395, %v2572, 0.0
        %2679 = vadd.xlane.f32.xlu0 %v2678
        %v2680 = vpop.xlane.xlu0 %2679
        %v2681 = vsel %vm1388, %v2573, 0.0
        %2682 = vadd.xlane.f32.xlu0 %v2681
        %v2683 = vpop.xlane.xlu0 %2682
        %v2684 = vsel %vm643, %v2574, 0.0
        %2685 = vadd.xlane.f32.xlu0 %v2684
        %v2686 = vpop.xlane.xlu0 %2685
        %v2687 = vsel %vm1395, %v2575, 0.0
        %2688 = vadd.xlane.f32.xlu0 %v2687
        %v2689 = vpop.xlane.xlu0 %2688
        %v2690 = vsel %vm1388, %v2576, 0.0
        %2691 = vadd.xlane.f32.xlu0 %v2690
        %v2692 = vpop.xlane.xlu0 %2691
        %v2693 = vsel %vm643, %v2577, 0.0
        %2694 = vadd.xlane.f32.xlu0 %v2693
        %v2695 = vpop.xlane.xlu0 %2694
        %v2696 = vsel %vm1395, %v2578, 0.0
        %2697 = vadd.xlane.f32.xlu0 %v2696
        %v2698 = vpop.xlane.xlu0 %2697
        %v2699 = vsel %vm1388, %v2579, 0.0
        %2700 = vadd.xlane.f32.xlu0 %v2699
        %v2701 = vpop.xlane.xlu0 %2700
        %v2702 = vsel %vm643, %v2580, 0.0
        %2703 = vadd.xlane.f32.xlu0 %v2702
        %v2704 = vpop.xlane.xlu0 %2703
        %v2705 = vsel %vm1395, %v2581, 0.0
        %2706 = vadd.xlane.f32.xlu0 %v2705
        %v2707 = vpop.xlane.xlu0 %2706
        %v2708 = vsel %vm1388, %v2582, 0.0
        %2709 = vadd.xlane.f32.xlu0 %v2708
        %v2710 = vpop.xlane.xlu0 %2709
        %v2711 = vsel %vm643, %v2583, 0.0
        %2712 = vadd.xlane.f32.xlu0 %v2711
        %v2713 = vpop.xlane.xlu0 %2712
        %v2714 = vsel %vm1395, %v2584, 0.0
        %2715 = vadd.xlane.f32.xlu0 %v2714
        %v2716 = vpop.xlane.xlu0 %2715
        %v2717 = vsel %vm1388, %v2585, 0.0
        %2718 = vadd.xlane.f32.xlu0 %v2717
        %v2719 = vpop.xlane.xlu0 %2718
        %v2720 = vsel %vm643, %v2586, 0.0
        %2721 = vadd.xlane.f32.xlu0 %v2720
        %v2722 = vpop.xlane.xlu0 %2721
        %v2723 = vsel %vm1395, %v2587, 0.0
        %2724 = vadd.xlane.f32.xlu0 %v2723
        %v2725 = vpop.xlane.xlu0 %2724
        %v2726 = vsel %vm1388, %v2588, 0.0
        %2727 = vadd.xlane.f32.xlu0 %v2726
        %v2728 = vpop.xlane.xlu0 %2727
        %v2729 = vsel %vm643, %v2589, 0.0
        %2730 = vadd.xlane.f32.xlu0 %v2729
        %v2731 = vpop.xlane.xlu0 %2730
        %v2732 = vsel %vm1395, %v2590, 0.0
        %2733 = vadd.xlane.f32.xlu0 %v2732
        %v2734 = vpop.xlane.xlu0 %2733
        %v2735 = vsel %vm1388, %v2591, 0.0
        %2736 = vadd.xlane.f32.xlu0 %v2735
        %v2737 = vpop.xlane.xlu0 %2736
        %v2738 = vsel %vm643, %v2592, 0.0
        %2739 = vadd.xlane.f32.xlu0 %v2738
        %v2740 = vpop.xlane.xlu0 %2739
        %v2741 = vsel %vm1395, %v2593, 0.0
        %2742 = vadd.xlane.f32.xlu0 %v2741
        %v2743 = vpop.xlane.xlu0 %2742
        %v2744 = vsel %vm1388, %v2594, 0.0
        %2745 = vadd.xlane.f32.xlu0 %v2744
        %v2746 = vpop.xlane.xlu0 %2745
        %v2747 = vsel %vm643, %v2595, 0.0
        %2748 = vadd.xlane.f32.xlu0 %v2747
        %v2749 = vpop.xlane.xlu0 %2748
        %v2750 = vsel %vm1395, %v2596, 0.0
        %2751 = vadd.xlane.f32.xlu0 %v2750
        %v2752 = vpop.xlane.xlu0 %2751
        %v2753 = vsel %vm1388, %v2597, 0.0
        %2754 = vadd.xlane.f32.xlu0 %v2753
        %v2755 = vpop.xlane.xlu0 %2754
        %v2756 = vsel %vm643, %v2598, 0.0
        %2757 = vadd.xlane.f32.xlu0 %v2756
        %v2758 = vpop.xlane.xlu0 %2757
        %v2759 = vsel %vm1395, %v2599, 0.0
        %2760 = vadd.xlane.f32.xlu0 %v2759
        %v2761 = vpop.xlane.xlu0 %2760
        %v2816 = vrot.slane %v2602, 2
        %v2817 = vrot.slane %v2605, 2
        %v2818 = vsel %vm1606, %v2816, %v2817
        %v2819 = vrot.slane %v2608, 2
        %v2820 = vsel %vm1606, %v2817, %v2819
        %v2821 = vrot.slane %v2611, 2
        %v2822 = vrot.slane %v2614, 2
        %v2823 = vsel %vm1606, %v2821, %v2822
        %v2824 = vrot.slane %v2617, 2
        %v2825 = vsel %vm1606, %v2822, %v2824
        %v2826 = vrot.slane %v2620, 2
        %v2827 = vrot.slane %v2623, 2
        %v2828 = vsel %vm1606, %v2826, %v2827
        %v2829 = vrot.slane %v2626, 2
        %v2830 = vsel %vm1606, %v2827, %v2829
        %v2831 = vrot.slane %v2629, 2
        %v2832 = vrot.slane %v2632, 2
        %v2833 = vsel %vm1606, %v2831, %v2832
        %v2834 = vrot.slane %v2635, 2
        %v2835 = vsel %vm1606, %v2832, %v2834
        %v2836 = vrot.slane %v2638, 2
        %v2837 = vrot.slane %v2641, 2
        %v2838 = vsel %vm1606, %v2836, %v2837
        %v2839 = vrot.slane %v2644, 2
        %v2840 = vsel %vm1606, %v2837, %v2839
        %v2841 = vrot.slane %v2647, 2
        %v2842 = vrot.slane %v2650, 2
        %v2843 = vsel %vm1606, %v2841, %v2842
        %v2844 = vrot.slane %v2653, 2
        %v2845 = vsel %vm1606, %v2842, %v2844
        %v2846 = vrot.slane %v2656, 2
        %v2847 = vrot.slane %v2659, 2
        %v2848 = vsel %vm1606, %v2846, %v2847
        %v2849 = vrot.slane %v2662, 2
        %v2850 = vsel %vm1606, %v2847, %v2849
        %v2851 = vrot.slane %v2665, 2
        %v2852 = vrot.slane %v2668, 2
        %v2853 = vsel %vm1606, %v2851, %v2852
        %v2854 = vrot.slane %v2671, 2
        %v2855 = vsel %vm1606, %v2852, %v2854
        %v2856 = vrot.slane %v2674, 2
        %v2857 = vrot.slane %v2677, 2
        %v2858 = vsel %vm1606, %v2856, %v2857
        %v2859 = vrot.slane %v2680, 2
        %v2860 = vsel %vm1606, %v2857, %v2859
        %v2861 = vrot.slane %v2683, 2
        %v2862 = vrot.slane %v2686, 2
        %v2863 = vsel %vm1606, %v2861, %v2862
        %v2864 = vrot.slane %v2689, 2
        %v2865 = vsel %vm1606, %v2862, %v2864
        %v2866 = vrot.slane %v2692, 2
        %v2867 = vrot.slane %v2695, 2
        %v2868 = vsel %vm1606, %v2866, %v2867
        %v2869 = vrot.slane %v2698, 2
        %v2870 = vsel %vm1606, %v2867, %v2869
        %v2871 = vrot.slane %v2701, 2
        %v2872 = vrot.slane %v2704, 2
        %v2873 = vsel %vm1606, %v2871, %v2872
        %v2874 = vrot.slane %v2707, 2
        %v2875 = vsel %vm1606, %v2872, %v2874
        %v2876 = vrot.slane %v2710, 2
        %v2877 = vrot.slane %v2713, 2
        %v2878 = vsel %vm1606, %v2876, %v2877
        %v2879 = vrot.slane %v2716, 2
        %v2880 = vsel %vm1606, %v2877, %v2879
        %v2881 = vrot.slane %v2719, 2
        %v2882 = vrot.slane %v2722, 2
        %v2883 = vsel %vm1606, %v2881, %v2882
        %v2884 = vrot.slane %v2725, 2
        %v2885 = vsel %vm1606, %v2882, %v2884
        %v2886 = vrot.slane %v2728, 2
        %v2887 = vrot.slane %v2731, 2
        %v2888 = vsel %vm1606, %v2886, %v2887
        %v2889 = vrot.slane %v2734, 2
        %v2890 = vsel %vm1606, %v2887, %v2889
        %v2891 = vrot.slane %v2737, 2
        %v2892 = vrot.slane %v2740, 2
        %v2893 = vsel %vm1606, %v2891, %v2892
        %v2894 = vrot.slane %v2743, 2
        %v2895 = vsel %vm1606, %v2892, %v2894
        %v2896 = vrot.slane %v2746, 2
        %v2897 = vrot.slane %v2749, 2
        %v2898 = vsel %vm1606, %v2896, %v2897
        %v2899 = vrot.slane %v2752, 2
        %v2900 = vsel %vm1606, %v2897, %v2899
        %v2901 = vrot.slane %v2755, 2
        %v2902 = vrot.slane %v2758, 2
        %v2903 = vsel %vm1606, %v2901, %v2902
        %v2904 = vrot.slane %v2761, 2
        %v2905 = vsel %vm1606, %v2902, %v2904
        %v2960 = vadd.f32 %v2491, %v2818
        %v2961 = vadd.f32 %v2492, %v2820
        %v2962 = vadd.f32 %v2493, %v2819
        %v2963 = vadd.f32 %v2494, %v2823
        %v2964 = vadd.f32 %v2495, %v2825
        %v2965 = vadd.f32 %v2496, %v2824
        %v2966 = vadd.f32 %v2497, %v2828
        %v2967 = vadd.f32 %v2498, %v2830
        %v2968 = vadd.f32 %v2499, %v2829
        %v2969 = vadd.f32 %v2500, %v2833
        %v2970 = vadd.f32 %v2501, %v2835
        %v2971 = vadd.f32 %v2502, %v2834
        %v2972 = vadd.f32 %v2503, %v2838
        %v2973 = vadd.f32 %v2504, %v2840
        %v2974 = vadd.f32 %v2505, %v2839
        %v2975 = vadd.f32 %v2506, %v2843
        %v2976 = vadd.f32 %v2507, %v2845
        %v2977 = vadd.f32 %v2508, %v2844
        %v2978 = vadd.f32 %v2509, %v2848
        %v2979 = vadd.f32 %v2510, %v2850
        %v2980 = vadd.f32 %v2511, %v2849
        %v2981 = vadd.f32 %v2512, %v2853
        %v2982 = vadd.f32 %v2513, %v2855
        %v2983 = vadd.f32 %v2514, %v2854
        %v2984 = vadd.f32 %v2515, %v2858
        %v2985 = vadd.f32 %v2516, %v2860
        %v2986 = vadd.f32 %v2517, %v2859
        %v2987 = vadd.f32 %v2518, %v2863
        %v2988 = vadd.f32 %v2519, %v2865
        %v2989 = vadd.f32 %v2520, %v2864
        %v2990 = vadd.f32 %v2521, %v2868
        %v2991 = vadd.f32 %v2522, %v2870
        %v2992 = vadd.f32 %v2523, %v2869
        %v2993 = vadd.f32 %v2524, %v2873
        %v2994 = vadd.f32 %v2525, %v2875
        %v2995 = vadd.f32 %v2526, %v2874
        %v2996 = vadd.f32 %v2527, %v2878
        %v2997 = vadd.f32 %v2528, %v2880
        %v2998 = vadd.f32 %v2529, %v2879
        %v2999 = vadd.f32 %v2530, %v2883
        %v3000 = vadd.f32 %v2531, %v2885
        %v3001 = vadd.f32 %v2532, %v2884
        %v3002 = vadd.f32 %v2533, %v2888
        %v3003 = vadd.f32 %v2534, %v2890
        %v3004 = vadd.f32 %v2535, %v2889
        %v3005 = vadd.f32 %v2536, %v2893
        %v3006 = vadd.f32 %v2537, %v2895
        %v3007 = vadd.f32 %v2538, %v2894
        %v3008 = vadd.f32 %v2539, %v2898
        %v3009 = vadd.f32 %v2540, %v2900
        %v3010 = vadd.f32 %v2541, %v2899
        %v3011 = vadd.f32 %v2542, %v2903
        %v3012 = vadd.f32 %v2543, %v2905
        %v3013 = vadd.f32 %v2544, %v2904
        %v3014 = vperm.slane %v586, 6
        %v3015 = vmul.f32 %v532, %v3014
        %v3016 = vmul.f32 %v533, %v3014
        %v3017 = vmul.f32 %v534, %v3014
        %v3018 = vmul.f32 %v535, %v3014
        %v3019 = vmul.f32 %v536, %v3014
        %v3020 = vmul.f32 %v537, %v3014
        %v3021 = vmul.f32 %v538, %v3014
        %v3022 = vmul.f32 %v539, %v3014
        %v3023 = vmul.f32 %v540, %v3014
        %v3024 = vmul.f32 %v541, %v3014
        %v3025 = vmul.f32 %v542, %v3014
        %v3026 = vmul.f32 %v543, %v3014
        %v3027 = vmul.f32 %v544, %v3014
        %v3028 = vmul.f32 %v545, %v3014
        %v3029 = vmul.f32 %v546, %v3014
        %v3030 = vmul.f32 %v547, %v3014
        %v3031 = vmul.f32 %v548, %v3014
        %v3032 = vmul.f32 %v549, %v3014
        %v3033 = vmul.f32 %v550, %v3014
        %v3034 = vmul.f32 %v551, %v3014
        %v3035 = vmul.f32 %v552, %v3014
        %v3036 = vmul.f32 %v553, %v3014
        %v3037 = vmul.f32 %v554, %v3014
        %v3038 = vmul.f32 %v555, %v3014
        %v3039 = vmul.f32 %v556, %v3014
        %v3040 = vmul.f32 %v557, %v3014
        %v3041 = vmul.f32 %v558, %v3014
        %v3042 = vmul.f32 %v559, %v3014
        %v3043 = vmul.f32 %v560, %v3014
        %v3044 = vmul.f32 %v561, %v3014
        %v3045 = vmul.f32 %v562, %v3014
        %v3046 = vmul.f32 %v563, %v3014
        %v3047 = vmul.f32 %v564, %v3014
        %v3048 = vmul.f32 %v565, %v3014
        %v3049 = vmul.f32 %v566, %v3014
        %v3050 = vmul.f32 %v567, %v3014
        %v3051 = vmul.f32 %v568, %v3014
        %v3052 = vmul.f32 %v569, %v3014
        %v3053 = vmul.f32 %v570, %v3014
        %v3054 = vmul.f32 %v571, %v3014
        %v3055 = vmul.f32 %v572, %v3014
        %v3056 = vmul.f32 %v573, %v3014
        %v3057 = vmul.f32 %v574, %v3014
        %v3058 = vmul.f32 %v575, %v3014
        %v3059 = vmul.f32 %v576, %v3014
        %v3060 = vmul.f32 %v577, %v3014
        %v3061 = vmul.f32 %v578, %v3014
        %v3062 = vmul.f32 %v579, %v3014
        %v3063 = vmul.f32 %v580, %v3014
        %v3064 = vmul.f32 %v581, %v3014
        %v3065 = vmul.f32 %v582, %v3014
        %v3066 = vmul.f32 %v583, %v3014
        %v3067 = vmul.f32 %v584, %v3014
        %v3068 = vmul.f32 %v585, %v3014
        %v3069 = vsel %vm643, %v3015, 0.0
        %3070 = vadd.xlane.f32.xlu0 %v3069
        %v3071 = vpop.xlane.xlu0 %3070
        %v3072 = vsel %vm643, %v3016, 0.0
        %3073 = vadd.xlane.f32.xlu0 %v3072
        %v3074 = vpop.xlane.xlu0 %3073
        %v3075 = vsel %vm650, %v3017, 0.0
        %3076 = vadd.xlane.f32.xlu0 %v3075
        %v3077 = vpop.xlane.xlu0 %3076
        %v3078 = vsel %vm643, %v3018, 0.0
        %3079 = vadd.xlane.f32.xlu0 %v3078
        %v3080 = vpop.xlane.xlu0 %3079
        %v3081 = vsel %vm643, %v3019, 0.0
        %3082 = vadd.xlane.f32.xlu0 %v3081
        %v3083 = vpop.xlane.xlu0 %3082
        %v3084 = vsel %vm650, %v3020, 0.0
        %3085 = vadd.xlane.f32.xlu0 %v3084
        %v3086 = vpop.xlane.xlu0 %3085
        %v3087 = vsel %vm643, %v3021, 0.0
        %3088 = vadd.xlane.f32.xlu0 %v3087
        %v3089 = vpop.xlane.xlu0 %3088
        %v3090 = vsel %vm643, %v3022, 0.0
        %3091 = vadd.xlane.f32.xlu0 %v3090
        %v3092 = vpop.xlane.xlu0 %3091
        %v3093 = vsel %vm650, %v3023, 0.0
        %3094 = vadd.xlane.f32.xlu0 %v3093
        %v3095 = vpop.xlane.xlu0 %3094
        %v3096 = vsel %vm643, %v3024, 0.0
        %3097 = vadd.xlane.f32.xlu0 %v3096
        %v3098 = vpop.xlane.xlu0 %3097
        %v3099 = vsel %vm643, %v3025, 0.0
        %3100 = vadd.xlane.f32.xlu0 %v3099
        %v3101 = vpop.xlane.xlu0 %3100
        %v3102 = vsel %vm650, %v3026, 0.0
        %3103 = vadd.xlane.f32.xlu0 %v3102
        %v3104 = vpop.xlane.xlu0 %3103
        %v3105 = vsel %vm643, %v3027, 0.0
        %3106 = vadd.xlane.f32.xlu0 %v3105
        %v3107 = vpop.xlane.xlu0 %3106
        %v3108 = vsel %vm643, %v3028, 0.0
        %3109 = vadd.xlane.f32.xlu0 %v3108
        %v3110 = vpop.xlane.xlu0 %3109
        %v3111 = vsel %vm650, %v3029, 0.0
        %3112 = vadd.xlane.f32.xlu0 %v3111
        %v3113 = vpop.xlane.xlu0 %3112
        %v3114 = vsel %vm643, %v3030, 0.0
        %3115 = vadd.xlane.f32.xlu0 %v3114
        %v3116 = vpop.xlane.xlu0 %3115
        %v3117 = vsel %vm643, %v3031, 0.0
        %3118 = vadd.xlane.f32.xlu0 %v3117
        %v3119 = vpop.xlane.xlu0 %3118
        %v3120 = vsel %vm650, %v3032, 0.0
        %3121 = vadd.xlane.f32.xlu0 %v3120
        %v3122 = vpop.xlane.xlu0 %3121
        %v3123 = vsel %vm643, %v3033, 0.0
        %3124 = vadd.xlane.f32.xlu0 %v3123
        %v3125 = vpop.xlane.xlu0 %3124
        %v3126 = vsel %vm643, %v3034, 0.0
        %3127 = vadd.xlane.f32.xlu0 %v3126
        %v3128 = vpop.xlane.xlu0 %3127
        %v3129 = vsel %vm650, %v3035, 0.0
        %3130 = vadd.xlane.f32.xlu0 %v3129
        %v3131 = vpop.xlane.xlu0 %3130
        %v3132 = vsel %vm643, %v3036, 0.0
        %3133 = vadd.xlane.f32.xlu0 %v3132
        %v3134 = vpop.xlane.xlu0 %3133
        %v3135 = vsel %vm643, %v3037, 0.0
        %3136 = vadd.xlane.f32.xlu0 %v3135
        %v3137 = vpop.xlane.xlu0 %3136
        %v3138 = vsel %vm650, %v3038, 0.0
        %3139 = vadd.xlane.f32.xlu0 %v3138
        %v3140 = vpop.xlane.xlu0 %3139
        %v3141 = vsel %vm643, %v3039, 0.0
        %3142 = vadd.xlane.f32.xlu0 %v3141
        %v3143 = vpop.xlane.xlu0 %3142
        %v3144 = vsel %vm643, %v3040, 0.0
        %3145 = vadd.xlane.f32.xlu0 %v3144
        %v3146 = vpop.xlane.xlu0 %3145
        %v3147 = vsel %vm650, %v3041, 0.0
        %3148 = vadd.xlane.f32.xlu0 %v3147
        %v3149 = vpop.xlane.xlu0 %3148
        %v3150 = vsel %vm643, %v3042, 0.0
        %3151 = vadd.xlane.f32.xlu0 %v3150
        %v3152 = vpop.xlane.xlu0 %3151
        %v3153 = vsel %vm643, %v3043, 0.0
        %3154 = vadd.xlane.f32.xlu0 %v3153
        %v3155 = vpop.xlane.xlu0 %3154
        %v3156 = vsel %vm650, %v3044, 0.0
        %3157 = vadd.xlane.f32.xlu0 %v3156
        %v3158 = vpop.xlane.xlu0 %3157
        %v3159 = vsel %vm643, %v3045, 0.0
        %3160 = vadd.xlane.f32.xlu0 %v3159
        %v3161 = vpop.xlane.xlu0 %3160
        %v3162 = vsel %vm643, %v3046, 0.0
        %3163 = vadd.xlane.f32.xlu0 %v3162
        %v3164 = vpop.xlane.xlu0 %3163
        %v3165 = vsel %vm650, %v3047, 0.0
        %3166 = vadd.xlane.f32.xlu0 %v3165
        %v3167 = vpop.xlane.xlu0 %3166
        %v3168 = vsel %vm643, %v3048, 0.0
        %3169 = vadd.xlane.f32.xlu0 %v3168
        %v3170 = vpop.xlane.xlu0 %3169
        %v3171 = vsel %vm643, %v3049, 0.0
        %3172 = vadd.xlane.f32.xlu0 %v3171
        %v3173 = vpop.xlane.xlu0 %3172
        %v3174 = vsel %vm650, %v3050, 0.0
        %3175 = vadd.xlane.f32.xlu0 %v3174
        %v3176 = vpop.xlane.xlu0 %3175
        %v3177 = vsel %vm643, %v3051, 0.0
        %3178 = vadd.xlane.f32.xlu0 %v3177
        %v3179 = vpop.xlane.xlu0 %3178
        %v3180 = vsel %vm643, %v3052, 0.0
        %3181 = vadd.xlane.f32.xlu0 %v3180
        %v3182 = vpop.xlane.xlu0 %3181
        %v3183 = vsel %vm650, %v3053, 0.0
        %3184 = vadd.xlane.f32.xlu0 %v3183
        %v3185 = vpop.xlane.xlu0 %3184
        %v3186 = vsel %vm643, %v3054, 0.0
        %3187 = vadd.xlane.f32.xlu0 %v3186
        %v3188 = vpop.xlane.xlu0 %3187
        %v3189 = vsel %vm643, %v3055, 0.0
        %3190 = vadd.xlane.f32.xlu0 %v3189
        %v3191 = vpop.xlane.xlu0 %3190
        %v3192 = vsel %vm650, %v3056, 0.0
        %3193 = vadd.xlane.f32.xlu0 %v3192
        %v3194 = vpop.xlane.xlu0 %3193
        %v3195 = vsel %vm643, %v3057, 0.0
        %3196 = vadd.xlane.f32.xlu0 %v3195
        %v3197 = vpop.xlane.xlu0 %3196
        %v3198 = vsel %vm643, %v3058, 0.0
        %3199 = vadd.xlane.f32.xlu0 %v3198
        %v3200 = vpop.xlane.xlu0 %3199
        %v3201 = vsel %vm650, %v3059, 0.0
        %3202 = vadd.xlane.f32.xlu0 %v3201
        %v3203 = vpop.xlane.xlu0 %3202
        %v3204 = vsel %vm643, %v3060, 0.0
        %3205 = vadd.xlane.f32.xlu0 %v3204
        %v3206 = vpop.xlane.xlu0 %3205
        %v3207 = vsel %vm643, %v3061, 0.0
        %3208 = vadd.xlane.f32.xlu0 %v3207
        %v3209 = vpop.xlane.xlu0 %3208
        %v3210 = vsel %vm650, %v3062, 0.0
        %3211 = vadd.xlane.f32.xlu0 %v3210
        %v3212 = vpop.xlane.xlu0 %3211
        %v3213 = vsel %vm643, %v3063, 0.0
        %3214 = vadd.xlane.f32.xlu0 %v3213
        %v3215 = vpop.xlane.xlu0 %3214
        %v3216 = vsel %vm643, %v3064, 0.0
        %3217 = vadd.xlane.f32.xlu0 %v3216
        %v3218 = vpop.xlane.xlu0 %3217
        %v3219 = vsel %vm650, %v3065, 0.0
        %3220 = vadd.xlane.f32.xlu0 %v3219
        %v3221 = vpop.xlane.xlu0 %3220
        %v3222 = vsel %vm643, %v3066, 0.0
        %3223 = vadd.xlane.f32.xlu0 %v3222
        %v3224 = vpop.xlane.xlu0 %3223
        %v3225 = vsel %vm643, %v3067, 0.0
        %3226 = vadd.xlane.f32.xlu0 %v3225
        %v3227 = vpop.xlane.xlu0 %3226
        %v3228 = vsel %vm650, %v3068, 0.0
        %3229 = vadd.xlane.f32.xlu0 %v3228
        %v3230 = vpop.xlane.xlu0 %3229
        %v3231 = vadd.f32 %v2960, %v3071
        %v3232 = vadd.f32 %v2961, %v3074
        %v3233 = vadd.f32 %v2962, %v3077
        %v3234 = vadd.f32 %v2963, %v3080
        %v3235 = vadd.f32 %v2964, %v3083
        %v3236 = vadd.f32 %v2965, %v3086
        %v3237 = vadd.f32 %v2966, %v3089
        %v3238 = vadd.f32 %v2967, %v3092
        %v3239 = vadd.f32 %v2968, %v3095
        %v3240 = vadd.f32 %v2969, %v3098
        %v3241 = vadd.f32 %v2970, %v3101
        %v3242 = vadd.f32 %v2971, %v3104
        %v3243 = vadd.f32 %v2972, %v3107
        %v3244 = vadd.f32 %v2973, %v3110
        %v3245 = vadd.f32 %v2974, %v3113
        %v3246 = vadd.f32 %v2975, %v3116
        %v3247 = vadd.f32 %v2976, %v3119
        %v3248 = vadd.f32 %v2977, %v3122
        %v3249 = vadd.f32 %v2978, %v3125
        %v3250 = vadd.f32 %v2979, %v3128
        %v3251 = vadd.f32 %v2980, %v3131
        %v3252 = vadd.f32 %v2981, %v3134
        %v3253 = vadd.f32 %v2982, %v3137
        %v3254 = vadd.f32 %v2983, %v3140
        %v3255 = vadd.f32 %v2984, %v3143
        %v3256 = vadd.f32 %v2985, %v3146
        %v3257 = vadd.f32 %v2986, %v3149
        %v3258 = vadd.f32 %v2987, %v3152
        %v3259 = vadd.f32 %v2988, %v3155
        %v3260 = vadd.f32 %v2989, %v3158
        %v3261 = vadd.f32 %v2990, %v3161
        %v3262 = vadd.f32 %v2991, %v3164
        %v3263 = vadd.f32 %v2992, %v3167
        %v3264 = vadd.f32 %v2993, %v3170
        %v3265 = vadd.f32 %v2994, %v3173
        %v3266 = vadd.f32 %v2995, %v3176
        %v3267 = vadd.f32 %v2996, %v3179
        %v3268 = vadd.f32 %v2997, %v3182
        %v3269 = vadd.f32 %v2998, %v3185
        %v3270 = vadd.f32 %v2999, %v3188
        %v3271 = vadd.f32 %v3000, %v3191
        %v3272 = vadd.f32 %v3001, %v3194
        %v3273 = vadd.f32 %v3002, %v3197
        %v3274 = vadd.f32 %v3003, %v3200
        %v3275 = vadd.f32 %v3004, %v3203
        %v3276 = vadd.f32 %v3005, %v3206
        %v3277 = vadd.f32 %v3006, %v3209
        %v3278 = vadd.f32 %v3007, %v3212
        %v3279 = vadd.f32 %v3008, %v3215
        %v3280 = vadd.f32 %v3009, %v3218
        %v3281 = vadd.f32 %v3010, %v3221
        %v3282 = vadd.f32 %v3011, %v3224
        %v3283 = vadd.f32 %v3012, %v3227
        %v3284 = vadd.f32 %v3013, %v3230
        %v3285 = vperm.slane %v586, 7
        %v3286 = vmul.f32 %v532, %v3285
        %v3287 = vmul.f32 %v533, %v3285
        %v3288 = vmul.f32 %v534, %v3285
        %v3289 = vmul.f32 %v535, %v3285
        %v3290 = vmul.f32 %v536, %v3285
        %v3291 = vmul.f32 %v537, %v3285
        %v3292 = vmul.f32 %v538, %v3285
        %v3293 = vmul.f32 %v539, %v3285
        %v3294 = vmul.f32 %v540, %v3285
        %v3295 = vmul.f32 %v541, %v3285
        %v3296 = vmul.f32 %v542, %v3285
        %v3297 = vmul.f32 %v543, %v3285
        %v3298 = vmul.f32 %v544, %v3285
        %v3299 = vmul.f32 %v545, %v3285
        %v3300 = vmul.f32 %v546, %v3285
        %v3301 = vmul.f32 %v547, %v3285
        %v3302 = vmul.f32 %v548, %v3285
        %v3303 = vmul.f32 %v549, %v3285
        %v3304 = vmul.f32 %v550, %v3285
        %v3305 = vmul.f32 %v551, %v3285
        %v3306 = vmul.f32 %v552, %v3285
        %v3307 = vmul.f32 %v553, %v3285
        %v3308 = vmul.f32 %v554, %v3285
        %v3309 = vmul.f32 %v555, %v3285
        %v3310 = vmul.f32 %v556, %v3285
        %v3311 = vmul.f32 %v557, %v3285
        %v3312 = vmul.f32 %v558, %v3285
        %v3313 = vmul.f32 %v559, %v3285
        %v3314 = vmul.f32 %v560, %v3285
        %v3315 = vmul.f32 %v561, %v3285
        %v3316 = vmul.f32 %v562, %v3285
        %v3317 = vmul.f32 %v563, %v3285
        %v3318 = vmul.f32 %v564, %v3285
        %v3319 = vmul.f32 %v565, %v3285
        %v3320 = vmul.f32 %v566, %v3285
        %v3321 = vmul.f32 %v567, %v3285
        %v3322 = vmul.f32 %v568, %v3285
        %v3323 = vmul.f32 %v569, %v3285
        %v3324 = vmul.f32 %v570, %v3285
        %v3325 = vmul.f32 %v571, %v3285
        %v3326 = vmul.f32 %v572, %v3285
        %v3327 = vmul.f32 %v573, %v3285
        %v3328 = vmul.f32 %v574, %v3285
        %v3329 = vmul.f32 %v575, %v3285
        %v3330 = vmul.f32 %v576, %v3285
        %v3331 = vmul.f32 %v577, %v3285
        %v3332 = vmul.f32 %v578, %v3285
        %v3333 = vmul.f32 %v579, %v3285
        %v3334 = vmul.f32 %v580, %v3285
        %v3335 = vmul.f32 %v581, %v3285
        %v3336 = vmul.f32 %v582, %v3285
        %v3337 = vmul.f32 %v583, %v3285
        %v3338 = vmul.f32 %v584, %v3285
        %v3339 = vmul.f32 %v585, %v3285
        %v3340 = vsel %vm916, %v3286, 0.0
        %3341 = vadd.xlane.f32.xlu0 %v3340
        %v3342 = vpop.xlane.xlu0 %3341
        %v3343 = vsel %vm643, %v3287, 0.0
        %3344 = vadd.xlane.f32.xlu0 %v3343
        %v3345 = vpop.xlane.xlu0 %3344
        %v3346 = vsel %vm923, %v3288, 0.0
        %3347 = vadd.xlane.f32.xlu0 %v3346
        %v3348 = vpop.xlane.xlu0 %3347
        %v3349 = vsel %vm916, %v3289, 0.0
        %3350 = vadd.xlane.f32.xlu0 %v3349
        %v3351 = vpop.xlane.xlu0 %3350
        %v3352 = vsel %vm643, %v3290, 0.0
        %3353 = vadd.xlane.f32.xlu0 %v3352
        %v3354 = vpop.xlane.xlu0 %3353
        %v3355 = vsel %vm923, %v3291, 0.0
        %3356 = vadd.xlane.f32.xlu0 %v3355
        %v3357 = vpop.xlane.xlu0 %3356
        %v3358 = vsel %vm916, %v3292, 0.0
        %3359 = vadd.xlane.f32.xlu0 %v3358
        %v3360 = vpop.xlane.xlu0 %3359
        %v3361 = vsel %vm643, %v3293, 0.0
        %3362 = vadd.xlane.f32.xlu0 %v3361
        %v3363 = vpop.xlane.xlu0 %3362
        %v3364 = vsel %vm923, %v3294, 0.0
        %3365 = vadd.xlane.f32.xlu0 %v3364
        %v3366 = vpop.xlane.xlu0 %3365
        %v3367 = vsel %vm916, %v3295, 0.0
        %3368 = vadd.xlane.f32.xlu0 %v3367
        %v3369 = vpop.xlane.xlu0 %3368
        %v3370 = vsel %vm643, %v3296, 0.0
        %3371 = vadd.xlane.f32.xlu0 %v3370
        %v3372 = vpop.xlane.xlu0 %3371
        %v3373 = vsel %vm923, %v3297, 0.0
        %3374 = vadd.xlane.f32.xlu0 %v3373
        %v3375 = vpop.xlane.xlu0 %3374
        %v3376 = vsel %vm916, %v3298, 0.0
        %3377 = vadd.xlane.f32.xlu0 %v3376
        %v3378 = vpop.xlane.xlu0 %3377
        %v3379 = vsel %vm643, %v3299, 0.0
        %3380 = vadd.xlane.f32.xlu0 %v3379
        %v3381 = vpop.xlane.xlu0 %3380
        %v3382 = vsel %vm923, %v3300, 0.0
        %3383 = vadd.xlane.f32.xlu0 %v3382
        %v3384 = vpop.xlane.xlu0 %3383
        %v3385 = vsel %vm916, %v3301, 0.0
        %3386 = vadd.xlane.f32.xlu0 %v3385
        %v3387 = vpop.xlane.xlu0 %3386
        %v3388 = vsel %vm643, %v3302, 0.0
        %3389 = vadd.xlane.f32.xlu0 %v3388
        %v3390 = vpop.xlane.xlu0 %3389
        %v3391 = vsel %vm923, %v3303, 0.0
        %3392 = vadd.xlane.f32.xlu0 %v3391
        %v3393 = vpop.xlane.xlu0 %3392
        %v3394 = vsel %vm916, %v3304, 0.0
        %3395 = vadd.xlane.f32.xlu0 %v3394
        %v3396 = vpop.xlane.xlu0 %3395
        %v3397 = vsel %vm643, %v3305, 0.0
        %3398 = vadd.xlane.f32.xlu0 %v3397
        %v3399 = vpop.xlane.xlu0 %3398
        %v3400 = vsel %vm923, %v3306, 0.0
        %3401 = vadd.xlane.f32.xlu0 %v3400
        %v3402 = vpop.xlane.xlu0 %3401
        %v3403 = vsel %vm916, %v3307, 0.0
        %3404 = vadd.xlane.f32.xlu0 %v3403
        %v3405 = vpop.xlane.xlu0 %3404
        %v3406 = vsel %vm643, %v3308, 0.0
        %3407 = vadd.xlane.f32.xlu0 %v3406
        %v3408 = vpop.xlane.xlu0 %3407
        %v3409 = vsel %vm923, %v3309, 0.0
        %3410 = vadd.xlane.f32.xlu0 %v3409
        %v3411 = vpop.xlane.xlu0 %3410
        %v3412 = vsel %vm916, %v3310, 0.0
        %3413 = vadd.xlane.f32.xlu0 %v3412
        %v3414 = vpop.xlane.xlu0 %3413
        %v3415 = vsel %vm643, %v3311, 0.0
        %3416 = vadd.xlane.f32.xlu0 %v3415
        %v3417 = vpop.xlane.xlu0 %3416
        %v3418 = vsel %vm923, %v3312, 0.0
        %3419 = vadd.xlane.f32.xlu0 %v3418
        %v3420 = vpop.xlane.xlu0 %3419
        %v3421 = vsel %vm916, %v3313, 0.0
        %3422 = vadd.xlane.f32.xlu0 %v3421
        %v3423 = vpop.xlane.xlu0 %3422
        %v3424 = vsel %vm643, %v3314, 0.0
        %3425 = vadd.xlane.f32.xlu0 %v3424
        %v3426 = vpop.xlane.xlu0 %3425
        %v3427 = vsel %vm923, %v3315, 0.0
        %3428 = vadd.xlane.f32.xlu0 %v3427
        %v3429 = vpop.xlane.xlu0 %3428
        %v3430 = vsel %vm916, %v3316, 0.0
        %3431 = vadd.xlane.f32.xlu0 %v3430
        %v3432 = vpop.xlane.xlu0 %3431
        %v3433 = vsel %vm643, %v3317, 0.0
        %3434 = vadd.xlane.f32.xlu0 %v3433
        %v3435 = vpop.xlane.xlu0 %3434
        %v3436 = vsel %vm923, %v3318, 0.0
        %3437 = vadd.xlane.f32.xlu0 %v3436
        %v3438 = vpop.xlane.xlu0 %3437
        %v3439 = vsel %vm916, %v3319, 0.0
        %3440 = vadd.xlane.f32.xlu0 %v3439
        %v3441 = vpop.xlane.xlu0 %3440
        %v3442 = vsel %vm643, %v3320, 0.0
        %3443 = vadd.xlane.f32.xlu0 %v3442
        %v3444 = vpop.xlane.xlu0 %3443
        %v3445 = vsel %vm923, %v3321, 0.0
        %3446 = vadd.xlane.f32.xlu0 %v3445
        %v3447 = vpop.xlane.xlu0 %3446
        %v3448 = vsel %vm916, %v3322, 0.0
        %3449 = vadd.xlane.f32.xlu0 %v3448
        %v3450 = vpop.xlane.xlu0 %3449
        %v3451 = vsel %vm643, %v3323, 0.0
        %3452 = vadd.xlane.f32.xlu0 %v3451
        %v3453 = vpop.xlane.xlu0 %3452
        %v3454 = vsel %vm923, %v3324, 0.0
        %3455 = vadd.xlane.f32.xlu0 %v3454
        %v3456 = vpop.xlane.xlu0 %3455
        %v3457 = vsel %vm916, %v3325, 0.0
        %3458 = vadd.xlane.f32.xlu0 %v3457
        %v3459 = vpop.xlane.xlu0 %3458
        %v3460 = vsel %vm643, %v3326, 0.0
        %3461 = vadd.xlane.f32.xlu0 %v3460
        %v3462 = vpop.xlane.xlu0 %3461
        %v3463 = vsel %vm923, %v3327, 0.0
        %3464 = vadd.xlane.f32.xlu0 %v3463
        %v3465 = vpop.xlane.xlu0 %3464
        %v3466 = vsel %vm916, %v3328, 0.0
        %3467 = vadd.xlane.f32.xlu0 %v3466
        %v3468 = vpop.xlane.xlu0 %3467
        %v3469 = vsel %vm643, %v3329, 0.0
        %3470 = vadd.xlane.f32.xlu0 %v3469
        %v3471 = vpop.xlane.xlu0 %3470
        %v3472 = vsel %vm923, %v3330, 0.0
        %3473 = vadd.xlane.f32.xlu0 %v3472
        %v3474 = vpop.xlane.xlu0 %3473
        %v3475 = vsel %vm916, %v3331, 0.0
        %3476 = vadd.xlane.f32.xlu0 %v3475
        %v3477 = vpop.xlane.xlu0 %3476
        %v3478 = vsel %vm643, %v3332, 0.0
        %3479 = vadd.xlane.f32.xlu0 %v3478
        %v3480 = vpop.xlane.xlu0 %3479
        %v3481 = vsel %vm923, %v3333, 0.0
        %3482 = vadd.xlane.f32.xlu0 %v3481
        %v3483 = vpop.xlane.xlu0 %3482
        %v3484 = vsel %vm916, %v3334, 0.0
        %3485 = vadd.xlane.f32.xlu0 %v3484
        %v3486 = vpop.xlane.xlu0 %3485
        %v3487 = vsel %vm643, %v3335, 0.0
        %3488 = vadd.xlane.f32.xlu0 %v3487
        %v3489 = vpop.xlane.xlu0 %3488
        %v3490 = vsel %vm923, %v3336, 0.0
        %3491 = vadd.xlane.f32.xlu0 %v3490
        %v3492 = vpop.xlane.xlu0 %3491
        %v3493 = vsel %vm916, %v3337, 0.0
        %3494 = vadd.xlane.f32.xlu0 %v3493
        %v3495 = vpop.xlane.xlu0 %3494
        %v3496 = vsel %vm643, %v3338, 0.0
        %3497 = vadd.xlane.f32.xlu0 %v3496
        %v3498 = vpop.xlane.xlu0 %3497
        %v3499 = vsel %vm923, %v3339, 0.0
        %3500 = vadd.xlane.f32.xlu0 %v3499
        %v3501 = vpop.xlane.xlu0 %3500
        %v3556 = vrot.slane %v3342, 1
        %v3557 = vrot.slane %v3345, 1
        %v3558 = vsel %vm1134, %v3556, %v3557
        %v3559 = vrot.slane %v3348, 1
        %v3560 = vsel %vm1134, %v3557, %v3559
        %v3561 = vrot.slane %v3351, 1
        %v3562 = vrot.slane %v3354, 1
        %v3563 = vsel %vm1134, %v3561, %v3562
        %v3564 = vrot.slane %v3357, 1
        %v3565 = vsel %vm1134, %v3562, %v3564
        %v3566 = vrot.slane %v3360, 1
        %v3567 = vrot.slane %v3363, 1
        %v3568 = vsel %vm1134, %v3566, %v3567
        %v3569 = vrot.slane %v3366, 1
        %v3570 = vsel %vm1134, %v3567, %v3569
        %v3571 = vrot.slane %v3369, 1
        %v3572 = vrot.slane %v3372, 1
        %v3573 = vsel %vm1134, %v3571, %v3572
        %v3574 = vrot.slane %v3375, 1
        %v3575 = vsel %vm1134, %v3572, %v3574
        %v3576 = vrot.slane %v3378, 1
        %v3577 = vrot.slane %v3381, 1
        %v3578 = vsel %vm1134, %v3576, %v3577
        %v3579 = vrot.slane %v3384, 1
        %v3580 = vsel %vm1134, %v3577, %v3579
        %v3581 = vrot.slane %v3387, 1
        %v3582 = vrot.slane %v3390, 1
        %v3583 = vsel %vm1134, %v3581, %v3582
        %v3584 = vrot.slane %v3393, 1
        %v3585 = vsel %vm1134, %v3582, %v3584
        %v3586 = vrot.slane %v3396, 1
        %v3587 = vrot.slane %v3399, 1
        %v3588 = vsel %vm1134, %v3586, %v3587
        %v3589 = vrot.slane %v3402, 1
        %v3590 = vsel %vm1134, %v3587, %v3589
        %v3591 = vrot.slane %v3405, 1
        %v3592 = vrot.slane %v3408, 1
        %v3593 = vsel %vm1134, %v3591, %v3592
        %v3594 = vrot.slane %v3411, 1
        %v3595 = vsel %vm1134, %v3592, %v3594
        %v3596 = vrot.slane %v3414, 1
        %v3597 = vrot.slane %v3417, 1
        %v3598 = vsel %vm1134, %v3596, %v3597
        %v3599 = vrot.slane %v3420, 1
        %v3600 = vsel %vm1134, %v3597, %v3599
        %v3601 = vrot.slane %v3423, 1
        %v3602 = vrot.slane %v3426, 1
        %v3603 = vsel %vm1134, %v3601, %v3602
        %v3604 = vrot.slane %v3429, 1
        %v3605 = vsel %vm1134, %v3602, %v3604
        %v3606 = vrot.slane %v3432, 1
        %v3607 = vrot.slane %v3435, 1
        %v3608 = vsel %vm1134, %v3606, %v3607
        %v3609 = vrot.slane %v3438, 1
        %v3610 = vsel %vm1134, %v3607, %v3609
        %v3611 = vrot.slane %v3441, 1
        %v3612 = vrot.slane %v3444, 1
        %v3613 = vsel %vm1134, %v3611, %v3612
        %v3614 = vrot.slane %v3447, 1
        %v3615 = vsel %vm1134, %v3612, %v3614
        %v3616 = vrot.slane %v3450, 1
        %v3617 = vrot.slane %v3453, 1
        %v3618 = vsel %vm1134, %v3616, %v3617
        %v3619 = vrot.slane %v3456, 1
        %v3620 = vsel %vm1134, %v3617, %v3619
        %v3621 = vrot.slane %v3459, 1
        %v3622 = vrot.slane %v3462, 1
        %v3623 = vsel %vm1134, %v3621, %v3622
        %v3624 = vrot.slane %v3465, 1
        %v3625 = vsel %vm1134, %v3622, %v3624
        %v3626 = vrot.slane %v3468, 1
        %v3627 = vrot.slane %v3471, 1
        %v3628 = vsel %vm1134, %v3626, %v3627
        %v3629 = vrot.slane %v3474, 1
        %v3630 = vsel %vm1134, %v3627, %v3629
        %v3631 = vrot.slane %v3477, 1
        %v3632 = vrot.slane %v3480, 1
        %v3633 = vsel %vm1134, %v3631, %v3632
        %v3634 = vrot.slane %v3483, 1
        %v3635 = vsel %vm1134, %v3632, %v3634
        %v3636 = vrot.slane %v3486, 1
        %v3637 = vrot.slane %v3489, 1
        %v3638 = vsel %vm1134, %v3636, %v3637
        %v3639 = vrot.slane %v3492, 1
        %v3640 = vsel %vm1134, %v3637, %v3639
        %v3641 = vrot.slane %v3495, 1
        %v3642 = vrot.slane %v3498, 1
        %v3643 = vsel %vm1134, %v3641, %v3642
        %v3644 = vrot.slane %v3501, 1
        %v3645 = vsel %vm1134, %v3642, %v3644
        %v3700 = vadd.f32 %v3231, %v3558
        %v3701 = vadd.f32 %v3232, %v3560
        %v3702 = vadd.f32 %v3233, %v3559
        %v3703 = vadd.f32 %v3234, %v3563
        %v3704 = vadd.f32 %v3235, %v3565
        %v3705 = vadd.f32 %v3236, %v3564
        %v3706 = vadd.f32 %v3237, %v3568
        %v3707 = vadd.f32 %v3238, %v3570
        %v3708 = vadd.f32 %v3239, %v3569
        %v3709 = vadd.f32 %v3240, %v3573
        %v3710 = vadd.f32 %v3241, %v3575
        %v3711 = vadd.f32 %v3242, %v3574
        %v3712 = vadd.f32 %v3243, %v3578
        %v3713 = vadd.f32 %v3244, %v3580
        %v3714 = vadd.f32 %v3245, %v3579
        %v3715 = vadd.f32 %v3246, %v3583
        %v3716 = vadd.f32 %v3247, %v3585
        %v3717 = vadd.f32 %v3248, %v3584
        %v3718 = vadd.f32 %v3249, %v3588
        %v3719 = vadd.f32 %v3250, %v3590
        %v3720 = vadd.f32 %v3251, %v3589
        %v3721 = vadd.f32 %v3252, %v3593
        %v3722 = vadd.f32 %v3253, %v3595
        %v3723 = vadd.f32 %v3254, %v3594
        %v3724 = vadd.f32 %v3255, %v3598
        %v3725 = vadd.f32 %v3256, %v3600
        %v3726 = vadd.f32 %v3257, %v3599
        %v3727 = vadd.f32 %v3258, %v3603
        %v3728 = vadd.f32 %v3259, %v3605
        %v3729 = vadd.f32 %v3260, %v3604
        %v3730 = vadd.f32 %v3261, %v3608
        %v3731 = vadd.f32 %v3262, %v3610
        %v3732 = vadd.f32 %v3263, %v3609
        %v3733 = vadd.f32 %v3264, %v3613
        %v3734 = vadd.f32 %v3265, %v3615
        %v3735 = vadd.f32 %v3266, %v3614
        %v3736 = vadd.f32 %v3267, %v3618
        %v3737 = vadd.f32 %v3268, %v3620
        %v3738 = vadd.f32 %v3269, %v3619
        %v3739 = vadd.f32 %v3270, %v3623
        %v3740 = vadd.f32 %v3271, %v3625
        %v3741 = vadd.f32 %v3272, %v3624
        %v3742 = vadd.f32 %v3273, %v3628
        %v3743 = vadd.f32 %v3274, %v3630
        %v3744 = vadd.f32 %v3275, %v3629
        %v3745 = vadd.f32 %v3276, %v3633
        %v3746 = vadd.f32 %v3277, %v3635
        %v3747 = vadd.f32 %v3278, %v3634
        %v3748 = vadd.f32 %v3279, %v3638
        %v3749 = vadd.f32 %v3280, %v3640
        %v3750 = vadd.f32 %v3281, %v3639
        %v3751 = vadd.f32 %v3282, %v3643
        %v3752 = vadd.f32 %v3283, %v3645
        %v3753 = vadd.f32 %v3284, %v3644
        %v3754 = vperm.slane %v587, 0
        %v3755 = vmul.f32 %v532, %v3754
        %v3756 = vmul.f32 %v533, %v3754
        %v3757 = vmul.f32 %v534, %v3754
        %v3758 = vmul.f32 %v535, %v3754
        %v3759 = vmul.f32 %v536, %v3754
        %v3760 = vmul.f32 %v537, %v3754
        %v3761 = vmul.f32 %v538, %v3754
        %v3762 = vmul.f32 %v539, %v3754
        %v3763 = vmul.f32 %v540, %v3754
        %v3764 = vmul.f32 %v541, %v3754
        %v3765 = vmul.f32 %v542, %v3754
        %v3766 = vmul.f32 %v543, %v3754
        %v3767 = vmul.f32 %v544, %v3754
        %v3768 = vmul.f32 %v545, %v3754
        %v3769 = vmul.f32 %v546, %v3754
        %v3770 = vmul.f32 %v547, %v3754
        %v3771 = vmul.f32 %v548, %v3754
        %v3772 = vmul.f32 %v549, %v3754
        %v3773 = vmul.f32 %v550, %v3754
        %v3774 = vmul.f32 %v551, %v3754
        %v3775 = vmul.f32 %v552, %v3754
        %v3776 = vmul.f32 %v553, %v3754
        %v3777 = vmul.f32 %v554, %v3754
        %v3778 = vmul.f32 %v555, %v3754
        %v3779 = vmul.f32 %v556, %v3754
        %v3780 = vmul.f32 %v557, %v3754
        %v3781 = vmul.f32 %v558, %v3754
        %v3782 = vmul.f32 %v559, %v3754
        %v3783 = vmul.f32 %v560, %v3754
        %v3784 = vmul.f32 %v561, %v3754
        %v3785 = vmul.f32 %v562, %v3754
        %v3786 = vmul.f32 %v563, %v3754
        %v3787 = vmul.f32 %v564, %v3754
        %v3788 = vmul.f32 %v565, %v3754
        %v3789 = vmul.f32 %v566, %v3754
        %v3790 = vmul.f32 %v567, %v3754
        %v3791 = vmul.f32 %v568, %v3754
        %v3792 = vmul.f32 %v569, %v3754
        %v3793 = vmul.f32 %v570, %v3754
        %v3794 = vmul.f32 %v571, %v3754
        %v3795 = vmul.f32 %v572, %v3754
        %v3796 = vmul.f32 %v573, %v3754
        %v3797 = vmul.f32 %v574, %v3754
        %v3798 = vmul.f32 %v575, %v3754
        %v3799 = vmul.f32 %v576, %v3754
        %v3800 = vmul.f32 %v577, %v3754
        %v3801 = vmul.f32 %v578, %v3754
        %v3802 = vmul.f32 %v579, %v3754
        %v3803 = vmul.f32 %v580, %v3754
        %v3804 = vmul.f32 %v581, %v3754
        %v3805 = vmul.f32 %v582, %v3754
        %v3806 = vmul.f32 %v583, %v3754
        %v3807 = vmul.f32 %v584, %v3754
        %v3808 = vmul.f32 %v585, %v3754
        %v3809 = vsel %vm1388, %v3755, 0.0
        %3810 = vadd.xlane.f32.xlu0 %v3809
        %v3811 = vpop.xlane.xlu0 %3810
        %v3812 = vsel %vm643, %v3756, 0.0
        %3813 = vadd.xlane.f32.xlu0 %v3812
        %v3814 = vpop.xlane.xlu0 %3813
        %v3815 = vsel %vm1395, %v3757, 0.0
        %3816 = vadd.xlane.f32.xlu0 %v3815
        %v3817 = vpop.xlane.xlu0 %3816
        %v3818 = vsel %vm1388, %v3758, 0.0
        %3819 = vadd.xlane.f32.xlu0 %v3818
        %v3820 = vpop.xlane.xlu0 %3819
        %v3821 = vsel %vm643, %v3759, 0.0
        %3822 = vadd.xlane.f32.xlu0 %v3821
        %v3823 = vpop.xlane.xlu0 %3822
        %v3824 = vsel %vm1395, %v3760, 0.0
        %3825 = vadd.xlane.f32.xlu0 %v3824
        %v3826 = vpop.xlane.xlu0 %3825
        %v3827 = vsel %vm1388, %v3761, 0.0
        %3828 = vadd.xlane.f32.xlu0 %v3827
        %v3829 = vpop.xlane.xlu0 %3828
        %v3830 = vsel %vm643, %v3762, 0.0
        %3831 = vadd.xlane.f32.xlu0 %v3830
        %v3832 = vpop.xlane.xlu0 %3831
        %v3833 = vsel %vm1395, %v3763, 0.0
        %3834 = vadd.xlane.f32.xlu0 %v3833
        %v3835 = vpop.xlane.xlu0 %3834
        %v3836 = vsel %vm1388, %v3764, 0.0
        %3837 = vadd.xlane.f32.xlu0 %v3836
        %v3838 = vpop.xlane.xlu0 %3837
        %v3839 = vsel %vm643, %v3765, 0.0
        %3840 = vadd.xlane.f32.xlu0 %v3839
        %v3841 = vpop.xlane.xlu0 %3840
        %v3842 = vsel %vm1395, %v3766, 0.0
        %3843 = vadd.xlane.f32.xlu0 %v3842
        %v3844 = vpop.xlane.xlu0 %3843
        %v3845 = vsel %vm1388, %v3767, 0.0
        %3846 = vadd.xlane.f32.xlu0 %v3845
        %v3847 = vpop.xlane.xlu0 %3846
        %v3848 = vsel %vm643, %v3768, 0.0
        %3849 = vadd.xlane.f32.xlu0 %v3848
        %v3850 = vpop.xlane.xlu0 %3849
        %v3851 = vsel %vm1395, %v3769, 0.0
        %3852 = vadd.xlane.f32.xlu0 %v3851
        %v3853 = vpop.xlane.xlu0 %3852
        %v3854 = vsel %vm1388, %v3770, 0.0
        %3855 = vadd.xlane.f32.xlu0 %v3854
        %v3856 = vpop.xlane.xlu0 %3855
        %v3857 = vsel %vm643, %v3771, 0.0
        %3858 = vadd.xlane.f32.xlu0 %v3857
        %v3859 = vpop.xlane.xlu0 %3858
        %v3860 = vsel %vm1395, %v3772, 0.0
        %3861 = vadd.xlane.f32.xlu0 %v3860
        %v3862 = vpop.xlane.xlu0 %3861
        %v3863 = vsel %vm1388, %v3773, 0.0
        %3864 = vadd.xlane.f32.xlu0 %v3863
        %v3865 = vpop.xlane.xlu0 %3864
        %v3866 = vsel %vm643, %v3774, 0.0
        %3867 = vadd.xlane.f32.xlu0 %v3866
        %v3868 = vpop.xlane.xlu0 %3867
        %v3869 = vsel %vm1395, %v3775, 0.0
        %3870 = vadd.xlane.f32.xlu0 %v3869
        %v3871 = vpop.xlane.xlu0 %3870
        %v3872 = vsel %vm1388, %v3776, 0.0
        %3873 = vadd.xlane.f32.xlu0 %v3872
        %v3874 = vpop.xlane.xlu0 %3873
        %v3875 = vsel %vm643, %v3777, 0.0
        %3876 = vadd.xlane.f32.xlu0 %v3875
        %v3877 = vpop.xlane.xlu0 %3876
        %v3878 = vsel %vm1395, %v3778, 0.0
        %3879 = vadd.xlane.f32.xlu0 %v3878
        %v3880 = vpop.xlane.xlu0 %3879
        %v3881 = vsel %vm1388, %v3779, 0.0
        %3882 = vadd.xlane.f32.xlu0 %v3881
        %v3883 = vpop.xlane.xlu0 %3882
        %v3884 = vsel %vm643, %v3780, 0.0
        %3885 = vadd.xlane.f32.xlu0 %v3884
        %v3886 = vpop.xlane.xlu0 %3885
        %v3887 = vsel %vm1395, %v3781, 0.0
        %3888 = vadd.xlane.f32.xlu0 %v3887
        %v3889 = vpop.xlane.xlu0 %3888
        %v3890 = vsel %vm1388, %v3782, 0.0
        %3891 = vadd.xlane.f32.xlu0 %v3890
        %v3892 = vpop.xlane.xlu0 %3891
        %v3893 = vsel %vm643, %v3783, 0.0
        %3894 = vadd.xlane.f32.xlu0 %v3893
        %v3895 = vpop.xlane.xlu0 %3894
        %v3896 = vsel %vm1395, %v3784, 0.0
        %3897 = vadd.xlane.f32.xlu0 %v3896
        %v3898 = vpop.xlane.xlu0 %3897
        %v3899 = vsel %vm1388, %v3785, 0.0
        %3900 = vadd.xlane.f32.xlu0 %v3899
        %v3901 = vpop.xlane.xlu0 %3900
        %v3902 = vsel %vm643, %v3786, 0.0
        %3903 = vadd.xlane.f32.xlu0 %v3902
        %v3904 = vpop.xlane.xlu0 %3903
        %v3905 = vsel %vm1395, %v3787, 0.0
        %3906 = vadd.xlane.f32.xlu0 %v3905
        %v3907 = vpop.xlane.xlu0 %3906
        %v3908 = vsel %vm1388, %v3788, 0.0
        %3909 = vadd.xlane.f32.xlu0 %v3908
        %v3910 = vpop.xlane.xlu0 %3909
        %v3911 = vsel %vm643, %v3789, 0.0
        %3912 = vadd.xlane.f32.xlu0 %v3911
        %v3913 = vpop.xlane.xlu0 %3912
        %v3914 = vsel %vm1395, %v3790, 0.0
        %3915 = vadd.xlane.f32.xlu0 %v3914
        %v3916 = vpop.xlane.xlu0 %3915
        %v3917 = vsel %vm1388, %v3791, 0.0
        %3918 = vadd.xlane.f32.xlu0 %v3917
        %v3919 = vpop.xlane.xlu0 %3918
        %v3920 = vsel %vm643, %v3792, 0.0
        %3921 = vadd.xlane.f32.xlu0 %v3920
        %v3922 = vpop.xlane.xlu0 %3921
        %v3923 = vsel %vm1395, %v3793, 0.0
        %3924 = vadd.xlane.f32.xlu0 %v3923
        %v3925 = vpop.xlane.xlu0 %3924
        %v3926 = vsel %vm1388, %v3794, 0.0
        %3927 = vadd.xlane.f32.xlu0 %v3926
        %v3928 = vpop.xlane.xlu0 %3927
        %v3929 = vsel %vm643, %v3795, 0.0
        %3930 = vadd.xlane.f32.xlu0 %v3929
        %v3931 = vpop.xlane.xlu0 %3930
        %v3932 = vsel %vm1395, %v3796, 0.0
        %3933 = vadd.xlane.f32.xlu0 %v3932
        %v3934 = vpop.xlane.xlu0 %3933
        %v3935 = vsel %vm1388, %v3797, 0.0
        %3936 = vadd.xlane.f32.xlu0 %v3935
        %v3937 = vpop.xlane.xlu0 %3936
        %v3938 = vsel %vm643, %v3798, 0.0
        %3939 = vadd.xlane.f32.xlu0 %v3938
        %v3940 = vpop.xlane.xlu0 %3939
        %v3941 = vsel %vm1395, %v3799, 0.0
        %3942 = vadd.xlane.f32.xlu0 %v3941
        %v3943 = vpop.xlane.xlu0 %3942
        %v3944 = vsel %vm1388, %v3800, 0.0
        %3945 = vadd.xlane.f32.xlu0 %v3944
        %v3946 = vpop.xlane.xlu0 %3945
        %v3947 = vsel %vm643, %v3801, 0.0
        %3948 = vadd.xlane.f32.xlu0 %v3947
        %v3949 = vpop.xlane.xlu0 %3948
        %v3950 = vsel %vm1395, %v3802, 0.0
        %3951 = vadd.xlane.f32.xlu0 %v3950
        %v3952 = vpop.xlane.xlu0 %3951
        %v3953 = vsel %vm1388, %v3803, 0.0
        %3954 = vadd.xlane.f32.xlu0 %v3953
        %v3955 = vpop.xlane.xlu0 %3954
        %v3956 = vsel %vm643, %v3804, 0.0
        %3957 = vadd.xlane.f32.xlu0 %v3956
        %v3958 = vpop.xlane.xlu0 %3957
        %v3959 = vsel %vm1395, %v3805, 0.0
        %3960 = vadd.xlane.f32.xlu0 %v3959
        %v3961 = vpop.xlane.xlu0 %3960
        %v3962 = vsel %vm1388, %v3806, 0.0
        %3963 = vadd.xlane.f32.xlu0 %v3962
        %v3964 = vpop.xlane.xlu0 %3963
        %v3965 = vsel %vm643, %v3807, 0.0
        %3966 = vadd.xlane.f32.xlu0 %v3965
        %v3967 = vpop.xlane.xlu0 %3966
        %v3968 = vsel %vm1395, %v3808, 0.0
        %3969 = vadd.xlane.f32.xlu0 %v3968
        %v3970 = vpop.xlane.xlu0 %3969
        %v4025 = vrot.slane %v3811, 2
        %v4026 = vrot.slane %v3814, 2
        %v4027 = vsel %vm1606, %v4025, %v4026
        %v4028 = vrot.slane %v3817, 2
        %v4029 = vsel %vm1606, %v4026, %v4028
        %v4030 = vrot.slane %v3820, 2
        %v4031 = vrot.slane %v3823, 2
        %v4032 = vsel %vm1606, %v4030, %v4031
        %v4033 = vrot.slane %v3826, 2
        %v4034 = vsel %vm1606, %v4031, %v4033
        %v4035 = vrot.slane %v3829, 2
        %v4036 = vrot.slane %v3832, 2
        %v4037 = vsel %vm1606, %v4035, %v4036
        %v4038 = vrot.slane %v3835, 2
        %v4039 = vsel %vm1606, %v4036, %v4038
        %v4040 = vrot.slane %v3838, 2
        %v4041 = vrot.slane %v3841, 2
        %v4042 = vsel %vm1606, %v4040, %v4041
        %v4043 = vrot.slane %v3844, 2
        %v4044 = vsel %vm1606, %v4041, %v4043
        %v4045 = vrot.slane %v3847, 2
        %v4046 = vrot.slane %v3850, 2
        %v4047 = vsel %vm1606, %v4045, %v4046
        %v4048 = vrot.slane %v3853, 2
        %v4049 = vsel %vm1606, %v4046, %v4048
        %v4050 = vrot.slane %v3856, 2
        %v4051 = vrot.slane %v3859, 2
        %v4052 = vsel %vm1606, %v4050, %v4051
        %v4053 = vrot.slane %v3862, 2
        %v4054 = vsel %vm1606, %v4051, %v4053
        %v4055 = vrot.slane %v3865, 2
        %v4056 = vrot.slane %v3868, 2
        %v4057 = vsel %vm1606, %v4055, %v4056
        %v4058 = vrot.slane %v3871, 2
        %v4059 = vsel %vm1606, %v4056, %v4058
        %v4060 = vrot.slane %v3874, 2
        %v4061 = vrot.slane %v3877, 2
        %v4062 = vsel %vm1606, %v4060, %v4061
        %v4063 = vrot.slane %v3880, 2
        %v4064 = vsel %vm1606, %v4061, %v4063
        %v4065 = vrot.slane %v3883, 2
        %v4066 = vrot.slane %v3886, 2
        %v4067 = vsel %vm1606, %v4065, %v4066
        %v4068 = vrot.slane %v3889, 2
        %v4069 = vsel %vm1606, %v4066, %v4068
        %v4070 = vrot.slane %v3892, 2
        %v4071 = vrot.slane %v3895, 2
        %v4072 = vsel %vm1606, %v4070, %v4071
        %v4073 = vrot.slane %v3898, 2
        %v4074 = vsel %vm1606, %v4071, %v4073
        %v4075 = vrot.slane %v3901, 2
        %v4076 = vrot.slane %v3904, 2
        %v4077 = vsel %vm1606, %v4075, %v4076
        %v4078 = vrot.slane %v3907, 2
        %v4079 = vsel %vm1606, %v4076, %v4078
        %v4080 = vrot.slane %v3910, 2
        %v4081 = vrot.slane %v3913, 2
        %v4082 = vsel %vm1606, %v4080, %v4081
        %v4083 = vrot.slane %v3916, 2
        %v4084 = vsel %vm1606, %v4081, %v4083
        %v4085 = vrot.slane %v3919, 2
        %v4086 = vrot.slane %v3922, 2
        %v4087 = vsel %vm1606, %v4085, %v4086
        %v4088 = vrot.slane %v3925, 2
        %v4089 = vsel %vm1606, %v4086, %v4088
        %v4090 = vrot.slane %v3928, 2
        %v4091 = vrot.slane %v3931, 2
        %v4092 = vsel %vm1606, %v4090, %v4091
        %v4093 = vrot.slane %v3934, 2
        %v4094 = vsel %vm1606, %v4091, %v4093
        %v4095 = vrot.slane %v3937, 2
        %v4096 = vrot.slane %v3940, 2
        %v4097 = vsel %vm1606, %v4095, %v4096
        %v4098 = vrot.slane %v3943, 2
        %v4099 = vsel %vm1606, %v4096, %v4098
        %v4100 = vrot.slane %v3946, 2
        %v4101 = vrot.slane %v3949, 2
        %v4102 = vsel %vm1606, %v4100, %v4101
        %v4103 = vrot.slane %v3952, 2
        %v4104 = vsel %vm1606, %v4101, %v4103
        %v4105 = vrot.slane %v3955, 2
        %v4106 = vrot.slane %v3958, 2
        %v4107 = vsel %vm1606, %v4105, %v4106
        %v4108 = vrot.slane %v3961, 2
        %v4109 = vsel %vm1606, %v4106, %v4108
        %v4110 = vrot.slane %v3964, 2
        %v4111 = vrot.slane %v3967, 2
        %v4112 = vsel %vm1606, %v4110, %v4111
        %v4113 = vrot.slane %v3970, 2
        %v4114 = vsel %vm1606, %v4111, %v4113
        %v4169 = vadd.f32 %v3700, %v4027
        %v4170 = vadd.f32 %v3701, %v4029
        %v4171 = vadd.f32 %v3702, %v4028
        %v4172 = vadd.f32 %v3703, %v4032
        %v4173 = vadd.f32 %v3704, %v4034
        %v4174 = vadd.f32 %v3705, %v4033
        %v4175 = vadd.f32 %v3706, %v4037
        %v4176 = vadd.f32 %v3707, %v4039
        %v4177 = vadd.f32 %v3708, %v4038
        %v4178 = vadd.f32 %v3709, %v4042
        %v4179 = vadd.f32 %v3710, %v4044
        %v4180 = vadd.f32 %v3711, %v4043
        %v4181 = vadd.f32 %v3712, %v4047
        %v4182 = vadd.f32 %v3713, %v4049
        %v4183 = vadd.f32 %v3714, %v4048
        %v4184 = vadd.f32 %v3715, %v4052
        %v4185 = vadd.f32 %v3716, %v4054
        %v4186 = vadd.f32 %v3717, %v4053
        %v4187 = vadd.f32 %v3718, %v4057
        %v4188 = vadd.f32 %v3719, %v4059
        %v4189 = vadd.f32 %v3720, %v4058
        %v4190 = vadd.f32 %v3721, %v4062
        %v4191 = vadd.f32 %v3722, %v4064
        %v4192 = vadd.f32 %v3723, %v4063
        %v4193 = vadd.f32 %v3724, %v4067
        %v4194 = vadd.f32 %v3725, %v4069
        %v4195 = vadd.f32 %v3726, %v4068
        %v4196 = vadd.f32 %v3727, %v4072
        %v4197 = vadd.f32 %v3728, %v4074
        %v4198 = vadd.f32 %v3729, %v4073
        %v4199 = vadd.f32 %v3730, %v4077
        %v4200 = vadd.f32 %v3731, %v4079
        %v4201 = vadd.f32 %v3732, %v4078
        %v4202 = vadd.f32 %v3733, %v4082
        %v4203 = vadd.f32 %v3734, %v4084
        %v4204 = vadd.f32 %v3735, %v4083
        %v4205 = vadd.f32 %v3736, %v4087
        %v4206 = vadd.f32 %v3737, %v4089
        %v4207 = vadd.f32 %v3738, %v4088
        %v4208 = vadd.f32 %v3739, %v4092
        %v4209 = vadd.f32 %v3740, %v4094
        %v4210 = vadd.f32 %v3741, %v4093
        %v4211 = vadd.f32 %v3742, %v4097
        %v4212 = vadd.f32 %v3743, %v4099
        %v4213 = vadd.f32 %v3744, %v4098
        %v4214 = vadd.f32 %v3745, %v4102
        %v4215 = vadd.f32 %v3746, %v4104
        %v4216 = vadd.f32 %v3747, %v4103
        %v4217 = vadd.f32 %v3748, %v4107
        %v4218 = vadd.f32 %v3749, %v4109
        %v4219 = vadd.f32 %v3750, %v4108
        %v4220 = vadd.f32 %v3751, %v4112
        %v4221 = vadd.f32 %v3752, %v4114
        %v4222 = vadd.f32 %v3753, %v4113
        %s4223 = sld [smem:[#allocation2]]
        %v4224 = vstv %s4223
        %v4225 = vadd.f32 %v4169, %v4224
        %v4226 = vadd.f32 %v4170, %v4224
        %v4227 = vadd.f32 %v4171, %v4224
        %v4228 = vadd.f32 %v4172, %v4224
        %v4229 = vadd.f32 %v4173, %v4224
        %v4230 = vadd.f32 %v4174, %v4224
        %v4231 = vadd.f32 %v4175, %v4224
        %v4232 = vadd.f32 %v4176, %v4224
        %v4233 = vadd.f32 %v4177, %v4224
        %v4234 = vadd.f32 %v4178, %v4224
        %v4235 = vadd.f32 %v4179, %v4224
        %v4236 = vadd.f32 %v4180, %v4224
        %v4237 = vadd.f32 %v4181, %v4224
        %v4238 = vadd.f32 %v4182, %v4224
        %v4239 = vadd.f32 %v4183, %v4224
        %v4240 = vadd.f32 %v4184, %v4224
        %v4241 = vadd.f32 %v4185, %v4224
        %v4242 = vadd.f32 %v4186, %v4224
        %v4243 = vadd.f32 %v4187, %v4224
        %v4244 = vadd.f32 %v4188, %v4224
        %v4245 = vadd.f32 %v4189, %v4224
        %v4246 = vadd.f32 %v4190, %v4224
        %v4247 = vadd.f32 %v4191, %v4224
        %v4248 = vadd.f32 %v4192, %v4224
        %v4249 = vadd.f32 %v4193, %v4224
        %v4250 = vadd.f32 %v4194, %v4224
        %v4251 = vadd.f32 %v4195, %v4224
        %v4252 = vadd.f32 %v4196, %v4224
        %v4253 = vadd.f32 %v4197, %v4224
        %v4254 = vadd.f32 %v4198, %v4224
        %v4255 = vadd.f32 %v4199, %v4224
        %v4256 = vadd.f32 %v4200, %v4224
        %v4257 = vadd.f32 %v4201, %v4224
        %v4258 = vadd.f32 %v4202, %v4224
        %v4259 = vadd.f32 %v4203, %v4224
        %v4260 = vadd.f32 %v4204, %v4224
        %v4261 = vadd.f32 %v4205, %v4224
        %v4262 = vadd.f32 %v4206, %v4224
        %v4263 = vadd.f32 %v4207, %v4224
        %v4264 = vadd.f32 %v4208, %v4224
        %v4265 = vadd.f32 %v4209, %v4224
        %v4266 = vadd.f32 %v4210, %v4224
        %v4267 = vadd.f32 %v4211, %v4224
        %v4268 = vadd.f32 %v4212, %v4224
        %v4269 = vadd.f32 %v4213, %v4224
        %v4270 = vadd.f32 %v4214, %v4224
        %v4271 = vadd.f32 %v4215, %v4224
        %v4272 = vadd.f32 %v4216, %v4224
        %v4273 = vadd.f32 %v4217, %v4224
        %v4274 = vadd.f32 %v4218, %v4224
        %v4275 = vadd.f32 %v4219, %v4224
        %v4276 = vadd.f32 %v4220, %v4224
        %v4277 = vadd.f32 %v4221, %v4224
        %v4278 = vadd.f32 %v4222, %v4224
        %v4279 = vlaneseq
        %v4280 = vshrl.u32 %v4279, 7
        %v4281 = vadd.s32 %v4280, 8
        %v4282 = vadd.s32 %v4280, 16
        %v4283 = vlaneseq
        %v4284 = vand.u32 %v4283, 127
        %vm4285 = vcmp.ge.s32.totalorder %v4280, 1
        %vm4286 = vcmp.ge.s32.totalorder %v4281, 1
        %vm4287 = vcmp.ge.s32.totalorder %v4282, 1
        %vm4288 = vcmp.le.s32.totalorder %v4280, 16
        %vm4289 = vcmp.le.s32.totalorder %v4281, 16
        %vm4290 = vcmp.le.s32.totalorder %v4282, 16
        %vm4291 = vmand %vm4285, %vm4288
        %vm4292 = vmand %vm4286, %vm4289
        %vm4293 = vmand %vm4287, %vm4290
        %vm4294 = vcmp.ge.s32.totalorder %v4284, 1
        %vm4295 = vmand %vm4291, %vm4294
        %vm4296 = vmand %vm4292, %vm4294
        %vm4297 = vmand %vm4293, %vm4294
        %vm4298 = vcmp.le.s32.totalorder %v4284, 16
        %vm4299 = vmand %vm4295, %vm4298
        %vm4300 = vmand %vm4296, %vm4298
        %vm4301 = vmand %vm4297, %vm4298
        %v4302 = vmul.f32 %v4225, 2.0
        %v4303 = vmul.f32 %v4226, 2.0
        %v4304 = vmul.f32 %v4227, 2.0
        %v4305 = vmul.f32 %v4228, 2.0
        %v4306 = vmul.f32 %v4229, 2.0
        %v4307 = vmul.f32 %v4230, 2.0
        %v4308 = vmul.f32 %v4231, 2.0
        %v4309 = vmul.f32 %v4232, 2.0
        %v4310 = vmul.f32 %v4233, 2.0
        %v4311 = vmul.f32 %v4234, 2.0
        %v4312 = vmul.f32 %v4235, 2.0
        %v4313 = vmul.f32 %v4236, 2.0
        %v4314 = vmul.f32 %v4237, 2.0
        %v4315 = vmul.f32 %v4238, 2.0
        %v4316 = vmul.f32 %v4239, 2.0
        %v4317 = vmul.f32 %v4240, 2.0
        %v4318 = vmul.f32 %v4241, 2.0
        %v4319 = vmul.f32 %v4242, 2.0
        %v4320 = vmul.f32 %v4243, 2.0
        %v4321 = vmul.f32 %v4244, 2.0
        %v4322 = vmul.f32 %v4245, 2.0
        %v4323 = vmul.f32 %v4246, 2.0
        %v4324 = vmul.f32 %v4247, 2.0
        %v4325 = vmul.f32 %v4248, 2.0
        %v4326 = vmul.f32 %v4249, 2.0
        %v4327 = vmul.f32 %v4250, 2.0
        %v4328 = vmul.f32 %v4251, 2.0
        %v4329 = vmul.f32 %v4252, 2.0
        %v4330 = vmul.f32 %v4253, 2.0
        %v4331 = vmul.f32 %v4254, 2.0
        %v4332 = vmul.f32 %v4255, 2.0
        %v4333 = vmul.f32 %v4256, 2.0
        %v4334 = vmul.f32 %v4257, 2.0
        %v4335 = vmul.f32 %v4258, 2.0
        %v4336 = vmul.f32 %v4259, 2.0
        %v4337 = vmul.f32 %v4260, 2.0
        %v4338 = vmul.f32 %v4261, 2.0
        %v4339 = vmul.f32 %v4262, 2.0
        %v4340 = vmul.f32 %v4263, 2.0
        %v4341 = vmul.f32 %v4264, 2.0
        %v4342 = vmul.f32 %v4265, 2.0
        %v4343 = vmul.f32 %v4266, 2.0
        %v4344 = vmul.f32 %v4267, 2.0
        %v4345 = vmul.f32 %v4268, 2.0
        %v4346 = vmul.f32 %v4269, 2.0
        %v4347 = vmul.f32 %v4270, 2.0
        %v4348 = vmul.f32 %v4271, 2.0
        %v4349 = vmul.f32 %v4272, 2.0
        %v4350 = vmul.f32 %v4273, 2.0
        %v4351 = vmul.f32 %v4274, 2.0
        %v4352 = vmul.f32 %v4275, 2.0
        %v4353 = vmul.f32 %v4276, 2.0
        %v4354 = vmul.f32 %v4277, 2.0
        %v4355 = vmul.f32 %v4278, 2.0
        %4410 = vset.pattern.permute.xlu0 0
        %4411 = vperm.xlu0 %4410, %v4302
        %v4412 = vpop.permute.xlu0 %4411
        %4413 = vset.pattern.permute.xlu0 0
        %4414 = vperm.xlu0 %4413, %v4303
        %v4415 = vpop.permute.xlu0 %4414
        %4416 = vset.pattern.permute.xlu0 0
        %4417 = vperm.xlu0 %4416, %v4304
        %v4418 = vpop.permute.xlu0 %4417
        %4419 = vset.pattern.permute.xlu0 0
        %4420 = vperm.xlu0 %4419, %v4305
        %v4421 = vpop.permute.xlu0 %4420
        %4422 = vset.pattern.permute.xlu0 0
        %4423 = vperm.xlu0 %4422, %v4306
        %v4424 = vpop.permute.xlu0 %4423
        %4425 = vset.pattern.permute.xlu0 0
        %4426 = vperm.xlu0 %4425, %v4307
        %v4427 = vpop.permute.xlu0 %4426
        %4428 = vset.pattern.permute.xlu0 0
        %4429 = vperm.xlu0 %4428, %v4308
        %v4430 = vpop.permute.xlu0 %4429
        %4431 = vset.pattern.permute.xlu0 0
        %4432 = vperm.xlu0 %4431, %v4309
        %v4433 = vpop.permute.xlu0 %4432
        %4434 = vset.pattern.permute.xlu0 0
        %4435 = vperm.xlu0 %4434, %v4310
        %v4436 = vpop.permute.xlu0 %4435
        %4437 = vset.pattern.permute.xlu0 0
        %4438 = vperm.xlu0 %4437, %v4311
        %v4439 = vpop.permute.xlu0 %4438
        %4440 = vset.pattern.permute.xlu0 0
        %4441 = vperm.xlu0 %4440, %v4312
        %v4442 = vpop.permute.xlu0 %4441
        %4443 = vset.pattern.permute.xlu0 0
        %4444 = vperm.xlu0 %4443, %v4313
        %v4445 = vpop.permute.xlu0 %4444
        %4446 = vset.pattern.permute.xlu0 0
        %4447 = vperm.xlu0 %4446, %v4314
        %v4448 = vpop.permute.xlu0 %4447
        %4449 = vset.pattern.permute.xlu0 0
        %4450 = vperm.xlu0 %4449, %v4315
        %v4451 = vpop.permute.xlu0 %4450
        %4452 = vset.pattern.permute.xlu0 0
        %4453 = vperm.xlu0 %4452, %v4316
        %v4454 = vpop.permute.xlu0 %4453
        %4455 = vset.pattern.permute.xlu0 0
        %4456 = vperm.xlu0 %4455, %v4317
        %v4457 = vpop.permute.xlu0 %4456
        %4458 = vset.pattern.permute.xlu0 0
        %4459 = vperm.xlu0 %4458, %v4318
        %v4460 = vpop.permute.xlu0 %4459
        %4461 = vset.pattern.permute.xlu0 0
        %4462 = vperm.xlu0 %4461, %v4319
        %v4463 = vpop.permute.xlu0 %4462
        %4464 = vset.pattern.permute.xlu0 0
        %4465 = vperm.xlu0 %4464, %v4320
        %v4466 = vpop.permute.xlu0 %4465
        %4467 = vset.pattern.permute.xlu0 0
        %4468 = vperm.xlu0 %4467, %v4321
        %v4469 = vpop.permute.xlu0 %4468
        %4470 = vset.pattern.permute.xlu0 0
        %4471 = vperm.xlu0 %4470, %v4322
        %v4472 = vpop.permute.xlu0 %4471
        %4473 = vset.pattern.permute.xlu0 0
        %4474 = vperm.xlu0 %4473, %v4323
        %v4475 = vpop.permute.xlu0 %4474
        %4476 = vset.pattern.permute.xlu0 0
        %4477 = vperm.xlu0 %4476, %v4324
        %v4478 = vpop.permute.xlu0 %4477
        %4479 = vset.pattern.permute.xlu0 0
        %4480 = vperm.xlu0 %4479, %v4325
        %v4481 = vpop.permute.xlu0 %4480
        %4482 = vset.pattern.permute.xlu0 0
        %4483 = vperm.xlu0 %4482, %v4326
        %v4484 = vpop.permute.xlu0 %4483
        %4485 = vset.pattern.permute.xlu0 0
        %4486 = vperm.xlu0 %4485, %v4327
        %v4487 = vpop.permute.xlu0 %4486
        %4488 = vset.pattern.permute.xlu0 0
        %4489 = vperm.xlu0 %4488, %v4328
        %v4490 = vpop.permute.xlu0 %4489
        %4491 = vset.pattern.permute.xlu0 0
        %4492 = vperm.xlu0 %4491, %v4329
        %v4493 = vpop.permute.xlu0 %4492
        %4494 = vset.pattern.permute.xlu0 0
        %4495 = vperm.xlu0 %4494, %v4330
        %v4496 = vpop.permute.xlu0 %4495
        %4497 = vset.pattern.permute.xlu0 0
        %4498 = vperm.xlu0 %4497, %v4331
        %v4499 = vpop.permute.xlu0 %4498
        %4500 = vset.pattern.permute.xlu0 0
        %4501 = vperm.xlu0 %4500, %v4332
        %v4502 = vpop.permute.xlu0 %4501
        %4503 = vset.pattern.permute.xlu0 0
        %4504 = vperm.xlu0 %4503, %v4333
        %v4505 = vpop.permute.xlu0 %4504
        %4506 = vset.pattern.permute.xlu0 0
        %4507 = vperm.xlu0 %4506, %v4334
        %v4508 = vpop.permute.xlu0 %4507
        %4509 = vset.pattern.permute.xlu0 0
        %4510 = vperm.xlu0 %4509, %v4335
        %v4511 = vpop.permute.xlu0 %4510
        %4512 = vset.pattern.permute.xlu0 0
        %4513 = vperm.xlu0 %4512, %v4336
        %v4514 = vpop.permute.xlu0 %4513
        %4515 = vset.pattern.permute.xlu0 0
        %4516 = vperm.xlu0 %4515, %v4337
        %v4517 = vpop.permute.xlu0 %4516
        %4518 = vset.pattern.permute.xlu0 0
        %4519 = vperm.xlu0 %4518, %v4338
        %v4520 = vpop.permute.xlu0 %4519
        %4521 = vset.pattern.permute.xlu0 0
        %4522 = vperm.xlu0 %4521, %v4339
        %v4523 = vpop.permute.xlu0 %4522
        %4524 = vset.pattern.permute.xlu0 0
        %4525 = vperm.xlu0 %4524, %v4340
        %v4526 = vpop.permute.xlu0 %4525
        %4527 = vset.pattern.permute.xlu0 0
        %4528 = vperm.xlu0 %4527, %v4341
        %v4529 = vpop.permute.xlu0 %4528
        %4530 = vset.pattern.permute.xlu0 0
        %4531 = vperm.xlu0 %4530, %v4342
        %v4532 = vpop.permute.xlu0 %4531
        %4533 = vset.pattern.permute.xlu0 0
        %4534 = vperm.xlu0 %4533, %v4343
        %v4535 = vpop.permute.xlu0 %4534
        %4536 = vset.pattern.permute.xlu0 0
        %4537 = vperm.xlu0 %4536, %v4344
        %v4538 = vpop.permute.xlu0 %4537
        %4539 = vset.pattern.permute.xlu0 0
        %4540 = vperm.xlu0 %4539, %v4345
        %v4541 = vpop.permute.xlu0 %4540
        %4542 = vset.pattern.permute.xlu0 0
        %4543 = vperm.xlu0 %4542, %v4346
        %v4544 = vpop.permute.xlu0 %4543
        %4545 = vset.pattern.permute.xlu0 0
        %4546 = vperm.xlu0 %4545, %v4347
        %v4547 = vpop.permute.xlu0 %4546
        %4548 = vset.pattern.permute.xlu0 0
        %4549 = vperm.xlu0 %4548, %v4348
        %v4550 = vpop.permute.xlu0 %4549
        %4551 = vset.pattern.permute.xlu0 0
        %4552 = vperm.xlu0 %4551, %v4349
        %v4553 = vpop.permute.xlu0 %4552
        %4554 = vset.pattern.permute.xlu0 0
        %4555 = vperm.xlu0 %4554, %v4350
        %v4556 = vpop.permute.xlu0 %4555
        %4557 = vset.pattern.permute.xlu0 0
        %4558 = vperm.xlu0 %4557, %v4351
        %v4559 = vpop.permute.xlu0 %4558
        %4560 = vset.pattern.permute.xlu0 0
        %4561 = vperm.xlu0 %4560, %v4352
        %v4562 = vpop.permute.xlu0 %4561
        %4563 = vset.pattern.permute.xlu0 0
        %4564 = vperm.xlu0 %4563, %v4353
        %v4565 = vpop.permute.xlu0 %4564
        %4566 = vset.pattern.permute.xlu0 0
        %4567 = vperm.xlu0 %4566, %v4354
        %v4568 = vpop.permute.xlu0 %4567
        %4569 = vset.pattern.permute.xlu0 0
        %4570 = vperm.xlu0 %4569, %v4355
        %v4571 = vpop.permute.xlu0 %4570
        %v4572 = vperm.slane %v4412, %v4284
        %v4573 = vadd.s32 %v4284, 4294967288
        %v4574 = vperm.slane %v4415, %v4573
        %vm4575 = vcmask 130112
        %v4576 = vsel %vm4575, %v4574, %v4572
        %v4577 = vadd.s32 %v4284, 4294967280
        %v4578 = vperm.slane %v4418, %v4577
        %vm4579 = vcmask 195712
        %v4580 = vsel %vm4579, %v4578, %v4576
        %v4581 = vperm.slane %v4421, %v4284
        %v4582 = vperm.slane %v4424, %v4573
        %v4583 = vsel %vm4575, %v4582, %v4581
        %v4584 = vperm.slane %v4427, %v4577
        %v4585 = vsel %vm4579, %v4584, %v4583
        %v4586 = vperm.slane %v4430, %v4284
        %v4587 = vperm.slane %v4433, %v4573
        %v4588 = vsel %vm4575, %v4587, %v4586
        %v4589 = vperm.slane %v4436, %v4577
        %v4590 = vsel %vm4579, %v4589, %v4588
        %v4591 = vperm.slane %v4439, %v4284
        %v4592 = vperm.slane %v4442, %v4573
        %v4593 = vsel %vm4575, %v4592, %v4591
        %v4594 = vperm.slane %v4445, %v4577
        %v4595 = vsel %vm4579, %v4594, %v4593
        %v4596 = vperm.slane %v4448, %v4284
        %v4597 = vperm.slane %v4451, %v4573
        %v4598 = vsel %vm4575, %v4597, %v4596
        %v4599 = vperm.slane %v4454, %v4577
        %v4600 = vsel %vm4579, %v4599, %v4598
        %v4601 = vperm.slane %v4457, %v4284
        %v4602 = vperm.slane %v4460, %v4573
        %v4603 = vsel %vm4575, %v4602, %v4601
        %v4604 = vperm.slane %v4463, %v4577
        %v4605 = vsel %vm4579, %v4604, %v4603
        %v4606 = vperm.slane %v4466, %v4284
        %v4607 = vperm.slane %v4469, %v4573
        %v4608 = vsel %vm4575, %v4607, %v4606
        %v4609 = vperm.slane %v4472, %v4577
        %v4610 = vsel %vm4579, %v4609, %v4608
        %v4611 = vperm.slane %v4475, %v4284
        %v4612 = vperm.slane %v4478, %v4573
        %v4613 = vsel %vm4575, %v4612, %v4611
        %v4614 = vperm.slane %v4481, %v4577
        %v4615 = vsel %vm4579, %v4614, %v4613
        %v4616 = vperm.slane %v4484, %v4284
        %v4617 = vperm.slane %v4487, %v4573
        %v4618 = vsel %vm4575, %v4617, %v4616
        %v4619 = vperm.slane %v4490, %v4577
        %v4620 = vsel %vm4579, %v4619, %v4618
        %v4621 = vperm.slane %v4493, %v4284
        %v4622 = vperm.slane %v4496, %v4573
        %v4623 = vsel %vm4575, %v4622, %v4621
        %v4624 = vperm.slane %v4499, %v4577
        %v4625 = vsel %vm4579, %v4624, %v4623
        %v4626 = vperm.slane %v4502, %v4284
        %v4627 = vperm.slane %v4505, %v4573
        %v4628 = vsel %vm4575, %v4627, %v4626
        %v4629 = vperm.slane %v4508, %v4577
        %v4630 = vsel %vm4579, %v4629, %v4628
        %v4631 = vperm.slane %v4511, %v4284
        %v4632 = vperm.slane %v4514, %v4573
        %v4633 = vsel %vm4575, %v4632, %v4631
        %v4634 = vperm.slane %v4517, %v4577
        %v4635 = vsel %vm4579, %v4634, %v4633
        %v4636 = vperm.slane %v4520, %v4284
        %v4637 = vperm.slane %v4523, %v4573
        %v4638 = vsel %vm4575, %v4637, %v4636
        %v4639 = vperm.slane %v4526, %v4577
        %v4640 = vsel %vm4579, %v4639, %v4638
        %v4641 = vperm.slane %v4529, %v4284
        %v4642 = vperm.slane %v4532, %v4573
        %v4643 = vsel %vm4575, %v4642, %v4641
        %v4644 = vperm.slane %v4535, %v4577
        %v4645 = vsel %vm4579, %v4644, %v4643
        %v4646 = vperm.slane %v4538, %v4284
        %v4647 = vperm.slane %v4541, %v4573
        %v4648 = vsel %vm4575, %v4647, %v4646
        %v4649 = vperm.slane %v4544, %v4577
        %v4650 = vsel %vm4579, %v4649, %v4648
        %v4651 = vperm.slane %v4547, %v4284
        %v4652 = vperm.slane %v4550, %v4573
        %v4653 = vsel %vm4575, %v4652, %v4651
        %v4654 = vperm.slane %v4553, %v4577
        %v4655 = vsel %vm4579, %v4654, %v4653
        %v4656 = vperm.slane %v4556, %v4284
        %v4657 = vperm.slane %v4559, %v4573
        %v4658 = vsel %vm4575, %v4657, %v4656
        %v4659 = vperm.slane %v4562, %v4577
        %v4660 = vsel %vm4579, %v4659, %v4658
        %v4661 = vperm.slane %v4565, %v4284
        %v4662 = vperm.slane %v4568, %v4573
        %v4663 = vsel %vm4575, %v4662, %v4661
        %v4664 = vperm.slane %v4571, %v4577
        %v4665 = vsel %vm4579, %v4664, %v4663
        %vm4666 = vcmask 1041409
        %v4667 = vsel %vm4666, %v4585, %v4580
        %vm4668 = vcmask 1042434
        %v4669 = vsel %vm4668, %v4590, %v4667
        %vm4670 = vcmask 1043459
        %v4671 = vsel %vm4670, %v4595, %v4669
        %vm4672 = vcmask 1044484
        %v4673 = vsel %vm4672, %v4600, %v4671
        %vm4674 = vcmask 1045509
        %v4675 = vsel %vm4674, %v4605, %v4673
        %vm4676 = vcmask 1046534
        %v4677 = vsel %vm4676, %v4610, %v4675
        %vm4678 = vcmask 1047559
        %v4679 = vsel %vm4678, %v4615, %v4677
        %v4680 = vsel %vm4666, %v4625, %v4620
        %v4681 = vsel %vm4668, %v4630, %v4680
        %v4682 = vsel %vm4670, %v4635, %v4681
        %v4683 = vsel %vm4672, %v4640, %v4682
        %v4684 = vsel %vm4674, %v4645, %v4683
        %v4685 = vsel %vm4676, %v4650, %v4684
        %v4686 = vsel %vm4678, %v4655, %v4685
        %v4687 = vsel %vm4666, %v4665, %v4660
        %v4691 = vsel %vm4299, %v4679, 0.0
        %v4692 = vsel %vm4300, %v4686, 0.0
        %v4693 = vsel %vm4301, %v4687, 0.0
        %s4694 = sld [smem:[#allocation4]]
        %v4695 = vstv %s4694
        %v4696 = vmul.f32 %v4691, %v4695
        %v4697 = vmul.f32 %v4692, %v4695
        %v4698 = vadd.f32 %v4696, 0.0
        %v4699 = vadd.f32 %v4697, 0.0
        %s4700 = sld [smem:[#allocation4 + $0x1]]
        %v4701 = vstv %s4700
        %v4702 = vmul.f32 %v4691, %v4701
        %v4703 = vmul.f32 %v4692, %v4701
        %4706 = vrot.lane.b32.xlu0 %v4702, 127
        %v4707 = vpop.permute.xlu0 %4706
        %4708 = vrot.lane.b32.xlu0 %v4703, 127
        %v4709 = vpop.permute.xlu0 %4708
        %v4712 = vadd.f32 %v4698, %v4707
        %v4713 = vadd.f32 %v4699, %v4709
        %s4714 = sld [smem:[#allocation4 + $0x2]]
        %v4715 = vstv %s4714
        %v4716 = vmul.f32 %v4691, %v4715
        %v4717 = vmul.f32 %v4692, %v4715
        %4720 = vrot.lane.b32.xlu0 %v4716, 126
        %v4721 = vpop.permute.xlu0 %4720
        %4722 = vrot.lane.b32.xlu0 %v4717, 126
        %v4723 = vpop.permute.xlu0 %4722
        %v4726 = vadd.f32 %v4712, %v4721
        %v4727 = vadd.f32 %v4713, %v4723
        %s4728 = sld [smem:[#allocation4 + $0x3]]
        %v4729 = vstv %s4728
        %v4730 = vmul.f32 %v4691, %v4729
        %v4731 = vmul.f32 %v4692, %v4729
        %v4732 = vmul.f32 %v4693, %v4729
        %v4736 = vrot.slane %v4730, 1
        %v4737 = vrot.slane %v4731, 1
        %v4738 = vsel %vm1134, %v4736, %v4737
        %v4739 = vrot.slane %v4732, 1
        %v4740 = vsel %vm1134, %v4737, %v4739
        %v4743 = vadd.f32 %v4726, %v4738
        %v4744 = vadd.f32 %v4727, %v4740
        %s4745 = sld [smem:[#allocation4 + $0x4]]
        %v4746 = vstv %s4745
        %v4747 = vmul.f32 %v4691, %v4746
        %v4748 = vmul.f32 %v4692, %v4746
        %v4749 = vmul.f32 %v4693, %v4746
        %v4753 = vrot.slane %v4747, 1
        %v4754 = vrot.slane %v4748, 1
        %v4755 = vsel %vm1134, %v4753, %v4754
        %v4756 = vrot.slane %v4749, 1
        %v4757 = vsel %vm1134, %v4754, %v4756
        %4758 = vrot.lane.b32.xlu0 %v4755, 127
        %v4759 = vpop.permute.xlu0 %4758
        %4760 = vrot.lane.b32.xlu0 %v4757, 127
        %v4761 = vpop.permute.xlu0 %4760
        %v4764 = vadd.f32 %v4743, %v4759
        %v4765 = vadd.f32 %v4744, %v4761
        %s4766 = sld [smem:[#allocation4 + $0x5]]
        %v4767 = vstv %s4766
        %v4768 = vmul.f32 %v4691, %v4767
        %v4769 = vmul.f32 %v4692, %v4767
        %v4770 = vmul.f32 %v4693, %v4767
        %v4774 = vrot.slane %v4768, 1
        %v4775 = vrot.slane %v4769, 1
        %v4776 = vsel %vm1134, %v4774, %v4775
        %v4777 = vrot.slane %v4770, 1
        %v4778 = vsel %vm1134, %v4775, %v4777
        %4779 = vrot.lane.b32.xlu0 %v4776, 126
        %v4780 = vpop.permute.xlu0 %4779
        %4781 = vrot.lane.b32.xlu0 %v4778, 126
        %v4782 = vpop.permute.xlu0 %4781
        %v4785 = vadd.f32 %v4764, %v4780
        %v4786 = vadd.f32 %v4765, %v4782
        %s4787 = sld [smem:[#allocation4 + $0x6]]
        %v4788 = vstv %s4787
        %v4789 = vmul.f32 %v4691, %v4788
        %v4790 = vmul.f32 %v4692, %v4788
        %v4791 = vmul.f32 %v4693, %v4788
        %v4795 = vrot.slane %v4789, 2
        %v4796 = vrot.slane %v4790, 2
        %v4797 = vsel %vm1606, %v4795, %v4796
        %v4798 = vrot.slane %v4791, 2
        %v4799 = vsel %vm1606, %v4796, %v4798
        %v4802 = vadd.f32 %v4785, %v4797
        %v4803 = vadd.f32 %v4786, %v4799
        %s4804 = sld [smem:[#allocation4 + $0x7]]
        %v4805 = vstv %s4804
        %v4806 = vmul.f32 %v4691, %v4805
        %v4807 = vmul.f32 %v4692, %v4805
        %v4808 = vmul.f32 %v4693, %v4805
        %v4812 = vrot.slane %v4806, 2
        %v4813 = vrot.slane %v4807, 2
        %v4814 = vsel %vm1606, %v4812, %v4813
        %v4815 = vrot.slane %v4808, 2
        %v4816 = vsel %vm1606, %v4813, %v4815
        %4817 = vrot.lane.b32.xlu0 %v4814, 127
        %v4818 = vpop.permute.xlu0 %4817
        %4819 = vrot.lane.b32.xlu0 %v4816, 127
        %v4820 = vpop.permute.xlu0 %4819
        %v4823 = vadd.f32 %v4802, %v4818
        %v4824 = vadd.f32 %v4803, %v4820
        %s4825 = sld [smem:[#allocation4 + $0x8]]
        %v4826 = vstv %s4825
        %v4827 = vmul.f32 %v4691, %v4826
        %v4828 = vmul.f32 %v4692, %v4826
        %v4829 = vmul.f32 %v4693, %v4826
        %v4833 = vrot.slane %v4827, 2
        %v4834 = vrot.slane %v4828, 2
        %v4835 = vsel %vm1606, %v4833, %v4834
        %v4836 = vrot.slane %v4829, 2
        %v4837 = vsel %vm1606, %v4834, %v4836
        %4838 = vrot.lane.b32.xlu0 %v4835, 126
        %v4839 = vpop.permute.xlu0 %4838
        %4840 = vrot.lane.b32.xlu0 %v4837, 126
        %v4841 = vpop.permute.xlu0 %4840
        %v4844 = vadd.f32 %v4823, %v4839
        %v4845 = vadd.f32 %v4824, %v4841
        %s4846 = sld [smem:[#allocation3]]
        %v4847 = vstv %s4846
        %v4848 = vadd.f32 %v4844, %v4847
        %v4849 = vadd.f32 %v4845, %v4847
        %v4850 = vtanh.pop %v4848
        %v4851 = vtanh.pop %v4849
        %4852 = vst.msk [vmem:[%s275] sm:$0xff] %vm643, %v4850
        %4853 = vst.msk [vmem:[%s275 + $0x8] sm:$0xff] %vm643, %v4851
        %s4854 = sand.u32 %s167, 1
        %s4855 = scalar_lea.sflag [#allocation5], %s4854
        %s4856 = sand.u32 %s167, 1
        %s4857 = smul.addr %s4856, 16
        %s4858 = scalar_lea.vmem [#allocation7], %s4857
        // Predicated region
        $region49: #{denoiser_forward.11} parent=43 // pred_check
          %p4859 = pneg %p177
        $region50: #{denoiser_forward.11} parent=43 // pred_check_branch
          %4861 = sbr.rel (%p4859) target = $region52
        $region51: #{denoiser_forward.11} parent=43 // pred_region
          %4863 = vsyncadd %s4855, 0
          %s4864 = smul.addr %s23, 2
          %s4865 = smul.addr %s4864, 8
          %s4866 = scalar_lea.hbm %s6, %s4865
          %s4867 = sshll.u32 %s4858, 4
          %s4868 = int_to_ptr.vmem [resolvable:$true] %s4867
          %s4869 = sshll.u32 %s4866, 4
          %s4870 = int_to_ptr.hbm [resolvable:$true] %s4869
          %4875 = dma.vmem_to_hbm [thread:$0]  %s4868, 256, %s4870, %s4855, 128, 128, 8
        $region52: #{denoiser_forward.11} parent=43 // pred_fallthru
          _
      $region44: #{denoiser_forward.11} parent=5 // pred_fallthru
        _
      %p4876 = scmp.le.s32.totalorder 2, %s18
      // Predicated region
      $region53: #{denoiser_forward.11} parent=5 // pred_check
        %p4877 = pneg %p4876
      $region54: #{denoiser_forward.11} parent=5 // pred_check_branch
        %4879 = sbr.rel (%p4877) target = $region56
      $region55: #{denoiser_forward.11} parent=5 // pred_region
        %s4880 = ssub.s32 %s18, 2
        // Predicated region
        $region57: #{denoiser_forward.11} parent=55 // pred_check
          %p4881 = pneg %p183
        $region58: #{denoiser_forward.11} parent=55 // pred_check_branch
          %4883 = sbr.rel (%p4881) target = $region60
        $region59: #{denoiser_forward.11} parent=55 // pred_region
          %s4884 = sand.u32 %s168, 1
          %s4885 = scalar_lea.sflag [#allocation5], %s4884
          %s4886 = sand.u32 %s168, 1
          %s4887 = smul.addr %s4886, 16
          %s4888 = scalar_lea.vmem [#allocation7], %s4887
          %4890 = dma.done %s4885, 256
        $region60: #{denoiser_forward.11} parent=55 // pred_fallthru
          _
      $region56: #{denoiser_forward.11} parent=5 // pred_fallthru
        _
    $region6: #{denoiser_forward.11} parent=1 // loop_footer
      %s22 = sadd.s32 1, %s18
    $region7: #{denoiser_forward.11} parent=1 // loop_footer_branch
      %17 = sbr.rel target = $region3
    $region8: #{denoiser_forward.11} parent=1 // loop_exit
      _
    %4891 = vsyncpa [#allocation5], 1
    %s4892 = scalar_lea.sflag [#allocation5], 1
    %4893 = vsyncpa %s4892, 1
    %4894 = vsyncpa [#allocation6], 1
    %s4895 = scalar_lea.sflag [#allocation6], 1
    %4896 = vsyncpa %s4895, 1

</llo_original>
